<compile_context>
chip_gen: v7x
topology: tpu7x:2x2x1
jax: 0.10.0
libtpu: 0.0.40
codegen_flags: <defaults>
</compile_context>

<pallas_src>
import functools

import jax
import jax.numpy as jnp
from jax.experimental import pallas as pl
from jax.experimental.pallas import tpu as pltpu


def _nbytes(a):
    return int(a.size) * a.dtype.itemsize


# ---------------------------------------------------------------------------
# Fused kernel: full encoder/decoder chain + one output-column tile of the
# final 1024 -> 16384 layer per grid step.
# ---------------------------------------------------------------------------
def _dense_ae_kernel(*refs, n_small):
    # refs = [x, w0, b0, ..., w8, b8, w_big_q(blocked), scale_big, b_big, o]
    x_ref = refs[0]
    small = refs[1:1 + 2 * n_small]
    w_big_ref = refs[1 + 2 * n_small]
    scale_ref = refs[2 + 2 * n_small]
    b_big_ref = refs[3 + 2 * n_small]
    o_ref = refs[4 + 2 * n_small]

    # Small-layer chain: bf16 weights, bf16 activations into the MXU, f32
    # accumulation + f32 bias/ReLU.  All weights VMEM-resident; at B=2 the
    # 4x recompute (one per grid step) is negligible and fully hidden.
    h = x_ref[...]
    for i in range(n_small):
        w = small[2 * i][...]              # bf16 (in, out)
        b = small[2 * i + 1][...]          # f32  (1, out)
        h = jnp.dot(h.astype(jnp.bfloat16), w,
                    preferred_element_type=jnp.float32) + b
        if i != 4:  # layer 4 is the encoder bottleneck Linear(12, 2): no ReLU
            h = jnp.maximum(h, 0.0)

    # Final layer tile: int8 weight slab streamed from HBM, dequantized to
    # bf16 (exact), f32 MXU accumulation, per-column scale + bias + sigmoid.
    q = w_big_ref[0].astype(jnp.bfloat16)          # (K, tn)
    y = jnp.dot(h.astype(jnp.bfloat16), q, preferred_element_type=jnp.float32)
    y = y * scale_ref[...] + b_big_ref[...]
    o_ref[...] = jax.nn.sigmoid(y).astype(o_ref.dtype)


def dense_ae_2dim_forward(kernel_params, x, *, tn=4096, use_pipeline_mode=True):
    """Single-pallas_call forward.  x: (B, img_size*img_size) f32."""
    small, (w_big_blk, scale_big, b_big) = kernel_params
    B, _ = x.shape
    n_tiles, k_big, tn_stored = w_big_blk.shape
    assert tn_stored == tn, (tn_stored, tn)
    n_out = n_tiles * tn
    assert scale_big.shape == (1, n_out) and b_big.shape == (1, n_out)

    def spec(shape, index_map, buffers=None):
        if use_pipeline_mode and buffers is not None:
            return pl.BlockSpec(shape, index_map,
                                pipeline_mode=pl.Buffered(buffers))
        return pl.BlockSpec(shape, index_map)

    inputs = [x]
    # Resident inputs: constant index_map -> single buffer is enough.
    in_specs = [spec(x.shape, lambda j: (0, 0), buffers=1)]
    for (w, b) in small:
        in_specs.append(spec(w.shape, lambda j: (0, 0), buffers=1))
        in_specs.append(spec(b.shape, lambda j: (0, 0), buffers=1))
        inputs += [w, b]
    # Big weight: one contiguous (1024, tn) int8 slab per grid step, 3-deep
    # buffered (12 MiB) to ride out HBM contention / DMA jitter.
    in_specs.append(spec((1, k_big, tn), lambda j: (j, 0, 0), buffers=3))
    in_specs.append(spec((1, tn), lambda j: (0, j)))   # per-column scales
    in_specs.append(spec((1, tn), lambda j: (0, j)))   # bias
    inputs += [w_big_blk, scale_big, b_big]

    kernel = functools.partial(_dense_ae_kernel, n_small=len(small))

    small_flops = sum(2 * B * w.shape[0] * w.shape[1] for (w, _) in small)
    flops = n_tiles * small_flops + 2 * B * k_big * n_out
    bytes_accessed = (_nbytes(w_big_blk) + _nbytes(scale_big) + _nbytes(b_big)
                      + _nbytes(x) + B * n_out * 4
                      + sum(_nbytes(w) + _nbytes(b) for (w, b) in small))

    return pl.pallas_call(
        kernel,
        out_shape=jax.ShapeDtypeStruct((B, n_out), jnp.float32),
        grid_spec=pltpu.PrefetchScalarGridSpec(
            num_scalar_prefetch=0,
            grid=(n_tiles,),
            in_specs=in_specs,
            out_specs=pl.BlockSpec((B, tn), lambda j: (0, j)),
        ),
        compiler_params=pltpu.CompilerParams(
            # 'parallel' lets v7x megacore split the weight stream across both
            # TensorCores; it is a no-op on v5e/v6e.
            dimension_semantics=("parallel",),
            vmem_limit_bytes=32 * 1024 * 1024,
        ),
        cost_estimate=pl.CostEstimate(
            flops=int(flops),
            transcendentals=int(B * n_out),       # sigmoid -> exp per element
            bytes_accessed=int(bytes_accessed),
        ),
    )(*inputs)


# ---------------------------------------------------------------------------
# Parameter construction (PyTorch nn.Linear default init:
# U(-1/sqrt(fan_in), 1/sqrt(fan_in)) for weight and bias), plus conversion to
# the kernel layout (bf16 small weights, int8 pre-blocked big weight).
# ---------------------------------------------------------------------------
def _init_linear(key, fan_in, fan_out):
    kw, kb = jax.random.split(key)
    bound = 1.0 / jnp.sqrt(jnp.float32(fan_in))
    w = jax.random.uniform(kw, (fan_in, fan_out), jnp.float32, -bound, bound)
    b = jax.random.uniform(kb, (fan_out,), jnp.float32, -bound, bound)
    return w, b


def make_params(key, img_size):
    enc = [img_size * img_size, 1024, 128, 64, 12, 2]
    dec = [2, 12, 64, 128, 1024, 128 * 128]
    dims = list(zip(enc[:-1], enc[1:])) + list(zip(dec[:-1], dec[1:]))
    keys = jax.random.split(key, len(dims))
    return [_init_linear(k, fi, fo) for k, (fi, fo) in zip(keys, dims)]


def prepare_kernel_params(params, *, tn=4096):
    *small, (w_big, b_big) = params
    # TODO(synk): at the real DenseAE_2dim image size (128x128) the first
    # encoder weight (16384x1024) is too large to stay VMEM-resident and must
    # be pre-blocked and streamed over its K dimension exactly like w_big.
    small_k = [(w.astype(jnp.bfloat16), b.reshape(1, -1)) for (w, b) in small]

    k_big, n_out = w_big.shape
    assert n_out % tn == 0
    n_tiles = n_out // tn
    # Per-output-column symmetric int8 quantization of the dominant weight:
    # halves the only real HBM stream.
    scale = jnp.max(jnp.abs(w_big), axis=0, keepdims=True) / 127.0   # (1, n_out)
    q = jnp.clip(jnp.round(w_big / scale), -127.0, 127.0).astype(jnp.int8)
    # Pre-block into contiguous (n_tiles, K, tn) slabs so each grid step DMAs
    # one fully-contiguous, lane-dense tile.
    q_blk = q.reshape(k_big, n_tiles, tn).transpose(1, 0, 2)
    return small_k, (q_blk, scale.astype(jnp.float32),
                     b_big.reshape(1, n_out).astype(jnp.float32))


# ---------------------------------------------------------------------------
# References.
# ---------------------------------------------------------------------------
def dense_ae_2dim_reference(kernel_params, x):
    """Pure-JAX reference matching the kernel numerics (bf16 weights with f32
    accumulation, per-column int8 big weight)."""
    small, (q_blk, scale, b_big) = kernel_params
    h = x
    for i, (w, b) in enumerate(small):
        h = jnp.dot(h.astype(jnp.bfloat16), w,
                    preferred_element_type=jnp.float32) + b
        if i != 4:
            h = jnp.maximum(h, 0.0)
    n_tiles, k_big, tn = q_blk.shape
    q = q_blk.transpose(1, 0, 2).reshape(k_big, n_tiles * tn)
    y = jnp.dot(h.astype(jnp.bfloat16), q.astype(jnp.bfloat16),
                preferred_element_type=jnp.float32)
    y = y * scale + b_big
    return jax.nn.sigmoid(y)


def dense_ae_2dim_reference_f32(params, x):
    """Full-precision reference of the original module forward."""
    h = x
    n = len(params)
    for i, (w, b) in enumerate(params):
        h = jnp.dot(h, w, preferred_element_type=jnp.float32) + b
        if i == n - 1:
            h = jax.nn.sigmoid(h)
        elif i != 4:
            h = jnp.maximum(h, 0.0)
    return h


if __name__ == "__main__":
    img_size = 16          # input feature dim = 16*16 = 256 (small test shape)
    batch = 2
    tn = 4096

    key = jax.random.PRNGKey(0)
    kp, kx = jax.random.split(key)
    params = make_params(kp, img_size)
    kernel_params = prepare_kernel_params(params, tn=tn)
    x = jax.random.normal(kx, (batch, img_size * img_size), jnp.float32)

    try:
        out = jax.block_until_ready(
            dense_ae_2dim_forward(kernel_params, x, tn=tn))
    except Exception:
        # Fallback: if this jax build does not honor pipeline_mode/Buffered on
        # the TPU pallas_call path, retry with default buffering (perf-only).
        out = jax.block_until_ready(
            dense_ae_2dim_forward(kernel_params, x, tn=tn,
                                  use_pipeline_mode=False))

    assert out.shape == (batch, 128 * 128), out.shape

    ref = jax.block_until_ready(dense_ae_2dim_reference(kernel_params, x))
    max_err = float(jnp.max(jnp.abs(out - ref)))
    assert max_err < 1e-3, max_err

    ref32 = jax.block_until_ready(dense_ae_2dim_reference_f32(params, x))
    max_err32 = float(jnp.max(jnp.abs(out - ref32)))
    assert max_err32 < 5e-3, max_err32   # bf16 / int8 quantization error budget

    print("KERNEL_OK")
</pallas_src>

<mosaic_0001>
module attributes {stable_mosaic.version = 11 : i64} {
  func.func @_dense_ae_kernel(%arg0: i32, %arg1: memref<2x256xf32, #tpu.memory_space<vmem>>, %arg2: memref<256x1024xbf16, #tpu.memory_space<vmem>>, %arg3: memref<1x1024xf32, #tpu.memory_space<vmem>>, %arg4: memref<1024x128xbf16, #tpu.memory_space<vmem>>, %arg5: memref<1x128xf32, #tpu.memory_space<vmem>>, %arg6: memref<128x64xbf16, #tpu.memory_space<vmem>>, %arg7: memref<1x64xf32, #tpu.memory_space<vmem>>, %arg8: memref<64x12xbf16, #tpu.memory_space<vmem>>, %arg9: memref<1x12xf32, #tpu.memory_space<vmem>>, %arg10: memref<12x2xbf16, #tpu.memory_space<vmem>>, %arg11: memref<1x2xf32, #tpu.memory_space<vmem>>, %arg12: memref<2x12xbf16, #tpu.memory_space<vmem>>, %arg13: memref<1x12xf32, #tpu.memory_space<vmem>>, %arg14: memref<12x64xbf16, #tpu.memory_space<vmem>>, %arg15: memref<1x64xf32, #tpu.memory_space<vmem>>, %arg16: memref<64x128xbf16, #tpu.memory_space<vmem>>, %arg17: memref<1x128xf32, #tpu.memory_space<vmem>>, %arg18: memref<128x1024xbf16, #tpu.memory_space<vmem>>, %arg19: memref<1x1024xf32, #tpu.memory_space<vmem>>, %arg20: memref<1x1024x4096xi8, #tpu.memory_space<vmem>>, %arg21: memref<1x4096xf32, #tpu.memory_space<vmem>>, %arg22: memref<1x4096xf32, #tpu.memory_space<vmem>>, %arg23: memref<2x4096xf32, #tpu.memory_space<vmem>>) attributes {dimension_semantics = [#tpu.dimension_semantics<parallel>], iteration_bounds = array<i64: 4>, scalar_prefetch = 0 : i64, scratch_operands = 0 : i64, tpu.core_type = #tpu.core_type<tc>, window_params = [{pipeline_mode = #tpu.pipeline_mode<synchronous>, transform_indices = @transform_0, window_bounds = array<i64: 2, 256>}, {pipeline_mode = #tpu.pipeline_mode<synchronous>, transform_indices = @transform_1, window_bounds = array<i64: 256, 1024>}, {pipeline_mode = #tpu.pipeline_mode<synchronous>, transform_indices = @transform_2, window_bounds = array<i64: 1, 1024>}, {pipeline_mode = #tpu.pipeline_mode<synchronous>, transform_indices = @transform_3, window_bounds = array<i64: 1024, 128>}, {pipeline_mode = #tpu.pipeline_mode<synchronous>, transform_indices = @transform_4, window_bounds = array<i64: 1, 128>}, {pipeline_mode = #tpu.pipeline_mode<synchronous>, transform_indices = @transform_5, window_bounds = array<i64: 128, 64>}, {pipeline_mode = #tpu.pipeline_mode<synchronous>, transform_indices = @transform_6, window_bounds = array<i64: 1, 64>}, {pipeline_mode = #tpu.pipeline_mode<synchronous>, transform_indices = @transform_7, window_bounds = array<i64: 64, 12>}, {pipeline_mode = #tpu.pipeline_mode<synchronous>, transform_indices = @transform_8, window_bounds = array<i64: 1, 12>}, {pipeline_mode = #tpu.pipeline_mode<synchronous>, transform_indices = @transform_9, window_bounds = array<i64: 12, 2>}, {pipeline_mode = #tpu.pipeline_mode<synchronous>, transform_indices = @transform_10, window_bounds = array<i64: 1, 2>}, {pipeline_mode = #tpu.pipeline_mode<synchronous>, transform_indices = @transform_11, window_bounds = array<i64: 2, 12>}, {pipeline_mode = #tpu.pipeline_mode<synchronous>, transform_indices = @transform_12, window_bounds = array<i64: 1, 12>}, {pipeline_mode = #tpu.pipeline_mode<synchronous>, transform_indices = @transform_13, window_bounds = array<i64: 12, 64>}, {pipeline_mode = #tpu.pipeline_mode<synchronous>, transform_indices = @transform_14, window_bounds = array<i64: 1, 64>}, {pipeline_mode = #tpu.pipeline_mode<synchronous>, transform_indices = @transform_15, window_bounds = array<i64: 64, 128>}, {pipeline_mode = #tpu.pipeline_mode<synchronous>, transform_indices = @transform_16, window_bounds = array<i64: 1, 128>}, {pipeline_mode = #tpu.pipeline_mode<synchronous>, transform_indices = @transform_17, window_bounds = array<i64: 128, 1024>}, {pipeline_mode = #tpu.pipeline_mode<synchronous>, transform_indices = @transform_18, window_bounds = array<i64: 1, 1024>}, {transform_indices = @transform_19, window_bounds = array<i64: 1, 1024, 4096>}, {transform_indices = @transform_20, window_bounds = array<i64: 1, 4096>}, {transform_indices = @transform_21, window_bounds = array<i64: 1, 4096>}, {transform_indices = @transform_22, window_bounds = array<i64: 2, 4096>}]} {
    %c0 = arith.constant 0 : index
    %c0_0 = arith.constant 0 : index
    %0 = vector.load %arg1[%c0, %c0_0] : memref<2x256xf32, #tpu.memory_space<vmem>>, vector<2x256xf32>
    %c0_1 = arith.constant 0 : index
    %c0_2 = arith.constant 0 : index
    %1 = vector.load %arg2[%c0_1, %c0_2] : memref<256x1024xbf16, #tpu.memory_space<vmem>>, vector<256x1024xbf16>
    %c0_3 = arith.constant 0 : index
    %c0_4 = arith.constant 0 : index
    %2 = vector.load %arg3[%c0_3, %c0_4] : memref<1x1024xf32, #tpu.memory_space<vmem>>, vector<1x1024xf32>
    %3 = arith.truncf %0 : vector<2x256xf32> to vector<2x256xbf16>
    %cst = arith.constant dense<0.000000e+00> : vector<2x1024xf32>
    %4 = tpu.matmul %3, %1, %cst {dimension_numbers = #tpu.dot_dimension_numbers<[1], [0], [0], [1], [0, 0, 1, 1], [], []>} : vector<2x256xbf16>, vector<256x1024xbf16>, vector<2x1024xf32> -> vector<2x1024xf32>
    %5 = vector.broadcast %2 : vector<1x1024xf32> to vector<2x1024xf32>
    %6 = arith.addf %4, %5 : vector<2x1024xf32>
    %cst_5 = arith.constant 0.000000e+00 : f32
    %7 = vector.broadcast %cst_5 : f32 to vector<2x1024xf32>
    %8 = arith.maximumf %6, %7 : vector<2x1024xf32>
    %c0_6 = arith.constant 0 : index
    %c0_7 = arith.constant 0 : index
    %9 = vector.load %arg4[%c0_6, %c0_7] : memref<1024x128xbf16, #tpu.memory_space<vmem>>, vector<1024x128xbf16>
    %c0_8 = arith.constant 0 : index
    %c0_9 = arith.constant 0 : index
    %10 = vector.load %arg5[%c0_8, %c0_9] : memref<1x128xf32, #tpu.memory_space<vmem>>, vector<1x128xf32>
    %11 = arith.truncf %8 : vector<2x1024xf32> to vector<2x1024xbf16>
    %cst_10 = arith.constant dense<0.000000e+00> : vector<2x128xf32>
    %12 = tpu.matmul %11, %9, %cst_10 {dimension_numbers = #tpu.dot_dimension_numbers<[1], [0], [0], [1], [0, 0, 1, 1], [], []>} : vector<2x1024xbf16>, vector<1024x128xbf16>, vector<2x128xf32> -> vector<2x128xf32>
    %13 = vector.broadcast %10 : vector<1x128xf32> to vector<2x128xf32>
    %14 = arith.addf %12, %13 : vector<2x128xf32>
    %cst_11 = arith.constant 0.000000e+00 : f32
    %15 = vector.broadcast %cst_11 : f32 to vector<2x128xf32>
    %16 = arith.maximumf %14, %15 : vector<2x128xf32>
    %c0_12 = arith.constant 0 : index
    %c0_13 = arith.constant 0 : index
    %17 = vector.load %arg6[%c0_12, %c0_13] : memref<128x64xbf16, #tpu.memory_space<vmem>>, vector<128x64xbf16>
    %c0_14 = arith.constant 0 : index
    %c0_15 = arith.constant 0 : index
    %18 = vector.load %arg7[%c0_14, %c0_15] : memref<1x64xf32, #tpu.memory_space<vmem>>, vector<1x64xf32>
    %19 = arith.truncf %16 : vector<2x128xf32> to vector<2x128xbf16>
    %cst_16 = arith.constant dense<0.000000e+00> : vector<2x64xf32>
    %20 = tpu.matmul %19, %17, %cst_16 {dimension_numbers = #tpu.dot_dimension_numbers<[1], [0], [0], [1], [0, 0, 1, 1], [], []>} : vector<2x128xbf16>, vector<128x64xbf16>, vector<2x64xf32> -> vector<2x64xf32>
    %21 = vector.broadcast %18 : vector<1x64xf32> to vector<2x64xf32>
    %22 = arith.addf %20, %21 : vector<2x64xf32>
    %cst_17 = arith.constant 0.000000e+00 : f32
    %23 = vector.broadcast %cst_17 : f32 to vector<2x64xf32>
    %24 = arith.maximumf %22, %23 : vector<2x64xf32>
    %c0_18 = arith.constant 0 : index
    %c0_19 = arith.constant 0 : index
    %25 = vector.load %arg8[%c0_18, %c0_19] : memref<64x12xbf16, #tpu.memory_space<vmem>>, vector<64x12xbf16>
    %c0_20 = arith.constant 0 : index
    %c0_21 = arith.constant 0 : index
    %26 = vector.load %arg9[%c0_20, %c0_21] : memref<1x12xf32, #tpu.memory_space<vmem>>, vector<1x12xf32>
    %27 = arith.truncf %24 : vector<2x64xf32> to vector<2x64xbf16>
    %cst_22 = arith.constant dense<0.000000e+00> : vector<2x12xf32>
    %28 = tpu.matmul %27, %25, %cst_22 {dimension_numbers = #tpu.dot_dimension_numbers<[1], [0], [0], [1], [0, 0, 1, 1], [], []>} : vector<2x64xbf16>, vector<64x12xbf16>, vector<2x12xf32> -> vector<2x12xf32>
    %29 = vector.broadcast %26 : vector<1x12xf32> to vector<2x12xf32>
    %30 = arith.addf %28, %29 : vector<2x12xf32>
    %cst_23 = arith.constant 0.000000e+00 : f32
    %31 = vector.broadcast %cst_23 : f32 to vector<2x12xf32>
    %32 = arith.maximumf %30, %31 : vector<2x12xf32>
    %c0_24 = arith.constant 0 : index
    %c0_25 = arith.constant 0 : index
    %33 = vector.load %arg10[%c0_24, %c0_25] : memref<12x2xbf16, #tpu.memory_space<vmem>>, vector<12x2xbf16>
    %c0_26 = arith.constant 0 : index
    %c0_27 = arith.constant 0 : index
    %34 = vector.load %arg11[%c0_26, %c0_27] : memref<1x2xf32, #tpu.memory_space<vmem>>, vector<1x2xf32>
    %35 = arith.truncf %32 : vector<2x12xf32> to vector<2x12xbf16>
    %cst_28 = arith.constant dense<0.000000e+00> : vector<2x2xf32>
    %36 = tpu.matmul %35, %33, %cst_28 {dimension_numbers = #tpu.dot_dimension_numbers<[1], [0], [0], [1], [0, 0, 1, 1], [], []>} : vector<2x12xbf16>, vector<12x2xbf16>, vector<2x2xf32> -> vector<2x2xf32>
    %37 = vector.broadcast %34 : vector<1x2xf32> to vector<2x2xf32>
    %38 = arith.addf %36, %37 : vector<2x2xf32>
    %c0_29 = arith.constant 0 : index
    %c0_30 = arith.constant 0 : index
    %39 = vector.load %arg12[%c0_29, %c0_30] : memref<2x12xbf16, #tpu.memory_space<vmem>>, vector<2x12xbf16>
    %c0_31 = arith.constant 0 : index
    %c0_32 = arith.constant 0 : index
    %40 = vector.load %arg13[%c0_31, %c0_32] : memref<1x12xf32, #tpu.memory_space<vmem>>, vector<1x12xf32>
    %41 = arith.truncf %38 : vector<2x2xf32> to vector<2x2xbf16>
    %cst_33 = arith.constant dense<0.000000e+00> : vector<2x12xf32>
    %42 = tpu.matmul %41, %39, %cst_33 {dimension_numbers = #tpu.dot_dimension_numbers<[1], [0], [0], [1], [0, 0, 1, 1], [], []>} : vector<2x2xbf16>, vector<2x12xbf16>, vector<2x12xf32> -> vector<2x12xf32>
    %43 = vector.broadcast %40 : vector<1x12xf32> to vector<2x12xf32>
    %44 = arith.addf %42, %43 : vector<2x12xf32>
    %cst_34 = arith.constant 0.000000e+00 : f32
    %45 = vector.broadcast %cst_34 : f32 to vector<2x12xf32>
    %46 = arith.maximumf %44, %45 : vector<2x12xf32>
    %c0_35 = arith.constant 0 : index
    %c0_36 = arith.constant 0 : index
    %47 = vector.load %arg14[%c0_35, %c0_36] : memref<12x64xbf16, #tpu.memory_space<vmem>>, vector<12x64xbf16>
    %c0_37 = arith.constant 0 : index
    %c0_38 = arith.constant 0 : index
    %48 = vector.load %arg15[%c0_37, %c0_38] : memref<1x64xf32, #tpu.memory_space<vmem>>, vector<1x64xf32>
    %49 = arith.truncf %46 : vector<2x12xf32> to vector<2x12xbf16>
    %cst_39 = arith.constant dense<0.000000e+00> : vector<2x64xf32>
    %50 = tpu.matmul %49, %47, %cst_39 {dimension_numbers = #tpu.dot_dimension_numbers<[1], [0], [0], [1], [0, 0, 1, 1], [], []>} : vector<2x12xbf16>, vector<12x64xbf16>, vector<2x64xf32> -> vector<2x64xf32>
    %51 = vector.broadcast %48 : vector<1x64xf32> to vector<2x64xf32>
    %52 = arith.addf %50, %51 : vector<2x64xf32>
    %cst_40 = arith.constant 0.000000e+00 : f32
    %53 = vector.broadcast %cst_40 : f32 to vector<2x64xf32>
    %54 = arith.maximumf %52, %53 : vector<2x64xf32>
    %c0_41 = arith.constant 0 : index
    %c0_42 = arith.constant 0 : index
    %55 = vector.load %arg16[%c0_41, %c0_42] : memref<64x128xbf16, #tpu.memory_space<vmem>>, vector<64x128xbf16>
    %c0_43 = arith.constant 0 : index
    %c0_44 = arith.constant 0 : index
    %56 = vector.load %arg17[%c0_43, %c0_44] : memref<1x128xf32, #tpu.memory_space<vmem>>, vector<1x128xf32>
    %57 = arith.truncf %54 : vector<2x64xf32> to vector<2x64xbf16>
    %cst_45 = arith.constant dense<0.000000e+00> : vector<2x128xf32>
    %58 = tpu.matmul %57, %55, %cst_45 {dimension_numbers = #tpu.dot_dimension_numbers<[1], [0], [0], [1], [0, 0, 1, 1], [], []>} : vector<2x64xbf16>, vector<64x128xbf16>, vector<2x128xf32> -> vector<2x128xf32>
    %59 = vector.broadcast %56 : vector<1x128xf32> to vector<2x128xf32>
    %60 = arith.addf %58, %59 : vector<2x128xf32>
    %cst_46 = arith.constant 0.000000e+00 : f32
    %61 = vector.broadcast %cst_46 : f32 to vector<2x128xf32>
    %62 = arith.maximumf %60, %61 : vector<2x128xf32>
    %c0_47 = arith.constant 0 : index
    %c0_48 = arith.constant 0 : index
    %63 = vector.load %arg18[%c0_47, %c0_48] : memref<128x1024xbf16, #tpu.memory_space<vmem>>, vector<128x1024xbf16>
    %c0_49 = arith.constant 0 : index
    %c0_50 = arith.constant 0 : index
    %64 = vector.load %arg19[%c0_49, %c0_50] : memref<1x1024xf32, #tpu.memory_space<vmem>>, vector<1x1024xf32>
    %65 = arith.truncf %62 : vector<2x128xf32> to vector<2x128xbf16>
    %cst_51 = arith.constant dense<0.000000e+00> : vector<2x1024xf32>
    %66 = tpu.matmul %65, %63, %cst_51 {dimension_numbers = #tpu.dot_dimension_numbers<[1], [0], [0], [1], [0, 0, 1, 1], [], []>} : vector<2x128xbf16>, vector<128x1024xbf16>, vector<2x1024xf32> -> vector<2x1024xf32>
    %67 = vector.broadcast %64 : vector<1x1024xf32> to vector<2x1024xf32>
    %68 = arith.addf %66, %67 : vector<2x1024xf32>
    %cst_52 = arith.constant 0.000000e+00 : f32
    %69 = vector.broadcast %cst_52 : f32 to vector<2x1024xf32>
    %70 = arith.maximumf %68, %69 : vector<2x1024xf32>
    %c0_53 = arith.constant 0 : index
    %c0_54 = arith.constant 0 : index
    %c0_55 = arith.constant 0 : index
    %71 = vector.load %arg20[%c0_53, %c0_54, %c0_55] : memref<1x1024x4096xi8, #tpu.memory_space<vmem>>, vector<1x1024x4096xi8>
    %72 = vector.shape_cast %71 : vector<1x1024x4096xi8> to vector<1024x4096xi8>
    %73 = arith.sitofp %72 : vector<1024x4096xi8> to vector<1024x4096xbf16>
    %74 = arith.truncf %70 : vector<2x1024xf32> to vector<2x1024xbf16>
    %cst_56 = arith.constant dense<0.000000e+00> : vector<2x4096xf32>
    %75 = tpu.matmul %74, %73, %cst_56 {dimension_numbers = #tpu.dot_dimension_numbers<[1], [0], [0], [1], [0, 0, 1, 1], [], []>} : vector<2x1024xbf16>, vector<1024x4096xbf16>, vector<2x4096xf32> -> vector<2x4096xf32>
    %c0_57 = arith.constant 0 : index
    %c0_58 = arith.constant 0 : index
    %76 = vector.load %arg21[%c0_57, %c0_58] : memref<1x4096xf32, #tpu.memory_space<vmem>>, vector<1x4096xf32>
    %77 = vector.broadcast %76 : vector<1x4096xf32> to vector<2x4096xf32>
    %78 = arith.mulf %75, %77 : vector<2x4096xf32>
    %c0_59 = arith.constant 0 : index
    %c0_60 = arith.constant 0 : index
    %79 = vector.load %arg22[%c0_59, %c0_60] : memref<1x4096xf32, #tpu.memory_space<vmem>>, vector<1x4096xf32>
    %80 = vector.broadcast %79 : vector<1x4096xf32> to vector<2x4096xf32>
    %81 = arith.addf %78, %80 : vector<2x4096xf32>
    %82 = arith.negf %81 : vector<2x4096xf32>
    %83 = math.exp %82 : vector<2x4096xf32>
    %cst_61 = arith.constant 1.000000e+00 : f32
    %84 = vector.broadcast %cst_61 : f32 to vector<2x4096xf32>
    %85 = arith.addf %84, %83 : vector<2x4096xf32>
    %86 = arith.divf %84, %85 : vector<2x4096xf32>
    %c0_62 = arith.constant 0 : index
    %c0_63 = arith.constant 0 : index
    %87 = vector.load %arg23[%c0_62, %c0_63] : memref<2x4096xf32, #tpu.memory_space<vmem>>, vector<2x4096xf32>
    tpu.vector_store %arg23[%c0_62, %c0_63], %86 {strides = array<i32>} : memref<2x4096xf32, #tpu.memory_space<vmem>>, vector<2x4096xf32>,
    return
  }
  func.func @transform_0(%arg0: i32) -> (i32, i32) {
    %c0_i32 = arith.constant 0 : i32
    %c0_i32_0 = arith.constant 0 : i32
    %c0_i32_1 = arith.constant 0 : i32
    return %c0_i32, %c0_i32_0 : i32, i32
  }
  func.func @transform_1(%arg0: i32) -> (i32, i32) {
    %c0_i32 = arith.constant 0 : i32
    %c0_i32_0 = arith.constant 0 : i32
    %c0_i32_1 = arith.constant 0 : i32
    return %c0_i32, %c0_i32_0 : i32, i32
  }
  func.func @transform_2(%arg0: i32) -> (i32, i32) {
    %c0_i32 = arith.constant 0 : i32
    %c0_i32_0 = arith.constant 0 : i32
    %c0_i32_1 = arith.constant 0 : i32
    return %c0_i32, %c0_i32_0 : i32, i32
  }
  func.func @transform_3(%arg0: i32) -> (i32, i32) {
    %c0_i32 = arith.constant 0 : i32
    %c0_i32_0 = arith.constant 0 : i32
    %c0_i32_1 = arith.constant 0 : i32
    return %c0_i32, %c0_i32_0 : i32, i32
  }
  func.func @transform_4(%arg0: i32) -> (i32, i32) {
    %c0_i32 = arith.constant 0 : i32
    %c0_i32_0 = arith.constant 0 : i32
    %c0_i32_1 = arith.constant 0 : i32
    return %c0_i32, %c0_i32_0 : i32, i32
  }
  func.func @transform_5(%arg0: i32) -> (i32, i32) {
    %c0_i32 = arith.constant 0 : i32
    %c0_i32_0 = arith.constant 0 : i32
    %c0_i32_1 = arith.constant 0 : i32
    return %c0_i32, %c0_i32_0 : i32, i32
  }
  func.func @transform_6(%arg0: i32) -> (i32, i32) {
    %c0_i32 = arith.constant 0 : i32
    %c0_i32_0 = arith.constant 0 : i32
    %c0_i32_1 = arith.constant 0 : i32
    return %c0_i32, %c0_i32_0 : i32, i32
  }
  func.func @transform_7(%arg0: i32) -> (i32, i32) {
    %c0_i32 = arith.constant 0 : i32
    %c0_i32_0 = arith.constant 0 : i32
    %c0_i32_1 = arith.constant 0 : i32
    return %c0_i32, %c0_i32_0 : i32, i32
  }
  func.func @transform_8(%arg0: i32) -> (i32, i32) {
    %c0_i32 = arith.constant 0 : i32
    %c0_i32_0 = arith.constant 0 : i32
    %c0_i32_1 = arith.constant 0 : i32
    return %c0_i32, %c0_i32_0 : i32, i32
  }
  func.func @transform_9(%arg0: i32) -> (i32, i32) {
    %c0_i32 = arith.constant 0 : i32
    %c0_i32_0 = arith.constant 0 : i32
    %c0_i32_1 = arith.constant 0 : i32
    return %c0_i32, %c0_i32_0 : i32, i32
  }
  func.func @transform_10(%arg0: i32) -> (i32, i32) {
    %c0_i32 = arith.constant 0 : i32
    %c0_i32_0 = arith.constant 0 : i32
    %c0_i32_1 = arith.constant 0 : i32
    return %c0_i32, %c0_i32_0 : i32, i32
  }
  func.func @transform_11(%arg0: i32) -> (i32, i32) {
    %c0_i32 = arith.constant 0 : i32
    %c0_i32_0 = arith.constant 0 : i32
    %c0_i32_1 = arith.constant 0 : i32
    return %c0_i32, %c0_i32_0 : i32, i32
  }
  func.func @transform_12(%arg0: i32) -> (i32, i32) {
    %c0_i32 = arith.constant 0 : i32
    %c0_i32_0 = arith.constant 0 : i32
    %c0_i32_1 = arith.constant 0 : i32
    return %c0_i32, %c0_i32_0 : i32, i32
  }
  func.func @transform_13(%arg0: i32) -> (i32, i32) {
    %c0_i32 = arith.constant 0 : i32
    %c0_i32_0 = arith.constant 0 : i32
    %c0_i32_1 = arith.constant 0 : i32
    return %c0_i32, %c0_i32_0 : i32, i32
  }
  func.func @transform_14(%arg0: i32) -> (i32, i32) {
    %c0_i32 = arith.constant 0 : i32
    %c0_i32_0 = arith.constant 0 : i32
    %c0_i32_1 = arith.constant 0 : i32
    return %c0_i32, %c0_i32_0 : i32, i32
  }
  func.func @transform_15(%arg0: i32) -> (i32, i32) {
    %c0_i32 = arith.constant 0 : i32
    %c0_i32_0 = arith.constant 0 : i32
    %c0_i32_1 = arith.constant 0 : i32
    return %c0_i32, %c0_i32_0 : i32, i32
  }
  func.func @transform_16(%arg0: i32) -> (i32, i32) {
    %c0_i32 = arith.constant 0 : i32
    %c0_i32_0 = arith.constant 0 : i32
    %c0_i32_1 = arith.constant 0 : i32
    return %c0_i32, %c0_i32_0 : i32, i32
  }
  func.func @transform_17(%arg0: i32) -> (i32, i32) {
    %c0_i32 = arith.constant 0 : i32
    %c0_i32_0 = arith.constant 0 : i32
    %c0_i32_1 = arith.constant 0 : i32
    return %c0_i32, %c0_i32_0 : i32, i32
  }
  func.func @transform_18(%arg0: i32) -> (i32, i32) {
    %c0_i32 = arith.constant 0 : i32
    %c0_i32_0 = arith.constant 0 : i32
    %c0_i32_1 = arith.constant 0 : i32
    return %c0_i32, %c0_i32_0 : i32, i32
  }
  func.func @transform_19(%arg0: i32) -> (i32, i32, i32) {
    %c0_i32 = arith.constant 0 : i32
    %c0_i32_0 = arith.constant 0 : i32
    %c0_i32_1 = arith.constant 0 : i32
    return %arg0, %c0_i32, %c0_i32_0 : i32, i32, i32
  }
  func.func @transform_20(%arg0: i32) -> (i32, i32) {
    %c0_i32 = arith.constant 0 : i32
    %c0_i32_0 = arith.constant 0 : i32
    return %c0_i32, %arg0 : i32, i32
  }
  func.func @transform_21(%arg0: i32) -> (i32, i32) {
    %c0_i32 = arith.constant 0 : i32
    %c0_i32_0 = arith.constant 0 : i32
    return %c0_i32, %arg0 : i32, i32
  }
  func.func @transform_22(%arg0: i32) -> (i32, i32) {
    %c0_i32 = arith.constant 0 : i32
    %c0_i32_0 = arith.constant 0 : i32
    return %c0_i32, %arg0 : i32, i32
  }
}

</mosaic_0001>

<llo_original>
// kernel: tpu_custom_call.1
$region0: #{tpu_custom_call.1}
  #allocation0 [shape = 'u32[]', space=smem, size = 0x4, offset = 0x4, fixed_abs, tag = 'smem constant byte address 0x4 - core index']
  #allocation1 [shape = 'u32[144,128]{1,0:T(1,128)}', space=vmem, size = 0x12000, scoped, tag = 'internal scratch']
  %s0 = inlined_call_operand.hbm [shape: f32[2,256], index: 0, kind: input, shape index: {}]
  %s1 = inlined_call_operand.hbm [shape: bf16[256,1024], index: 1, kind: input, shape index: {}]
  %s2 = inlined_call_operand.hbm [shape: f32[1,1024], index: 2, kind: input, shape index: {}]
  %s3 = inlined_call_operand.hbm [shape: bf16[1024,128], index: 3, kind: input, shape index: {}]
  %s4 = inlined_call_operand.hbm [shape: f32[1,128], index: 4, kind: input, shape index: {}]
  %s5 = inlined_call_operand.vmem [shape: bf16[128,64], index: 5, kind: input, shape index: {}]
  %s6 = inlined_call_operand.hbm [shape: f32[1,64], index: 6, kind: input, shape index: {}]
  %s7 = inlined_call_operand.vmem [shape: bf16[64,12], index: 7, kind: input, shape index: {}]
  %s8 = inlined_call_operand.hbm [shape: f32[1,12], index: 8, kind: input, shape index: {}]
  %s9 = inlined_call_operand.vmem [shape: bf16[12,2], index: 9, kind: input, shape index: {}]
  %s10 = inlined_call_operand.hbm [shape: f32[1,2], index: 10, kind: input, shape index: {}]
  %s11 = inlined_call_operand.hbm [shape: bf16[2,12], index: 11, kind: input, shape index: {}]
  %s12 = inlined_call_operand.hbm [shape: f32[1,12], index: 12, kind: input, shape index: {}]
  %s13 = inlined_call_operand.hbm [shape: bf16[12,64], index: 13, kind: input, shape index: {}]
  %s14 = inlined_call_operand.hbm [shape: f32[1,64], index: 14, kind: input, shape index: {}]
  %s15 = inlined_call_operand.hbm [shape: bf16[64,128], index: 15, kind: input, shape index: {}]
  %s16 = inlined_call_operand.hbm [shape: f32[1,128], index: 16, kind: input, shape index: {}]
  %s17 = inlined_call_operand.hbm [shape: bf16[128,1024], index: 17, kind: input, shape index: {}]
  %s18 = inlined_call_operand.hbm [shape: f32[1,1024], index: 18, kind: input, shape index: {}]
  %s19 = inlined_call_operand.hbm [shape: s8[4,1024,4096], index: 19, kind: input, shape index: {}]
  %s20 = inlined_call_operand.hbm [shape: f32[1,16384], index: 20, kind: input, shape index: {}]
  %s21 = inlined_call_operand.hbm [shape: f32[1,16384], index: 21, kind: input, shape index: {}]
  %s22 = inlined_call_operand.hbm [shape: f32[2,16384], index: 22, kind: output, shape index: {}]
  %s23 = sld [smem:[#allocation0]]
  $region197: #{tpu_custom_call.1} parent=0
    _
  %s25 = ssub.s32 1, %s23
  %s26 = scalar_select 0, %s25, %s23
  $region1: #{tpu_custom_call.1} parent=0
    #allocation2 [shape = 'u8[2048]{0}', space=vmem, size = 0x800, scoped, tag = 'input window, operand 0, single buffered']
    #allocation3 [shape = 's32[2]{0}', space=sflag, size = 0x8, scoped, tag = 'scoped memory for tpu_custom_call.1']
    #allocation4 [shape = 's32[2]{0}', space=sflag, size = 0x8, scoped, tag = 'scoped memory for tpu_custom_call.1']
    #allocation5 [shape = 'u8[524288]{0}', space=vmem, size = 0x80000, scoped, tag = 'input window, operand 1, single buffered']
    #allocation6 [shape = 's32[1]{0}', space=sflag, size = 0x4, scoped, tag = 'scoped memory for tpu_custom_call.1']
    #allocation7 [shape = 'u8[4096]{0}', space=vmem, size = 0x1000, scoped, tag = 'input window, operand 2, single buffered']
    #allocation8 [shape = 'u8[262144]{0}', space=vmem, size = 0x40000, scoped, tag = 'input window, operand 3, single buffered']
    #allocation9 [shape = 's32[1]{0}', space=sflag, size = 0x4, scoped, tag = 'scoped memory for tpu_custom_call.1']
    #allocation10 [shape = 'u8[512]{0}', space=vmem, size = 0x400, scoped, tag = 'input window, operand 4, single buffered']
    #allocation11 [shape = 'u8[512]{0}', space=vmem, size = 0x400, scoped, tag = 'input window, operand 6, single buffered']
    #allocation12 [shape = 's32[1]{0}', space=sflag, size = 0x4, scoped, tag = 'scoped memory for tpu_custom_call.1']
    #allocation13 [shape = 'u8[512]{0}', space=vmem, size = 0x400, scoped, tag = 'input window, operand 8, single buffered']
    #allocation14 [shape = 'u8[512]{0}', space=vmem, size = 0x400, scoped, tag = 'input window, operand 10, single buffered']
    #allocation15 [shape = 's32[1]{0}', space=sflag, size = 0x4, scoped, tag = 'scoped memory for tpu_custom_call.1']
    #allocation16 [shape = 'u8[512]{0}', space=vmem, size = 0x400, scoped, tag = 'input window, operand 11, single buffered']
    #allocation17 [shape = 'u8[512]{0}', space=vmem, size = 0x400, scoped, tag = 'input window, operand 12, single buffered']
    #allocation18 [shape = 's32[1]{0}', space=sflag, size = 0x4, scoped, tag = 'scoped memory for tpu_custom_call.1']
    #allocation19 [shape = 'u8[4096]{0}', space=vmem, size = 0x1000, scoped, tag = 'input window, operand 13, single buffered']
    #allocation20 [shape = 'u8[512]{0}', space=vmem, size = 0x400, scoped, tag = 'input window, operand 14, single buffered']
    #allocation21 [shape = 's32[1]{0}', space=sflag, size = 0x4, scoped, tag = 'scoped memory for tpu_custom_call.1']
    #allocation22 [shape = 'u8[16384]{0}', space=vmem, size = 0x4000, scoped, tag = 'input window, operand 15, single buffered']
    #allocation23 [shape = 'u8[512]{0}', space=vmem, size = 0x400, scoped, tag = 'input window, operand 16, single buffered']
    #allocation24 [shape = 's32[1]{0}', space=sflag, size = 0x4, scoped, tag = 'scoped memory for tpu_custom_call.1']
    #allocation25 [shape = 'u8[262144]{0}', space=vmem, size = 0x40000, scoped, tag = 'input window, operand 17, single buffered']
    #allocation26 [shape = 'u8[4096]{0}', space=vmem, size = 0x1000, scoped, tag = 'input window, operand 18, single buffered']
    #allocation27 [shape = 's32[1]{0}', space=sflag, size = 0x4, scoped, tag = 'scoped memory for tpu_custom_call.1']
    #allocation28 [shape = 'u8[8388608]{0}', space=vmem, size = 0x800000, scoped, tag = 'input window, operand 19']
    #allocation29 [shape = 'u8[32768]{0}', space=vmem, size = 0x8000, scoped, tag = 'input window, operand 20']
    #allocation30 [shape = 'u8[32768]{0}', space=vmem, size = 0x8000, scoped, tag = 'input window, operand 21']
    #allocation31 [shape = 'u8[65536]{0}', space=vmem, size = 0x10000, scoped, tag = 'output window, operand 0']
    %27 = vsyncpa [#allocation3], 0
    %28 = vsyncpa [#allocation6], 0
    %29 = vsyncpa [#allocation9], 0
    %30 = vsyncpa [#allocation12], 0
    %31 = vsyncpa [#allocation15], 0
    %32 = vsyncpa [#allocation18], 0
    %33 = vsyncpa [#allocation21], 0
    %34 = vsyncpa [#allocation24], 0
    %35 = vsyncpa [#allocation27], 0
    %36 = vsyncpa [#allocation4], 0
    %s37 = scalar_lea.sflag [#allocation4], 1
    %38 = vsyncpa %s37, 0
    loop: start=0, step=1, limit=6
    $region2: #{tpu_custom_call.1} parent=1 // loop_pre_header
      _
    $region3: #{tpu_custom_call.1} parent=1 // loop_header
      %s40 = sphi 0, %s44
      %p41 = scmp.ge.s32.totalorder %s40, 6
      %s48 = sphi 0, %s48
      %s50 = sphi 0, %s48
      %s51 = sphi 0, %s50
      %s65 = sphi 0, %s51
      %s69 = sphi 0, %s69
      %s71 = sphi 0, %s69
      %s72 = sphi 0, %s71
      %s86 = sphi 0, %s72
      %s90 = sphi 0, %s90
      %s92 = sphi 0, %s90
      %s93 = sphi 0, %s92
      %s107 = sphi 0, %s93
      %s111 = sphi 0, %s111
      %s113 = sphi 0, %s111
      %s114 = sphi 0, %s113
      %s128 = sphi 0, %s114
      %s132 = sphi 0, %s132
      %s134 = sphi 0, %s132
      %s135 = sphi 0, %s134
      %s149 = sphi 0, %s135
      %s153 = sphi 0, %s153
      %s155 = sphi 0, %s153
      %s156 = sphi 0, %s155
      %s170 = sphi 0, %s156
      %s174 = sphi 0, %s174
      %s176 = sphi 0, %s174
      %s177 = sphi 0, %s176
      %s191 = sphi 0, %s177
      %s195 = sphi 0, %s195
      %s197 = sphi 0, %s195
      %s198 = sphi 0, %s197
      %s212 = sphi 0, %s198
      %s216 = sphi 0, %s216
      %s218 = sphi 0, %s216
      %s219 = sphi 0, %s218
      %s233 = sphi 0, %s219
      %s237 = sphi 0, %s237
      %s239 = sphi 0, %s237
      %s240 = sphi 0, %s239
      %s254 = sphi 0, %s240
      %s258 = sphi 0, %s258
      %s260 = sphi 0, %s258
      %s261 = sphi 0, %s260
      %s275 = sphi 0, %s261
      %s279 = sphi 0, %s279
      %s281 = sphi 0, %s279
      %s282 = sphi 0, %s281
      %s296 = sphi 0, %s282
      %s300 = sphi 0, %s300
      %s302 = sphi 0, %s300
      %s303 = sphi 0, %s302
      %s317 = sphi 0, %s303
      %s321 = sphi 0, %s321
      %s323 = sphi 0, %s321
      %s324 = sphi 0, %s323
      %s338 = sphi 0, %s324
      %s342 = sphi 0, %s342
      %s344 = sphi 0, %s342
      %s345 = sphi 0, %s344
      %s359 = sphi 0, %s345
      %s363 = sphi 0, %s363
      %s365 = sphi 0, %s363
      %s366 = sphi 0, %s365
      %s380 = sphi 0, %s366
      %s384 = sphi 0, %s384
      %s386 = sphi 0, %s384
      %s387 = sphi 0, %s386
      %s401 = sphi 0, %s387
      %s405 = sphi 0, %s405
      %s407 = sphi 0, %s405
      %s408 = sphi 0, %s407
      %s422 = sphi 0, %s408
      %s426 = sphi 0, %s426
      %s428 = sphi 0, %s426
      %s429 = sphi 0, %s428
      %s443 = sphi 0, %s429
      %s449 = sphi 0, %s451
      %s452 = sphi 0, %s449
      %s453 = sphi 0, %s452
      %s469 = sphi 0, %s453
      %s475 = sphi 0, %s477
      %s478 = sphi 0, %s475
      %s479 = sphi 0, %s478
      %s495 = sphi 0, %s479
      %s501 = sphi 0, %s503
      %s504 = sphi 0, %s501
      %s505 = sphi 0, %s504
      %s521 = sphi 0, %s505
      %s527 = sphi 0, %s529
      %s530 = sphi 0, %s527
      %s531 = sphi 0, %s530
      %s547 = sphi 0, %s531
    $region4: #{tpu_custom_call.1} parent=1 // loop_header_branch
      %43 = sbr.rel (%p41) target = $region8
    $region5: #{tpu_custom_call.1} parent=1 // loop_body
      %s45 = ssub.s32 %s40, 1
      %s46 = ssub.s32 %s40, 2
      %s47 = sadd.s32 %s40, 1
      %s49 = sadd.s32 %s48, 1
      %p52 = scmp.eq.s32.totalorder %s40, 3
      %p53 = scmp.ne.s32.totalorder %s48, %s50
      %p54 = scmp.eq.s32.totalorder %s40, 0
      %p55 = por %p53, %p54
      %p56 = scmp.ne.s32.totalorder %s48, %s50
      %p57 = scmp.eq.s32.totalorder %s45, 3
      %p58 = por %p56, %p57
      %p59 = scmp.ne.s32.totalorder %s50, %s51
      %p60 = scmp.eq.s32.totalorder %s45, 0
      %p61 = por %p59, %p60
      %p62 = scmp.ne.s32.totalorder %s50, %s51
      %p63 = scmp.eq.s32.totalorder %s46, 3
      %p64 = por %p62, %p63
      %p66 = scmp.ne.s32.totalorder %s51, %s65
      %p67 = scmp.eq.s32.totalorder %s46, 0
      %p68 = por %p66, %p67
      %s70 = sadd.s32 %s69, 1
      %p73 = scmp.eq.s32.totalorder %s40, 3
      %p74 = scmp.ne.s32.totalorder %s69, %s71
      %p75 = scmp.eq.s32.totalorder %s40, 0
      %p76 = por %p74, %p75
      %p77 = scmp.ne.s32.totalorder %s69, %s71
      %p78 = scmp.eq.s32.totalorder %s45, 3
      %p79 = por %p77, %p78
      %p80 = scmp.ne.s32.totalorder %s71, %s72
      %p81 = scmp.eq.s32.totalorder %s45, 0
      %p82 = por %p80, %p81
      %p83 = scmp.ne.s32.totalorder %s71, %s72
      %p84 = scmp.eq.s32.totalorder %s46, 3
      %p85 = por %p83, %p84
      %p87 = scmp.ne.s32.totalorder %s72, %s86
      %p88 = scmp.eq.s32.totalorder %s46, 0
      %p89 = por %p87, %p88
      %s91 = sadd.s32 %s90, 1
      %p94 = scmp.eq.s32.totalorder %s40, 3
      %p95 = scmp.ne.s32.totalorder %s90, %s92
      %p96 = scmp.eq.s32.totalorder %s40, 0
      %p97 = por %p95, %p96
      %p98 = scmp.ne.s32.totalorder %s90, %s92
      %p99 = scmp.eq.s32.totalorder %s45, 3
      %p100 = por %p98, %p99
      %p101 = scmp.ne.s32.totalorder %s92, %s93
      %p102 = scmp.eq.s32.totalorder %s45, 0
      %p103 = por %p101, %p102
      %p104 = scmp.ne.s32.totalorder %s92, %s93
      %p105 = scmp.eq.s32.totalorder %s46, 3
      %p106 = por %p104, %p105
      %p108 = scmp.ne.s32.totalorder %s93, %s107
      %p109 = scmp.eq.s32.totalorder %s46, 0
      %p110 = por %p108, %p109
      %s112 = sadd.s32 %s111, 1
      %p115 = scmp.eq.s32.totalorder %s40, 3
      %p116 = scmp.ne.s32.totalorder %s111, %s113
      %p117 = scmp.eq.s32.totalorder %s40, 0
      %p118 = por %p116, %p117
      %p119 = scmp.ne.s32.totalorder %s111, %s113
      %p120 = scmp.eq.s32.totalorder %s45, 3
      %p121 = por %p119, %p120
      %p122 = scmp.ne.s32.totalorder %s113, %s114
      %p123 = scmp.eq.s32.totalorder %s45, 0
      %p124 = por %p122, %p123
      %p125 = scmp.ne.s32.totalorder %s113, %s114
      %p126 = scmp.eq.s32.totalorder %s46, 3
      %p127 = por %p125, %p126
      %p129 = scmp.ne.s32.totalorder %s114, %s128
      %p130 = scmp.eq.s32.totalorder %s46, 0
      %p131 = por %p129, %p130
      %s133 = sadd.s32 %s132, 1
      %p136 = scmp.eq.s32.totalorder %s40, 3
      %p137 = scmp.ne.s32.totalorder %s132, %s134
      %p138 = scmp.eq.s32.totalorder %s40, 0
      %p139 = por %p137, %p138
      %p140 = scmp.ne.s32.totalorder %s132, %s134
      %p141 = scmp.eq.s32.totalorder %s45, 3
      %p142 = por %p140, %p141
      %p143 = scmp.ne.s32.totalorder %s134, %s135
      %p144 = scmp.eq.s32.totalorder %s45, 0
      %p145 = por %p143, %p144
      %p146 = scmp.ne.s32.totalorder %s134, %s135
      %p147 = scmp.eq.s32.totalorder %s46, 3
      %p148 = por %p146, %p147
      %p150 = scmp.ne.s32.totalorder %s135, %s149
      %p151 = scmp.eq.s32.totalorder %s46, 0
      %p152 = por %p150, %p151
      %s154 = sadd.s32 %s153, 1
      %p157 = scmp.eq.s32.totalorder %s40, 3
      %p158 = scmp.ne.s32.totalorder %s153, %s155
      %p159 = scmp.eq.s32.totalorder %s40, 0
      %p160 = por %p158, %p159
      %p161 = scmp.ne.s32.totalorder %s153, %s155
      %p162 = scmp.eq.s32.totalorder %s45, 3
      %p163 = por %p161, %p162
      %p164 = scmp.ne.s32.totalorder %s155, %s156
      %p165 = scmp.eq.s32.totalorder %s45, 0
      %p166 = por %p164, %p165
      %p167 = scmp.ne.s32.totalorder %s155, %s156
      %p168 = scmp.eq.s32.totalorder %s46, 3
      %p169 = por %p167, %p168
      %p171 = scmp.ne.s32.totalorder %s156, %s170
      %p172 = scmp.eq.s32.totalorder %s46, 0
      %p173 = por %p171, %p172
      %s175 = sadd.s32 %s174, 1
      %p178 = scmp.eq.s32.totalorder %s40, 3
      %p179 = scmp.ne.s32.totalorder %s174, %s176
      %p180 = scmp.eq.s32.totalorder %s40, 0
      %p181 = por %p179, %p180
      %p182 = scmp.ne.s32.totalorder %s174, %s176
      %p183 = scmp.eq.s32.totalorder %s45, 3
      %p184 = por %p182, %p183
      %p185 = scmp.ne.s32.totalorder %s176, %s177
      %p186 = scmp.eq.s32.totalorder %s45, 0
      %p187 = por %p185, %p186
      %p188 = scmp.ne.s32.totalorder %s176, %s177
      %p189 = scmp.eq.s32.totalorder %s46, 3
      %p190 = por %p188, %p189
      %p192 = scmp.ne.s32.totalorder %s177, %s191
      %p193 = scmp.eq.s32.totalorder %s46, 0
      %p194 = por %p192, %p193
      %s196 = sadd.s32 %s195, 1
      %p199 = scmp.eq.s32.totalorder %s40, 3
      %p200 = scmp.ne.s32.totalorder %s195, %s197
      %p201 = scmp.eq.s32.totalorder %s40, 0
      %p202 = por %p200, %p201
      %p203 = scmp.ne.s32.totalorder %s195, %s197
      %p204 = scmp.eq.s32.totalorder %s45, 3
      %p205 = por %p203, %p204
      %p206 = scmp.ne.s32.totalorder %s197, %s198
      %p207 = scmp.eq.s32.totalorder %s45, 0
      %p208 = por %p206, %p207
      %p209 = scmp.ne.s32.totalorder %s197, %s198
      %p210 = scmp.eq.s32.totalorder %s46, 3
      %p211 = por %p209, %p210
      %p213 = scmp.ne.s32.totalorder %s198, %s212
      %p214 = scmp.eq.s32.totalorder %s46, 0
      %p215 = por %p213, %p214
      %s217 = sadd.s32 %s216, 1
      %p220 = scmp.eq.s32.totalorder %s40, 3
      %p221 = scmp.ne.s32.totalorder %s216, %s218
      %p222 = scmp.eq.s32.totalorder %s40, 0
      %p223 = por %p221, %p222
      %p224 = scmp.ne.s32.totalorder %s216, %s218
      %p225 = scmp.eq.s32.totalorder %s45, 3
      %p226 = por %p224, %p225
      %p227 = scmp.ne.s32.totalorder %s218, %s219
      %p228 = scmp.eq.s32.totalorder %s45, 0
      %p229 = por %p227, %p228
      %p230 = scmp.ne.s32.totalorder %s218, %s219
      %p231 = scmp.eq.s32.totalorder %s46, 3
      %p232 = por %p230, %p231
      %p234 = scmp.ne.s32.totalorder %s219, %s233
      %p235 = scmp.eq.s32.totalorder %s46, 0
      %p236 = por %p234, %p235
      %s238 = sadd.s32 %s237, 1
      %p241 = scmp.eq.s32.totalorder %s40, 3
      %p242 = scmp.ne.s32.totalorder %s237, %s239
      %p243 = scmp.eq.s32.totalorder %s40, 0
      %p244 = por %p242, %p243
      %p245 = scmp.ne.s32.totalorder %s237, %s239
      %p246 = scmp.eq.s32.totalorder %s45, 3
      %p247 = por %p245, %p246
      %p248 = scmp.ne.s32.totalorder %s239, %s240
      %p249 = scmp.eq.s32.totalorder %s45, 0
      %p250 = por %p248, %p249
      %p251 = scmp.ne.s32.totalorder %s239, %s240
      %p252 = scmp.eq.s32.totalorder %s46, 3
      %p253 = por %p251, %p252
      %p255 = scmp.ne.s32.totalorder %s240, %s254
      %p256 = scmp.eq.s32.totalorder %s46, 0
      %p257 = por %p255, %p256
      %s259 = sadd.s32 %s258, 1
      %p262 = scmp.eq.s32.totalorder %s40, 3
      %p263 = scmp.ne.s32.totalorder %s258, %s260
      %p264 = scmp.eq.s32.totalorder %s40, 0
      %p265 = por %p263, %p264
      %p266 = scmp.ne.s32.totalorder %s258, %s260
      %p267 = scmp.eq.s32.totalorder %s45, 3
      %p268 = por %p266, %p267
      %p269 = scmp.ne.s32.totalorder %s260, %s261
      %p270 = scmp.eq.s32.totalorder %s45, 0
      %p271 = por %p269, %p270
      %p272 = scmp.ne.s32.totalorder %s260, %s261
      %p273 = scmp.eq.s32.totalorder %s46, 3
      %p274 = por %p272, %p273
      %p276 = scmp.ne.s32.totalorder %s261, %s275
      %p277 = scmp.eq.s32.totalorder %s46, 0
      %p278 = por %p276, %p277
      %s280 = sadd.s32 %s279, 1
      %p283 = scmp.eq.s32.totalorder %s40, 3
      %p284 = scmp.ne.s32.totalorder %s279, %s281
      %p285 = scmp.eq.s32.totalorder %s40, 0
      %p286 = por %p284, %p285
      %p287 = scmp.ne.s32.totalorder %s279, %s281
      %p288 = scmp.eq.s32.totalorder %s45, 3
      %p289 = por %p287, %p288
      %p290 = scmp.ne.s32.totalorder %s281, %s282
      %p291 = scmp.eq.s32.totalorder %s45, 0
      %p292 = por %p290, %p291
      %p293 = scmp.ne.s32.totalorder %s281, %s282
      %p294 = scmp.eq.s32.totalorder %s46, 3
      %p295 = por %p293, %p294
      %p297 = scmp.ne.s32.totalorder %s282, %s296
      %p298 = scmp.eq.s32.totalorder %s46, 0
      %p299 = por %p297, %p298
      %s301 = sadd.s32 %s300, 1
      %p304 = scmp.eq.s32.totalorder %s40, 3
      %p305 = scmp.ne.s32.totalorder %s300, %s302
      %p306 = scmp.eq.s32.totalorder %s40, 0
      %p307 = por %p305, %p306
      %p308 = scmp.ne.s32.totalorder %s300, %s302
      %p309 = scmp.eq.s32.totalorder %s45, 3
      %p310 = por %p308, %p309
      %p311 = scmp.ne.s32.totalorder %s302, %s303
      %p312 = scmp.eq.s32.totalorder %s45, 0
      %p313 = por %p311, %p312
      %p314 = scmp.ne.s32.totalorder %s302, %s303
      %p315 = scmp.eq.s32.totalorder %s46, 3
      %p316 = por %p314, %p315
      %p318 = scmp.ne.s32.totalorder %s303, %s317
      %p319 = scmp.eq.s32.totalorder %s46, 0
      %p320 = por %p318, %p319
      %s322 = sadd.s32 %s321, 1
      %p325 = scmp.eq.s32.totalorder %s40, 3
      %p326 = scmp.ne.s32.totalorder %s321, %s323
      %p327 = scmp.eq.s32.totalorder %s40, 0
      %p328 = por %p326, %p327
      %p329 = scmp.ne.s32.totalorder %s321, %s323
      %p330 = scmp.eq.s32.totalorder %s45, 3
      %p331 = por %p329, %p330
      %p332 = scmp.ne.s32.totalorder %s323, %s324
      %p333 = scmp.eq.s32.totalorder %s45, 0
      %p334 = por %p332, %p333
      %p335 = scmp.ne.s32.totalorder %s323, %s324
      %p336 = scmp.eq.s32.totalorder %s46, 3
      %p337 = por %p335, %p336
      %p339 = scmp.ne.s32.totalorder %s324, %s338
      %p340 = scmp.eq.s32.totalorder %s46, 0
      %p341 = por %p339, %p340
      %s343 = sadd.s32 %s342, 1
      %p346 = scmp.eq.s32.totalorder %s40, 3
      %p347 = scmp.ne.s32.totalorder %s342, %s344
      %p348 = scmp.eq.s32.totalorder %s40, 0
      %p349 = por %p347, %p348
      %p350 = scmp.ne.s32.totalorder %s342, %s344
      %p351 = scmp.eq.s32.totalorder %s45, 3
      %p352 = por %p350, %p351
      %p353 = scmp.ne.s32.totalorder %s344, %s345
      %p354 = scmp.eq.s32.totalorder %s45, 0
      %p355 = por %p353, %p354
      %p356 = scmp.ne.s32.totalorder %s344, %s345
      %p357 = scmp.eq.s32.totalorder %s46, 3
      %p358 = por %p356, %p357
      %p360 = scmp.ne.s32.totalorder %s345, %s359
      %p361 = scmp.eq.s32.totalorder %s46, 0
      %p362 = por %p360, %p361
      %s364 = sadd.s32 %s363, 1
      %p367 = scmp.eq.s32.totalorder %s40, 3
      %p368 = scmp.ne.s32.totalorder %s363, %s365
      %p369 = scmp.eq.s32.totalorder %s40, 0
      %p370 = por %p368, %p369
      %p371 = scmp.ne.s32.totalorder %s363, %s365
      %p372 = scmp.eq.s32.totalorder %s45, 3
      %p373 = por %p371, %p372
      %p374 = scmp.ne.s32.totalorder %s365, %s366
      %p375 = scmp.eq.s32.totalorder %s45, 0
      %p376 = por %p374, %p375
      %p377 = scmp.ne.s32.totalorder %s365, %s366
      %p378 = scmp.eq.s32.totalorder %s46, 3
      %p379 = por %p377, %p378
      %p381 = scmp.ne.s32.totalorder %s366, %s380
      %p382 = scmp.eq.s32.totalorder %s46, 0
      %p383 = por %p381, %p382
      %s385 = sadd.s32 %s384, 1
      %p388 = scmp.eq.s32.totalorder %s40, 3
      %p389 = scmp.ne.s32.totalorder %s384, %s386
      %p390 = scmp.eq.s32.totalorder %s40, 0
      %p391 = por %p389, %p390
      %p392 = scmp.ne.s32.totalorder %s384, %s386
      %p393 = scmp.eq.s32.totalorder %s45, 3
      %p394 = por %p392, %p393
      %p395 = scmp.ne.s32.totalorder %s386, %s387
      %p396 = scmp.eq.s32.totalorder %s45, 0
      %p397 = por %p395, %p396
      %p398 = scmp.ne.s32.totalorder %s386, %s387
      %p399 = scmp.eq.s32.totalorder %s46, 3
      %p400 = por %p398, %p399
      %p402 = scmp.ne.s32.totalorder %s387, %s401
      %p403 = scmp.eq.s32.totalorder %s46, 0
      %p404 = por %p402, %p403
      %s406 = sadd.s32 %s405, 1
      %p409 = scmp.eq.s32.totalorder %s40, 3
      %p410 = scmp.ne.s32.totalorder %s405, %s407
      %p411 = scmp.eq.s32.totalorder %s40, 0
      %p412 = por %p410, %p411
      %p413 = scmp.ne.s32.totalorder %s405, %s407
      %p414 = scmp.eq.s32.totalorder %s45, 3
      %p415 = por %p413, %p414
      %p416 = scmp.ne.s32.totalorder %s407, %s408
      %p417 = scmp.eq.s32.totalorder %s45, 0
      %p418 = por %p416, %p417
      %p419 = scmp.ne.s32.totalorder %s407, %s408
      %p420 = scmp.eq.s32.totalorder %s46, 3
      %p421 = por %p419, %p420
      %p423 = scmp.ne.s32.totalorder %s408, %s422
      %p424 = scmp.eq.s32.totalorder %s46, 0
      %p425 = por %p423, %p424
      %s427 = sadd.s32 %s426, 1
      %p430 = scmp.eq.s32.totalorder %s40, 3
      %p431 = scmp.ne.s32.totalorder %s426, %s428
      %p432 = scmp.eq.s32.totalorder %s40, 0
      %p433 = por %p431, %p432
      %p434 = scmp.ne.s32.totalorder %s426, %s428
      %p435 = scmp.eq.s32.totalorder %s45, 3
      %p436 = por %p434, %p435
      %p437 = scmp.ne.s32.totalorder %s428, %s429
      %p438 = scmp.eq.s32.totalorder %s45, 0
      %p439 = por %p437, %p438
      %p440 = scmp.ne.s32.totalorder %s428, %s429
      %p441 = scmp.eq.s32.totalorder %s46, 3
      %p442 = por %p440, %p441
      %p444 = scmp.ne.s32.totalorder %s429, %s443
      %p445 = scmp.eq.s32.totalorder %s46, 0
      %p446 = por %p444, %p445
      %s447 = ssub.s32 %s40, %s47
      %p448 = scmp.eq.s32.totalorder %s447, 0
      %s450 = sadd.s32 %s449, 1
      %s451 = scalar_select %p448, %s449, %s450
      %p454 = pneg %p448
      %p455 = scmp.eq.s32.totalorder %s40, 3
      %p456 = por %p454, %p455
      %p457 = scmp.ne.s32.totalorder %s449, %s452
      %p458 = scmp.eq.s32.totalorder %s40, 0
      %p459 = por %p457, %p458
      %p460 = scmp.ne.s32.totalorder %s449, %s452
      %p461 = scmp.eq.s32.totalorder %s45, 3
      %p462 = por %p460, %p461
      %p463 = scmp.ne.s32.totalorder %s452, %s453
      %p464 = scmp.eq.s32.totalorder %s45, 0
      %p465 = por %p463, %p464
      %p466 = scmp.ne.s32.totalorder %s452, %s453
      %p467 = scmp.eq.s32.totalorder %s46, 3
      %p468 = por %p466, %p467
      %p470 = scmp.ne.s32.totalorder %s453, %s469
      %p471 = scmp.eq.s32.totalorder %s46, 0
      %p472 = por %p470, %p471
      %s473 = ssub.s32 %s40, %s47
      %p474 = scmp.eq.s32.totalorder %s473, 0
      %s476 = sadd.s32 %s475, 1
      %s477 = scalar_select %p474, %s475, %s476
      %p480 = pneg %p474
      %p481 = scmp.eq.s32.totalorder %s40, 3
      %p482 = por %p480, %p481
      %p483 = scmp.ne.s32.totalorder %s475, %s478
      %p484 = scmp.eq.s32.totalorder %s40, 0
      %p485 = por %p483, %p484
      %p486 = scmp.ne.s32.totalorder %s475, %s478
      %p487 = scmp.eq.s32.totalorder %s45, 3
      %p488 = por %p486, %p487
      %p489 = scmp.ne.s32.totalorder %s478, %s479
      %p490 = scmp.eq.s32.totalorder %s45, 0
      %p491 = por %p489, %p490
      %p492 = scmp.ne.s32.totalorder %s478, %s479
      %p493 = scmp.eq.s32.totalorder %s46, 3
      %p494 = por %p492, %p493
      %p496 = scmp.ne.s32.totalorder %s479, %s495
      %p497 = scmp.eq.s32.totalorder %s46, 0
      %p498 = por %p496, %p497
      %s499 = ssub.s32 %s40, %s47
      %p500 = scmp.eq.s32.totalorder %s499, 0
      %s502 = sadd.s32 %s501, 1
      %s503 = scalar_select %p500, %s501, %s502
      %p506 = pneg %p500
      %p507 = scmp.eq.s32.totalorder %s40, 3
      %p508 = por %p506, %p507
      %p509 = scmp.ne.s32.totalorder %s501, %s504
      %p510 = scmp.eq.s32.totalorder %s40, 0
      %p511 = por %p509, %p510
      %p512 = scmp.ne.s32.totalorder %s501, %s504
      %p513 = scmp.eq.s32.totalorder %s45, 3
      %p514 = por %p512, %p513
      %p515 = scmp.ne.s32.totalorder %s504, %s505
      %p516 = scmp.eq.s32.totalorder %s45, 0
      %p517 = por %p515, %p516
      %p518 = scmp.ne.s32.totalorder %s504, %s505
      %p519 = scmp.eq.s32.totalorder %s46, 3
      %p520 = por %p518, %p519
      %p522 = scmp.ne.s32.totalorder %s505, %s521
      %p523 = scmp.eq.s32.totalorder %s46, 0
      %p524 = por %p522, %p523
      %s525 = ssub.s32 %s40, %s47
      %p526 = scmp.eq.s32.totalorder %s525, 0
      %s528 = sadd.s32 %s527, 1
      %s529 = scalar_select %p526, %s527, %s528
      %p532 = pneg %p526
      %p533 = scmp.eq.s32.totalorder %s40, 3
      %p534 = por %p532, %p533
      %p535 = scmp.ne.s32.totalorder %s527, %s530
      %p536 = scmp.eq.s32.totalorder %s40, 0
      %p537 = por %p535, %p536
      %p538 = scmp.ne.s32.totalorder %s527, %s530
      %p539 = scmp.eq.s32.totalorder %s45, 3
      %p540 = por %p538, %p539
      %p541 = scmp.ne.s32.totalorder %s530, %s531
      %p542 = scmp.eq.s32.totalorder %s45, 0
      %p543 = por %p541, %p542
      %p544 = scmp.ne.s32.totalorder %s530, %s531
      %p545 = scmp.eq.s32.totalorder %s46, 3
      %p546 = por %p544, %p545
      %p548 = scmp.ne.s32.totalorder %s531, %s547
      %p549 = scmp.eq.s32.totalorder %s46, 0
      %p550 = por %p548, %p549
      %p551 = scmp.le.s32.totalorder 1, %s40
      %p552 = scmp.lt.s32.totalorder %s40, 5
      %p553 = pnand %p551, %p552
      %p554 = pneg %p553
      // Predicated region
      $region9: #{tpu_custom_call.1} parent=5 // pred_check
        _
      $region10: #{tpu_custom_call.1} parent=5 // pred_check_branch
        %556 = sbr.rel (%p553) target = $region12
      $region11: #{tpu_custom_call.1} parent=5 // pred_region
        %s557 = ssub.s32 %s40, 1
        // Predicated region
        $region13: #{tpu_custom_call.1} parent=11 // pred_check
          %p558 = pneg %p61
        $region14: #{tpu_custom_call.1} parent=11 // pred_check_branch
          %560 = sbr.rel (%p558) target = $region16
        $region15: #{tpu_custom_call.1} parent=11 // pred_region
          %s562 = ssub.s32 64, 64
          %563 = vsyncadd [#allocation3], %s562
          %s565 = sshll.u32 [#allocation2], 4
          %s566 = int_to_ptr.vmem [resolvable:$true] %s565
          %568 = dma.hbm_to_vmem [thread:$0]  %s0, 64, %s566, [#allocation3]
        $region16: #{tpu_custom_call.1} parent=11 // pred_fallthru
          _
        // Predicated region
        $region17: #{tpu_custom_call.1} parent=11 // pred_check
          %p569 = pneg %p82
        $region18: #{tpu_custom_call.1} parent=11 // pred_check_branch
          %571 = sbr.rel (%p569) target = $region20
        $region19: #{tpu_custom_call.1} parent=11 // pred_region
          %s573 = ssub.s32 16384, 16384
          %574 = vsyncadd [#allocation6], %s573
          %s575 = sshll.u32 [#allocation5], 4
          %s576 = int_to_ptr.vmem [resolvable:$true] %s575
          %581 = dma.hbm_to_vmem [thread:$0]  %s1, 16384, %s576, [#allocation6], 512, 512, 32
        $region20: #{tpu_custom_call.1} parent=11 // pred_fallthru
          _
        // Predicated region
        $region21: #{tpu_custom_call.1} parent=11 // pred_check
          %p582 = pneg %p103
        $region22: #{tpu_custom_call.1} parent=11 // pred_check_branch
          %584 = sbr.rel (%p582) target = $region24
        $region23: #{tpu_custom_call.1} parent=11 // pred_region
          %s586 = ssub.s32 128, 128
          %587 = vsyncadd [#allocation6], %s586
          %s589 = sshll.u32 [#allocation7], 4
          %s590 = int_to_ptr.vmem [resolvable:$true] %s589
          %592 = dma.hbm_to_vmem [thread:$0]  %s2, 128, %s590, [#allocation6]
        $region24: #{tpu_custom_call.1} parent=11 // pred_fallthru
          _
        // Predicated region
        $region25: #{tpu_custom_call.1} parent=11 // pred_check
          %p593 = pneg %p124
        $region26: #{tpu_custom_call.1} parent=11 // pred_check_branch
          %595 = sbr.rel (%p593) target = $region28
        $region27: #{tpu_custom_call.1} parent=11 // pred_region
          %s597 = ssub.s32 8192, 8192
          %598 = vsyncadd [#allocation9], %s597
          %s599 = sshll.u32 [#allocation8], 4
          %s600 = int_to_ptr.vmem [resolvable:$true] %s599
          %605 = dma.hbm_to_vmem [thread:$0]  %s3, 8192, %s600, [#allocation9], 64, 64, 4
        $region28: #{tpu_custom_call.1} parent=11 // pred_fallthru
          _
        // Predicated region
        $region29: #{tpu_custom_call.1} parent=11 // pred_check
          %p606 = pneg %p145
        $region30: #{tpu_custom_call.1} parent=11 // pred_check_branch
          %608 = sbr.rel (%p606) target = $region32
        $region31: #{tpu_custom_call.1} parent=11 // pred_region
          %s610 = ssub.s32 16, 16
          %611 = vsyncadd [#allocation9], %s610
          %s613 = sshll.u32 [#allocation10], 4
          %s614 = int_to_ptr.vmem [resolvable:$true] %s613
          %616 = dma.hbm_to_vmem [thread:$0]  %s4, 16, %s614, [#allocation9]
        $region32: #{tpu_custom_call.1} parent=11 // pred_fallthru
          _
        // Predicated region
        $region33: #{tpu_custom_call.1} parent=11 // pred_check
          %p617 = pneg %p166
        $region34: #{tpu_custom_call.1} parent=11 // pred_check_branch
          %619 = sbr.rel (%p617) target = $region36
        $region35: #{tpu_custom_call.1} parent=11 // pred_region
          _
        $region36: #{tpu_custom_call.1} parent=11 // pred_fallthru
          _
        // Predicated region
        $region37: #{tpu_custom_call.1} parent=11 // pred_check
          %p620 = pneg %p187
        $region38: #{tpu_custom_call.1} parent=11 // pred_check_branch
          %622 = sbr.rel (%p620) target = $region40
        $region39: #{tpu_custom_call.1} parent=11 // pred_region
          %s624 = ssub.s32 16, 16
          %625 = vsyncadd [#allocation12], %s624
          %s627 = sshll.u32 [#allocation11], 4
          %s628 = int_to_ptr.vmem [resolvable:$true] %s627
          %630 = dma.hbm_to_vmem [thread:$0]  %s6, 16, %s628, [#allocation12]
        $region40: #{tpu_custom_call.1} parent=11 // pred_fallthru
          _
        // Predicated region
        $region41: #{tpu_custom_call.1} parent=11 // pred_check
          %p631 = pneg %p208
        $region42: #{tpu_custom_call.1} parent=11 // pred_check_branch
          %633 = sbr.rel (%p631) target = $region44
        $region43: #{tpu_custom_call.1} parent=11 // pred_region
          _
        $region44: #{tpu_custom_call.1} parent=11 // pred_fallthru
          _
        // Predicated region
        $region45: #{tpu_custom_call.1} parent=11 // pred_check
          %p634 = pneg %p229
        $region46: #{tpu_custom_call.1} parent=11 // pred_check_branch
          %636 = sbr.rel (%p634) target = $region48
        $region47: #{tpu_custom_call.1} parent=11 // pred_region
          %s638 = ssub.s32 16, 16
          %639 = vsyncadd [#allocation12], %s638
          %s641 = sshll.u32 [#allocation13], 4
          %s642 = int_to_ptr.vmem [resolvable:$true] %s641
          %644 = dma.hbm_to_vmem [thread:$0]  %s8, 16, %s642, [#allocation12]
        $region48: #{tpu_custom_call.1} parent=11 // pred_fallthru
          _
        // Predicated region
        $region49: #{tpu_custom_call.1} parent=11 // pred_check
          %p645 = pneg %p250
        $region50: #{tpu_custom_call.1} parent=11 // pred_check_branch
          %647 = sbr.rel (%p645) target = $region52
        $region51: #{tpu_custom_call.1} parent=11 // pred_region
          _
        $region52: #{tpu_custom_call.1} parent=11 // pred_fallthru
          _
        // Predicated region
        $region53: #{tpu_custom_call.1} parent=11 // pred_check
          %p648 = pneg %p271
        $region54: #{tpu_custom_call.1} parent=11 // pred_check_branch
          %650 = sbr.rel (%p648) target = $region56
        $region55: #{tpu_custom_call.1} parent=11 // pred_region
          %s652 = ssub.s32 16, 16
          %653 = vsyncadd [#allocation15], %s652
          %s655 = sshll.u32 [#allocation14], 4
          %s656 = int_to_ptr.vmem [resolvable:$true] %s655
          %658 = dma.hbm_to_vmem [thread:$0]  %s10, 16, %s656, [#allocation15]
        $region56: #{tpu_custom_call.1} parent=11 // pred_fallthru
          _
        // Predicated region
        $region57: #{tpu_custom_call.1} parent=11 // pred_check
          %p659 = pneg %p292
        $region58: #{tpu_custom_call.1} parent=11 // pred_check_branch
          %661 = sbr.rel (%p659) target = $region60
        $region59: #{tpu_custom_call.1} parent=11 // pred_region
          %s663 = ssub.s32 16, 16
          %664 = vsyncadd [#allocation15], %s663
          %s666 = sshll.u32 [#allocation16], 4
          %s667 = int_to_ptr.vmem [resolvable:$true] %s666
          %669 = dma.hbm_to_vmem [thread:$0]  %s11, 16, %s667, [#allocation15]
        $region60: #{tpu_custom_call.1} parent=11 // pred_fallthru
          _
        // Predicated region
        $region61: #{tpu_custom_call.1} parent=11 // pred_check
          %p670 = pneg %p313
        $region62: #{tpu_custom_call.1} parent=11 // pred_check_branch
          %672 = sbr.rel (%p670) target = $region64
        $region63: #{tpu_custom_call.1} parent=11 // pred_region
          %s674 = ssub.s32 16, 16
          %675 = vsyncadd [#allocation18], %s674
          %s677 = sshll.u32 [#allocation17], 4
          %s678 = int_to_ptr.vmem [resolvable:$true] %s677
          %680 = dma.hbm_to_vmem [thread:$0]  %s12, 16, %s678, [#allocation18]
        $region64: #{tpu_custom_call.1} parent=11 // pred_fallthru
          _
        // Predicated region
        $region65: #{tpu_custom_call.1} parent=11 // pred_check
          %p681 = pneg %p334
        $region66: #{tpu_custom_call.1} parent=11 // pred_check_branch
          %683 = sbr.rel (%p681) target = $region68
        $region67: #{tpu_custom_call.1} parent=11 // pred_region
          %s685 = ssub.s32 128, 128
          %686 = vsyncadd [#allocation18], %s685
          %s687 = sshll.u32 [#allocation19], 4
          %s688 = int_to_ptr.vmem [resolvable:$true] %s687
          %693 = dma.hbm_to_vmem [thread:$0]  %s13, 128, %s688, [#allocation18], 64, 64, 4
        $region68: #{tpu_custom_call.1} parent=11 // pred_fallthru
          _
        // Predicated region
        $region69: #{tpu_custom_call.1} parent=11 // pred_check
          %p694 = pneg %p355
        $region70: #{tpu_custom_call.1} parent=11 // pred_check_branch
          %696 = sbr.rel (%p694) target = $region72
        $region71: #{tpu_custom_call.1} parent=11 // pred_region
          %s698 = ssub.s32 16, 16
          %699 = vsyncadd [#allocation21], %s698
          %s701 = sshll.u32 [#allocation20], 4
          %s702 = int_to_ptr.vmem [resolvable:$true] %s701
          %704 = dma.hbm_to_vmem [thread:$0]  %s14, 16, %s702, [#allocation21]
        $region72: #{tpu_custom_call.1} parent=11 // pred_fallthru
          _
        // Predicated region
        $region73: #{tpu_custom_call.1} parent=11 // pred_check
          %p705 = pneg %p376
        $region74: #{tpu_custom_call.1} parent=11 // pred_check_branch
          %707 = sbr.rel (%p705) target = $region76
        $region75: #{tpu_custom_call.1} parent=11 // pred_region
          %s709 = ssub.s32 512, 512
          %710 = vsyncadd [#allocation21], %s709
          %s711 = sshll.u32 [#allocation22], 4
          %s712 = int_to_ptr.vmem [resolvable:$true] %s711
          %717 = dma.hbm_to_vmem [thread:$0]  %s15, 512, %s712, [#allocation21], 64, 64, 4
        $region76: #{tpu_custom_call.1} parent=11 // pred_fallthru
          _
        // Predicated region
        $region77: #{tpu_custom_call.1} parent=11 // pred_check
          %p718 = pneg %p397
        $region78: #{tpu_custom_call.1} parent=11 // pred_check_branch
          %720 = sbr.rel (%p718) target = $region80
        $region79: #{tpu_custom_call.1} parent=11 // pred_region
          %s722 = ssub.s32 16, 16
          %723 = vsyncadd [#allocation24], %s722
          %s725 = sshll.u32 [#allocation23], 4
          %s726 = int_to_ptr.vmem [resolvable:$true] %s725
          %728 = dma.hbm_to_vmem [thread:$0]  %s16, 16, %s726, [#allocation24]
        $region80: #{tpu_custom_call.1} parent=11 // pred_fallthru
          _
        // Predicated region
        $region81: #{tpu_custom_call.1} parent=11 // pred_check
          %p729 = pneg %p418
        $region82: #{tpu_custom_call.1} parent=11 // pred_check_branch
          %731 = sbr.rel (%p729) target = $region84
        $region83: #{tpu_custom_call.1} parent=11 // pred_region
          %s733 = ssub.s32 8192, 8192
          %734 = vsyncadd [#allocation24], %s733
          %s735 = sshll.u32 [#allocation25], 4
          %s736 = int_to_ptr.vmem [resolvable:$true] %s735
          %741 = dma.hbm_to_vmem [thread:$0]  %s17, 8192, %s736, [#allocation24], 512, 512, 32
        $region84: #{tpu_custom_call.1} parent=11 // pred_fallthru
          _
        // Predicated region
        $region85: #{tpu_custom_call.1} parent=11 // pred_check
          %p742 = pneg %p439
        $region86: #{tpu_custom_call.1} parent=11 // pred_check_branch
          %744 = sbr.rel (%p742) target = $region88
        $region87: #{tpu_custom_call.1} parent=11 // pred_region
          %s746 = ssub.s32 128, 128
          %747 = vsyncadd [#allocation27], %s746
          %s749 = sshll.u32 [#allocation26], 4
          %s750 = int_to_ptr.vmem [resolvable:$true] %s749
          %752 = dma.hbm_to_vmem [thread:$0]  %s18, 128, %s750, [#allocation27]
        $region88: #{tpu_custom_call.1} parent=11 // pred_fallthru
          _
      $region12: #{tpu_custom_call.1} parent=5 // pred_fallthru
        _
      %p753 = scmp.lt.s32.totalorder %s40, 4
      // Predicated region
      $region89: #{tpu_custom_call.1} parent=5 // pred_check
        %p754 = pneg %p753
      $region90: #{tpu_custom_call.1} parent=5 // pred_check_branch
        %756 = sbr.rel (%p754) target = $region92
      $region91: #{tpu_custom_call.1} parent=5 // pred_region
        // Predicated region
        $region93: #{tpu_custom_call.1} parent=91 // pred_check
          %p757 = pneg %p459
        $region94: #{tpu_custom_call.1} parent=91 // pred_check_branch
          %759 = sbr.rel (%p757) target = $region96
        $region95: #{tpu_custom_call.1} parent=91 // pred_region
          %s760 = sand.u32 %s40, 1
          %s761 = scalar_lea.sflag [#allocation3], %s760
          %s762 = sand.u32 %s449, 1
          %s763 = smul.addr %s762, 8192
          %s764 = scalar_lea.vmem [#allocation28], %s763
          %s766 = ssub.s32 131072, 131072
          %767 = vsyncadd %s761, %s766
          %s768 = smul.addr %s40, 1024
          %s769 = smul.addr %s768, 128
          %s770 = scalar_lea.hbm %s19, %s769
          %s771 = sshll.u32 %s764, 4
          %s772 = int_to_ptr.vmem [resolvable:$true] %s771
          %777 = dma.hbm_to_vmem [thread:$0]  %s770, 131072, %s772, %s761, 4096, 4096, 256
        $region96: #{tpu_custom_call.1} parent=91 // pred_fallthru
          _
        // Predicated region
        $region97: #{tpu_custom_call.1} parent=91 // pred_check
          %p778 = pneg %p485
        $region98: #{tpu_custom_call.1} parent=91 // pred_check_branch
          %780 = sbr.rel (%p778) target = $region100
        $region99: #{tpu_custom_call.1} parent=91 // pred_region
          %s781 = sand.u32 %s40, 1
          %s782 = scalar_lea.sflag [#allocation3], %s781
          %s783 = sand.u32 %s475, 1
          %s784 = smul.addr %s783, 32
          %s785 = scalar_lea.vmem [#allocation29], %s784
          %s786 = smul.u32 32, %s40
          %s788 = ssub.s32 512, 512
          %789 = vsyncadd %s782, %s788
          %s790 = smul.addr %s786, 16
          %s791 = scalar_lea.hbm %s20, %s790
          %s793 = sshll.u32 %s785, 4
          %s794 = int_to_ptr.vmem [resolvable:$true] %s793
          %796 = dma.hbm_to_vmem [thread:$0]  %s791, 512, %s794, %s782
        $region100: #{tpu_custom_call.1} parent=91 // pred_fallthru
          _
        // Predicated region
        $region101: #{tpu_custom_call.1} parent=91 // pred_check
          %p797 = pneg %p511
        $region102: #{tpu_custom_call.1} parent=91 // pred_check_branch
          %799 = sbr.rel (%p797) target = $region104
        $region103: #{tpu_custom_call.1} parent=91 // pred_region
          %s800 = sand.u32 %s40, 1
          %s801 = scalar_lea.sflag [#allocation3], %s800
          %s802 = sand.u32 %s501, 1
          %s803 = smul.addr %s802, 32
          %s804 = scalar_lea.vmem [#allocation30], %s803
          %s805 = smul.u32 32, %s40
          %s807 = ssub.s32 512, 512
          %808 = vsyncadd %s801, %s807
          %s809 = smul.addr %s805, 16
          %s810 = scalar_lea.hbm %s21, %s809
          %s812 = sshll.u32 %s804, 4
          %s813 = int_to_ptr.vmem [resolvable:$true] %s812
          %815 = dma.hbm_to_vmem [thread:$0]  %s810, 512, %s813, %s801
        $region104: #{tpu_custom_call.1} parent=91 // pred_fallthru
          _
      $region92: #{tpu_custom_call.1} parent=5 // pred_fallthru
        _
      %p816 = scmp.le.s32.totalorder 1, %s40
      %p817 = scmp.lt.s32.totalorder %s40, 5
      %p818 = pnand %p816, %p817
      %p819 = pneg %p818
      // Predicated region
      $region105: #{tpu_custom_call.1} parent=5 // pred_check
        _
      $region106: #{tpu_custom_call.1} parent=5 // pred_check_branch
        %821 = sbr.rel (%p818) target = $region108
      $region107: #{tpu_custom_call.1} parent=5 // pred_region
        %s822 = ssub.s32 %s40, 1
        // Predicated region
        $region109: #{tpu_custom_call.1} parent=107 // pred_check
          %p823 = pneg %p61
        $region110: #{tpu_custom_call.1} parent=107 // pred_check_branch
          %825 = sbr.rel (%p823) target = $region112
        $region111: #{tpu_custom_call.1} parent=107 // pred_region
          %826 = dma.done [#allocation3], 64
        $region112: #{tpu_custom_call.1} parent=107 // pred_fallthru
          _
        // Predicated region
        $region113: #{tpu_custom_call.1} parent=107 // pred_check
          %p827 = pneg %p82
        $region114: #{tpu_custom_call.1} parent=107 // pred_check_branch
          %829 = sbr.rel (%p827) target = $region116
        $region115: #{tpu_custom_call.1} parent=107 // pred_region
          %830 = dma.done [#allocation6], 16384
        $region116: #{tpu_custom_call.1} parent=107 // pred_fallthru
          _
        // Predicated region
        $region117: #{tpu_custom_call.1} parent=107 // pred_check
          %p831 = pneg %p103
        $region118: #{tpu_custom_call.1} parent=107 // pred_check_branch
          %833 = sbr.rel (%p831) target = $region120
        $region119: #{tpu_custom_call.1} parent=107 // pred_region
          %834 = dma.done [#allocation6], 128
        $region120: #{tpu_custom_call.1} parent=107 // pred_fallthru
          _
        // Predicated region
        $region121: #{tpu_custom_call.1} parent=107 // pred_check
          %p835 = pneg %p124
        $region122: #{tpu_custom_call.1} parent=107 // pred_check_branch
          %837 = sbr.rel (%p835) target = $region124
        $region123: #{tpu_custom_call.1} parent=107 // pred_region
          %838 = dma.done [#allocation9], 8192
        $region124: #{tpu_custom_call.1} parent=107 // pred_fallthru
          _
        // Predicated region
        $region125: #{tpu_custom_call.1} parent=107 // pred_check
          %p839 = pneg %p145
        $region126: #{tpu_custom_call.1} parent=107 // pred_check_branch
          %841 = sbr.rel (%p839) target = $region128
        $region127: #{tpu_custom_call.1} parent=107 // pred_region
          %842 = dma.done [#allocation9], 16
        $region128: #{tpu_custom_call.1} parent=107 // pred_fallthru
          _
        // Predicated region
        $region129: #{tpu_custom_call.1} parent=107 // pred_check
          %p843 = pneg %p187
        $region130: #{tpu_custom_call.1} parent=107 // pred_check_branch
          %845 = sbr.rel (%p843) target = $region132
        $region131: #{tpu_custom_call.1} parent=107 // pred_region
          %846 = dma.done [#allocation12], 16
        $region132: #{tpu_custom_call.1} parent=107 // pred_fallthru
          _
        // Predicated region
        $region133: #{tpu_custom_call.1} parent=107 // pred_check
          %p847 = pneg %p229
        $region134: #{tpu_custom_call.1} parent=107 // pred_check_branch
          %849 = sbr.rel (%p847) target = $region136
        $region135: #{tpu_custom_call.1} parent=107 // pred_region
          %850 = dma.done [#allocation12], 16
        $region136: #{tpu_custom_call.1} parent=107 // pred_fallthru
          _
        // Predicated region
        $region137: #{tpu_custom_call.1} parent=107 // pred_check
          %p851 = pneg %p271
        $region138: #{tpu_custom_call.1} parent=107 // pred_check_branch
          %853 = sbr.rel (%p851) target = $region140
        $region139: #{tpu_custom_call.1} parent=107 // pred_region
          %854 = dma.done [#allocation15], 16
        $region140: #{tpu_custom_call.1} parent=107 // pred_fallthru
          _
        // Predicated region
        $region141: #{tpu_custom_call.1} parent=107 // pred_check
          %p855 = pneg %p292
        $region142: #{tpu_custom_call.1} parent=107 // pred_check_branch
          %857 = sbr.rel (%p855) target = $region144
        $region143: #{tpu_custom_call.1} parent=107 // pred_region
          %858 = dma.done [#allocation15], 16
        $region144: #{tpu_custom_call.1} parent=107 // pred_fallthru
          _
        // Predicated region
        $region145: #{tpu_custom_call.1} parent=107 // pred_check
          %p859 = pneg %p313
        $region146: #{tpu_custom_call.1} parent=107 // pred_check_branch
          %861 = sbr.rel (%p859) target = $region148
        $region147: #{tpu_custom_call.1} parent=107 // pred_region
          %862 = dma.done [#allocation18], 16
        $region148: #{tpu_custom_call.1} parent=107 // pred_fallthru
          _
        // Predicated region
        $region149: #{tpu_custom_call.1} parent=107 // pred_check
          %p863 = pneg %p334
        $region150: #{tpu_custom_call.1} parent=107 // pred_check_branch
          %865 = sbr.rel (%p863) target = $region152
        $region151: #{tpu_custom_call.1} parent=107 // pred_region
          %866 = dma.done [#allocation18], 128
        $region152: #{tpu_custom_call.1} parent=107 // pred_fallthru
          _
        // Predicated region
        $region153: #{tpu_custom_call.1} parent=107 // pred_check
          %p867 = pneg %p355
        $region154: #{tpu_custom_call.1} parent=107 // pred_check_branch
          %869 = sbr.rel (%p867) target = $region156
        $region155: #{tpu_custom_call.1} parent=107 // pred_region
          %870 = dma.done [#allocation21], 16
        $region156: #{tpu_custom_call.1} parent=107 // pred_fallthru
          _
        // Predicated region
        $region157: #{tpu_custom_call.1} parent=107 // pred_check
          %p871 = pneg %p376
        $region158: #{tpu_custom_call.1} parent=107 // pred_check_branch
          %873 = sbr.rel (%p871) target = $region160
        $region159: #{tpu_custom_call.1} parent=107 // pred_region
          %874 = dma.done [#allocation21], 512
        $region160: #{tpu_custom_call.1} parent=107 // pred_fallthru
          _
        // Predicated region
        $region161: #{tpu_custom_call.1} parent=107 // pred_check
          %p875 = pneg %p397
        $region162: #{tpu_custom_call.1} parent=107 // pred_check_branch
          %877 = sbr.rel (%p875) target = $region164
        $region163: #{tpu_custom_call.1} parent=107 // pred_region
          %878 = dma.done [#allocation24], 16
        $region164: #{tpu_custom_call.1} parent=107 // pred_fallthru
          _
        // Predicated region
        $region165: #{tpu_custom_call.1} parent=107 // pred_check
          %p879 = pneg %p418
        $region166: #{tpu_custom_call.1} parent=107 // pred_check_branch
          %881 = sbr.rel (%p879) target = $region168
        $region167: #{tpu_custom_call.1} parent=107 // pred_region
          %882 = dma.done [#allocation24], 8192
        $region168: #{tpu_custom_call.1} parent=107 // pred_fallthru
          _
        // Predicated region
        $region169: #{tpu_custom_call.1} parent=107 // pred_check
          %p883 = pneg %p439
        $region170: #{tpu_custom_call.1} parent=107 // pred_check_branch
          %885 = sbr.rel (%p883) target = $region172
        $region171: #{tpu_custom_call.1} parent=107 // pred_region
          %886 = dma.done [#allocation27], 128
        $region172: #{tpu_custom_call.1} parent=107 // pred_fallthru
          _
        %s887 = sand.u32 %s45, 1
        %s888 = scalar_lea.sflag [#allocation3], %s887
        %s889 = sand.u32 %s452, 1
        %s890 = smul.addr %s889, 8192
        %s891 = scalar_lea.vmem [#allocation28], %s890
        // Predicated region
        $region173: #{tpu_custom_call.1} parent=107 // pred_check
          %p892 = pneg %p465
        $region174: #{tpu_custom_call.1} parent=107 // pred_check_branch
          %894 = sbr.rel (%p892) target = $region176
        $region175: #{tpu_custom_call.1} parent=107 // pred_region
          %895 = dma.done %s888, 131072
        $region176: #{tpu_custom_call.1} parent=107 // pred_fallthru
          _
        %s896 = sand.u32 %s45, 1
        %s897 = scalar_lea.sflag [#allocation3], %s896
        %s898 = sand.u32 %s478, 1
        %s899 = smul.addr %s898, 32
        %s900 = scalar_lea.vmem [#allocation29], %s899
        // Predicated region
        $region177: #{tpu_custom_call.1} parent=107 // pred_check
          %p901 = pneg %p491
        $region178: #{tpu_custom_call.1} parent=107 // pred_check_branch
          %903 = sbr.rel (%p901) target = $region180
        $region179: #{tpu_custom_call.1} parent=107 // pred_region
          %904 = dma.done %s897, 512
        $region180: #{tpu_custom_call.1} parent=107 // pred_fallthru
          _
        %s905 = sand.u32 %s45, 1
        %s906 = scalar_lea.sflag [#allocation3], %s905
        %s907 = sand.u32 %s504, 1
        %s908 = smul.addr %s907, 32
        %s909 = scalar_lea.vmem [#allocation30], %s908
        // Predicated region
        $region181: #{tpu_custom_call.1} parent=107 // pred_check
          %p910 = pneg %p517
        $region182: #{tpu_custom_call.1} parent=107 // pred_check_branch
          %912 = sbr.rel (%p910) target = $region184
        $region183: #{tpu_custom_call.1} parent=107 // pred_region
          %913 = dma.done %s906, 512
        $region184: #{tpu_custom_call.1} parent=107 // pred_fallthru
          _
        %p914 = pneg %p61
        %p915 = pneg %p58
        %p916 = pneg %p82
        %p917 = pneg %p79
        %p918 = pneg %p103
        %p919 = pneg %p100
        %p920 = pneg %p124
        %p921 = pneg %p121
        %p922 = pneg %p145
        %p923 = pneg %p142
        %p924 = pneg %p166
        %p925 = pneg %p163
        %p926 = pneg %p187
        %p927 = pneg %p184
        %p928 = pneg %p208
        %p929 = pneg %p205
        %p930 = pneg %p229
        %p931 = pneg %p226
        %p932 = pneg %p250
        %p933 = pneg %p247
        %p934 = pneg %p271
        %p935 = pneg %p268
        %p936 = pneg %p292
        %p937 = pneg %p289
        %p938 = pneg %p313
        %p939 = pneg %p310
        %p940 = pneg %p334
        %p941 = pneg %p331
        %p942 = pneg %p355
        %p943 = pneg %p352
        %p944 = pneg %p376
        %p945 = pneg %p373
        %p946 = pneg %p397
        %p947 = pneg %p394
        %p948 = pneg %p418
        %p949 = pneg %p415
        %p950 = pneg %p439
        %p951 = pneg %p436
        %s952 = sand.u32 %s45, 1
        %s953 = scalar_lea.sflag [#allocation3], %s952
        %s954 = sand.u32 %s452, 1
        %s955 = smul.addr %s954, 8192
        %s956 = scalar_lea.vmem [#allocation28], %s955
        %p957 = pneg %p465
        %p958 = pneg %p462
        %s959 = sand.u32 %s45, 1
        %s960 = scalar_lea.sflag [#allocation3], %s959
        %s961 = sand.u32 %s478, 1
        %s962 = smul.addr %s961, 32
        %s963 = scalar_lea.vmem [#allocation29], %s962
        %p964 = pneg %p491
        %p965 = pneg %p488
        %s966 = sand.u32 %s45, 1
        %s967 = scalar_lea.sflag [#allocation3], %s966
        %s968 = sand.u32 %s504, 1
        %s969 = smul.addr %s968, 32
        %s970 = scalar_lea.vmem [#allocation30], %s969
        %p971 = pneg %p517
        %p972 = pneg %p514
        %p973 = pneg %p543
        %p974 = pneg %p540
        %s975 = sand.u32 %s530, 1
        %s976 = scalar_lea.sflag [#allocation4], %s975
        %s977 = sand.u32 %s530, 1
        %s978 = smul.addr %s977, 64
        %s979 = scalar_lea.vmem [#allocation31], %s978
        %s980 = smul.u32 32, %s45
        %s981 = smul.u32 32, %s45
        %s982 = smul.u32 32, %s45
        %v984 = vld [vmem:[#allocation2] sm:$0xf]
        %v985 = vld [vmem:[#allocation5] sm:$0xff]
        %v986 = vld [vmem:[#allocation5 + $0x8] sm:$0xff]
        %v987 = vld [vmem:[#allocation5 + $0x10] sm:$0xff]
        %v988 = vld [vmem:[#allocation5 + $0x18] sm:$0xff]
        %v989 = vld [vmem:[#allocation5 + $0x20] sm:$0xff]
        %v990 = vld [vmem:[#allocation5 + $0x28] sm:$0xff]
        %v991 = vld [vmem:[#allocation5 + $0x30] sm:$0xff]
        %v992 = vld [vmem:[#allocation5 + $0x38] sm:$0xff]
        %v993 = vld [vmem:[#allocation5 + $0x40] sm:$0xff]
        %v994 = vld [vmem:[#allocation5 + $0x48] sm:$0xff]
        %v995 = vld [vmem:[#allocation5 + $0x50] sm:$0xff]
        %v996 = vld [vmem:[#allocation5 + $0x58] sm:$0xff]
        %v997 = vld [vmem:[#allocation5 + $0x60] sm:$0xff]
        %v998 = vld [vmem:[#allocation5 + $0x68] sm:$0xff]
        %v999 = vld [vmem:[#allocation5 + $0x70] sm:$0xff]
        %v1000 = vld [vmem:[#allocation5 + $0x78] sm:$0xff]
        %v1001 = vld [vmem:[#allocation5 + $0x80] sm:$0xff]
        %v1002 = vld [vmem:[#allocation5 + $0x88] sm:$0xff]
        %v1003 = vld [vmem:[#allocation5 + $0x90] sm:$0xff]
        %v1004 = vld [vmem:[#allocation5 + $0x98] sm:$0xff]
        %v1005 = vld [vmem:[#allocation5 + $0xa0] sm:$0xff]
        %v1006 = vld [vmem:[#allocation5 + $0xa8] sm:$0xff]
        %v1007 = vld [vmem:[#allocation5 + $0xb0] sm:$0xff]
        %v1008 = vld [vmem:[#allocation5 + $0xb8] sm:$0xff]
        %v1009 = vld [vmem:[#allocation5 + $0xc0] sm:$0xff]
        %v1010 = vld [vmem:[#allocation5 + $0xc8] sm:$0xff]
        %v1011 = vld [vmem:[#allocation5 + $0xd0] sm:$0xff]
        %v1012 = vld [vmem:[#allocation5 + $0xd8] sm:$0xff]
        %v1013 = vld [vmem:[#allocation5 + $0xe0] sm:$0xff]
        %v1014 = vld [vmem:[#allocation5 + $0xe8] sm:$0xff]
        %v1015 = vld [vmem:[#allocation5 + $0xf0] sm:$0xff]
        %v1016 = vld [vmem:[#allocation5 + $0xf8] sm:$0xff]
        %v1017 = vld [vmem:[#allocation5 + $0x100] sm:$0xff]
        %v1018 = vld [vmem:[#allocation5 + $0x108] sm:$0xff]
        %v1019 = vld [vmem:[#allocation5 + $0x110] sm:$0xff]
        %v1020 = vld [vmem:[#allocation5 + $0x118] sm:$0xff]
        %v1021 = vld [vmem:[#allocation5 + $0x120] sm:$0xff]
        %v1022 = vld [vmem:[#allocation5 + $0x128] sm:$0xff]
        %v1023 = vld [vmem:[#allocation5 + $0x130] sm:$0xff]
        %v1024 = vld [vmem:[#allocation5 + $0x138] sm:$0xff]
        %v1025 = vld [vmem:[#allocation5 + $0x140] sm:$0xff]
        %v1026 = vld [vmem:[#allocation5 + $0x148] sm:$0xff]
        %v1027 = vld [vmem:[#allocation5 + $0x150] sm:$0xff]
        %v1028 = vld [vmem:[#allocation5 + $0x158] sm:$0xff]
        %v1029 = vld [vmem:[#allocation5 + $0x160] sm:$0xff]
        %v1030 = vld [vmem:[#allocation5 + $0x168] sm:$0xff]
        %v1031 = vld [vmem:[#allocation5 + $0x170] sm:$0xff]
        %v1032 = vld [vmem:[#allocation5 + $0x178] sm:$0xff]
        %v1033 = vld [vmem:[#allocation5 + $0x180] sm:$0xff]
        %v1034 = vld [vmem:[#allocation5 + $0x188] sm:$0xff]
        %v1035 = vld [vmem:[#allocation5 + $0x190] sm:$0xff]
        %v1036 = vld [vmem:[#allocation5 + $0x198] sm:$0xff]
        %v1037 = vld [vmem:[#allocation5 + $0x1a0] sm:$0xff]
        %v1038 = vld [vmem:[#allocation5 + $0x1a8] sm:$0xff]
        %v1039 = vld [vmem:[#allocation5 + $0x1b0] sm:$0xff]
        %v1040 = vld [vmem:[#allocation5 + $0x1b8] sm:$0xff]
        %v1041 = vld [vmem:[#allocation5 + $0x1c0] sm:$0xff]
        %v1042 = vld [vmem:[#allocation5 + $0x1c8] sm:$0xff]
        %v1043 = vld [vmem:[#allocation5 + $0x1d0] sm:$0xff]
        %v1044 = vld [vmem:[#allocation5 + $0x1d8] sm:$0xff]
        %v1045 = vld [vmem:[#allocation5 + $0x1e0] sm:$0xff]
        %v1046 = vld [vmem:[#allocation5 + $0x1e8] sm:$0xff]
        %v1047 = vld [vmem:[#allocation5 + $0x1f0] sm:$0xff]
        %v1048 = vld [vmem:[#allocation5 + $0x1f8] sm:$0xff]
        %v1049 = vld [vmem:[#allocation5 + $0x200] sm:$0xff]
        %v1050 = vld [vmem:[#allocation5 + $0x208] sm:$0xff]
        %v1051 = vld [vmem:[#allocation5 + $0x210] sm:$0xff]
        %v1052 = vld [vmem:[#allocation5 + $0x218] sm:$0xff]
        %v1053 = vld [vmem:[#allocation5 + $0x220] sm:$0xff]
        %v1054 = vld [vmem:[#allocation5 + $0x228] sm:$0xff]
        %v1055 = vld [vmem:[#allocation5 + $0x230] sm:$0xff]
        %v1056 = vld [vmem:[#allocation5 + $0x238] sm:$0xff]
        %v1057 = vld [vmem:[#allocation5 + $0x240] sm:$0xff]
        %v1058 = vld [vmem:[#allocation5 + $0x248] sm:$0xff]
        %v1059 = vld [vmem:[#allocation5 + $0x250] sm:$0xff]
        %v1060 = vld [vmem:[#allocation5 + $0x258] sm:$0xff]
        %v1061 = vld [vmem:[#allocation5 + $0x260] sm:$0xff]
        %v1062 = vld [vmem:[#allocation5 + $0x268] sm:$0xff]
        %v1063 = vld [vmem:[#allocation5 + $0x270] sm:$0xff]
        %v1064 = vld [vmem:[#allocation5 + $0x278] sm:$0xff]
        %v1065 = vld [vmem:[#allocation5 + $0x280] sm:$0xff]
        %v1066 = vld [vmem:[#allocation5 + $0x288] sm:$0xff]
        %v1067 = vld [vmem:[#allocation5 + $0x290] sm:$0xff]
        %v1068 = vld [vmem:[#allocation5 + $0x298] sm:$0xff]
        %v1069 = vld [vmem:[#allocation5 + $0x2a0] sm:$0xff]
        %v1070 = vld [vmem:[#allocation5 + $0x2a8] sm:$0xff]
        %v1071 = vld [vmem:[#allocation5 + $0x2b0] sm:$0xff]
        %v1072 = vld [vmem:[#allocation5 + $0x2b8] sm:$0xff]
        %v1073 = vld [vmem:[#allocation5 + $0x2c0] sm:$0xff]
        %v1074 = vld [vmem:[#allocation5 + $0x2c8] sm:$0xff]
        %v1075 = vld [vmem:[#allocation5 + $0x2d0] sm:$0xff]
        %v1076 = vld [vmem:[#allocation5 + $0x2d8] sm:$0xff]
        %v1077 = vld [vmem:[#allocation5 + $0x2e0] sm:$0xff]
        %v1078 = vld [vmem:[#allocation5 + $0x2e8] sm:$0xff]
        %v1079 = vld [vmem:[#allocation5 + $0x2f0] sm:$0xff]
        %v1080 = vld [vmem:[#allocation5 + $0x2f8] sm:$0xff]
        %v1081 = vld [vmem:[#allocation5 + $0x300] sm:$0xff]
        %v1082 = vld [vmem:[#allocation5 + $0x308] sm:$0xff]
        %v1083 = vld [vmem:[#allocation5 + $0x310] sm:$0xff]
        %v1084 = vld [vmem:[#allocation5 + $0x318] sm:$0xff]
        %v1085 = vld [vmem:[#allocation5 + $0x320] sm:$0xff]
        %v1086 = vld [vmem:[#allocation5 + $0x328] sm:$0xff]
        %v1087 = vld [vmem:[#allocation5 + $0x330] sm:$0xff]
        %v1088 = vld [vmem:[#allocation5 + $0x338] sm:$0xff]
        %v1089 = vld [vmem:[#allocation5 + $0x340] sm:$0xff]
        %v1090 = vld [vmem:[#allocation5 + $0x348] sm:$0xff]
        %v1091 = vld [vmem:[#allocation5 + $0x350] sm:$0xff]
        %v1092 = vld [vmem:[#allocation5 + $0x358] sm:$0xff]
        %v1093 = vld [vmem:[#allocation5 + $0x360] sm:$0xff]
        %v1094 = vld [vmem:[#allocation5 + $0x368] sm:$0xff]
        %v1095 = vld [vmem:[#allocation5 + $0x370] sm:$0xff]
        %v1096 = vld [vmem:[#allocation5 + $0x378] sm:$0xff]
        %v1097 = vld [vmem:[#allocation5 + $0x380] sm:$0xff]
        %v1098 = vld [vmem:[#allocation5 + $0x388] sm:$0xff]
        %v1099 = vld [vmem:[#allocation5 + $0x390] sm:$0xff]
        %v1100 = vld [vmem:[#allocation5 + $0x398] sm:$0xff]
        %v1101 = vld [vmem:[#allocation5 + $0x3a0] sm:$0xff]
        %v1102 = vld [vmem:[#allocation5 + $0x3a8] sm:$0xff]
        %v1103 = vld [vmem:[#allocation5 + $0x3b0] sm:$0xff]
        %v1104 = vld [vmem:[#allocation5 + $0x3b8] sm:$0xff]
        %v1105 = vld [vmem:[#allocation5 + $0x3c0] sm:$0xff]
        %v1106 = vld [vmem:[#allocation5 + $0x3c8] sm:$0xff]
        %v1107 = vld [vmem:[#allocation5 + $0x3d0] sm:$0xff]
        %v1108 = vld [vmem:[#allocation5 + $0x3d8] sm:$0xff]
        %v1109 = vld [vmem:[#allocation5 + $0x3e0] sm:$0xff]
        %v1110 = vld [vmem:[#allocation5 + $0x3e8] sm:$0xff]
        %v1111 = vld [vmem:[#allocation5 + $0x3f0] sm:$0xff]
        %v1112 = vld [vmem:[#allocation5 + $0x3f8] sm:$0xff]
        %v1113 = vld [vmem:[#allocation7] sm:$0xff]
        %v1116 = vunpack.c.l.s4 1983009808
        %v1117 = vunpack.c.0.s8 %v1116
        %v1118 = vlaneseq
        %v1119 = vshrl.u32 %v1118, 7
        %v1120 = vsub.s32 %v1117, %v1119
        %v1121 = vrot.slane %v984, %v1120
        %v1122 = vcombine.high %v1121, %v1121
        %v1125 = vpack.c.bf16 %v1121, %v1121
        %v1126 = vpack.c.bf16 %v1122, %v1122
        %v1128 = vlaneseq
        %v1129 = vshrl.u32 %v1128, 7
        %v1130 = vsub.s32 0, %v1129
        %v1131 = vrot.slane %v1113, %v1130
        %v1132 = vlaneseq
        %v1133 = vshrl.u32 %v1132, 7
        %v1134 = vsub.s32 1, %v1133
        %v1135 = vrot.slane %v1113, %v1134
        %v1136 = vlaneseq
        %v1137 = vshrl.u32 %v1136, 7
        %v1138 = vsub.s32 2, %v1137
        %v1139 = vrot.slane %v1113, %v1138
        %v1140 = vlaneseq
        %v1141 = vshrl.u32 %v1140, 7
        %v1142 = vsub.s32 3, %v1141
        %v1143 = vrot.slane %v1113, %v1142
        %v1144 = vlaneseq
        %v1145 = vshrl.u32 %v1144, 7
        %v1146 = vsub.s32 4, %v1145
        %v1147 = vrot.slane %v1113, %v1146
        %v1148 = vlaneseq
        %v1149 = vshrl.u32 %v1148, 7
        %v1150 = vsub.s32 5, %v1149
        %v1151 = vrot.slane %v1113, %v1150
        %v1152 = vlaneseq
        %v1153 = vshrl.u32 %v1152, 7
        %v1154 = vsub.s32 6, %v1153
        %v1155 = vrot.slane %v1113, %v1154
        %v1156 = vlaneseq
        %v1157 = vshrl.u32 %v1156, 7
        %v1158 = vsub.s32 7, %v1157
        %v1159 = vrot.slane %v1113, %v1158
        %v1296 = vunpack.c.l.b16 %v985
        %v1297 = vunpack.c.h.b16 %v985
        %v1298 = vunpack.c.l.b16 %v986
        %v1299 = vunpack.c.h.b16 %v986
        %v1300 = vunpack.c.l.b16 %v987
        %v1301 = vunpack.c.h.b16 %v987
        %v1302 = vunpack.c.l.b16 %v988
        %v1303 = vunpack.c.h.b16 %v988
        %v1304 = vunpack.c.l.b16 %v989
        %v1305 = vunpack.c.h.b16 %v989
        %v1306 = vunpack.c.l.b16 %v990
        %v1307 = vunpack.c.h.b16 %v990
        %v1308 = vunpack.c.l.b16 %v991
        %v1309 = vunpack.c.h.b16 %v991
        %v1310 = vunpack.c.l.b16 %v992
        %v1311 = vunpack.c.h.b16 %v992
        %v1312 = vunpack.c.l.b16 %v993
        %v1313 = vunpack.c.h.b16 %v993
        %v1314 = vunpack.c.l.b16 %v994
        %v1315 = vunpack.c.h.b16 %v994
        %v1316 = vunpack.c.l.b16 %v995
        %v1317 = vunpack.c.h.b16 %v995
        %v1318 = vunpack.c.l.b16 %v996
        %v1319 = vunpack.c.h.b16 %v996
        %v1320 = vunpack.c.l.b16 %v997
        %v1321 = vunpack.c.h.b16 %v997
        %v1322 = vunpack.c.l.b16 %v998
        %v1323 = vunpack.c.h.b16 %v998
        %v1324 = vunpack.c.l.b16 %v999
        %v1325 = vunpack.c.h.b16 %v999
        %v1326 = vunpack.c.l.b16 %v1000
        %v1327 = vunpack.c.h.b16 %v1000
        %v1328 = vunpack.c.l.b16 %v1001
        %v1329 = vunpack.c.h.b16 %v1001
        %v1330 = vunpack.c.l.b16 %v1002
        %v1331 = vunpack.c.h.b16 %v1002
        %v1332 = vunpack.c.l.b16 %v1003
        %v1333 = vunpack.c.h.b16 %v1003
        %v1334 = vunpack.c.l.b16 %v1004
        %v1335 = vunpack.c.h.b16 %v1004
        %v1336 = vunpack.c.l.b16 %v1005
        %v1337 = vunpack.c.h.b16 %v1005
        %v1338 = vunpack.c.l.b16 %v1006
        %v1339 = vunpack.c.h.b16 %v1006
        %v1340 = vunpack.c.l.b16 %v1007
        %v1341 = vunpack.c.h.b16 %v1007
        %v1342 = vunpack.c.l.b16 %v1008
        %v1343 = vunpack.c.h.b16 %v1008
        %v1344 = vunpack.c.l.b16 %v1009
        %v1345 = vunpack.c.h.b16 %v1009
        %v1346 = vunpack.c.l.b16 %v1010
        %v1347 = vunpack.c.h.b16 %v1010
        %v1348 = vunpack.c.l.b16 %v1011
        %v1349 = vunpack.c.h.b16 %v1011
        %v1350 = vunpack.c.l.b16 %v1012
        %v1351 = vunpack.c.h.b16 %v1012
        %v1352 = vunpack.c.l.b16 %v1013
        %v1353 = vunpack.c.h.b16 %v1013
        %v1354 = vunpack.c.l.b16 %v1014
        %v1355 = vunpack.c.h.b16 %v1014
        %v1356 = vunpack.c.l.b16 %v1015
        %v1357 = vunpack.c.h.b16 %v1015
        %v1358 = vunpack.c.l.b16 %v1016
        %v1359 = vunpack.c.h.b16 %v1016
        %v1360 = vunpack.c.l.b16 %v1017
        %v1361 = vunpack.c.h.b16 %v1017
        %v1362 = vunpack.c.l.b16 %v1018
        %v1363 = vunpack.c.h.b16 %v1018
        %v1364 = vunpack.c.l.b16 %v1019
        %v1365 = vunpack.c.h.b16 %v1019
        %v1366 = vunpack.c.l.b16 %v1020
        %v1367 = vunpack.c.h.b16 %v1020
        %v1368 = vunpack.c.l.b16 %v1021
        %v1369 = vunpack.c.h.b16 %v1021
        %v1370 = vunpack.c.l.b16 %v1022
        %v1371 = vunpack.c.h.b16 %v1022
        %v1372 = vunpack.c.l.b16 %v1023
        %v1373 = vunpack.c.h.b16 %v1023
        %v1374 = vunpack.c.l.b16 %v1024
        %v1375 = vunpack.c.h.b16 %v1024
        %v1376 = vunpack.c.l.b16 %v1025
        %v1377 = vunpack.c.h.b16 %v1025
        %v1378 = vunpack.c.l.b16 %v1026
        %v1379 = vunpack.c.h.b16 %v1026
        %v1380 = vunpack.c.l.b16 %v1027
        %v1381 = vunpack.c.h.b16 %v1027
        %v1382 = vunpack.c.l.b16 %v1028
        %v1383 = vunpack.c.h.b16 %v1028
        %v1384 = vunpack.c.l.b16 %v1029
        %v1385 = vunpack.c.h.b16 %v1029
        %v1386 = vunpack.c.l.b16 %v1030
        %v1387 = vunpack.c.h.b16 %v1030
        %v1388 = vunpack.c.l.b16 %v1031
        %v1389 = vunpack.c.h.b16 %v1031
        %v1390 = vunpack.c.l.b16 %v1032
        %v1391 = vunpack.c.h.b16 %v1032
        %v1392 = vunpack.c.l.b16 %v1033
        %v1393 = vunpack.c.h.b16 %v1033
        %v1394 = vunpack.c.l.b16 %v1034
        %v1395 = vunpack.c.h.b16 %v1034
        %v1396 = vunpack.c.l.b16 %v1035
        %v1397 = vunpack.c.h.b16 %v1035
        %v1398 = vunpack.c.l.b16 %v1036
        %v1399 = vunpack.c.h.b16 %v1036
        %v1400 = vunpack.c.l.b16 %v1037
        %v1401 = vunpack.c.h.b16 %v1037
        %v1402 = vunpack.c.l.b16 %v1038
        %v1403 = vunpack.c.h.b16 %v1038
        %v1404 = vunpack.c.l.b16 %v1039
        %v1405 = vunpack.c.h.b16 %v1039
        %v1406 = vunpack.c.l.b16 %v1040
        %v1407 = vunpack.c.h.b16 %v1040
        %v1408 = vunpack.c.l.b16 %v1041
        %v1409 = vunpack.c.h.b16 %v1041
        %v1410 = vunpack.c.l.b16 %v1042
        %v1411 = vunpack.c.h.b16 %v1042
        %v1412 = vunpack.c.l.b16 %v1043
        %v1413 = vunpack.c.h.b16 %v1043
        %v1414 = vunpack.c.l.b16 %v1044
        %v1415 = vunpack.c.h.b16 %v1044
        %v1416 = vunpack.c.l.b16 %v1045
        %v1417 = vunpack.c.h.b16 %v1045
        %v1418 = vunpack.c.l.b16 %v1046
        %v1419 = vunpack.c.h.b16 %v1046
        %v1420 = vunpack.c.l.b16 %v1047
        %v1421 = vunpack.c.h.b16 %v1047
        %v1422 = vunpack.c.l.b16 %v1048
        %v1423 = vunpack.c.h.b16 %v1048
        %v1424 = vunpack.c.l.b16 %v1049
        %v1425 = vunpack.c.h.b16 %v1049
        %v1426 = vunpack.c.l.b16 %v1050
        %v1427 = vunpack.c.h.b16 %v1050
        %v1428 = vunpack.c.l.b16 %v1051
        %v1429 = vunpack.c.h.b16 %v1051
        %v1430 = vunpack.c.l.b16 %v1052
        %v1431 = vunpack.c.h.b16 %v1052
        %v1432 = vunpack.c.l.b16 %v1053
        %v1433 = vunpack.c.h.b16 %v1053
        %v1434 = vunpack.c.l.b16 %v1054
        %v1435 = vunpack.c.h.b16 %v1054
        %v1436 = vunpack.c.l.b16 %v1055
        %v1437 = vunpack.c.h.b16 %v1055
        %v1438 = vunpack.c.l.b16 %v1056
        %v1439 = vunpack.c.h.b16 %v1056
        %v1440 = vunpack.c.l.b16 %v1057
        %v1441 = vunpack.c.h.b16 %v1057
        %v1442 = vunpack.c.l.b16 %v1058
        %v1443 = vunpack.c.h.b16 %v1058
        %v1444 = vunpack.c.l.b16 %v1059
        %v1445 = vunpack.c.h.b16 %v1059
        %v1446 = vunpack.c.l.b16 %v1060
        %v1447 = vunpack.c.h.b16 %v1060
        %v1448 = vunpack.c.l.b16 %v1061
        %v1449 = vunpack.c.h.b16 %v1061
        %v1450 = vunpack.c.l.b16 %v1062
        %v1451 = vunpack.c.h.b16 %v1062
        %v1452 = vunpack.c.l.b16 %v1063
        %v1453 = vunpack.c.h.b16 %v1063
        %v1454 = vunpack.c.l.b16 %v1064
        %v1455 = vunpack.c.h.b16 %v1064
        %v1456 = vunpack.c.l.b16 %v1065
        %v1457 = vunpack.c.h.b16 %v1065
        %v1458 = vunpack.c.l.b16 %v1066
        %v1459 = vunpack.c.h.b16 %v1066
        %v1460 = vunpack.c.l.b16 %v1067
        %v1461 = vunpack.c.h.b16 %v1067
        %v1462 = vunpack.c.l.b16 %v1068
        %v1463 = vunpack.c.h.b16 %v1068
        %v1464 = vunpack.c.l.b16 %v1069
        %v1465 = vunpack.c.h.b16 %v1069
        %v1466 = vunpack.c.l.b16 %v1070
        %v1467 = vunpack.c.h.b16 %v1070
        %v1468 = vunpack.c.l.b16 %v1071
        %v1469 = vunpack.c.h.b16 %v1071
        %v1470 = vunpack.c.l.b16 %v1072
        %v1471 = vunpack.c.h.b16 %v1072
        %v1472 = vunpack.c.l.b16 %v1073
        %v1473 = vunpack.c.h.b16 %v1073
        %v1474 = vunpack.c.l.b16 %v1074
        %v1475 = vunpack.c.h.b16 %v1074
        %v1476 = vunpack.c.l.b16 %v1075
        %v1477 = vunpack.c.h.b16 %v1075
        %v1478 = vunpack.c.l.b16 %v1076
        %v1479 = vunpack.c.h.b16 %v1076
        %v1480 = vunpack.c.l.b16 %v1077
        %v1481 = vunpack.c.h.b16 %v1077
        %v1482 = vunpack.c.l.b16 %v1078
        %v1483 = vunpack.c.h.b16 %v1078
        %v1484 = vunpack.c.l.b16 %v1079
        %v1485 = vunpack.c.h.b16 %v1079
        %v1486 = vunpack.c.l.b16 %v1080
        %v1487 = vunpack.c.h.b16 %v1080
        %v1488 = vunpack.c.l.b16 %v1081
        %v1489 = vunpack.c.h.b16 %v1081
        %v1490 = vunpack.c.l.b16 %v1082
        %v1491 = vunpack.c.h.b16 %v1082
        %v1492 = vunpack.c.l.b16 %v1083
        %v1493 = vunpack.c.h.b16 %v1083
        %v1494 = vunpack.c.l.b16 %v1084
        %v1495 = vunpack.c.h.b16 %v1084
        %v1496 = vunpack.c.l.b16 %v1085
        %v1497 = vunpack.c.h.b16 %v1085
        %v1498 = vunpack.c.l.b16 %v1086
        %v1499 = vunpack.c.h.b16 %v1086
        %v1500 = vunpack.c.l.b16 %v1087
        %v1501 = vunpack.c.h.b16 %v1087
        %v1502 = vunpack.c.l.b16 %v1088
        %v1503 = vunpack.c.h.b16 %v1088
        %v1504 = vunpack.c.l.b16 %v1089
        %v1505 = vunpack.c.h.b16 %v1089
        %v1506 = vunpack.c.l.b16 %v1090
        %v1507 = vunpack.c.h.b16 %v1090
        %v1508 = vunpack.c.l.b16 %v1091
        %v1509 = vunpack.c.h.b16 %v1091
        %v1510 = vunpack.c.l.b16 %v1092
        %v1511 = vunpack.c.h.b16 %v1092
        %v1512 = vunpack.c.l.b16 %v1093
        %v1513 = vunpack.c.h.b16 %v1093
        %v1514 = vunpack.c.l.b16 %v1094
        %v1515 = vunpack.c.h.b16 %v1094
        %v1516 = vunpack.c.l.b16 %v1095
        %v1517 = vunpack.c.h.b16 %v1095
        %v1518 = vunpack.c.l.b16 %v1096
        %v1519 = vunpack.c.h.b16 %v1096
        %v1520 = vunpack.c.l.b16 %v1097
        %v1521 = vunpack.c.h.b16 %v1097
        %v1522 = vunpack.c.l.b16 %v1098
        %v1523 = vunpack.c.h.b16 %v1098
        %v1524 = vunpack.c.l.b16 %v1099
        %v1525 = vunpack.c.h.b16 %v1099
        %v1526 = vunpack.c.l.b16 %v1100
        %v1527 = vunpack.c.h.b16 %v1100
        %v1528 = vunpack.c.l.b16 %v1101
        %v1529 = vunpack.c.h.b16 %v1101
        %v1530 = vunpack.c.l.b16 %v1102
        %v1531 = vunpack.c.h.b16 %v1102
        %v1532 = vunpack.c.l.b16 %v1103
        %v1533 = vunpack.c.h.b16 %v1103
        %v1534 = vunpack.c.l.b16 %v1104
        %v1535 = vunpack.c.h.b16 %v1104
        %v1536 = vunpack.c.l.b16 %v1105
        %v1537 = vunpack.c.h.b16 %v1105
        %v1538 = vunpack.c.l.b16 %v1106
        %v1539 = vunpack.c.h.b16 %v1106
        %v1540 = vunpack.c.l.b16 %v1107
        %v1541 = vunpack.c.h.b16 %v1107
        %v1542 = vunpack.c.l.b16 %v1108
        %v1543 = vunpack.c.h.b16 %v1108
        %v1544 = vunpack.c.l.b16 %v1109
        %v1545 = vunpack.c.h.b16 %v1109
        %v1546 = vunpack.c.l.b16 %v1110
        %v1547 = vunpack.c.h.b16 %v1110
        %v1548 = vunpack.c.l.b16 %v1111
        %v1549 = vunpack.c.h.b16 %v1111
        %v1550 = vunpack.c.l.b16 %v1112
        %v1551 = vunpack.c.h.b16 %v1112
        %v1552 = vpack.c.b16 %v1304, %v1296
        %v1553 = vpack.c.b16 %v1305, %v1297
        %v1554 = vpack.c.b16 %v1306, %v1298
        %v1555 = vpack.c.b16 %v1307, %v1299
        %v1556 = vpack.c.b16 %v1308, %v1300
        %v1557 = vpack.c.b16 %v1309, %v1301
        %v1558 = vpack.c.b16 %v1310, %v1302
        %v1559 = vpack.c.b16 %v1311, %v1303
        %v1560 = vpack.c.b16 %v1320, %v1312
        %v1561 = vpack.c.b16 %v1321, %v1313
        %v1562 = vpack.c.b16 %v1322, %v1314
        %v1563 = vpack.c.b16 %v1323, %v1315
        %v1564 = vpack.c.b16 %v1324, %v1316
        %v1565 = vpack.c.b16 %v1325, %v1317
        %v1566 = vpack.c.b16 %v1326, %v1318
        %v1567 = vpack.c.b16 %v1327, %v1319
        %v1568 = vpack.c.b16 %v1336, %v1328
        %v1569 = vpack.c.b16 %v1337, %v1329
        %v1570 = vpack.c.b16 %v1338, %v1330
        %v1571 = vpack.c.b16 %v1339, %v1331
        %v1572 = vpack.c.b16 %v1340, %v1332
        %v1573 = vpack.c.b16 %v1341, %v1333
        %v1574 = vpack.c.b16 %v1342, %v1334
        %v1575 = vpack.c.b16 %v1343, %v1335
        %v1576 = vpack.c.b16 %v1352, %v1344
        %v1577 = vpack.c.b16 %v1353, %v1345
        %v1578 = vpack.c.b16 %v1354, %v1346
        %v1579 = vpack.c.b16 %v1355, %v1347
        %v1580 = vpack.c.b16 %v1356, %v1348
        %v1581 = vpack.c.b16 %v1357, %v1349
        %v1582 = vpack.c.b16 %v1358, %v1350
        %v1583 = vpack.c.b16 %v1359, %v1351
        %v1584 = vpack.c.b16 %v1368, %v1360
        %v1585 = vpack.c.b16 %v1369, %v1361
        %v1586 = vpack.c.b16 %v1370, %v1362
        %v1587 = vpack.c.b16 %v1371, %v1363
        %v1588 = vpack.c.b16 %v1372, %v1364
        %v1589 = vpack.c.b16 %v1373, %v1365
        %v1590 = vpack.c.b16 %v1374, %v1366
        %v1591 = vpack.c.b16 %v1375, %v1367
        %v1592 = vpack.c.b16 %v1384, %v1376
        %v1593 = vpack.c.b16 %v1385, %v1377
        %v1594 = vpack.c.b16 %v1386, %v1378
        %v1595 = vpack.c.b16 %v1387, %v1379
        %v1596 = vpack.c.b16 %v1388, %v1380
        %v1597 = vpack.c.b16 %v1389, %v1381
        %v1598 = vpack.c.b16 %v1390, %v1382
        %v1599 = vpack.c.b16 %v1391, %v1383
        %v1600 = vpack.c.b16 %v1400, %v1392
        %v1601 = vpack.c.b16 %v1401, %v1393
        %v1602 = vpack.c.b16 %v1402, %v1394
        %v1603 = vpack.c.b16 %v1403, %v1395
        %v1604 = vpack.c.b16 %v1404, %v1396
        %v1605 = vpack.c.b16 %v1405, %v1397
        %v1606 = vpack.c.b16 %v1406, %v1398
        %v1607 = vpack.c.b16 %v1407, %v1399
        %v1608 = vpack.c.b16 %v1416, %v1408
        %v1609 = vpack.c.b16 %v1417, %v1409
        %v1610 = vpack.c.b16 %v1418, %v1410
        %v1611 = vpack.c.b16 %v1419, %v1411
        %v1612 = vpack.c.b16 %v1420, %v1412
        %v1613 = vpack.c.b16 %v1421, %v1413
        %v1614 = vpack.c.b16 %v1422, %v1414
        %v1615 = vpack.c.b16 %v1423, %v1415
        %v1616 = vpack.c.b16 %v1432, %v1424
        %v1617 = vpack.c.b16 %v1433, %v1425
        %v1618 = vpack.c.b16 %v1434, %v1426
        %v1619 = vpack.c.b16 %v1435, %v1427
        %v1620 = vpack.c.b16 %v1436, %v1428
        %v1621 = vpack.c.b16 %v1437, %v1429
        %v1622 = vpack.c.b16 %v1438, %v1430
        %v1623 = vpack.c.b16 %v1439, %v1431
        %v1624 = vpack.c.b16 %v1448, %v1440
        %v1625 = vpack.c.b16 %v1449, %v1441
        %v1626 = vpack.c.b16 %v1450, %v1442
        %v1627 = vpack.c.b16 %v1451, %v1443
        %v1628 = vpack.c.b16 %v1452, %v1444
        %v1629 = vpack.c.b16 %v1453, %v1445
        %v1630 = vpack.c.b16 %v1454, %v1446
        %v1631 = vpack.c.b16 %v1455, %v1447
        %v1632 = vpack.c.b16 %v1464, %v1456
        %v1633 = vpack.c.b16 %v1465, %v1457
        %v1634 = vpack.c.b16 %v1466, %v1458
        %v1635 = vpack.c.b16 %v1467, %v1459
        %v1636 = vpack.c.b16 %v1468, %v1460
        %v1637 = vpack.c.b16 %v1469, %v1461
        %v1638 = vpack.c.b16 %v1470, %v1462
        %v1639 = vpack.c.b16 %v1471, %v1463
        %v1640 = vpack.c.b16 %v1480, %v1472
        %v1641 = vpack.c.b16 %v1481, %v1473
        %v1642 = vpack.c.b16 %v1482, %v1474
        %v1643 = vpack.c.b16 %v1483, %v1475
        %v1644 = vpack.c.b16 %v1484, %v1476
        %v1645 = vpack.c.b16 %v1485, %v1477
        %v1646 = vpack.c.b16 %v1486, %v1478
        %v1647 = vpack.c.b16 %v1487, %v1479
        %v1648 = vpack.c.b16 %v1496, %v1488
        %v1649 = vpack.c.b16 %v1497, %v1489
        %v1650 = vpack.c.b16 %v1498, %v1490
        %v1651 = vpack.c.b16 %v1499, %v1491
        %v1652 = vpack.c.b16 %v1500, %v1492
        %v1653 = vpack.c.b16 %v1501, %v1493
        %v1654 = vpack.c.b16 %v1502, %v1494
        %v1655 = vpack.c.b16 %v1503, %v1495
        %v1656 = vpack.c.b16 %v1512, %v1504
        %v1657 = vpack.c.b16 %v1513, %v1505
        %v1658 = vpack.c.b16 %v1514, %v1506
        %v1659 = vpack.c.b16 %v1515, %v1507
        %v1660 = vpack.c.b16 %v1516, %v1508
        %v1661 = vpack.c.b16 %v1517, %v1509
        %v1662 = vpack.c.b16 %v1518, %v1510
        %v1663 = vpack.c.b16 %v1519, %v1511
        %v1664 = vpack.c.b16 %v1528, %v1520
        %v1665 = vpack.c.b16 %v1529, %v1521
        %v1666 = vpack.c.b16 %v1530, %v1522
        %v1667 = vpack.c.b16 %v1531, %v1523
        %v1668 = vpack.c.b16 %v1532, %v1524
        %v1669 = vpack.c.b16 %v1533, %v1525
        %v1670 = vpack.c.b16 %v1534, %v1526
        %v1671 = vpack.c.b16 %v1535, %v1527
        %v1672 = vpack.c.b16 %v1544, %v1536
        %v1673 = vpack.c.b16 %v1545, %v1537
        %v1674 = vpack.c.b16 %v1546, %v1538
        %v1675 = vpack.c.b16 %v1547, %v1539
        %v1676 = vpack.c.b16 %v1548, %v1540
        %v1677 = vpack.c.b16 %v1549, %v1541
        %v1678 = vpack.c.b16 %v1550, %v1542
        %v1679 = vpack.c.b16 %v1551, %v1543
        %1808 = vmatprep.subr.bf16.mxu0 %v1553
        %1809 = vmatpush1.bf16.msra.mxu0 %v1552
        %1810 = vmatprep.subr.bf16.mxu0 %v1561
        %1811 = vmatpush1.bf16.msra.mxu0 %v1560
        %1812 = vmatprep.subr.bf16.mxu0 %v1569
        %1813 = vmatpush1.bf16.msra.mxu0 %v1568
        %1814 = vmatprep.subr.bf16.mxu0 %v1577
        %1815 = vmatpush1.bf16.msra.mxu0 %v1576
        %1816 = vmatprep.subr.bf16.mxu0 %v1585
        %1817 = vmatpush1.bf16.msra.mxu0 %v1584
        %1818 = vmatprep.subr.bf16.mxu0 %v1593
        %1819 = vmatpush1.bf16.msra.mxu0 %v1592
        %1820 = vmatprep.subr.bf16.mxu0 %v1601
        %1821 = vmatpush1.bf16.msra.mxu0 %v1600
        %1822 = vmatprep.subr.bf16.mxu0 %v1609
        %1823 = vmatpush1.bf16.msra.mxu0 %v1608
        %1824 = vmatprep.subr.bf16.mxu0 %v1617
        %1825 = vmatpush1.bf16.msra.mxu0 %v1616
        %1826 = vmatprep.subr.bf16.mxu0 %v1625
        %1827 = vmatpush1.bf16.msra.mxu0 %v1624
        %1828 = vmatprep.subr.bf16.mxu0 %v1633
        %1829 = vmatpush1.bf16.msra.mxu0 %v1632
        %1830 = vmatprep.subr.bf16.mxu0 %v1641
        %1831 = vmatpush1.bf16.msra.mxu0 %v1640
        %1832 = vmatprep.subr.bf16.mxu0 %v1649
        %1833 = vmatpush1.bf16.msra.mxu0 %v1648
        %1834 = vmatprep.subr.bf16.mxu0 %v1657
        %1835 = vmatpush1.bf16.msra.mxu0 %v1656
        %1836 = vmatprep.subr.bf16.mxu0 %v1665
        %1837 = vmatpush1.bf16.msra.mxu0 %v1664
        %1838 = vmatprep.subr.bf16.mxu0 %v1673
        %1839 = vmatpush1.bf16.msra.mxu0 %v1672
        %1840 = vmatprep.mubr.bf16.mxu0 %v1126
        %1841 = vmatmul.mubr.bf16.gmra.mrb[0].mxu0 %v1125
        %v1842 = vpop.f32.mrb[0].mxu0
        %v1843 = vadd.f32 %v1131, %v1842
        %v1844 = vpop.f32.mrb[0].mxu0
        %v1845 = vadd.f32 %v1135, %v1844
        %v1846 = vpop.f32.mrb[0].mxu0
        %v1847 = vpop.f32.mrb[0].mxu0
        %1848 = vdwg.mxu0
        %1849 = vmatprep.subr.bf16.mxu0 %v1555
        %1850 = vmatpush1.bf16.msra.mxu0 %v1554
        %1851 = vmatprep.subr.bf16.mxu0 %v1563
        %1852 = vmatpush1.bf16.msra.mxu0 %v1562
        %1853 = vmatprep.subr.bf16.mxu0 %v1571
        %1854 = vmatpush1.bf16.msra.mxu0 %v1570
        %1855 = vmatprep.subr.bf16.mxu0 %v1579
        %1856 = vmatpush1.bf16.msra.mxu0 %v1578
        %1857 = vmatprep.subr.bf16.mxu0 %v1587
        %1858 = vmatpush1.bf16.msra.mxu0 %v1586
        %1859 = vmatprep.subr.bf16.mxu0 %v1595
        %1860 = vmatpush1.bf16.msra.mxu0 %v1594
        %1861 = vmatprep.subr.bf16.mxu0 %v1603
        %1862 = vmatpush1.bf16.msra.mxu0 %v1602
        %1863 = vmatprep.subr.bf16.mxu0 %v1611
        %1864 = vmatpush1.bf16.msra.mxu0 %v1610
        %1865 = vmatprep.subr.bf16.mxu0 %v1619
        %1866 = vmatpush1.bf16.msra.mxu0 %v1618
        %1867 = vmatprep.subr.bf16.mxu0 %v1627
        %1868 = vmatpush1.bf16.msra.mxu0 %v1626
        %1869 = vmatprep.subr.bf16.mxu0 %v1635
        %1870 = vmatpush1.bf16.msra.mxu0 %v1634
        %1871 = vmatprep.subr.bf16.mxu0 %v1643
        %1872 = vmatpush1.bf16.msra.mxu0 %v1642
        %1873 = vmatprep.subr.bf16.mxu0 %v1651
        %1874 = vmatpush1.bf16.msra.mxu0 %v1650
        %1875 = vmatprep.subr.bf16.mxu0 %v1659
        %1876 = vmatpush1.bf16.msra.mxu0 %v1658
        %1877 = vmatprep.subr.bf16.mxu0 %v1667
        %1878 = vmatpush1.bf16.msra.mxu0 %v1666
        %1879 = vmatprep.subr.bf16.mxu0 %v1675
        %1880 = vmatpush1.bf16.msra.mxu0 %v1674
        %1881 = vmatprep.mubr.bf16.mxu0 %v1126
        %1882 = vmatmul.mubr.bf16.gmra.mrb[0].mxu0 %v1125
        %v1883 = vpop.f32.mrb[0].mxu0
        %v1884 = vadd.f32 %v1139, %v1883
        %v1885 = vpop.f32.mrb[0].mxu0
        %v1886 = vadd.f32 %v1143, %v1885
        %v1887 = vpop.f32.mrb[0].mxu0
        %v1888 = vpop.f32.mrb[0].mxu0
        %1889 = vdwg.mxu0
        %1890 = vmatprep.subr.bf16.mxu0 %v1557
        %1891 = vmatpush1.bf16.msra.mxu0 %v1556
        %1892 = vmatprep.subr.bf16.mxu0 %v1565
        %1893 = vmatpush1.bf16.msra.mxu0 %v1564
        %1894 = vmatprep.subr.bf16.mxu0 %v1573
        %1895 = vmatpush1.bf16.msra.mxu0 %v1572
        %1896 = vmatprep.subr.bf16.mxu0 %v1581
        %1897 = vmatpush1.bf16.msra.mxu0 %v1580
        %1898 = vmatprep.subr.bf16.mxu0 %v1589
        %1899 = vmatpush1.bf16.msra.mxu0 %v1588
        %1900 = vmatprep.subr.bf16.mxu0 %v1597
        %1901 = vmatpush1.bf16.msra.mxu0 %v1596
        %1902 = vmatprep.subr.bf16.mxu0 %v1605
        %1903 = vmatpush1.bf16.msra.mxu0 %v1604
        %1904 = vmatprep.subr.bf16.mxu0 %v1613
        %1905 = vmatpush1.bf16.msra.mxu0 %v1612
        %1906 = vmatprep.subr.bf16.mxu0 %v1621
        %1907 = vmatpush1.bf16.msra.mxu0 %v1620
        %1908 = vmatprep.subr.bf16.mxu0 %v1629
        %1909 = vmatpush1.bf16.msra.mxu0 %v1628
        %1910 = vmatprep.subr.bf16.mxu0 %v1637
        %1911 = vmatpush1.bf16.msra.mxu0 %v1636
        %1912 = vmatprep.subr.bf16.mxu0 %v1645
        %1913 = vmatpush1.bf16.msra.mxu0 %v1644
        %1914 = vmatprep.subr.bf16.mxu0 %v1653
        %1915 = vmatpush1.bf16.msra.mxu0 %v1652
        %1916 = vmatprep.subr.bf16.mxu0 %v1661
        %1917 = vmatpush1.bf16.msra.mxu0 %v1660
        %1918 = vmatprep.subr.bf16.mxu0 %v1669
        %1919 = vmatpush1.bf16.msra.mxu0 %v1668
        %1920 = vmatprep.subr.bf16.mxu0 %v1677
        %1921 = vmatpush1.bf16.msra.mxu0 %v1676
        %1922 = vmatprep.mubr.bf16.mxu0 %v1126
        %1923 = vmatmul.mubr.bf16.gmra.mrb[0].mxu0 %v1125
        %v1924 = vpop.f32.mrb[0].mxu0
        %v1925 = vadd.f32 %v1147, %v1924
        %v1926 = vpop.f32.mrb[0].mxu0
        %v1927 = vadd.f32 %v1151, %v1926
        %v1928 = vpop.f32.mrb[0].mxu0
        %v1929 = vpop.f32.mrb[0].mxu0
        %1930 = vdwg.mxu0
        %1931 = vmatprep.subr.bf16.mxu0 %v1559
        %1932 = vmatpush1.bf16.msra.mxu0 %v1558
        %1933 = vmatprep.subr.bf16.mxu0 %v1567
        %1934 = vmatpush1.bf16.msra.mxu0 %v1566
        %1935 = vmatprep.subr.bf16.mxu0 %v1575
        %1936 = vmatpush1.bf16.msra.mxu0 %v1574
        %1937 = vmatprep.subr.bf16.mxu0 %v1583
        %1938 = vmatpush1.bf16.msra.mxu0 %v1582
        %1939 = vmatprep.subr.bf16.mxu0 %v1591
        %1940 = vmatpush1.bf16.msra.mxu0 %v1590
        %1941 = vmatprep.subr.bf16.mxu0 %v1599
        %1942 = vmatpush1.bf16.msra.mxu0 %v1598
        %1943 = vmatprep.subr.bf16.mxu0 %v1607
        %1944 = vmatpush1.bf16.msra.mxu0 %v1606
        %1945 = vmatprep.subr.bf16.mxu0 %v1615
        %1946 = vmatpush1.bf16.msra.mxu0 %v1614
        %1947 = vmatprep.subr.bf16.mxu0 %v1623
        %1948 = vmatpush1.bf16.msra.mxu0 %v1622
        %1949 = vmatprep.subr.bf16.mxu0 %v1631
        %1950 = vmatpush1.bf16.msra.mxu0 %v1630
        %1951 = vmatprep.subr.bf16.mxu0 %v1639
        %1952 = vmatpush1.bf16.msra.mxu0 %v1638
        %1953 = vmatprep.subr.bf16.mxu0 %v1647
        %1954 = vmatpush1.bf16.msra.mxu0 %v1646
        %1955 = vmatprep.subr.bf16.mxu0 %v1655
        %1956 = vmatpush1.bf16.msra.mxu0 %v1654
        %1957 = vmatprep.subr.bf16.mxu0 %v1663
        %1958 = vmatpush1.bf16.msra.mxu0 %v1662
        %1959 = vmatprep.subr.bf16.mxu0 %v1671
        %1960 = vmatpush1.bf16.msra.mxu0 %v1670
        %1961 = vmatprep.subr.bf16.mxu0 %v1679
        %1962 = vmatpush1.bf16.msra.mxu0 %v1678
        %1963 = vmatprep.mubr.bf16.mxu0 %v1126
        %1964 = vmatmul.mubr.bf16.gmra.mrb[0].mxu0 %v1125
        %v1965 = vpop.f32.mrb[0].mxu0
        %v1966 = vadd.f32 %v1155, %v1965
        %v1967 = vpop.f32.mrb[0].mxu0
        %v1968 = vadd.f32 %v1159, %v1967
        %v1969 = vpop.f32.mrb[0].mxu0
        %v1970 = vpop.f32.mrb[0].mxu0
        %1971 = vdwg.mxu0
        %v1972 = vmax.f32 %v1843, 0.0
        %v1973 = vmax.f32 %v1845, 0.0
        %v1974 = vmax.f32 %v1884, 0.0
        %v1975 = vmax.f32 %v1886, 0.0
        %v1976 = vmax.f32 %v1925, 0.0
        %v1977 = vmax.f32 %v1927, 0.0
        %v1978 = vmax.f32 %v1966, 0.0
        %v1979 = vmax.f32 %v1968, 0.0
        %v1980 = vld [vmem:[#allocation8] sm:$0xf]
        %v1981 = vld [vmem:[#allocation8 + $0x4] sm:$0xf]
        %v1982 = vld [vmem:[#allocation8 + $0x8] sm:$0xf]
        %v1983 = vld [vmem:[#allocation8 + $0xc] sm:$0xf]
        %v1984 = vld [vmem:[#allocation8 + $0x10] sm:$0xf]
        %v1985 = vld [vmem:[#allocation8 + $0x14] sm:$0xf]
        %v1986 = vld [vmem:[#allocation8 + $0x18] sm:$0xf]
        %v1987 = vld [vmem:[#allocation8 + $0x1c] sm:$0xf]
        %v1988 = vld [vmem:[#allocation8 + $0x20] sm:$0xf]
        %v1989 = vld [vmem:[#allocation8 + $0x24] sm:$0xf]
        %v1990 = vld [vmem:[#allocation8 + $0x28] sm:$0xf]
        %v1991 = vld [vmem:[#allocation8 + $0x2c] sm:$0xf]
        %v1992 = vld [vmem:[#allocation8 + $0x30] sm:$0xf]
        %v1993 = vld [vmem:[#allocation8 + $0x34] sm:$0xf]
        %v1994 = vld [vmem:[#allocation8 + $0x38] sm:$0xf]
        %v1995 = vld [vmem:[#allocation8 + $0x3c] sm:$0xf]
        %v1996 = vld [vmem:[#allocation8 + $0x40] sm:$0xf]
        %v1997 = vld [vmem:[#allocation8 + $0x44] sm:$0xf]
        %v1998 = vld [vmem:[#allocation8 + $0x48] sm:$0xf]
        %v1999 = vld [vmem:[#allocation8 + $0x4c] sm:$0xf]
        %v2000 = vld [vmem:[#allocation8 + $0x50] sm:$0xf]
        %v2001 = vld [vmem:[#allocation8 + $0x54] sm:$0xf]
        %v2002 = vld [vmem:[#allocation8 + $0x58] sm:$0xf]
        %v2003 = vld [vmem:[#allocation8 + $0x5c] sm:$0xf]
        %v2004 = vld [vmem:[#allocation8 + $0x60] sm:$0xf]
        %v2005 = vld [vmem:[#allocation8 + $0x64] sm:$0xf]
        %v2006 = vld [vmem:[#allocation8 + $0x68] sm:$0xf]
        %v2007 = vld [vmem:[#allocation8 + $0x6c] sm:$0xf]
        %v2008 = vld [vmem:[#allocation8 + $0x70] sm:$0xf]
        %v2009 = vld [vmem:[#allocation8 + $0x74] sm:$0xf]
        %v2010 = vld [vmem:[#allocation8 + $0x78] sm:$0xf]
        %v2011 = vld [vmem:[#allocation8 + $0x7c] sm:$0xf]
        %v2012 = vld [vmem:[#allocation8 + $0x80] sm:$0xf]
        %v2013 = vld [vmem:[#allocation8 + $0x84] sm:$0xf]
        %v2014 = vld [vmem:[#allocation8 + $0x88] sm:$0xf]
        %v2015 = vld [vmem:[#allocation8 + $0x8c] sm:$0xf]
        %v2016 = vld [vmem:[#allocation8 + $0x90] sm:$0xf]
        %v2017 = vld [vmem:[#allocation8 + $0x94] sm:$0xf]
        %v2018 = vld [vmem:[#allocation8 + $0x98] sm:$0xf]
        %v2019 = vld [vmem:[#allocation8 + $0x9c] sm:$0xf]
        %v2020 = vld [vmem:[#allocation8 + $0xa0] sm:$0xf]
        %v2021 = vld [vmem:[#allocation8 + $0xa4] sm:$0xf]
        %v2022 = vld [vmem:[#allocation8 + $0xa8] sm:$0xf]
        %v2023 = vld [vmem:[#allocation8 + $0xac] sm:$0xf]
        %v2024 = vld [vmem:[#allocation8 + $0xb0] sm:$0xf]
        %v2025 = vld [vmem:[#allocation8 + $0xb4] sm:$0xf]
        %v2026 = vld [vmem:[#allocation8 + $0xb8] sm:$0xf]
        %v2027 = vld [vmem:[#allocation8 + $0xbc] sm:$0xf]
        %v2028 = vld [vmem:[#allocation8 + $0xc0] sm:$0xf]
        %v2029 = vld [vmem:[#allocation8 + $0xc4] sm:$0xf]
        %v2030 = vld [vmem:[#allocation8 + $0xc8] sm:$0xf]
        %v2031 = vld [vmem:[#allocation8 + $0xcc] sm:$0xf]
        %v2032 = vld [vmem:[#allocation8 + $0xd0] sm:$0xf]
        %v2033 = vld [vmem:[#allocation8 + $0xd4] sm:$0xf]
        %v2034 = vld [vmem:[#allocation8 + $0xd8] sm:$0xf]
        %v2035 = vld [vmem:[#allocation8 + $0xdc] sm:$0xf]
        %v2036 = vld [vmem:[#allocation8 + $0xe0] sm:$0xf]
        %v2037 = vld [vmem:[#allocation8 + $0xe4] sm:$0xf]
        %v2038 = vld [vmem:[#allocation8 + $0xe8] sm:$0xf]
        %v2039 = vld [vmem:[#allocation8 + $0xec] sm:$0xf]
        %v2040 = vld [vmem:[#allocation8 + $0xf0] sm:$0xf]
        %v2041 = vld [vmem:[#allocation8 + $0xf4] sm:$0xf]
        %v2042 = vld [vmem:[#allocation8 + $0xf8] sm:$0xf]
        %v2043 = vld [vmem:[#allocation8 + $0xfc] sm:$0xf]
        %v2044 = vld [vmem:[#allocation8 + $0x100] sm:$0xf]
        %v2045 = vld [vmem:[#allocation8 + $0x104] sm:$0xf]
        %v2046 = vld [vmem:[#allocation8 + $0x108] sm:$0xf]
        %v2047 = vld [vmem:[#allocation8 + $0x10c] sm:$0xf]
        %v2048 = vld [vmem:[#allocation8 + $0x110] sm:$0xf]
        %v2049 = vld [vmem:[#allocation8 + $0x114] sm:$0xf]
        %v2050 = vld [vmem:[#allocation8 + $0x118] sm:$0xf]
        %v2051 = vld [vmem:[#allocation8 + $0x11c] sm:$0xf]
        %v2052 = vld [vmem:[#allocation8 + $0x120] sm:$0xf]
        %v2053 = vld [vmem:[#allocation8 + $0x124] sm:$0xf]
        %v2054 = vld [vmem:[#allocation8 + $0x128] sm:$0xf]
        %v2055 = vld [vmem:[#allocation8 + $0x12c] sm:$0xf]
        %v2056 = vld [vmem:[#allocation8 + $0x130] sm:$0xf]
        %v2057 = vld [vmem:[#allocation8 + $0x134] sm:$0xf]
        %v2058 = vld [vmem:[#allocation8 + $0x138] sm:$0xf]
        %v2059 = vld [vmem:[#allocation8 + $0x13c] sm:$0xf]
        %v2060 = vld [vmem:[#allocation8 + $0x140] sm:$0xf]
        %v2061 = vld [vmem:[#allocation8 + $0x144] sm:$0xf]
        %v2062 = vld [vmem:[#allocation8 + $0x148] sm:$0xf]
        %v2063 = vld [vmem:[#allocation8 + $0x14c] sm:$0xf]
        %v2064 = vld [vmem:[#allocation8 + $0x150] sm:$0xf]
        %v2065 = vld [vmem:[#allocation8 + $0x154] sm:$0xf]
        %v2066 = vld [vmem:[#allocation8 + $0x158] sm:$0xf]
        %v2067 = vld [vmem:[#allocation8 + $0x15c] sm:$0xf]
        %v2068 = vld [vmem:[#allocation8 + $0x160] sm:$0xf]
        %v2069 = vld [vmem:[#allocation8 + $0x164] sm:$0xf]
        %v2070 = vld [vmem:[#allocation8 + $0x168] sm:$0xf]
        %v2071 = vld [vmem:[#allocation8 + $0x16c] sm:$0xf]
        %v2072 = vld [vmem:[#allocation8 + $0x170] sm:$0xf]
        %v2073 = vld [vmem:[#allocation8 + $0x174] sm:$0xf]
        %v2074 = vld [vmem:[#allocation8 + $0x178] sm:$0xf]
        %v2075 = vld [vmem:[#allocation8 + $0x17c] sm:$0xf]
        %v2076 = vld [vmem:[#allocation8 + $0x180] sm:$0xf]
        %v2077 = vld [vmem:[#allocation8 + $0x184] sm:$0xf]
        %v2078 = vld [vmem:[#allocation8 + $0x188] sm:$0xf]
        %v2079 = vld [vmem:[#allocation8 + $0x18c] sm:$0xf]
        %v2080 = vld [vmem:[#allocation8 + $0x190] sm:$0xf]
        %v2081 = vld [vmem:[#allocation8 + $0x194] sm:$0xf]
        %v2082 = vld [vmem:[#allocation8 + $0x198] sm:$0xf]
        %v2083 = vld [vmem:[#allocation8 + $0x19c] sm:$0xf]
        %v2084 = vld [vmem:[#allocation8 + $0x1a0] sm:$0xf]
        %v2085 = vld [vmem:[#allocation8 + $0x1a4] sm:$0xf]
        %v2086 = vld [vmem:[#allocation8 + $0x1a8] sm:$0xf]
        %v2087 = vld [vmem:[#allocation8 + $0x1ac] sm:$0xf]
        %v2088 = vld [vmem:[#allocation8 + $0x1b0] sm:$0xf]
        %v2089 = vld [vmem:[#allocation8 + $0x1b4] sm:$0xf]
        %v2090 = vld [vmem:[#allocation8 + $0x1b8] sm:$0xf]
        %v2091 = vld [vmem:[#allocation8 + $0x1bc] sm:$0xf]
        %v2092 = vld [vmem:[#allocation8 + $0x1c0] sm:$0xf]
        %v2093 = vld [vmem:[#allocation8 + $0x1c4] sm:$0xf]
        %v2094 = vld [vmem:[#allocation8 + $0x1c8] sm:$0xf]
        %v2095 = vld [vmem:[#allocation8 + $0x1cc] sm:$0xf]
        %v2096 = vld [vmem:[#allocation8 + $0x1d0] sm:$0xf]
        %v2097 = vld [vmem:[#allocation8 + $0x1d4] sm:$0xf]
        %v2098 = vld [vmem:[#allocation8 + $0x1d8] sm:$0xf]
        %v2099 = vld [vmem:[#allocation8 + $0x1dc] sm:$0xf]
        %v2100 = vld [vmem:[#allocation8 + $0x1e0] sm:$0xf]
        %v2101 = vld [vmem:[#allocation8 + $0x1e4] sm:$0xf]
        %v2102 = vld [vmem:[#allocation8 + $0x1e8] sm:$0xf]
        %v2103 = vld [vmem:[#allocation8 + $0x1ec] sm:$0xf]
        %v2104 = vld [vmem:[#allocation8 + $0x1f0] sm:$0xf]
        %v2105 = vld [vmem:[#allocation8 + $0x1f4] sm:$0xf]
        %v2106 = vld [vmem:[#allocation8 + $0x1f8] sm:$0xf]
        %v2107 = vld [vmem:[#allocation8 + $0x1fc] sm:$0xf]
        %v2108 = vld [vmem:[#allocation10] sm:$0x1]
        %v2109 = vpack.c.bf16 %v1972, %v1972
        %v2110 = vpack.c.bf16 %v1973, %v1973
        %v2111 = vpack.c.bf16 %v1974, %v1974
        %v2112 = vpack.c.bf16 %v1975, %v1975
        %v2113 = vpack.c.bf16 %v1976, %v1976
        %v2114 = vpack.c.bf16 %v1977, %v1977
        %v2115 = vpack.c.bf16 %v1978, %v1978
        %v2116 = vpack.c.bf16 %v1979, %v1979
        %v2118 = vlaneseq
        %v2119 = vshrl.u32 %v2118, 7
        %v2120 = vsub.s32 0, %v2119
        %v2121 = vrot.slane %v2108, %v2120
        %v2251 = vunpack.c.l.b16 %v1980
        %v2252 = vunpack.c.l.b16 %v1981
        %v2253 = vunpack.c.l.b16 %v1982
        %v2254 = vunpack.c.l.b16 %v1983
        %v2255 = vunpack.c.l.b16 %v1984
        %v2256 = vunpack.c.l.b16 %v1985
        %v2257 = vunpack.c.l.b16 %v1986
        %v2258 = vunpack.c.l.b16 %v1987
        %v2259 = vunpack.c.l.b16 %v1988
        %v2260 = vunpack.c.l.b16 %v1989
        %v2261 = vunpack.c.l.b16 %v1990
        %v2262 = vunpack.c.l.b16 %v1991
        %v2263 = vunpack.c.l.b16 %v1992
        %v2264 = vunpack.c.l.b16 %v1993
        %v2265 = vunpack.c.l.b16 %v1994
        %v2266 = vunpack.c.l.b16 %v1995
        %v2267 = vunpack.c.l.b16 %v1996
        %v2268 = vunpack.c.l.b16 %v1997
        %v2269 = vunpack.c.l.b16 %v1998
        %v2270 = vunpack.c.l.b16 %v1999
        %v2271 = vunpack.c.l.b16 %v2000
        %v2272 = vunpack.c.l.b16 %v2001
        %v2273 = vunpack.c.l.b16 %v2002
        %v2274 = vunpack.c.l.b16 %v2003
        %v2275 = vunpack.c.l.b16 %v2004
        %v2276 = vunpack.c.l.b16 %v2005
        %v2277 = vunpack.c.l.b16 %v2006
        %v2278 = vunpack.c.l.b16 %v2007
        %v2279 = vunpack.c.l.b16 %v2008
        %v2280 = vunpack.c.l.b16 %v2009
        %v2281 = vunpack.c.l.b16 %v2010
        %v2282 = vunpack.c.l.b16 %v2011
        %v2283 = vunpack.c.l.b16 %v2012
        %v2284 = vunpack.c.l.b16 %v2013
        %v2285 = vunpack.c.l.b16 %v2014
        %v2286 = vunpack.c.l.b16 %v2015
        %v2287 = vunpack.c.l.b16 %v2016
        %v2288 = vunpack.c.l.b16 %v2017
        %v2289 = vunpack.c.l.b16 %v2018
        %v2290 = vunpack.c.l.b16 %v2019
        %v2291 = vunpack.c.l.b16 %v2020
        %v2292 = vunpack.c.l.b16 %v2021
        %v2293 = vunpack.c.l.b16 %v2022
        %v2294 = vunpack.c.l.b16 %v2023
        %v2295 = vunpack.c.l.b16 %v2024
        %v2296 = vunpack.c.l.b16 %v2025
        %v2297 = vunpack.c.l.b16 %v2026
        %v2298 = vunpack.c.l.b16 %v2027
        %v2299 = vunpack.c.l.b16 %v2028
        %v2300 = vunpack.c.l.b16 %v2029
        %v2301 = vunpack.c.l.b16 %v2030
        %v2302 = vunpack.c.l.b16 %v2031
        %v2303 = vunpack.c.l.b16 %v2032
        %v2304 = vunpack.c.l.b16 %v2033
        %v2305 = vunpack.c.l.b16 %v2034
        %v2306 = vunpack.c.l.b16 %v2035
        %v2307 = vunpack.c.l.b16 %v2036
        %v2308 = vunpack.c.l.b16 %v2037
        %v2309 = vunpack.c.l.b16 %v2038
        %v2310 = vunpack.c.l.b16 %v2039
        %v2311 = vunpack.c.l.b16 %v2040
        %v2312 = vunpack.c.l.b16 %v2041
        %v2313 = vunpack.c.l.b16 %v2042
        %v2314 = vunpack.c.l.b16 %v2043
        %v2315 = vunpack.c.l.b16 %v2044
        %v2316 = vunpack.c.l.b16 %v2045
        %v2317 = vunpack.c.l.b16 %v2046
        %v2318 = vunpack.c.l.b16 %v2047
        %v2319 = vunpack.c.l.b16 %v2048
        %v2320 = vunpack.c.l.b16 %v2049
        %v2321 = vunpack.c.l.b16 %v2050
        %v2322 = vunpack.c.l.b16 %v2051
        %v2323 = vunpack.c.l.b16 %v2052
        %v2324 = vunpack.c.l.b16 %v2053
        %v2325 = vunpack.c.l.b16 %v2054
        %v2326 = vunpack.c.l.b16 %v2055
        %v2327 = vunpack.c.l.b16 %v2056
        %v2328 = vunpack.c.l.b16 %v2057
        %v2329 = vunpack.c.l.b16 %v2058
        %v2330 = vunpack.c.l.b16 %v2059
        %v2331 = vunpack.c.l.b16 %v2060
        %v2332 = vunpack.c.l.b16 %v2061
        %v2333 = vunpack.c.l.b16 %v2062
        %v2334 = vunpack.c.l.b16 %v2063
        %v2335 = vunpack.c.l.b16 %v2064
        %v2336 = vunpack.c.l.b16 %v2065
        %v2337 = vunpack.c.l.b16 %v2066
        %v2338 = vunpack.c.l.b16 %v2067
        %v2339 = vunpack.c.l.b16 %v2068
        %v2340 = vunpack.c.l.b16 %v2069
        %v2341 = vunpack.c.l.b16 %v2070
        %v2342 = vunpack.c.l.b16 %v2071
        %v2343 = vunpack.c.l.b16 %v2072
        %v2344 = vunpack.c.l.b16 %v2073
        %v2345 = vunpack.c.l.b16 %v2074
        %v2346 = vunpack.c.l.b16 %v2075
        %v2347 = vunpack.c.l.b16 %v2076
        %v2348 = vunpack.c.l.b16 %v2077
        %v2349 = vunpack.c.l.b16 %v2078
        %v2350 = vunpack.c.l.b16 %v2079
        %v2351 = vunpack.c.l.b16 %v2080
        %v2352 = vunpack.c.l.b16 %v2081
        %v2353 = vunpack.c.l.b16 %v2082
        %v2354 = vunpack.c.l.b16 %v2083
        %v2355 = vunpack.c.l.b16 %v2084
        %v2356 = vunpack.c.l.b16 %v2085
        %v2357 = vunpack.c.l.b16 %v2086
        %v2358 = vunpack.c.l.b16 %v2087
        %v2359 = vunpack.c.l.b16 %v2088
        %v2360 = vunpack.c.l.b16 %v2089
        %v2361 = vunpack.c.l.b16 %v2090
        %v2362 = vunpack.c.l.b16 %v2091
        %v2363 = vunpack.c.l.b16 %v2092
        %v2364 = vunpack.c.l.b16 %v2093
        %v2365 = vunpack.c.l.b16 %v2094
        %v2366 = vunpack.c.l.b16 %v2095
        %v2367 = vunpack.c.l.b16 %v2096
        %v2368 = vunpack.c.l.b16 %v2097
        %v2369 = vunpack.c.l.b16 %v2098
        %v2370 = vunpack.c.l.b16 %v2099
        %v2371 = vunpack.c.l.b16 %v2100
        %v2372 = vunpack.c.l.b16 %v2101
        %v2373 = vunpack.c.l.b16 %v2102
        %v2374 = vunpack.c.l.b16 %v2103
        %v2375 = vunpack.c.l.b16 %v2104
        %v2376 = vunpack.c.l.b16 %v2105
        %v2377 = vunpack.c.l.b16 %v2106
        %v2378 = vunpack.c.l.b16 %v2107
        %v2379 = vpack.c.b16 %v2252, %v2251
        %v2380 = vpack.c.b16 %v2254, %v2253
        %v2381 = vpack.c.b16 %v2256, %v2255
        %v2382 = vpack.c.b16 %v2258, %v2257
        %v2383 = vpack.c.b16 %v2260, %v2259
        %v2384 = vpack.c.b16 %v2262, %v2261
        %v2385 = vpack.c.b16 %v2264, %v2263
        %v2386 = vpack.c.b16 %v2266, %v2265
        %v2387 = vpack.c.b16 %v2268, %v2267
        %v2388 = vpack.c.b16 %v2270, %v2269
        %v2389 = vpack.c.b16 %v2272, %v2271
        %v2390 = vpack.c.b16 %v2274, %v2273
        %v2391 = vpack.c.b16 %v2276, %v2275
        %v2392 = vpack.c.b16 %v2278, %v2277
        %v2393 = vpack.c.b16 %v2280, %v2279
        %v2394 = vpack.c.b16 %v2282, %v2281
        %v2395 = vpack.c.b16 %v2284, %v2283
        %v2396 = vpack.c.b16 %v2286, %v2285
        %v2397 = vpack.c.b16 %v2288, %v2287
        %v2398 = vpack.c.b16 %v2290, %v2289
        %v2399 = vpack.c.b16 %v2292, %v2291
        %v2400 = vpack.c.b16 %v2294, %v2293
        %v2401 = vpack.c.b16 %v2296, %v2295
        %v2402 = vpack.c.b16 %v2298, %v2297
        %v2403 = vpack.c.b16 %v2300, %v2299
        %v2404 = vpack.c.b16 %v2302, %v2301
        %v2405 = vpack.c.b16 %v2304, %v2303
        %v2406 = vpack.c.b16 %v2306, %v2305
        %v2407 = vpack.c.b16 %v2308, %v2307
        %v2408 = vpack.c.b16 %v2310, %v2309
        %v2409 = vpack.c.b16 %v2312, %v2311
        %v2410 = vpack.c.b16 %v2314, %v2313
        %v2411 = vpack.c.b16 %v2316, %v2315
        %v2412 = vpack.c.b16 %v2318, %v2317
        %v2413 = vpack.c.b16 %v2320, %v2319
        %v2414 = vpack.c.b16 %v2322, %v2321
        %v2415 = vpack.c.b16 %v2324, %v2323
        %v2416 = vpack.c.b16 %v2326, %v2325
        %v2417 = vpack.c.b16 %v2328, %v2327
        %v2418 = vpack.c.b16 %v2330, %v2329
        %v2419 = vpack.c.b16 %v2332, %v2331
        %v2420 = vpack.c.b16 %v2334, %v2333
        %v2421 = vpack.c.b16 %v2336, %v2335
        %v2422 = vpack.c.b16 %v2338, %v2337
        %v2423 = vpack.c.b16 %v2340, %v2339
        %v2424 = vpack.c.b16 %v2342, %v2341
        %v2425 = vpack.c.b16 %v2344, %v2343
        %v2426 = vpack.c.b16 %v2346, %v2345
        %v2427 = vpack.c.b16 %v2348, %v2347
        %v2428 = vpack.c.b16 %v2350, %v2349
        %v2429 = vpack.c.b16 %v2352, %v2351
        %v2430 = vpack.c.b16 %v2354, %v2353
        %v2431 = vpack.c.b16 %v2356, %v2355
        %v2432 = vpack.c.b16 %v2358, %v2357
        %v2433 = vpack.c.b16 %v2360, %v2359
        %v2434 = vpack.c.b16 %v2362, %v2361
        %v2435 = vpack.c.b16 %v2364, %v2363
        %v2436 = vpack.c.b16 %v2366, %v2365
        %v2437 = vpack.c.b16 %v2368, %v2367
        %v2438 = vpack.c.b16 %v2370, %v2369
        %v2439 = vpack.c.b16 %v2372, %v2371
        %v2440 = vpack.c.b16 %v2374, %v2373
        %v2441 = vpack.c.b16 %v2376, %v2375
        %v2442 = vpack.c.b16 %v2378, %v2377
        %2507 = vmatprep.subr.bf16.mxu0 0
        %2508 = vmatpush1.bf16.msra.mxu0 %v2379
        %2509 = vmatprep.subr.bf16.mxu0 0
        %2510 = vmatpush1.bf16.msra.mxu0 %v2380
        %2511 = vmatprep.subr.bf16.mxu0 0
        %2512 = vmatpush1.bf16.msra.mxu0 %v2381
        %2513 = vmatprep.subr.bf16.mxu0 0
        %2514 = vmatpush1.bf16.msra.mxu0 %v2382
        %2515 = vmatprep.subr.bf16.mxu0 0
        %2516 = vmatpush1.bf16.msra.mxu0 %v2383
        %2517 = vmatprep.subr.bf16.mxu0 0
        %2518 = vmatpush1.bf16.msra.mxu0 %v2384
        %2519 = vmatprep.subr.bf16.mxu0 0
        %2520 = vmatpush1.bf16.msra.mxu0 %v2385
        %2521 = vmatprep.subr.bf16.mxu0 0
        %2522 = vmatpush1.bf16.msra.mxu0 %v2386
        %2523 = vmatprep.subr.bf16.mxu0 0
        %2524 = vmatpush1.bf16.msra.mxu0 %v2387
        %2525 = vmatprep.subr.bf16.mxu0 0
        %2526 = vmatpush1.bf16.msra.mxu0 %v2388
        %2527 = vmatprep.subr.bf16.mxu0 0
        %2528 = vmatpush1.bf16.msra.mxu0 %v2389
        %2529 = vmatprep.subr.bf16.mxu0 0
        %2530 = vmatpush1.bf16.msra.mxu0 %v2390
        %2531 = vmatprep.subr.bf16.mxu0 0
        %2532 = vmatpush1.bf16.msra.mxu0 %v2391
        %2533 = vmatprep.subr.bf16.mxu0 0
        %2534 = vmatpush1.bf16.msra.mxu0 %v2392
        %2535 = vmatprep.subr.bf16.mxu0 0
        %2536 = vmatpush1.bf16.msra.mxu0 %v2393
        %2537 = vmatprep.subr.bf16.mxu0 0
        %2538 = vmatpush1.bf16.msra.mxu0 %v2394
        %2539 = vmatprep.mubr.bf16.mxu0 %v2110
        %2540 = vmatmul.mubr.bf16.gmra.mrb[0].mxu0 %v2109
        %v2541 = vpop.f32.mrb[0].mxu0
        %v2542 = vadd.f32 %v2121, %v2541
        %v2543 = vpop.f32.mrb[0].mxu0
        %v2544 = vpop.f32.mrb[0].mxu0
        %v2545 = vpop.f32.mrb[0].mxu0
        %2546 = vdwg.mxu0
        %2547 = vmatprep.subr.bf16.mxu0 0
        %2548 = vmatpush1.bf16.msra.mxu0 %v2395
        %2549 = vmatprep.subr.bf16.mxu0 0
        %2550 = vmatpush1.bf16.msra.mxu0 %v2396
        %2551 = vmatprep.subr.bf16.mxu0 0
        %2552 = vmatpush1.bf16.msra.mxu0 %v2397
        %2553 = vmatprep.subr.bf16.mxu0 0
        %2554 = vmatpush1.bf16.msra.mxu0 %v2398
        %2555 = vmatprep.subr.bf16.mxu0 0
        %2556 = vmatpush1.bf16.msra.mxu0 %v2399
        %2557 = vmatprep.subr.bf16.mxu0 0
        %2558 = vmatpush1.bf16.msra.mxu0 %v2400
        %2559 = vmatprep.subr.bf16.mxu0 0
        %2560 = vmatpush1.bf16.msra.mxu0 %v2401
        %2561 = vmatprep.subr.bf16.mxu0 0
        %2562 = vmatpush1.bf16.msra.mxu0 %v2402
        %2563 = vmatprep.subr.bf16.mxu0 0
        %2564 = vmatpush1.bf16.msra.mxu0 %v2403
        %2565 = vmatprep.subr.bf16.mxu0 0
        %2566 = vmatpush1.bf16.msra.mxu0 %v2404
        %2567 = vmatprep.subr.bf16.mxu0 0
        %2568 = vmatpush1.bf16.msra.mxu0 %v2405
        %2569 = vmatprep.subr.bf16.mxu0 0
        %2570 = vmatpush1.bf16.msra.mxu0 %v2406
        %2571 = vmatprep.subr.bf16.mxu0 0
        %2572 = vmatpush1.bf16.msra.mxu0 %v2407
        %2573 = vmatprep.subr.bf16.mxu0 0
        %2574 = vmatpush1.bf16.msra.mxu0 %v2408
        %2575 = vmatprep.subr.bf16.mxu0 0
        %2576 = vmatpush1.bf16.msra.mxu0 %v2409
        %2577 = vmatprep.subr.bf16.mxu0 0
        %2578 = vmatpush1.bf16.msra.mxu0 %v2410
        %2579 = vmatprep.mubr.bf16.mxu0 %v2112
        %2580 = vmatmul.mubr.bf16.gmra.mrb[0].mxu0 %v2111
        %v2581 = vpop.f32.mrb[0].mxu0
        %v2582 = vadd.f32 %v2542, %v2581
        %v2583 = vpop.f32.mrb[0].mxu0
        %v2584 = vpop.f32.mrb[0].mxu0
        %v2585 = vpop.f32.mrb[0].mxu0
        %2586 = vdwg.mxu0
        %2587 = vmatprep.subr.bf16.mxu0 0
        %2588 = vmatpush1.bf16.msra.mxu0 %v2411
        %2589 = vmatprep.subr.bf16.mxu0 0
        %2590 = vmatpush1.bf16.msra.mxu0 %v2412
        %2591 = vmatprep.subr.bf16.mxu0 0
        %2592 = vmatpush1.bf16.msra.mxu0 %v2413
        %2593 = vmatprep.subr.bf16.mxu0 0
        %2594 = vmatpush1.bf16.msra.mxu0 %v2414
        %2595 = vmatprep.subr.bf16.mxu0 0
        %2596 = vmatpush1.bf16.msra.mxu0 %v2415
        %2597 = vmatprep.subr.bf16.mxu0 0
        %2598 = vmatpush1.bf16.msra.mxu0 %v2416
        %2599 = vmatprep.subr.bf16.mxu0 0
        %2600 = vmatpush1.bf16.msra.mxu0 %v2417
        %2601 = vmatprep.subr.bf16.mxu0 0
        %2602 = vmatpush1.bf16.msra.mxu0 %v2418
        %2603 = vmatprep.subr.bf16.mxu0 0
        %2604 = vmatpush1.bf16.msra.mxu0 %v2419
        %2605 = vmatprep.subr.bf16.mxu0 0
        %2606 = vmatpush1.bf16.msra.mxu0 %v2420
        %2607 = vmatprep.subr.bf16.mxu0 0
        %2608 = vmatpush1.bf16.msra.mxu0 %v2421
        %2609 = vmatprep.subr.bf16.mxu0 0
        %2610 = vmatpush1.bf16.msra.mxu0 %v2422
        %2611 = vmatprep.subr.bf16.mxu0 0
        %2612 = vmatpush1.bf16.msra.mxu0 %v2423
        %2613 = vmatprep.subr.bf16.mxu0 0
        %2614 = vmatpush1.bf16.msra.mxu0 %v2424
        %2615 = vmatprep.subr.bf16.mxu0 0
        %2616 = vmatpush1.bf16.msra.mxu0 %v2425
        %2617 = vmatprep.subr.bf16.mxu0 0
        %2618 = vmatpush1.bf16.msra.mxu0 %v2426
        %2619 = vmatprep.mubr.bf16.mxu0 %v2114
        %2620 = vmatmul.mubr.bf16.gmra.mrb[0].mxu0 %v2113
        %v2621 = vpop.f32.mrb[0].mxu0
        %v2622 = vadd.f32 %v2582, %v2621
        %v2623 = vpop.f32.mrb[0].mxu0
        %v2624 = vpop.f32.mrb[0].mxu0
        %v2625 = vpop.f32.mrb[0].mxu0
        %2626 = vdwg.mxu0
        %2627 = vmatprep.subr.bf16.mxu0 0
        %2628 = vmatpush1.bf16.msra.mxu0 %v2427
        %2629 = vmatprep.subr.bf16.mxu0 0
        %2630 = vmatpush1.bf16.msra.mxu0 %v2428
        %2631 = vmatprep.subr.bf16.mxu0 0
        %2632 = vmatpush1.bf16.msra.mxu0 %v2429
        %2633 = vmatprep.subr.bf16.mxu0 0
        %2634 = vmatpush1.bf16.msra.mxu0 %v2430
        %2635 = vmatprep.subr.bf16.mxu0 0
        %2636 = vmatpush1.bf16.msra.mxu0 %v2431
        %2637 = vmatprep.subr.bf16.mxu0 0
        %2638 = vmatpush1.bf16.msra.mxu0 %v2432
        %2639 = vmatprep.subr.bf16.mxu0 0
        %2640 = vmatpush1.bf16.msra.mxu0 %v2433
        %2641 = vmatprep.subr.bf16.mxu0 0
        %2642 = vmatpush1.bf16.msra.mxu0 %v2434
        %2643 = vmatprep.subr.bf16.mxu0 0
        %2644 = vmatpush1.bf16.msra.mxu0 %v2435
        %2645 = vmatprep.subr.bf16.mxu0 0
        %2646 = vmatpush1.bf16.msra.mxu0 %v2436
        %2647 = vmatprep.subr.bf16.mxu0 0
        %2648 = vmatpush1.bf16.msra.mxu0 %v2437
        %2649 = vmatprep.subr.bf16.mxu0 0
        %2650 = vmatpush1.bf16.msra.mxu0 %v2438
        %2651 = vmatprep.subr.bf16.mxu0 0
        %2652 = vmatpush1.bf16.msra.mxu0 %v2439
        %2653 = vmatprep.subr.bf16.mxu0 0
        %2654 = vmatpush1.bf16.msra.mxu0 %v2440
        %2655 = vmatprep.subr.bf16.mxu0 0
        %2656 = vmatpush1.bf16.msra.mxu0 %v2441
        %2657 = vmatprep.subr.bf16.mxu0 0
        %2658 = vmatpush1.bf16.msra.mxu0 %v2442
        %2659 = vmatprep.mubr.bf16.mxu0 %v2116
        %2660 = vmatmul.mubr.bf16.gmra.mrb[0].mxu0 %v2115
        %v2661 = vpop.f32.mrb[0].mxu0
        %v2662 = vadd.f32 %v2622, %v2661
        %v2663 = vpop.f32.mrb[0].mxu0
        %v2664 = vpop.f32.mrb[0].mxu0
        %v2665 = vpop.f32.mrb[0].mxu0
        %2666 = vdwg.mxu0
        %v2667 = vmax.f32 %v2662, 0.0
        %v2668 = vld [vmem:[%s5] sm:$0xf]
        %v2669 = vld [vmem:[%s5 + $0x4] sm:$0xf]
        %v2670 = vld [vmem:[%s5 + $0x8] sm:$0xf]
        %v2671 = vld [vmem:[%s5 + $0xc] sm:$0xf]
        %v2672 = vld [vmem:[%s5 + $0x10] sm:$0xf]
        %v2673 = vld [vmem:[%s5 + $0x14] sm:$0xf]
        %v2674 = vld [vmem:[%s5 + $0x18] sm:$0xf]
        %v2675 = vld [vmem:[%s5 + $0x1c] sm:$0xf]
        %v2676 = vld [vmem:[%s5 + $0x20] sm:$0xf]
        %v2677 = vld [vmem:[%s5 + $0x24] sm:$0xf]
        %v2678 = vld [vmem:[%s5 + $0x28] sm:$0xf]
        %v2679 = vld [vmem:[%s5 + $0x2c] sm:$0xf]
        %v2680 = vld [vmem:[%s5 + $0x30] sm:$0xf]
        %v2681 = vld [vmem:[%s5 + $0x34] sm:$0xf]
        %v2682 = vld [vmem:[%s5 + $0x38] sm:$0xf]
        %v2683 = vld [vmem:[%s5 + $0x3c] sm:$0xf]
        %v2684 = vld [vmem:[#allocation11] sm:$0x1]
        %v2685 = vpack.c.bf16 %v2667, %v2667
        %v2687 = vlaneseq
        %v2688 = vshrl.u32 %v2687, 7
        %v2689 = vsub.s32 0, %v2688
        %v2690 = vrot.slane %v2684, %v2689
        %v2708 = vunpack.c.l.b16 %v2668
        %v2709 = vunpack.c.l.b16 %v2669
        %v2710 = vunpack.c.l.b16 %v2670
        %v2711 = vunpack.c.l.b16 %v2671
        %v2712 = vunpack.c.l.b16 %v2672
        %v2713 = vunpack.c.l.b16 %v2673
        %v2714 = vunpack.c.l.b16 %v2674
        %v2715 = vunpack.c.l.b16 %v2675
        %v2716 = vunpack.c.l.b16 %v2676
        %v2717 = vunpack.c.l.b16 %v2677
        %v2718 = vunpack.c.l.b16 %v2678
        %v2719 = vunpack.c.l.b16 %v2679
        %v2720 = vunpack.c.l.b16 %v2680
        %v2721 = vunpack.c.l.b16 %v2681
        %v2722 = vunpack.c.l.b16 %v2682
        %v2723 = vunpack.c.l.b16 %v2683
        %v2724 = vpack.c.b16 %v2709, %v2708
        %v2725 = vpack.c.b16 %v2711, %v2710
        %v2726 = vpack.c.b16 %v2713, %v2712
        %v2727 = vpack.c.b16 %v2715, %v2714
        %v2728 = vpack.c.b16 %v2717, %v2716
        %v2729 = vpack.c.b16 %v2719, %v2718
        %v2730 = vpack.c.b16 %v2721, %v2720
        %v2731 = vpack.c.b16 %v2723, %v2722
        %2740 = vmatprep.subr.bf16.mxu0 0
        %2741 = vmatpush1.bf16.msra.mxu0 %v2724
        %2742 = vmatprep.subr.bf16.mxu0 0
        %2743 = vmatpush1.bf16.msra.mxu0 %v2725
        %2744 = vmatprep.subr.bf16.mxu0 0
        %2745 = vmatpush1.bf16.msra.mxu0 %v2726
        %2746 = vmatprep.subr.bf16.mxu0 0
        %2747 = vmatpush1.bf16.msra.mxu0 %v2727
        %2748 = vmatprep.subr.bf16.mxu0 0
        %2749 = vmatpush1.bf16.msra.mxu0 %v2728
        %2750 = vmatprep.subr.bf16.mxu0 0
        %2751 = vmatpush1.bf16.msra.mxu0 %v2729
        %2752 = vmatprep.subr.bf16.mxu0 0
        %2753 = vmatpush1.bf16.msra.mxu0 %v2730
        %2754 = vmatprep.subr.bf16.mxu0 0
        %2755 = vmatpush1.bf16.msra.mxu0 %v2731
        %2756 = vmatprep.subr.bf16.mxu0 0
        %2757 = vmatpush1.bf16.msra.mxu0 0
        %2758 = vmatprep.subr.bf16.mxu0 0
        %2759 = vmatpush1.bf16.msra.mxu0 0
        %2760 = vmatprep.subr.bf16.mxu0 0
        %2761 = vmatpush1.bf16.msra.mxu0 0
        %2762 = vmatprep.subr.bf16.mxu0 0
        %2763 = vmatpush1.bf16.msra.mxu0 0
        %2764 = vmatprep.subr.bf16.mxu0 0
        %2765 = vmatpush1.bf16.msra.mxu0 0
        %2766 = vmatprep.subr.bf16.mxu0 0
        %2767 = vmatpush1.bf16.msra.mxu0 0
        %2768 = vmatprep.subr.bf16.mxu0 0
        %2769 = vmatpush1.bf16.msra.mxu0 0
        %2770 = vmatprep.subr.bf16.mxu0 0
        %2771 = vmatpush1.bf16.msra.mxu0 0
        %2772 = vmatprep.mubr.bf16.mxu0 0
        %2773 = vmatmul.mubr.bf16.gmra.mrb[0].mxu0 %v2685
        %v2774 = vpop.f32.mrb[0].mxu0
        %v2775 = vadd.f32 %v2690, %v2774
        %v2776 = vpop.f32.mrb[0].mxu0
        %v2777 = vpop.f32.mrb[0].mxu0
        %v2778 = vpop.f32.mrb[0].mxu0
        %2779 = vdwg.mxu0
        %v2780 = vmax.f32 %v2775, 0.0
        %v2781 = vld [vmem:[%s7] sm:$0xf]
        %v2782 = vld [vmem:[%s7 + $0x4] sm:$0xf]
        %v2783 = vld [vmem:[%s7 + $0x8] sm:$0xf]
        %v2784 = vld [vmem:[%s7 + $0xc] sm:$0xf]
        %v2785 = vld [vmem:[%s7 + $0x10] sm:$0xf]
        %v2786 = vld [vmem:[%s7 + $0x14] sm:$0xf]
        %v2787 = vld [vmem:[%s7 + $0x18] sm:$0xf]
        %v2788 = vld [vmem:[%s7 + $0x1c] sm:$0xf]
        %v2789 = vld [vmem:[#allocation13] sm:$0x1]
        %v2790 = vpack.c.bf16 %v2780, %v2780
        %v2792 = vlaneseq
        %v2793 = vshrl.u32 %v2792, 7
        %v2794 = vsub.s32 0, %v2793
        %v2795 = vrot.slane %v2789, %v2794
        %v2805 = vunpack.c.l.b16 %v2781
        %v2806 = vunpack.c.l.b16 %v2782
        %v2807 = vunpack.c.l.b16 %v2783
        %v2808 = vunpack.c.l.b16 %v2784
        %v2809 = vunpack.c.l.b16 %v2785
        %v2810 = vunpack.c.l.b16 %v2786
        %v2811 = vunpack.c.l.b16 %v2787
        %v2812 = vunpack.c.l.b16 %v2788
        %v2813 = vpack.c.b16 %v2806, %v2805
        %v2814 = vpack.c.b16 %v2808, %v2807
        %v2815 = vpack.c.b16 %v2810, %v2809
        %v2816 = vpack.c.b16 %v2812, %v2811
        %vm2821 = vcmask 523264
        %v2823 = vsel %vm2821, %v2790, 0
        %2825 = vmatprep.subr.bf16.mxu0 0
        %2826 = vmatpush1.bf16.msra.mxu0 %v2813
        %2827 = vmatprep.subr.bf16.mxu0 0
        %2828 = vmatpush1.bf16.msra.mxu0 %v2814
        %2829 = vmatprep.subr.bf16.mxu0 0
        %2830 = vmatpush1.bf16.msra.mxu0 %v2815
        %2831 = vmatprep.subr.bf16.mxu0 0
        %2832 = vmatpush1.bf16.msra.mxu0 %v2816
        %2833 = vmatprep.subr.bf16.mxu0 0
        %2834 = vmatpush1.bf16.msra.mxu0 0
        %2835 = vmatprep.subr.bf16.mxu0 0
        %2836 = vmatpush1.bf16.msra.mxu0 0
        %2837 = vmatprep.subr.bf16.mxu0 0
        %2838 = vmatpush1.bf16.msra.mxu0 0
        %2839 = vmatprep.subr.bf16.mxu0 0
        %2840 = vmatpush1.bf16.msra.mxu0 0
        %2841 = vmatprep.subr.bf16.mxu0 0
        %2842 = vmatpush1.bf16.msra.mxu0 0
        %2843 = vmatprep.subr.bf16.mxu0 0
        %2844 = vmatpush1.bf16.msra.mxu0 0
        %2845 = vmatprep.subr.bf16.mxu0 0
        %2846 = vmatpush1.bf16.msra.mxu0 0
        %2847 = vmatprep.subr.bf16.mxu0 0
        %2848 = vmatpush1.bf16.msra.mxu0 0
        %2849 = vmatprep.subr.bf16.mxu0 0
        %2850 = vmatpush1.bf16.msra.mxu0 0
        %2851 = vmatprep.subr.bf16.mxu0 0
        %2852 = vmatpush1.bf16.msra.mxu0 0
        %2853 = vmatprep.subr.bf16.mxu0 0
        %2854 = vmatpush1.bf16.msra.mxu0 0
        %2855 = vmatprep.subr.bf16.mxu0 0
        %2856 = vmatpush1.bf16.msra.mxu0 0
        %2857 = vmatprep.mubr.bf16.mxu0 0
        %2858 = vmatmul.mubr.bf16.gmra.mrb[0].mxu0 %v2823
        %v2859 = vpop.f32.mrb[0].mxu0
        %v2860 = vadd.f32 %v2795, %v2859
        %v2861 = vpop.f32.mrb[0].mxu0
        %v2862 = vpop.f32.mrb[0].mxu0
        %v2863 = vpop.f32.mrb[0].mxu0
        %2864 = vdwg.mxu0
        %v2865 = vmax.f32 %v2860, 0.0
        %v2866 = vld [vmem:[%s9] sm:$0xf]
        %v2867 = vld [vmem:[%s9 + $0x4] sm:$0x3]
        %v2868 = vld [vmem:[#allocation14] sm:$0x1]
        %v2869 = vpack.c.bf16 %v2865, %v2865
        %v2871 = vlaneseq
        %v2872 = vshrl.u32 %v2871, 7
        %v2873 = vsub.s32 0, %v2872
        %v2874 = vrot.slane %v2868, %v2873
        %v2878 = vunpack.c.l.b16 %v2866
        %v2879 = vunpack.c.l.b16 %v2867
        %v2880 = vpack.c.b16 %v2879, %v2878
        %vm2881 = vcmask 97280
        %v2883 = vsel %vm2881, %v2869, 0
        %vm2885 = vcmask 1045504
        %v2887 = vsel %vm2885, %v2880, 0
        %2889 = vmatprep.subr.bf16.mxu0 0
        %2890 = vmatpush1.bf16.msra.mxu0 %v2887
        %2891 = vmatprep.subr.bf16.mxu0 0
        %2892 = vmatpush1.bf16.msra.mxu0 0
        %2893 = vmatprep.subr.bf16.mxu0 0
        %2894 = vmatpush1.bf16.msra.mxu0 0
        %2895 = vmatprep.subr.bf16.mxu0 0
        %2896 = vmatpush1.bf16.msra.mxu0 0
        %2897 = vmatprep.subr.bf16.mxu0 0
        %2898 = vmatpush1.bf16.msra.mxu0 0
        %2899 = vmatprep.subr.bf16.mxu0 0
        %2900 = vmatpush1.bf16.msra.mxu0 0
        %2901 = vmatprep.subr.bf16.mxu0 0
        %2902 = vmatpush1.bf16.msra.mxu0 0
        %2903 = vmatprep.subr.bf16.mxu0 0
        %2904 = vmatpush1.bf16.msra.mxu0 0
        %2905 = vmatprep.subr.bf16.mxu0 0
        %2906 = vmatpush1.bf16.msra.mxu0 0
        %2907 = vmatprep.subr.bf16.mxu0 0
        %2908 = vmatpush1.bf16.msra.mxu0 0
        %2909 = vmatprep.subr.bf16.mxu0 0
        %2910 = vmatpush1.bf16.msra.mxu0 0
        %2911 = vmatprep.subr.bf16.mxu0 0
        %2912 = vmatpush1.bf16.msra.mxu0 0
        %2913 = vmatprep.subr.bf16.mxu0 0
        %2914 = vmatpush1.bf16.msra.mxu0 0
        %2915 = vmatprep.subr.bf16.mxu0 0
        %2916 = vmatpush1.bf16.msra.mxu0 0
        %2917 = vmatprep.subr.bf16.mxu0 0
        %2918 = vmatpush1.bf16.msra.mxu0 0
        %2919 = vmatprep.subr.bf16.mxu0 0
        %2920 = vmatpush1.bf16.msra.mxu0 0
        %2921 = vmatprep.mubr.bf16.mxu0 0
        %2922 = vmatmul.mubr.bf16.gmra.mrb[0].mxu0 %v2883
        %v2923 = vpop.f32.mrb[0].mxu0
        %v2924 = vadd.f32 %v2874, %v2923
        %v2925 = vpop.f32.mrb[0].mxu0
        %v2926 = vpop.f32.mrb[0].mxu0
        %v2927 = vpop.f32.mrb[0].mxu0
        %2928 = vdwg.mxu0
        %v2929 = vld [vmem:[#allocation16] sm:$0x1]
        %v2930 = vld [vmem:[#allocation17] sm:$0x1]
        %v2931 = vpack.c.bf16 %v2924, %v2924
        %v2933 = vlaneseq
        %v2934 = vshrl.u32 %v2933, 7
        %v2935 = vsub.s32 0, %v2934
        %v2936 = vrot.slane %v2930, %v2935
        %vm2938 = vcmask 15360
        %v2940 = vsel %vm2938, %v2931, 0
        %vm2942 = vcmask 1040384
        %v2944 = vsel %vm2942, %v2929, 0
        %2946 = vmatprep.subr.bf16.mxu0 0
        %2947 = vmatpush1.bf16.msra.mxu0 %v2944
        %2948 = vmatprep.subr.bf16.mxu0 0
        %2949 = vmatpush1.bf16.msra.mxu0 0
        %2950 = vmatprep.subr.bf16.mxu0 0
        %2951 = vmatpush1.bf16.msra.mxu0 0
        %2952 = vmatprep.subr.bf16.mxu0 0
        %2953 = vmatpush1.bf16.msra.mxu0 0
        %2954 = vmatprep.subr.bf16.mxu0 0
        %2955 = vmatpush1.bf16.msra.mxu0 0
        %2956 = vmatprep.subr.bf16.mxu0 0
        %2957 = vmatpush1.bf16.msra.mxu0 0
        %2958 = vmatprep.subr.bf16.mxu0 0
        %2959 = vmatpush1.bf16.msra.mxu0 0
        %2960 = vmatprep.subr.bf16.mxu0 0
        %2961 = vmatpush1.bf16.msra.mxu0 0
        %2962 = vmatprep.subr.bf16.mxu0 0
        %2963 = vmatpush1.bf16.msra.mxu0 0
        %2964 = vmatprep.subr.bf16.mxu0 0
        %2965 = vmatpush1.bf16.msra.mxu0 0
        %2966 = vmatprep.subr.bf16.mxu0 0
        %2967 = vmatpush1.bf16.msra.mxu0 0
        %2968 = vmatprep.subr.bf16.mxu0 0
        %2969 = vmatpush1.bf16.msra.mxu0 0
        %2970 = vmatprep.subr.bf16.mxu0 0
        %2971 = vmatpush1.bf16.msra.mxu0 0
        %2972 = vmatprep.subr.bf16.mxu0 0
        %2973 = vmatpush1.bf16.msra.mxu0 0
        %2974 = vmatprep.subr.bf16.mxu0 0
        %2975 = vmatpush1.bf16.msra.mxu0 0
        %2976 = vmatprep.subr.bf16.mxu0 0
        %2977 = vmatpush1.bf16.msra.mxu0 0
        %2978 = vmatprep.mubr.bf16.mxu0 0
        %2979 = vmatmul.mubr.bf16.gmra.mrb[0].mxu0 %v2940
        %v2980 = vpop.f32.mrb[0].mxu0
        %v2981 = vadd.f32 %v2936, %v2980
        %v2982 = vpop.f32.mrb[0].mxu0
        %v2983 = vpop.f32.mrb[0].mxu0
        %v2984 = vpop.f32.mrb[0].mxu0
        %2985 = vdwg.mxu0
        %v2986 = vmax.f32 %v2981, 0.0
        %v2987 = vld [vmem:[#allocation19] sm:$0xf]
        %v2988 = vld [vmem:[#allocation19 + $0x4] sm:$0x3]
        %v2989 = vld [vmem:[#allocation20] sm:$0x1]
        %v2990 = vpack.c.bf16 %v2986, %v2986
        %v2992 = vlaneseq
        %v2993 = vshrl.u32 %v2992, 7
        %v2994 = vsub.s32 0, %v2993
        %v2995 = vrot.slane %v2989, %v2994
        %v2999 = vunpack.c.l.b16 %v2987
        %v3000 = vunpack.c.l.b16 %v2988
        %v3001 = vpack.c.b16 %v3000, %v2999
        %v3003 = vsel %vm2881, %v2990, 0
        %v3006 = vsel %vm2885, %v3001, 0
        %3008 = vmatprep.subr.bf16.mxu0 0
        %3009 = vmatpush1.bf16.msra.mxu0 %v3006
        %3010 = vmatprep.subr.bf16.mxu0 0
        %3011 = vmatpush1.bf16.msra.mxu0 0
        %3012 = vmatprep.subr.bf16.mxu0 0
        %3013 = vmatpush1.bf16.msra.mxu0 0
        %3014 = vmatprep.subr.bf16.mxu0 0
        %3015 = vmatpush1.bf16.msra.mxu0 0
        %3016 = vmatprep.subr.bf16.mxu0 0
        %3017 = vmatpush1.bf16.msra.mxu0 0
        %3018 = vmatprep.subr.bf16.mxu0 0
        %3019 = vmatpush1.bf16.msra.mxu0 0
        %3020 = vmatprep.subr.bf16.mxu0 0
        %3021 = vmatpush1.bf16.msra.mxu0 0
        %3022 = vmatprep.subr.bf16.mxu0 0
        %3023 = vmatpush1.bf16.msra.mxu0 0
        %3024 = vmatprep.subr.bf16.mxu0 0
        %3025 = vmatpush1.bf16.msra.mxu0 0
        %3026 = vmatprep.subr.bf16.mxu0 0
        %3027 = vmatpush1.bf16.msra.mxu0 0
        %3028 = vmatprep.subr.bf16.mxu0 0
        %3029 = vmatpush1.bf16.msra.mxu0 0
        %3030 = vmatprep.subr.bf16.mxu0 0
        %3031 = vmatpush1.bf16.msra.mxu0 0
        %3032 = vmatprep.subr.bf16.mxu0 0
        %3033 = vmatpush1.bf16.msra.mxu0 0
        %3034 = vmatprep.subr.bf16.mxu0 0
        %3035 = vmatpush1.bf16.msra.mxu0 0
        %3036 = vmatprep.subr.bf16.mxu0 0
        %3037 = vmatpush1.bf16.msra.mxu0 0
        %3038 = vmatprep.subr.bf16.mxu0 0
        %3039 = vmatpush1.bf16.msra.mxu0 0
        %3040 = vmatprep.mubr.bf16.mxu0 0
        %3041 = vmatmul.mubr.bf16.gmra.mrb[0].mxu0 %v3003
        %v3042 = vpop.f32.mrb[0].mxu0
        %v3043 = vadd.f32 %v2995, %v3042
        %v3044 = vpop.f32.mrb[0].mxu0
        %v3045 = vpop.f32.mrb[0].mxu0
        %v3046 = vpop.f32.mrb[0].mxu0
        %3047 = vdwg.mxu0
        %v3048 = vmax.f32 %v3043, 0.0
        %v3049 = vld [vmem:[#allocation22] sm:$0xf]
        %v3050 = vld [vmem:[#allocation22 + $0x4] sm:$0xf]
        %v3051 = vld [vmem:[#allocation22 + $0x8] sm:$0xf]
        %v3052 = vld [vmem:[#allocation22 + $0xc] sm:$0xf]
        %v3053 = vld [vmem:[#allocation22 + $0x10] sm:$0xf]
        %v3054 = vld [vmem:[#allocation22 + $0x14] sm:$0xf]
        %v3055 = vld [vmem:[#allocation22 + $0x18] sm:$0xf]
        %v3056 = vld [vmem:[#allocation22 + $0x1c] sm:$0xf]
        %v3057 = vld [vmem:[#allocation23] sm:$0x1]
        %v3058 = vpack.c.bf16 %v3048, %v3048
        %v3060 = vlaneseq
        %v3061 = vshrl.u32 %v3060, 7
        %v3062 = vsub.s32 0, %v3061
        %v3063 = vrot.slane %v3057, %v3062
        %v3073 = vunpack.c.l.b16 %v3049
        %v3074 = vunpack.c.l.b16 %v3050
        %v3075 = vunpack.c.l.b16 %v3051
        %v3076 = vunpack.c.l.b16 %v3052
        %v3077 = vunpack.c.l.b16 %v3053
        %v3078 = vunpack.c.l.b16 %v3054
        %v3079 = vunpack.c.l.b16 %v3055
        %v3080 = vunpack.c.l.b16 %v3056
        %v3081 = vpack.c.b16 %v3074, %v3073
        %v3082 = vpack.c.b16 %v3076, %v3075
        %v3083 = vpack.c.b16 %v3078, %v3077
        %v3084 = vpack.c.b16 %v3080, %v3079
        %v3090 = vsel %vm2821, %v3058, 0
        %3092 = vmatprep.subr.bf16.mxu0 0
        %3093 = vmatpush1.bf16.msra.mxu0 %v3081
        %3094 = vmatprep.subr.bf16.mxu0 0
        %3095 = vmatpush1.bf16.msra.mxu0 %v3082
        %3096 = vmatprep.subr.bf16.mxu0 0
        %3097 = vmatpush1.bf16.msra.mxu0 %v3083
        %3098 = vmatprep.subr.bf16.mxu0 0
        %3099 = vmatpush1.bf16.msra.mxu0 %v3084
        %3100 = vmatprep.subr.bf16.mxu0 0
        %3101 = vmatpush1.bf16.msra.mxu0 0
        %3102 = vmatprep.subr.bf16.mxu0 0
        %3103 = vmatpush1.bf16.msra.mxu0 0
        %3104 = vmatprep.subr.bf16.mxu0 0
        %3105 = vmatpush1.bf16.msra.mxu0 0
        %3106 = vmatprep.subr.bf16.mxu0 0
        %3107 = vmatpush1.bf16.msra.mxu0 0
        %3108 = vmatprep.subr.bf16.mxu0 0
        %3109 = vmatpush1.bf16.msra.mxu0 0
        %3110 = vmatprep.subr.bf16.mxu0 0
        %3111 = vmatpush1.bf16.msra.mxu0 0
        %3112 = vmatprep.subr.bf16.mxu0 0
        %3113 = vmatpush1.bf16.msra.mxu0 0
        %3114 = vmatprep.subr.bf16.mxu0 0
        %3115 = vmatpush1.bf16.msra.mxu0 0
        %3116 = vmatprep.subr.bf16.mxu0 0
        %3117 = vmatpush1.bf16.msra.mxu0 0
        %3118 = vmatprep.subr.bf16.mxu0 0
        %3119 = vmatpush1.bf16.msra.mxu0 0
        %3120 = vmatprep.subr.bf16.mxu0 0
        %3121 = vmatpush1.bf16.msra.mxu0 0
        %3122 = vmatprep.subr.bf16.mxu0 0
        %3123 = vmatpush1.bf16.msra.mxu0 0
        %3124 = vmatprep.mubr.bf16.mxu0 0
        %3125 = vmatmul.mubr.bf16.gmra.mrb[0].mxu0 %v3090
        %v3126 = vpop.f32.mrb[0].mxu0
        %v3127 = vadd.f32 %v3063, %v3126
        %v3128 = vpop.f32.mrb[0].mxu0
        %v3129 = vpop.f32.mrb[0].mxu0
        %v3130 = vpop.f32.mrb[0].mxu0
        %3131 = vdwg.mxu0
        %v3132 = vmax.f32 %v3127, 0.0
        %v3133 = vld [vmem:[#allocation25] sm:$0xff]
        %v3134 = vld [vmem:[#allocation25 + $0x8] sm:$0xff]
        %v3135 = vld [vmem:[#allocation25 + $0x10] sm:$0xff]
        %v3136 = vld [vmem:[#allocation25 + $0x18] sm:$0xff]
        %v3137 = vld [vmem:[#allocation25 + $0x20] sm:$0xff]
        %v3138 = vld [vmem:[#allocation25 + $0x28] sm:$0xff]
        %v3139 = vld [vmem:[#allocation25 + $0x30] sm:$0xff]
        %v3140 = vld [vmem:[#allocation25 + $0x38] sm:$0xff]
        %v3141 = vld [vmem:[#allocation25 + $0x40] sm:$0xff]
        %v3142 = vld [vmem:[#allocation25 + $0x48] sm:$0xff]
        %v3143 = vld [vmem:[#allocation25 + $0x50] sm:$0xff]
        %v3144 = vld [vmem:[#allocation25 + $0x58] sm:$0xff]
        %v3145 = vld [vmem:[#allocation25 + $0x60] sm:$0xff]
        %v3146 = vld [vmem:[#allocation25 + $0x68] sm:$0xff]
        %v3147 = vld [vmem:[#allocation25 + $0x70] sm:$0xff]
        %v3148 = vld [vmem:[#allocation25 + $0x78] sm:$0xff]
        %v3149 = vld [vmem:[#allocation25 + $0x80] sm:$0xff]
        %v3150 = vld [vmem:[#allocation25 + $0x88] sm:$0xff]
        %v3151 = vld [vmem:[#allocation25 + $0x90] sm:$0xff]
        %v3152 = vld [vmem:[#allocation25 + $0x98] sm:$0xff]
        %v3153 = vld [vmem:[#allocation25 + $0xa0] sm:$0xff]
        %v3154 = vld [vmem:[#allocation25 + $0xa8] sm:$0xff]
        %v3155 = vld [vmem:[#allocation25 + $0xb0] sm:$0xff]
        %v3156 = vld [vmem:[#allocation25 + $0xb8] sm:$0xff]
        %v3157 = vld [vmem:[#allocation25 + $0xc0] sm:$0xff]
        %v3158 = vld [vmem:[#allocation25 + $0xc8] sm:$0xff]
        %v3159 = vld [vmem:[#allocation25 + $0xd0] sm:$0xff]
        %v3160 = vld [vmem:[#allocation25 + $0xd8] sm:$0xff]
        %v3161 = vld [vmem:[#allocation25 + $0xe0] sm:$0xff]
        %v3162 = vld [vmem:[#allocation25 + $0xe8] sm:$0xff]
        %v3163 = vld [vmem:[#allocation25 + $0xf0] sm:$0xff]
        %v3164 = vld [vmem:[#allocation25 + $0xf8] sm:$0xff]
        %v3165 = vld [vmem:[#allocation25 + $0x100] sm:$0xff]
        %v3166 = vld [vmem:[#allocation25 + $0x108] sm:$0xff]
        %v3167 = vld [vmem:[#allocation25 + $0x110] sm:$0xff]
        %v3168 = vld [vmem:[#allocation25 + $0x118] sm:$0xff]
        %v3169 = vld [vmem:[#allocation25 + $0x120] sm:$0xff]
        %v3170 = vld [vmem:[#allocation25 + $0x128] sm:$0xff]
        %v3171 = vld [vmem:[#allocation25 + $0x130] sm:$0xff]
        %v3172 = vld [vmem:[#allocation25 + $0x138] sm:$0xff]
        %v3173 = vld [vmem:[#allocation25 + $0x140] sm:$0xff]
        %v3174 = vld [vmem:[#allocation25 + $0x148] sm:$0xff]
        %v3175 = vld [vmem:[#allocation25 + $0x150] sm:$0xff]
        %v3176 = vld [vmem:[#allocation25 + $0x158] sm:$0xff]
        %v3177 = vld [vmem:[#allocation25 + $0x160] sm:$0xff]
        %v3178 = vld [vmem:[#allocation25 + $0x168] sm:$0xff]
        %v3179 = vld [vmem:[#allocation25 + $0x170] sm:$0xff]
        %v3180 = vld [vmem:[#allocation25 + $0x178] sm:$0xff]
        %v3181 = vld [vmem:[#allocation25 + $0x180] sm:$0xff]
        %v3182 = vld [vmem:[#allocation25 + $0x188] sm:$0xff]
        %v3183 = vld [vmem:[#allocation25 + $0x190] sm:$0xff]
        %v3184 = vld [vmem:[#allocation25 + $0x198] sm:$0xff]
        %v3185 = vld [vmem:[#allocation25 + $0x1a0] sm:$0xff]
        %v3186 = vld [vmem:[#allocation25 + $0x1a8] sm:$0xff]
        %v3187 = vld [vmem:[#allocation25 + $0x1b0] sm:$0xff]
        %v3188 = vld [vmem:[#allocation25 + $0x1b8] sm:$0xff]
        %v3189 = vld [vmem:[#allocation25 + $0x1c0] sm:$0xff]
        %v3190 = vld [vmem:[#allocation25 + $0x1c8] sm:$0xff]
        %v3191 = vld [vmem:[#allocation25 + $0x1d0] sm:$0xff]
        %v3192 = vld [vmem:[#allocation25 + $0x1d8] sm:$0xff]
        %v3193 = vld [vmem:[#allocation25 + $0x1e0] sm:$0xff]
        %v3194 = vld [vmem:[#allocation25 + $0x1e8] sm:$0xff]
        %v3195 = vld [vmem:[#allocation25 + $0x1f0] sm:$0xff]
        %v3196 = vld [vmem:[#allocation25 + $0x1f8] sm:$0xff]
        %v3197 = vld [vmem:[#allocation26] sm:$0xff]
        %v3198 = vpack.c.bf16 %v3132, %v3132
        %v3200 = vlaneseq
        %v3201 = vshrl.u32 %v3200, 7
        %v3202 = vsub.s32 0, %v3201
        %v3203 = vrot.slane %v3197, %v3202
        %v3204 = vlaneseq
        %v3205 = vshrl.u32 %v3204, 7
        %v3206 = vsub.s32 1, %v3205
        %v3207 = vrot.slane %v3197, %v3206
        %v3208 = vlaneseq
        %v3209 = vshrl.u32 %v3208, 7
        %v3210 = vsub.s32 2, %v3209
        %v3211 = vrot.slane %v3197, %v3210
        %v3212 = vlaneseq
        %v3213 = vshrl.u32 %v3212, 7
        %v3214 = vsub.s32 3, %v3213
        %v3215 = vrot.slane %v3197, %v3214
        %v3216 = vlaneseq
        %v3217 = vshrl.u32 %v3216, 7
        %v3218 = vsub.s32 4, %v3217
        %v3219 = vrot.slane %v3197, %v3218
        %v3220 = vlaneseq
        %v3221 = vshrl.u32 %v3220, 7
        %v3222 = vsub.s32 5, %v3221
        %v3223 = vrot.slane %v3197, %v3222
        %v3224 = vlaneseq
        %v3225 = vshrl.u32 %v3224, 7
        %v3226 = vsub.s32 6, %v3225
        %v3227 = vrot.slane %v3197, %v3226
        %v3228 = vlaneseq
        %v3229 = vshrl.u32 %v3228, 7
        %v3230 = vsub.s32 7, %v3229
        %v3231 = vrot.slane %v3197, %v3230
        %v3304 = vunpack.c.l.b16 %v3133
        %v3305 = vunpack.c.h.b16 %v3133
        %v3306 = vunpack.c.l.b16 %v3134
        %v3307 = vunpack.c.h.b16 %v3134
        %v3308 = vunpack.c.l.b16 %v3135
        %v3309 = vunpack.c.h.b16 %v3135
        %v3310 = vunpack.c.l.b16 %v3136
        %v3311 = vunpack.c.h.b16 %v3136
        %v3312 = vunpack.c.l.b16 %v3137
        %v3313 = vunpack.c.h.b16 %v3137
        %v3314 = vunpack.c.l.b16 %v3138
        %v3315 = vunpack.c.h.b16 %v3138
        %v3316 = vunpack.c.l.b16 %v3139
        %v3317 = vunpack.c.h.b16 %v3139
        %v3318 = vunpack.c.l.b16 %v3140
        %v3319 = vunpack.c.h.b16 %v3140
        %v3320 = vunpack.c.l.b16 %v3141
        %v3321 = vunpack.c.h.b16 %v3141
        %v3322 = vunpack.c.l.b16 %v3142
        %v3323 = vunpack.c.h.b16 %v3142
        %v3324 = vunpack.c.l.b16 %v3143
        %v3325 = vunpack.c.h.b16 %v3143
        %v3326 = vunpack.c.l.b16 %v3144
        %v3327 = vunpack.c.h.b16 %v3144
        %v3328 = vunpack.c.l.b16 %v3145
        %v3329 = vunpack.c.h.b16 %v3145
        %v3330 = vunpack.c.l.b16 %v3146
        %v3331 = vunpack.c.h.b16 %v3146
        %v3332 = vunpack.c.l.b16 %v3147
        %v3333 = vunpack.c.h.b16 %v3147
        %v3334 = vunpack.c.l.b16 %v3148
        %v3335 = vunpack.c.h.b16 %v3148
        %v3336 = vunpack.c.l.b16 %v3149
        %v3337 = vunpack.c.h.b16 %v3149
        %v3338 = vunpack.c.l.b16 %v3150
        %v3339 = vunpack.c.h.b16 %v3150
        %v3340 = vunpack.c.l.b16 %v3151
        %v3341 = vunpack.c.h.b16 %v3151
        %v3342 = vunpack.c.l.b16 %v3152
        %v3343 = vunpack.c.h.b16 %v3152
        %v3344 = vunpack.c.l.b16 %v3153
        %v3345 = vunpack.c.h.b16 %v3153
        %v3346 = vunpack.c.l.b16 %v3154
        %v3347 = vunpack.c.h.b16 %v3154
        %v3348 = vunpack.c.l.b16 %v3155
        %v3349 = vunpack.c.h.b16 %v3155
        %v3350 = vunpack.c.l.b16 %v3156
        %v3351 = vunpack.c.h.b16 %v3156
        %v3352 = vunpack.c.l.b16 %v3157
        %v3353 = vunpack.c.h.b16 %v3157
        %v3354 = vunpack.c.l.b16 %v3158
        %v3355 = vunpack.c.h.b16 %v3158
        %v3356 = vunpack.c.l.b16 %v3159
        %v3357 = vunpack.c.h.b16 %v3159
        %v3358 = vunpack.c.l.b16 %v3160
        %v3359 = vunpack.c.h.b16 %v3160
        %v3360 = vunpack.c.l.b16 %v3161
        %v3361 = vunpack.c.h.b16 %v3161
        %v3362 = vunpack.c.l.b16 %v3162
        %v3363 = vunpack.c.h.b16 %v3162
        %v3364 = vunpack.c.l.b16 %v3163
        %v3365 = vunpack.c.h.b16 %v3163
        %v3366 = vunpack.c.l.b16 %v3164
        %v3367 = vunpack.c.h.b16 %v3164
        %v3368 = vunpack.c.l.b16 %v3165
        %v3369 = vunpack.c.h.b16 %v3165
        %v3370 = vunpack.c.l.b16 %v3166
        %v3371 = vunpack.c.h.b16 %v3166
        %v3372 = vunpack.c.l.b16 %v3167
        %v3373 = vunpack.c.h.b16 %v3167
        %v3374 = vunpack.c.l.b16 %v3168
        %v3375 = vunpack.c.h.b16 %v3168
        %v3376 = vunpack.c.l.b16 %v3169
        %v3377 = vunpack.c.h.b16 %v3169
        %v3378 = vunpack.c.l.b16 %v3170
        %v3379 = vunpack.c.h.b16 %v3170
        %v3380 = vunpack.c.l.b16 %v3171
        %v3381 = vunpack.c.h.b16 %v3171
        %v3382 = vunpack.c.l.b16 %v3172
        %v3383 = vunpack.c.h.b16 %v3172
        %v3384 = vunpack.c.l.b16 %v3173
        %v3385 = vunpack.c.h.b16 %v3173
        %v3386 = vunpack.c.l.b16 %v3174
        %v3387 = vunpack.c.h.b16 %v3174
        %v3388 = vunpack.c.l.b16 %v3175
        %v3389 = vunpack.c.h.b16 %v3175
        %v3390 = vunpack.c.l.b16 %v3176
        %v3391 = vunpack.c.h.b16 %v3176
        %v3392 = vunpack.c.l.b16 %v3177
        %v3393 = vunpack.c.h.b16 %v3177
        %v3394 = vunpack.c.l.b16 %v3178
        %v3395 = vunpack.c.h.b16 %v3178
        %v3396 = vunpack.c.l.b16 %v3179
        %v3397 = vunpack.c.h.b16 %v3179
        %v3398 = vunpack.c.l.b16 %v3180
        %v3399 = vunpack.c.h.b16 %v3180
        %v3400 = vunpack.c.l.b16 %v3181
        %v3401 = vunpack.c.h.b16 %v3181
        %v3402 = vunpack.c.l.b16 %v3182
        %v3403 = vunpack.c.h.b16 %v3182
        %v3404 = vunpack.c.l.b16 %v3183
        %v3405 = vunpack.c.h.b16 %v3183
        %v3406 = vunpack.c.l.b16 %v3184
        %v3407 = vunpack.c.h.b16 %v3184
        %v3408 = vunpack.c.l.b16 %v3185
        %v3409 = vunpack.c.h.b16 %v3185
        %v3410 = vunpack.c.l.b16 %v3186
        %v3411 = vunpack.c.h.b16 %v3186
        %v3412 = vunpack.c.l.b16 %v3187
        %v3413 = vunpack.c.h.b16 %v3187
        %v3414 = vunpack.c.l.b16 %v3188
        %v3415 = vunpack.c.h.b16 %v3188
        %v3416 = vunpack.c.l.b16 %v3189
        %v3417 = vunpack.c.h.b16 %v3189
        %v3418 = vunpack.c.l.b16 %v3190
        %v3419 = vunpack.c.h.b16 %v3190
        %v3420 = vunpack.c.l.b16 %v3191
        %v3421 = vunpack.c.h.b16 %v3191
        %v3422 = vunpack.c.l.b16 %v3192
        %v3423 = vunpack.c.h.b16 %v3192
        %v3424 = vunpack.c.l.b16 %v3193
        %v3425 = vunpack.c.h.b16 %v3193
        %v3426 = vunpack.c.l.b16 %v3194
        %v3427 = vunpack.c.h.b16 %v3194
        %v3428 = vunpack.c.l.b16 %v3195
        %v3429 = vunpack.c.h.b16 %v3195
        %v3430 = vunpack.c.l.b16 %v3196
        %v3431 = vunpack.c.h.b16 %v3196
        %v3432 = vpack.c.b16 %v3312, %v3304
        %v3433 = vpack.c.b16 %v3313, %v3305
        %v3434 = vpack.c.b16 %v3314, %v3306
        %v3435 = vpack.c.b16 %v3315, %v3307
        %v3436 = vpack.c.b16 %v3316, %v3308
        %v3437 = vpack.c.b16 %v3317, %v3309
        %v3438 = vpack.c.b16 %v3318, %v3310
        %v3439 = vpack.c.b16 %v3319, %v3311
        %v3440 = vpack.c.b16 %v3328, %v3320
        %v3441 = vpack.c.b16 %v3329, %v3321
        %v3442 = vpack.c.b16 %v3330, %v3322
        %v3443 = vpack.c.b16 %v3331, %v3323
        %v3444 = vpack.c.b16 %v3332, %v3324
        %v3445 = vpack.c.b16 %v3333, %v3325
        %v3446 = vpack.c.b16 %v3334, %v3326
        %v3447 = vpack.c.b16 %v3335, %v3327
        %v3448 = vpack.c.b16 %v3344, %v3336
        %v3449 = vpack.c.b16 %v3345, %v3337
        %v3450 = vpack.c.b16 %v3346, %v3338
        %v3451 = vpack.c.b16 %v3347, %v3339
        %v3452 = vpack.c.b16 %v3348, %v3340
        %v3453 = vpack.c.b16 %v3349, %v3341
        %v3454 = vpack.c.b16 %v3350, %v3342
        %v3455 = vpack.c.b16 %v3351, %v3343
        %v3456 = vpack.c.b16 %v3360, %v3352
        %v3457 = vpack.c.b16 %v3361, %v3353
        %v3458 = vpack.c.b16 %v3362, %v3354
        %v3459 = vpack.c.b16 %v3363, %v3355
        %v3460 = vpack.c.b16 %v3364, %v3356
        %v3461 = vpack.c.b16 %v3365, %v3357
        %v3462 = vpack.c.b16 %v3366, %v3358
        %v3463 = vpack.c.b16 %v3367, %v3359
        %v3464 = vpack.c.b16 %v3376, %v3368
        %v3465 = vpack.c.b16 %v3377, %v3369
        %v3466 = vpack.c.b16 %v3378, %v3370
        %v3467 = vpack.c.b16 %v3379, %v3371
        %v3468 = vpack.c.b16 %v3380, %v3372
        %v3469 = vpack.c.b16 %v3381, %v3373
        %v3470 = vpack.c.b16 %v3382, %v3374
        %v3471 = vpack.c.b16 %v3383, %v3375
        %v3472 = vpack.c.b16 %v3392, %v3384
        %v3473 = vpack.c.b16 %v3393, %v3385
        %v3474 = vpack.c.b16 %v3394, %v3386
        %v3475 = vpack.c.b16 %v3395, %v3387
        %v3476 = vpack.c.b16 %v3396, %v3388
        %v3477 = vpack.c.b16 %v3397, %v3389
        %v3478 = vpack.c.b16 %v3398, %v3390
        %v3479 = vpack.c.b16 %v3399, %v3391
        %v3480 = vpack.c.b16 %v3408, %v3400
        %v3481 = vpack.c.b16 %v3409, %v3401
        %v3482 = vpack.c.b16 %v3410, %v3402
        %v3483 = vpack.c.b16 %v3411, %v3403
        %v3484 = vpack.c.b16 %v3412, %v3404
        %v3485 = vpack.c.b16 %v3413, %v3405
        %v3486 = vpack.c.b16 %v3414, %v3406
        %v3487 = vpack.c.b16 %v3415, %v3407
        %v3488 = vpack.c.b16 %v3424, %v3416
        %v3489 = vpack.c.b16 %v3425, %v3417
        %v3490 = vpack.c.b16 %v3426, %v3418
        %v3491 = vpack.c.b16 %v3427, %v3419
        %v3492 = vpack.c.b16 %v3428, %v3420
        %v3493 = vpack.c.b16 %v3429, %v3421
        %v3494 = vpack.c.b16 %v3430, %v3422
        %v3495 = vpack.c.b16 %v3431, %v3423
        %3560 = vmatprep.subr.bf16.mxu0 %v3433
        %3561 = vmatpush1.bf16.msra.mxu0 %v3432
        %3562 = vmatprep.subr.bf16.mxu0 %v3441
        %3563 = vmatpush1.bf16.msra.mxu0 %v3440
        %3564 = vmatprep.subr.bf16.mxu0 %v3449
        %3565 = vmatpush1.bf16.msra.mxu0 %v3448
        %3566 = vmatprep.subr.bf16.mxu0 %v3457
        %3567 = vmatpush1.bf16.msra.mxu0 %v3456
        %3568 = vmatprep.subr.bf16.mxu0 %v3465
        %3569 = vmatpush1.bf16.msra.mxu0 %v3464
        %3570 = vmatprep.subr.bf16.mxu0 %v3473
        %3571 = vmatpush1.bf16.msra.mxu0 %v3472
        %3572 = vmatprep.subr.bf16.mxu0 %v3481
        %3573 = vmatpush1.bf16.msra.mxu0 %v3480
        %3574 = vmatprep.subr.bf16.mxu0 %v3489
        %3575 = vmatpush1.bf16.msra.mxu0 %v3488
        %3576 = vmatprep.subr.bf16.mxu0 0
        %3577 = vmatpush1.bf16.msra.mxu0 0
        %3578 = vmatprep.subr.bf16.mxu0 0
        %3579 = vmatpush1.bf16.msra.mxu0 0
        %3580 = vmatprep.subr.bf16.mxu0 0
        %3581 = vmatpush1.bf16.msra.mxu0 0
        %3582 = vmatprep.subr.bf16.mxu0 0
        %3583 = vmatpush1.bf16.msra.mxu0 0
        %3584 = vmatprep.subr.bf16.mxu0 0
        %3585 = vmatpush1.bf16.msra.mxu0 0
        %3586 = vmatprep.subr.bf16.mxu0 0
        %3587 = vmatpush1.bf16.msra.mxu0 0
        %3588 = vmatprep.subr.bf16.mxu0 0
        %3589 = vmatpush1.bf16.msra.mxu0 0
        %3590 = vmatprep.subr.bf16.mxu0 0
        %3591 = vmatpush1.bf16.msra.mxu0 0
        %3592 = vmatprep.mubr.bf16.mxu0 0
        %3593 = vmatmul.mubr.bf16.gmra.mrb[0].mxu0 %v3198
        %v3594 = vpop.f32.mrb[0].mxu0
        %v3595 = vadd.f32 %v3203, %v3594
        %v3596 = vpop.f32.mrb[0].mxu0
        %v3597 = vadd.f32 %v3207, %v3596
        %v3598 = vpop.f32.mrb[0].mxu0
        %v3599 = vpop.f32.mrb[0].mxu0
        %3600 = vdwg.mxu0
        %3601 = vmatprep.subr.bf16.mxu0 %v3435
        %3602 = vmatpush1.bf16.msra.mxu0 %v3434
        %3603 = vmatprep.subr.bf16.mxu0 %v3443
        %3604 = vmatpush1.bf16.msra.mxu0 %v3442
        %3605 = vmatprep.subr.bf16.mxu0 %v3451
        %3606 = vmatpush1.bf16.msra.mxu0 %v3450
        %3607 = vmatprep.subr.bf16.mxu0 %v3459
        %3608 = vmatpush1.bf16.msra.mxu0 %v3458
        %3609 = vmatprep.subr.bf16.mxu0 %v3467
        %3610 = vmatpush1.bf16.msra.mxu0 %v3466
        %3611 = vmatprep.subr.bf16.mxu0 %v3475
        %3612 = vmatpush1.bf16.msra.mxu0 %v3474
        %3613 = vmatprep.subr.bf16.mxu0 %v3483
        %3614 = vmatpush1.bf16.msra.mxu0 %v3482
        %3615 = vmatprep.subr.bf16.mxu0 %v3491
        %3616 = vmatpush1.bf16.msra.mxu0 %v3490
        %3617 = vmatprep.subr.bf16.mxu0 0
        %3618 = vmatpush1.bf16.msra.mxu0 0
        %3619 = vmatprep.subr.bf16.mxu0 0
        %3620 = vmatpush1.bf16.msra.mxu0 0
        %3621 = vmatprep.subr.bf16.mxu0 0
        %3622 = vmatpush1.bf16.msra.mxu0 0
        %3623 = vmatprep.subr.bf16.mxu0 0
        %3624 = vmatpush1.bf16.msra.mxu0 0
        %3625 = vmatprep.subr.bf16.mxu0 0
        %3626 = vmatpush1.bf16.msra.mxu0 0
        %3627 = vmatprep.subr.bf16.mxu0 0
        %3628 = vmatpush1.bf16.msra.mxu0 0
        %3629 = vmatprep.subr.bf16.mxu0 0
        %3630 = vmatpush1.bf16.msra.mxu0 0
        %3631 = vmatprep.subr.bf16.mxu0 0
        %3632 = vmatpush1.bf16.msra.mxu0 0
        %3633 = vmatprep.mubr.bf16.mxu0 0
        %3634 = vmatmul.mubr.bf16.gmra.mrb[0].mxu0 %v3198
        %v3635 = vpop.f32.mrb[0].mxu0
        %v3636 = vadd.f32 %v3211, %v3635
        %v3637 = vpop.f32.mrb[0].mxu0
        %v3638 = vadd.f32 %v3215, %v3637
        %v3639 = vpop.f32.mrb[0].mxu0
        %v3640 = vpop.f32.mrb[0].mxu0
        %3641 = vdwg.mxu0
        %3642 = vmatprep.subr.bf16.mxu0 %v3437
        %3643 = vmatpush1.bf16.msra.mxu0 %v3436
        %3644 = vmatprep.subr.bf16.mxu0 %v3445
        %3645 = vmatpush1.bf16.msra.mxu0 %v3444
        %3646 = vmatprep.subr.bf16.mxu0 %v3453
        %3647 = vmatpush1.bf16.msra.mxu0 %v3452
        %3648 = vmatprep.subr.bf16.mxu0 %v3461
        %3649 = vmatpush1.bf16.msra.mxu0 %v3460
        %3650 = vmatprep.subr.bf16.mxu0 %v3469
        %3651 = vmatpush1.bf16.msra.mxu0 %v3468
        %3652 = vmatprep.subr.bf16.mxu0 %v3477
        %3653 = vmatpush1.bf16.msra.mxu0 %v3476
        %3654 = vmatprep.subr.bf16.mxu0 %v3485
        %3655 = vmatpush1.bf16.msra.mxu0 %v3484
        %3656 = vmatprep.subr.bf16.mxu0 %v3493
        %3657 = vmatpush1.bf16.msra.mxu0 %v3492
        %3658 = vmatprep.subr.bf16.mxu0 0
        %3659 = vmatpush1.bf16.msra.mxu0 0
        %3660 = vmatprep.subr.bf16.mxu0 0
        %3661 = vmatpush1.bf16.msra.mxu0 0
        %3662 = vmatprep.subr.bf16.mxu0 0
        %3663 = vmatpush1.bf16.msra.mxu0 0
        %3664 = vmatprep.subr.bf16.mxu0 0
        %3665 = vmatpush1.bf16.msra.mxu0 0
        %3666 = vmatprep.subr.bf16.mxu0 0
        %3667 = vmatpush1.bf16.msra.mxu0 0
        %3668 = vmatprep.subr.bf16.mxu0 0
        %3669 = vmatpush1.bf16.msra.mxu0 0
        %3670 = vmatprep.subr.bf16.mxu0 0
        %3671 = vmatpush1.bf16.msra.mxu0 0
        %3672 = vmatprep.subr.bf16.mxu0 0
        %3673 = vmatpush1.bf16.msra.mxu0 0
        %3674 = vmatprep.mubr.bf16.mxu0 0
        %3675 = vmatmul.mubr.bf16.gmra.mrb[0].mxu0 %v3198
        %v3676 = vpop.f32.mrb[0].mxu0
        %v3677 = vadd.f32 %v3219, %v3676
        %v3678 = vpop.f32.mrb[0].mxu0
        %v3679 = vadd.f32 %v3223, %v3678
        %v3680 = vpop.f32.mrb[0].mxu0
        %v3681 = vpop.f32.mrb[0].mxu0
        %3682 = vdwg.mxu0
        %3683 = vmatprep.subr.bf16.mxu0 %v3439
        %3684 = vmatpush1.bf16.msra.mxu0 %v3438
        %3685 = vmatprep.subr.bf16.mxu0 %v3447
        %3686 = vmatpush1.bf16.msra.mxu0 %v3446
        %3687 = vmatprep.subr.bf16.mxu0 %v3455
        %3688 = vmatpush1.bf16.msra.mxu0 %v3454
        %3689 = vmatprep.subr.bf16.mxu0 %v3463
        %3690 = vmatpush1.bf16.msra.mxu0 %v3462
        %3691 = vmatprep.subr.bf16.mxu0 %v3471
        %3692 = vmatpush1.bf16.msra.mxu0 %v3470
        %3693 = vmatprep.subr.bf16.mxu0 %v3479
        %3694 = vmatpush1.bf16.msra.mxu0 %v3478
        %3695 = vmatprep.subr.bf16.mxu0 %v3487
        %3696 = vmatpush1.bf16.msra.mxu0 %v3486
        %3697 = vmatprep.subr.bf16.mxu0 %v3495
        %3698 = vmatpush1.bf16.msra.mxu0 %v3494
        %3699 = vmatprep.subr.bf16.mxu0 0
        %3700 = vmatpush1.bf16.msra.mxu0 0
        %3701 = vmatprep.subr.bf16.mxu0 0
        %3702 = vmatpush1.bf16.msra.mxu0 0
        %3703 = vmatprep.subr.bf16.mxu0 0
        %3704 = vmatpush1.bf16.msra.mxu0 0
        %3705 = vmatprep.subr.bf16.mxu0 0
        %3706 = vmatpush1.bf16.msra.mxu0 0
        %3707 = vmatprep.subr.bf16.mxu0 0
        %3708 = vmatpush1.bf16.msra.mxu0 0
        %3709 = vmatprep.subr.bf16.mxu0 0
        %3710 = vmatpush1.bf16.msra.mxu0 0
        %3711 = vmatprep.subr.bf16.mxu0 0
        %3712 = vmatpush1.bf16.msra.mxu0 0
        %3713 = vmatprep.subr.bf16.mxu0 0
        %3714 = vmatpush1.bf16.msra.mxu0 0
        %3715 = vmatprep.mubr.bf16.mxu0 0
        %3716 = vmatmul.mubr.bf16.gmra.mrb[0].mxu0 %v3198
        %v3717 = vpop.f32.mrb[0].mxu0
        %v3718 = vadd.f32 %v3227, %v3717
        %v3719 = vpop.f32.mrb[0].mxu0
        %v3720 = vadd.f32 %v3231, %v3719
        %v3721 = vpop.f32.mrb[0].mxu0
        %v3722 = vpop.f32.mrb[0].mxu0
        %3723 = vdwg.mxu0
        %v3724 = vmax.f32 %v3595, 0.0
        %v3725 = vmax.f32 %v3597, 0.0
        %v3726 = vmax.f32 %v3636, 0.0
        %v3727 = vmax.f32 %v3638, 0.0
        %v3728 = vmax.f32 %v3677, 0.0
        %v3729 = vmax.f32 %v3679, 0.0
        %v3730 = vmax.f32 %v3718, 0.0
        %v3731 = vmax.f32 %v3720, 0.0
        %v3732 = vld [vmem:[%s891] sm:$0xff]
        %v3733 = vld [vmem:[%s891 + $0x8] sm:$0xff]
        %v3734 = vld [vmem:[%s891 + $0x10] sm:$0xff]
        %v3735 = vld [vmem:[%s891 + $0x18] sm:$0xff]
        %v3736 = vld [vmem:[%s891 + $0x20] sm:$0xff]
        %v3737 = vld [vmem:[%s891 + $0x28] sm:$0xff]
        %v3738 = vld [vmem:[%s891 + $0x30] sm:$0xff]
        %v3739 = vld [vmem:[%s891 + $0x38] sm:$0xff]
        %v3740 = vld [vmem:[%s891 + $0x40] sm:$0xff]
        %v3741 = vld [vmem:[%s891 + $0x48] sm:$0xff]
        %v3742 = vld [vmem:[%s891 + $0x50] sm:$0xff]
        %v3743 = vld [vmem:[%s891 + $0x58] sm:$0xff]
        %v3744 = vld [vmem:[%s891 + $0x60] sm:$0xff]
        %v3745 = vld [vmem:[%s891 + $0x68] sm:$0xff]
        %v3746 = vld [vmem:[%s891 + $0x70] sm:$0xff]
        %v3747 = vld [vmem:[%s891 + $0x78] sm:$0xff]
        %v3748 = vld [vmem:[%s891 + $0x80] sm:$0xff]
        %v3749 = vld [vmem:[%s891 + $0x88] sm:$0xff]
        %v3750 = vld [vmem:[%s891 + $0x90] sm:$0xff]
        %v3751 = vld [vmem:[%s891 + $0x98] sm:$0xff]
        %v3752 = vld [vmem:[%s891 + $0xa0] sm:$0xff]
        %v3753 = vld [vmem:[%s891 + $0xa8] sm:$0xff]
        %v3754 = vld [vmem:[%s891 + $0xb0] sm:$0xff]
        %v3755 = vld [vmem:[%s891 + $0xb8] sm:$0xff]
        %v3756 = vld [vmem:[%s891 + $0xc0] sm:$0xff]
        %v3757 = vld [vmem:[%s891 + $0xc8] sm:$0xff]
        %v3758 = vld [vmem:[%s891 + $0xd0] sm:$0xff]
        %v3759 = vld [vmem:[%s891 + $0xd8] sm:$0xff]
        %v3760 = vld [vmem:[%s891 + $0xe0] sm:$0xff]
        %v3761 = vld [vmem:[%s891 + $0xe8] sm:$0xff]
        %v3762 = vld [vmem:[%s891 + $0xf0] sm:$0xff]
        %v3763 = vld [vmem:[%s891 + $0xf8] sm:$0xff]
        %v3764 = vld [vmem:[%s891 + $0x100] sm:$0xff]
        %v3765 = vld [vmem:[%s891 + $0x108] sm:$0xff]
        %v3766 = vld [vmem:[%s891 + $0x110] sm:$0xff]
        %v3767 = vld [vmem:[%s891 + $0x118] sm:$0xff]
        %v3768 = vld [vmem:[%s891 + $0x120] sm:$0xff]
        %v3769 = vld [vmem:[%s891 + $0x128] sm:$0xff]
        %v3770 = vld [vmem:[%s891 + $0x130] sm:$0xff]
        %v3771 = vld [vmem:[%s891 + $0x138] sm:$0xff]
        %v3772 = vld [vmem:[%s891 + $0x140] sm:$0xff]
        %v3773 = vld [vmem:[%s891 + $0x148] sm:$0xff]
        %v3774 = vld [vmem:[%s891 + $0x150] sm:$0xff]
        %v3775 = vld [vmem:[%s891 + $0x158] sm:$0xff]
        %v3776 = vld [vmem:[%s891 + $0x160] sm:$0xff]
        %v3777 = vld [vmem:[%s891 + $0x168] sm:$0xff]
        %v3778 = vld [vmem:[%s891 + $0x170] sm:$0xff]
        %v3779 = vld [vmem:[%s891 + $0x178] sm:$0xff]
        %v3780 = vld [vmem:[%s891 + $0x180] sm:$0xff]
        %v3781 = vld [vmem:[%s891 + $0x188] sm:$0xff]
        %v3782 = vld [vmem:[%s891 + $0x190] sm:$0xff]
        %v3783 = vld [vmem:[%s891 + $0x198] sm:$0xff]
        %v3784 = vld [vmem:[%s891 + $0x1a0] sm:$0xff]
        %v3785 = vld [vmem:[%s891 + $0x1a8] sm:$0xff]
        %v3786 = vld [vmem:[%s891 + $0x1b0] sm:$0xff]
        %v3787 = vld [vmem:[%s891 + $0x1b8] sm:$0xff]
        %v3788 = vld [vmem:[%s891 + $0x1c0] sm:$0xff]
        %v3789 = vld [vmem:[%s891 + $0x1c8] sm:$0xff]
        %v3790 = vld [vmem:[%s891 + $0x1d0] sm:$0xff]
        %v3791 = vld [vmem:[%s891 + $0x1d8] sm:$0xff]
        %v3792 = vld [vmem:[%s891 + $0x1e0] sm:$0xff]
        %v3793 = vld [vmem:[%s891 + $0x1e8] sm:$0xff]
        %v3794 = vld [vmem:[%s891 + $0x1f0] sm:$0xff]
        %v3795 = vld [vmem:[%s891 + $0x1f8] sm:$0xff]
        %v3796 = vld [vmem:[%s891 + $0x200] sm:$0xff]
        %v3797 = vld [vmem:[%s891 + $0x208] sm:$0xff]
        %v3798 = vld [vmem:[%s891 + $0x210] sm:$0xff]
        %v3799 = vld [vmem:[%s891 + $0x218] sm:$0xff]
        %v3800 = vld [vmem:[%s891 + $0x220] sm:$0xff]
        %v3801 = vld [vmem:[%s891 + $0x228] sm:$0xff]
        %v3802 = vld [vmem:[%s891 + $0x230] sm:$0xff]
        %v3803 = vld [vmem:[%s891 + $0x238] sm:$0xff]
        %v3804 = vld [vmem:[%s891 + $0x240] sm:$0xff]
        %v3805 = vld [vmem:[%s891 + $0x248] sm:$0xff]
        %v3806 = vld [vmem:[%s891 + $0x250] sm:$0xff]
        %v3807 = vld [vmem:[%s891 + $0x258] sm:$0xff]
        %v3808 = vld [vmem:[%s891 + $0x260] sm:$0xff]
        %v3809 = vld [vmem:[%s891 + $0x268] sm:$0xff]
        %v3810 = vld [vmem:[%s891 + $0x270] sm:$0xff]
        %v3811 = vld [vmem:[%s891 + $0x278] sm:$0xff]
        %v3812 = vld [vmem:[%s891 + $0x280] sm:$0xff]
        %v3813 = vld [vmem:[%s891 + $0x288] sm:$0xff]
        %v3814 = vld [vmem:[%s891 + $0x290] sm:$0xff]
        %v3815 = vld [vmem:[%s891 + $0x298] sm:$0xff]
        %v3816 = vld [vmem:[%s891 + $0x2a0] sm:$0xff]
        %v3817 = vld [vmem:[%s891 + $0x2a8] sm:$0xff]
        %v3818 = vld [vmem:[%s891 + $0x2b0] sm:$0xff]
        %v3819 = vld [vmem:[%s891 + $0x2b8] sm:$0xff]
        %v3820 = vld [vmem:[%s891 + $0x2c0] sm:$0xff]
        %v3821 = vld [vmem:[%s891 + $0x2c8] sm:$0xff]
        %v3822 = vld [vmem:[%s891 + $0x2d0] sm:$0xff]
        %v3823 = vld [vmem:[%s891 + $0x2d8] sm:$0xff]
        %v3824 = vld [vmem:[%s891 + $0x2e0] sm:$0xff]
        %v3825 = vld [vmem:[%s891 + $0x2e8] sm:$0xff]
        %v3826 = vld [vmem:[%s891 + $0x2f0] sm:$0xff]
        %v3827 = vld [vmem:[%s891 + $0x2f8] sm:$0xff]
        %v3828 = vld [vmem:[%s891 + $0x300] sm:$0xff]
        %v3829 = vld [vmem:[%s891 + $0x308] sm:$0xff]
        %v3830 = vld [vmem:[%s891 + $0x310] sm:$0xff]
        %v3831 = vld [vmem:[%s891 + $0x318] sm:$0xff]
        %v3832 = vld [vmem:[%s891 + $0x320] sm:$0xff]
        %v3833 = vld [vmem:[%s891 + $0x328] sm:$0xff]
        %v3834 = vld [vmem:[%s891 + $0x330] sm:$0xff]
        %v3835 = vld [vmem:[%s891 + $0x338] sm:$0xff]
        %v3836 = vld [vmem:[%s891 + $0x340] sm:$0xff]
        %v3837 = vld [vmem:[%s891 + $0x348] sm:$0xff]
        %v3838 = vld [vmem:[%s891 + $0x350] sm:$0xff]
        %v3839 = vld [vmem:[%s891 + $0x358] sm:$0xff]
        %v3840 = vld [vmem:[%s891 + $0x360] sm:$0xff]
        %v3841 = vld [vmem:[%s891 + $0x368] sm:$0xff]
        %v3842 = vld [vmem:[%s891 + $0x370] sm:$0xff]
        %v3843 = vld [vmem:[%s891 + $0x378] sm:$0xff]
        %v3844 = vld [vmem:[%s891 + $0x380] sm:$0xff]
        %v3845 = vld [vmem:[%s891 + $0x388] sm:$0xff]
        %v3846 = vld [vmem:[%s891 + $0x390] sm:$0xff]
        %v3847 = vld [vmem:[%s891 + $0x398] sm:$0xff]
        %v3848 = vld [vmem:[%s891 + $0x3a0] sm:$0xff]
        %v3849 = vld [vmem:[%s891 + $0x3a8] sm:$0xff]
        %v3850 = vld [vmem:[%s891 + $0x3b0] sm:$0xff]
        %v3851 = vld [vmem:[%s891 + $0x3b8] sm:$0xff]
        %v3852 = vld [vmem:[%s891 + $0x3c0] sm:$0xff]
        %v3853 = vld [vmem:[%s891 + $0x3c8] sm:$0xff]
        %v3854 = vld [vmem:[%s891 + $0x3d0] sm:$0xff]
        %v3855 = vld [vmem:[%s891 + $0x3d8] sm:$0xff]
        %v3856 = vld [vmem:[%s891 + $0x3e0] sm:$0xff]
        %v3857 = vld [vmem:[%s891 + $0x3e8] sm:$0xff]
        %v3858 = vld [vmem:[%s891 + $0x3f0] sm:$0xff]
        %v3859 = vld [vmem:[%s891 + $0x3f8] sm:$0xff]
        %v3860 = vld [vmem:[%s891 + $0x400] sm:$0xff]
        %v3861 = vld [vmem:[%s891 + $0x408] sm:$0xff]
        %v3862 = vld [vmem:[%s891 + $0x410] sm:$0xff]
        %v3863 = vld [vmem:[%s891 + $0x418] sm:$0xff]
        %v3864 = vld [vmem:[%s891 + $0x420] sm:$0xff]
        %v3865 = vld [vmem:[%s891 + $0x428] sm:$0xff]
        %v3866 = vld [vmem:[%s891 + $0x430] sm:$0xff]
        %v3867 = vld [vmem:[%s891 + $0x438] sm:$0xff]
        %v3868 = vld [vmem:[%s891 + $0x440] sm:$0xff]
        %v3869 = vld [vmem:[%s891 + $0x448] sm:$0xff]
        %v3870 = vld [vmem:[%s891 + $0x450] sm:$0xff]
        %v3871 = vld [vmem:[%s891 + $0x458] sm:$0xff]
        %v3872 = vld [vmem:[%s891 + $0x460] sm:$0xff]
        %v3873 = vld [vmem:[%s891 + $0x468] sm:$0xff]
        %v3874 = vld [vmem:[%s891 + $0x470] sm:$0xff]
        %v3875 = vld [vmem:[%s891 + $0x478] sm:$0xff]
        %v3876 = vld [vmem:[%s891 + $0x480] sm:$0xff]
        %v3877 = vld [vmem:[%s891 + $0x488] sm:$0xff]
        %v3878 = vld [vmem:[%s891 + $0x490] sm:$0xff]
        %v3879 = vld [vmem:[%s891 + $0x498] sm:$0xff]
        %v3880 = vld [vmem:[%s891 + $0x4a0] sm:$0xff]
        %v3881 = vld [vmem:[%s891 + $0x4a8] sm:$0xff]
        %v3882 = vld [vmem:[%s891 + $0x4b0] sm:$0xff]
        %v3883 = vld [vmem:[%s891 + $0x4b8] sm:$0xff]
        %v3884 = vld [vmem:[%s891 + $0x4c0] sm:$0xff]
        %v3885 = vld [vmem:[%s891 + $0x4c8] sm:$0xff]
        %v3886 = vld [vmem:[%s891 + $0x4d0] sm:$0xff]
        %v3887 = vld [vmem:[%s891 + $0x4d8] sm:$0xff]
        %v3888 = vld [vmem:[%s891 + $0x4e0] sm:$0xff]
        %v3889 = vld [vmem:[%s891 + $0x4e8] sm:$0xff]
        %v3890 = vld [vmem:[%s891 + $0x4f0] sm:$0xff]
        %v3891 = vld [vmem:[%s891 + $0x4f8] sm:$0xff]
        %v3892 = vld [vmem:[%s891 + $0x500] sm:$0xff]
        %v3893 = vld [vmem:[%s891 + $0x508] sm:$0xff]
        %v3894 = vld [vmem:[%s891 + $0x510] sm:$0xff]
        %v3895 = vld [vmem:[%s891 + $0x518] sm:$0xff]
        %v3896 = vld [vmem:[%s891 + $0x520] sm:$0xff]
        %v3897 = vld [vmem:[%s891 + $0x528] sm:$0xff]
        %v3898 = vld [vmem:[%s891 + $0x530] sm:$0xff]
        %v3899 = vld [vmem:[%s891 + $0x538] sm:$0xff]
        %v3900 = vld [vmem:[%s891 + $0x540] sm:$0xff]
        %v3901 = vld [vmem:[%s891 + $0x548] sm:$0xff]
        %v3902 = vld [vmem:[%s891 + $0x550] sm:$0xff]
        %v3903 = vld [vmem:[%s891 + $0x558] sm:$0xff]
        %v3904 = vld [vmem:[%s891 + $0x560] sm:$0xff]
        %v3905 = vld [vmem:[%s891 + $0x568] sm:$0xff]
        %v3906 = vld [vmem:[%s891 + $0x570] sm:$0xff]
        %v3907 = vld [vmem:[%s891 + $0x578] sm:$0xff]
        %v3908 = vld [vmem:[%s891 + $0x580] sm:$0xff]
        %v3909 = vld [vmem:[%s891 + $0x588] sm:$0xff]
        %v3910 = vld [vmem:[%s891 + $0x590] sm:$0xff]
        %v3911 = vld [vmem:[%s891 + $0x598] sm:$0xff]
        %v3912 = vld [vmem:[%s891 + $0x5a0] sm:$0xff]
        %v3913 = vld [vmem:[%s891 + $0x5a8] sm:$0xff]
        %v3914 = vld [vmem:[%s891 + $0x5b0] sm:$0xff]
        %v3915 = vld [vmem:[%s891 + $0x5b8] sm:$0xff]
        %v3916 = vld [vmem:[%s891 + $0x5c0] sm:$0xff]
        %v3917 = vld [vmem:[%s891 + $0x5c8] sm:$0xff]
        %v3918 = vld [vmem:[%s891 + $0x5d0] sm:$0xff]
        %v3919 = vld [vmem:[%s891 + $0x5d8] sm:$0xff]
        %v3920 = vld [vmem:[%s891 + $0x5e0] sm:$0xff]
        %v3921 = vld [vmem:[%s891 + $0x5e8] sm:$0xff]
        %v3922 = vld [vmem:[%s891 + $0x5f0] sm:$0xff]
        %v3923 = vld [vmem:[%s891 + $0x5f8] sm:$0xff]
        %v3924 = vld [vmem:[%s891 + $0x600] sm:$0xff]
        %v3925 = vld [vmem:[%s891 + $0x608] sm:$0xff]
        %v3926 = vld [vmem:[%s891 + $0x610] sm:$0xff]
        %v3927 = vld [vmem:[%s891 + $0x618] sm:$0xff]
        %v3928 = vld [vmem:[%s891 + $0x620] sm:$0xff]
        %v3929 = vld [vmem:[%s891 + $0x628] sm:$0xff]
        %v3930 = vld [vmem:[%s891 + $0x630] sm:$0xff]
        %v3931 = vld [vmem:[%s891 + $0x638] sm:$0xff]
        %v3932 = vld [vmem:[%s891 + $0x640] sm:$0xff]
        %v3933 = vld [vmem:[%s891 + $0x648] sm:$0xff]
        %v3934 = vld [vmem:[%s891 + $0x650] sm:$0xff]
        %v3935 = vld [vmem:[%s891 + $0x658] sm:$0xff]
        %v3936 = vld [vmem:[%s891 + $0x660] sm:$0xff]
        %v3937 = vld [vmem:[%s891 + $0x668] sm:$0xff]
        %v3938 = vld [vmem:[%s891 + $0x670] sm:$0xff]
        %v3939 = vld [vmem:[%s891 + $0x678] sm:$0xff]
        %v3940 = vld [vmem:[%s891 + $0x680] sm:$0xff]
        %v3941 = vld [vmem:[%s891 + $0x688] sm:$0xff]
        %v3942 = vld [vmem:[%s891 + $0x690] sm:$0xff]
        %v3943 = vld [vmem:[%s891 + $0x698] sm:$0xff]
        %v3944 = vld [vmem:[%s891 + $0x6a0] sm:$0xff]
        %v3945 = vld [vmem:[%s891 + $0x6a8] sm:$0xff]
        %v3946 = vld [vmem:[%s891 + $0x6b0] sm:$0xff]
        %v3947 = vld [vmem:[%s891 + $0x6b8] sm:$0xff]
        %v3948 = vld [vmem:[%s891 + $0x6c0] sm:$0xff]
        %v3949 = vld [vmem:[%s891 + $0x6c8] sm:$0xff]
        %v3950 = vld [vmem:[%s891 + $0x6d0] sm:$0xff]
        %v3951 = vld [vmem:[%s891 + $0x6d8] sm:$0xff]
        %v3952 = vld [vmem:[%s891 + $0x6e0] sm:$0xff]
        %v3953 = vld [vmem:[%s891 + $0x6e8] sm:$0xff]
        %v3954 = vld [vmem:[%s891 + $0x6f0] sm:$0xff]
        %v3955 = vld [vmem:[%s891 + $0x6f8] sm:$0xff]
        %v3956 = vld [vmem:[%s891 + $0x700] sm:$0xff]
        %v3957 = vld [vmem:[%s891 + $0x708] sm:$0xff]
        %v3958 = vld [vmem:[%s891 + $0x710] sm:$0xff]
        %v3959 = vld [vmem:[%s891 + $0x718] sm:$0xff]
        %v3960 = vld [vmem:[%s891 + $0x720] sm:$0xff]
        %v3961 = vld [vmem:[%s891 + $0x728] sm:$0xff]
        %v3962 = vld [vmem:[%s891 + $0x730] sm:$0xff]
        %v3963 = vld [vmem:[%s891 + $0x738] sm:$0xff]
        %v3964 = vld [vmem:[%s891 + $0x740] sm:$0xff]
        %v3965 = vld [vmem:[%s891 + $0x748] sm:$0xff]
        %v3966 = vld [vmem:[%s891 + $0x750] sm:$0xff]
        %v3967 = vld [vmem:[%s891 + $0x758] sm:$0xff]
        %v3968 = vld [vmem:[%s891 + $0x760] sm:$0xff]
        %v3969 = vld [vmem:[%s891 + $0x768] sm:$0xff]
        %v3970 = vld [vmem:[%s891 + $0x770] sm:$0xff]
        %v3971 = vld [vmem:[%s891 + $0x778] sm:$0xff]
        %v3972 = vld [vmem:[%s891 + $0x780] sm:$0xff]
        %v3973 = vld [vmem:[%s891 + $0x788] sm:$0xff]
        %v3974 = vld [vmem:[%s891 + $0x790] sm:$0xff]
        %v3975 = vld [vmem:[%s891 + $0x798] sm:$0xff]
        %v3976 = vld [vmem:[%s891 + $0x7a0] sm:$0xff]
        %v3977 = vld [vmem:[%s891 + $0x7a8] sm:$0xff]
        %v3978 = vld [vmem:[%s891 + $0x7b0] sm:$0xff]
        %v3979 = vld [vmem:[%s891 + $0x7b8] sm:$0xff]
        %v3980 = vld [vmem:[%s891 + $0x7c0] sm:$0xff]
        %v3981 = vld [vmem:[%s891 + $0x7c8] sm:$0xff]
        %v3982 = vld [vmem:[%s891 + $0x7d0] sm:$0xff]
        %v3983 = vld [vmem:[%s891 + $0x7d8] sm:$0xff]
        %v3984 = vld [vmem:[%s891 + $0x7e0] sm:$0xff]
        %v3985 = vld [vmem:[%s891 + $0x7e8] sm:$0xff]
        %v3986 = vld [vmem:[%s891 + $0x7f0] sm:$0xff]
        %v3987 = vld [vmem:[%s891 + $0x7f8] sm:$0xff]
        %v3988 = vld [vmem:[%s891 + $0x800] sm:$0xff]
        %v3989 = vld [vmem:[%s891 + $0x808] sm:$0xff]
        %v3990 = vld [vmem:[%s891 + $0x810] sm:$0xff]
        %v3991 = vld [vmem:[%s891 + $0x818] sm:$0xff]
        %v3992 = vld [vmem:[%s891 + $0x820] sm:$0xff]
        %v3993 = vld [vmem:[%s891 + $0x828] sm:$0xff]
        %v3994 = vld [vmem:[%s891 + $0x830] sm:$0xff]
        %v3995 = vld [vmem:[%s891 + $0x838] sm:$0xff]
        %v3996 = vld [vmem:[%s891 + $0x840] sm:$0xff]
        %v3997 = vld [vmem:[%s891 + $0x848] sm:$0xff]
        %v3998 = vld [vmem:[%s891 + $0x850] sm:$0xff]
        %v3999 = vld [vmem:[%s891 + $0x858] sm:$0xff]
        %v4000 = vld [vmem:[%s891 + $0x860] sm:$0xff]
        %v4001 = vld [vmem:[%s891 + $0x868] sm:$0xff]
        %v4002 = vld [vmem:[%s891 + $0x870] sm:$0xff]
        %v4003 = vld [vmem:[%s891 + $0x878] sm:$0xff]
        %v4004 = vld [vmem:[%s891 + $0x880] sm:$0xff]
        %v4005 = vld [vmem:[%s891 + $0x888] sm:$0xff]
        %v4006 = vld [vmem:[%s891 + $0x890] sm:$0xff]
        %v4007 = vld [vmem:[%s891 + $0x898] sm:$0xff]
        %v4008 = vld [vmem:[%s891 + $0x8a0] sm:$0xff]
        %v4009 = vld [vmem:[%s891 + $0x8a8] sm:$0xff]
        %v4010 = vld [vmem:[%s891 + $0x8b0] sm:$0xff]
        %v4011 = vld [vmem:[%s891 + $0x8b8] sm:$0xff]
        %v4012 = vld [vmem:[%s891 + $0x8c0] sm:$0xff]
        %v4013 = vld [vmem:[%s891 + $0x8c8] sm:$0xff]
        %v4014 = vld [vmem:[%s891 + $0x8d0] sm:$0xff]
        %v4015 = vld [vmem:[%s891 + $0x8d8] sm:$0xff]
        %v4016 = vld [vmem:[%s891 + $0x8e0] sm:$0xff]
        %v4017 = vld [vmem:[%s891 + $0x8e8] sm:$0xff]
        %v4018 = vld [vmem:[%s891 + $0x8f0] sm:$0xff]
        %v4019 = vld [vmem:[%s891 + $0x8f8] sm:$0xff]
        %v4020 = vld [vmem:[%s891 + $0x900] sm:$0xff]
        %v4021 = vld [vmem:[%s891 + $0x908] sm:$0xff]
        %v4022 = vld [vmem:[%s891 + $0x910] sm:$0xff]
        %v4023 = vld [vmem:[%s891 + $0x918] sm:$0xff]
        %v4024 = vld [vmem:[%s891 + $0x920] sm:$0xff]
        %v4025 = vld [vmem:[%s891 + $0x928] sm:$0xff]
        %v4026 = vld [vmem:[%s891 + $0x930] sm:$0xff]
        %v4027 = vld [vmem:[%s891 + $0x938] sm:$0xff]
        %v4028 = vld [vmem:[%s891 + $0x940] sm:$0xff]
        %v4029 = vld [vmem:[%s891 + $0x948] sm:$0xff]
        %v4030 = vld [vmem:[%s891 + $0x950] sm:$0xff]
        %v4031 = vld [vmem:[%s891 + $0x958] sm:$0xff]
        %v4032 = vld [vmem:[%s891 + $0x960] sm:$0xff]
        %v4033 = vld [vmem:[%s891 + $0x968] sm:$0xff]
        %v4034 = vld [vmem:[%s891 + $0x970] sm:$0xff]
        %v4035 = vld [vmem:[%s891 + $0x978] sm:$0xff]
        %v4036 = vld [vmem:[%s891 + $0x980] sm:$0xff]
        %v4037 = vld [vmem:[%s891 + $0x988] sm:$0xff]
        %v4038 = vld [vmem:[%s891 + $0x990] sm:$0xff]
        %v4039 = vld [vmem:[%s891 + $0x998] sm:$0xff]
        %v4040 = vld [vmem:[%s891 + $0x9a0] sm:$0xff]
        %v4041 = vld [vmem:[%s891 + $0x9a8] sm:$0xff]
        %v4042 = vld [vmem:[%s891 + $0x9b0] sm:$0xff]
        %v4043 = vld [vmem:[%s891 + $0x9b8] sm:$0xff]
        %v4044 = vld [vmem:[%s891 + $0x9c0] sm:$0xff]
        %v4045 = vld [vmem:[%s891 + $0x9c8] sm:$0xff]
        %v4046 = vld [vmem:[%s891 + $0x9d0] sm:$0xff]
        %v4047 = vld [vmem:[%s891 + $0x9d8] sm:$0xff]
        %v4048 = vld [vmem:[%s891 + $0x9e0] sm:$0xff]
        %v4049 = vld [vmem:[%s891 + $0x9e8] sm:$0xff]
        %v4050 = vld [vmem:[%s891 + $0x9f0] sm:$0xff]
        %v4051 = vld [vmem:[%s891 + $0x9f8] sm:$0xff]
        %v4052 = vld [vmem:[%s891 + $0xa00] sm:$0xff]
        %v4053 = vld [vmem:[%s891 + $0xa08] sm:$0xff]
        %v4054 = vld [vmem:[%s891 + $0xa10] sm:$0xff]
        %v4055 = vld [vmem:[%s891 + $0xa18] sm:$0xff]
        %v4056 = vld [vmem:[%s891 + $0xa20] sm:$0xff]
        %v4057 = vld [vmem:[%s891 + $0xa28] sm:$0xff]
        %v4058 = vld [vmem:[%s891 + $0xa30] sm:$0xff]
        %v4059 = vld [vmem:[%s891 + $0xa38] sm:$0xff]
        %v4060 = vld [vmem:[%s891 + $0xa40] sm:$0xff]
        %v4061 = vld [vmem:[%s891 + $0xa48] sm:$0xff]
        %v4062 = vld [vmem:[%s891 + $0xa50] sm:$0xff]
        %v4063 = vld [vmem:[%s891 + $0xa58] sm:$0xff]
        %v4064 = vld [vmem:[%s891 + $0xa60] sm:$0xff]
        %v4065 = vld [vmem:[%s891 + $0xa68] sm:$0xff]
        %v4066 = vld [vmem:[%s891 + $0xa70] sm:$0xff]
        %v4067 = vld [vmem:[%s891 + $0xa78] sm:$0xff]
        %v4068 = vld [vmem:[%s891 + $0xa80] sm:$0xff]
        %v4069 = vld [vmem:[%s891 + $0xa88] sm:$0xff]
        %v4070 = vld [vmem:[%s891 + $0xa90] sm:$0xff]
        %v4071 = vld [vmem:[%s891 + $0xa98] sm:$0xff]
        %v4072 = vld [vmem:[%s891 + $0xaa0] sm:$0xff]
        %v4073 = vld [vmem:[%s891 + $0xaa8] sm:$0xff]
        %v4074 = vld [vmem:[%s891 + $0xab0] sm:$0xff]
        %v4075 = vld [vmem:[%s891 + $0xab8] sm:$0xff]
        %v4076 = vld [vmem:[%s891 + $0xac0] sm:$0xff]
        %v4077 = vld [vmem:[%s891 + $0xac8] sm:$0xff]
        %v4078 = vld [vmem:[%s891 + $0xad0] sm:$0xff]
        %v4079 = vld [vmem:[%s891 + $0xad8] sm:$0xff]
        %v4080 = vld [vmem:[%s891 + $0xae0] sm:$0xff]
        %v4081 = vld [vmem:[%s891 + $0xae8] sm:$0xff]
        %v4082 = vld [vmem:[%s891 + $0xaf0] sm:$0xff]
        %v4083 = vld [vmem:[%s891 + $0xaf8] sm:$0xff]
        %v4084 = vld [vmem:[%s891 + $0xb00] sm:$0xff]
        %v4085 = vld [vmem:[%s891 + $0xb08] sm:$0xff]
        %v4086 = vld [vmem:[%s891 + $0xb10] sm:$0xff]
        %v4087 = vld [vmem:[%s891 + $0xb18] sm:$0xff]
        %v4088 = vld [vmem:[%s891 + $0xb20] sm:$0xff]
        %v4089 = vld [vmem:[%s891 + $0xb28] sm:$0xff]
        %v4090 = vld [vmem:[%s891 + $0xb30] sm:$0xff]
        %v4091 = vld [vmem:[%s891 + $0xb38] sm:$0xff]
        %v4092 = vld [vmem:[%s891 + $0xb40] sm:$0xff]
        %v4093 = vld [vmem:[%s891 + $0xb48] sm:$0xff]
        %v4094 = vld [vmem:[%s891 + $0xb50] sm:$0xff]
        %v4095 = vld [vmem:[%s891 + $0xb58] sm:$0xff]
        %v4096 = vld [vmem:[%s891 + $0xb60] sm:$0xff]
        %v4097 = vld [vmem:[%s891 + $0xb68] sm:$0xff]
        %v4098 = vld [vmem:[%s891 + $0xb70] sm:$0xff]
        %v4099 = vld [vmem:[%s891 + $0xb78] sm:$0xff]
        %v4100 = vld [vmem:[%s891 + $0xb80] sm:$0xff]
        %v4101 = vld [vmem:[%s891 + $0xb88] sm:$0xff]
        %v4102 = vld [vmem:[%s891 + $0xb90] sm:$0xff]
        %v4103 = vld [vmem:[%s891 + $0xb98] sm:$0xff]
        %v4104 = vld [vmem:[%s891 + $0xba0] sm:$0xff]
        %v4105 = vld [vmem:[%s891 + $0xba8] sm:$0xff]
        %v4106 = vld [vmem:[%s891 + $0xbb0] sm:$0xff]
        %v4107 = vld [vmem:[%s891 + $0xbb8] sm:$0xff]
        %v4108 = vld [vmem:[%s891 + $0xbc0] sm:$0xff]
        %v4109 = vld [vmem:[%s891 + $0xbc8] sm:$0xff]
        %v4110 = vld [vmem:[%s891 + $0xbd0] sm:$0xff]
        %v4111 = vld [vmem:[%s891 + $0xbd8] sm:$0xff]
        %v4112 = vld [vmem:[%s891 + $0xbe0] sm:$0xff]
        %v4113 = vld [vmem:[%s891 + $0xbe8] sm:$0xff]
        %v4114 = vld [vmem:[%s891 + $0xbf0] sm:$0xff]
        %v4115 = vld [vmem:[%s891 + $0xbf8] sm:$0xff]
        %v4116 = vld [vmem:[%s891 + $0xc00] sm:$0xff]
        %v4117 = vld [vmem:[%s891 + $0xc08] sm:$0xff]
        %v4118 = vld [vmem:[%s891 + $0xc10] sm:$0xff]
        %v4119 = vld [vmem:[%s891 + $0xc18] sm:$0xff]
        %v4120 = vld [vmem:[%s891 + $0xc20] sm:$0xff]
        %v4121 = vld [vmem:[%s891 + $0xc28] sm:$0xff]
        %v4122 = vld [vmem:[%s891 + $0xc30] sm:$0xff]
        %v4123 = vld [vmem:[%s891 + $0xc38] sm:$0xff]
        %v4124 = vld [vmem:[%s891 + $0xc40] sm:$0xff]
        %v4125 = vld [vmem:[%s891 + $0xc48] sm:$0xff]
        %v4126 = vld [vmem:[%s891 + $0xc50] sm:$0xff]
        %v4127 = vld [vmem:[%s891 + $0xc58] sm:$0xff]
        %v4128 = vld [vmem:[%s891 + $0xc60] sm:$0xff]
        %v4129 = vld [vmem:[%s891 + $0xc68] sm:$0xff]
        %v4130 = vld [vmem:[%s891 + $0xc70] sm:$0xff]
        %v4131 = vld [vmem:[%s891 + $0xc78] sm:$0xff]
        %v4132 = vld [vmem:[%s891 + $0xc80] sm:$0xff]
        %v4133 = vld [vmem:[%s891 + $0xc88] sm:$0xff]
        %v4134 = vld [vmem:[%s891 + $0xc90] sm:$0xff]
        %v4135 = vld [vmem:[%s891 + $0xc98] sm:$0xff]
        %v4136 = vld [vmem:[%s891 + $0xca0] sm:$0xff]
        %v4137 = vld [vmem:[%s891 + $0xca8] sm:$0xff]
        %v4138 = vld [vmem:[%s891 + $0xcb0] sm:$0xff]
        %v4139 = vld [vmem:[%s891 + $0xcb8] sm:$0xff]
        %v4140 = vld [vmem:[%s891 + $0xcc0] sm:$0xff]
        %v4141 = vld [vmem:[%s891 + $0xcc8] sm:$0xff]
        %v4142 = vld [vmem:[%s891 + $0xcd0] sm:$0xff]
        %v4143 = vld [vmem:[%s891 + $0xcd8] sm:$0xff]
        %v4144 = vld [vmem:[%s891 + $0xce0] sm:$0xff]
        %v4145 = vld [vmem:[%s891 + $0xce8] sm:$0xff]
        %v4146 = vld [vmem:[%s891 + $0xcf0] sm:$0xff]
        %v4147 = vld [vmem:[%s891 + $0xcf8] sm:$0xff]
        %v4148 = vld [vmem:[%s891 + $0xd00] sm:$0xff]
        %v4149 = vld [vmem:[%s891 + $0xd08] sm:$0xff]
        %v4150 = vld [vmem:[%s891 + $0xd10] sm:$0xff]
        %v4151 = vld [vmem:[%s891 + $0xd18] sm:$0xff]
        %v4152 = vld [vmem:[%s891 + $0xd20] sm:$0xff]
        %v4153 = vld [vmem:[%s891 + $0xd28] sm:$0xff]
        %v4154 = vld [vmem:[%s891 + $0xd30] sm:$0xff]
        %v4155 = vld [vmem:[%s891 + $0xd38] sm:$0xff]
        %v4156 = vld [vmem:[%s891 + $0xd40] sm:$0xff]
        %v4157 = vld [vmem:[%s891 + $0xd48] sm:$0xff]
        %v4158 = vld [vmem:[%s891 + $0xd50] sm:$0xff]
        %v4159 = vld [vmem:[%s891 + $0xd58] sm:$0xff]
        %v4160 = vld [vmem:[%s891 + $0xd60] sm:$0xff]
        %v4161 = vld [vmem:[%s891 + $0xd68] sm:$0xff]
        %v4162 = vld [vmem:[%s891 + $0xd70] sm:$0xff]
        %v4163 = vld [vmem:[%s891 + $0xd78] sm:$0xff]
        %v4164 = vld [vmem:[%s891 + $0xd80] sm:$0xff]
        %v4165 = vld [vmem:[%s891 + $0xd88] sm:$0xff]
        %v4166 = vld [vmem:[%s891 + $0xd90] sm:$0xff]
        %v4167 = vld [vmem:[%s891 + $0xd98] sm:$0xff]
        %v4168 = vld [vmem:[%s891 + $0xda0] sm:$0xff]
        %v4169 = vld [vmem:[%s891 + $0xda8] sm:$0xff]
        %v4170 = vld [vmem:[%s891 + $0xdb0] sm:$0xff]
        %v4171 = vld [vmem:[%s891 + $0xdb8] sm:$0xff]
        %v4172 = vld [vmem:[%s891 + $0xdc0] sm:$0xff]
        %v4173 = vld [vmem:[%s891 + $0xdc8] sm:$0xff]
        %v4174 = vld [vmem:[%s891 + $0xdd0] sm:$0xff]
        %v4175 = vld [vmem:[%s891 + $0xdd8] sm:$0xff]
        %v4176 = vld [vmem:[%s891 + $0xde0] sm:$0xff]
        %v4177 = vld [vmem:[%s891 + $0xde8] sm:$0xff]
        %v4178 = vld [vmem:[%s891 + $0xdf0] sm:$0xff]
        %v4179 = vld [vmem:[%s891 + $0xdf8] sm:$0xff]
        %v4180 = vld [vmem:[%s891 + $0xe00] sm:$0xff]
        %v4181 = vld [vmem:[%s891 + $0xe08] sm:$0xff]
        %v4182 = vld [vmem:[%s891 + $0xe10] sm:$0xff]
        %v4183 = vld [vmem:[%s891 + $0xe18] sm:$0xff]
        %v4184 = vld [vmem:[%s891 + $0xe20] sm:$0xff]
        %v4185 = vld [vmem:[%s891 + $0xe28] sm:$0xff]
        %v4186 = vld [vmem:[%s891 + $0xe30] sm:$0xff]
        %v4187 = vld [vmem:[%s891 + $0xe38] sm:$0xff]
        %v4188 = vld [vmem:[%s891 + $0xe40] sm:$0xff]
        %v4189 = vld [vmem:[%s891 + $0xe48] sm:$0xff]
        %v4190 = vld [vmem:[%s891 + $0xe50] sm:$0xff]
        %v4191 = vld [vmem:[%s891 + $0xe58] sm:$0xff]
        %v4192 = vld [vmem:[%s891 + $0xe60] sm:$0xff]
        %v4193 = vld [vmem:[%s891 + $0xe68] sm:$0xff]
        %v4194 = vld [vmem:[%s891 + $0xe70] sm:$0xff]
        %v4195 = vld [vmem:[%s891 + $0xe78] sm:$0xff]
        %v4196 = vld [vmem:[%s891 + $0xe80] sm:$0xff]
        %v4197 = vld [vmem:[%s891 + $0xe88] sm:$0xff]
        %v4198 = vld [vmem:[%s891 + $0xe90] sm:$0xff]
        %v4199 = vld [vmem:[%s891 + $0xe98] sm:$0xff]
        %v4200 = vld [vmem:[%s891 + $0xea0] sm:$0xff]
        %v4201 = vld [vmem:[%s891 + $0xea8] sm:$0xff]
        %v4202 = vld [vmem:[%s891 + $0xeb0] sm:$0xff]
        %v4203 = vld [vmem:[%s891 + $0xeb8] sm:$0xff]
        %v4204 = vld [vmem:[%s891 + $0xec0] sm:$0xff]
        %v4205 = vld [vmem:[%s891 + $0xec8] sm:$0xff]
        %v4206 = vld [vmem:[%s891 + $0xed0] sm:$0xff]
        %v4207 = vld [vmem:[%s891 + $0xed8] sm:$0xff]
        %v4208 = vld [vmem:[%s891 + $0xee0] sm:$0xff]
        %v4209 = vld [vmem:[%s891 + $0xee8] sm:$0xff]
        %v4210 = vld [vmem:[%s891 + $0xef0] sm:$0xff]
        %v4211 = vld [vmem:[%s891 + $0xef8] sm:$0xff]
        %v4212 = vld [vmem:[%s891 + $0xf00] sm:$0xff]
        %v4213 = vld [vmem:[%s891 + $0xf08] sm:$0xff]
        %v4214 = vld [vmem:[%s891 + $0xf10] sm:$0xff]
        %v4215 = vld [vmem:[%s891 + $0xf18] sm:$0xff]
        %v4216 = vld [vmem:[%s891 + $0xf20] sm:$0xff]
        %v4217 = vld [vmem:[%s891 + $0xf28] sm:$0xff]
        %v4218 = vld [vmem:[%s891 + $0xf30] sm:$0xff]
        %v4219 = vld [vmem:[%s891 + $0xf38] sm:$0xff]
        %v4220 = vld [vmem:[%s891 + $0xf40] sm:$0xff]
        %v4221 = vld [vmem:[%s891 + $0xf48] sm:$0xff]
        %v4222 = vld [vmem:[%s891 + $0xf50] sm:$0xff]
        %v4223 = vld [vmem:[%s891 + $0xf58] sm:$0xff]
        %v4224 = vld [vmem:[%s891 + $0xf60] sm:$0xff]
        %v4225 = vld [vmem:[%s891 + $0xf68] sm:$0xff]
        %v4226 = vld [vmem:[%s891 + $0xf70] sm:$0xff]
        %v4227 = vld [vmem:[%s891 + $0xf78] sm:$0xff]
        %v4228 = vld [vmem:[%s891 + $0xf80] sm:$0xff]
        %v4229 = vld [vmem:[%s891 + $0xf88] sm:$0xff]
        %v4230 = vld [vmem:[%s891 + $0xf90] sm:$0xff]
        %v4231 = vld [vmem:[%s891 + $0xf98] sm:$0xff]
        %v4232 = vld [vmem:[%s891 + $0xfa0] sm:$0xff]
        %v4233 = vld [vmem:[%s891 + $0xfa8] sm:$0xff]
        %v4234 = vld [vmem:[%s891 + $0xfb0] sm:$0xff]
        %v4235 = vld [vmem:[%s891 + $0xfb8] sm:$0xff]
        %v4236 = vld [vmem:[%s891 + $0xfc0] sm:$0xff]
        %v4237 = vld [vmem:[%s891 + $0xfc8] sm:$0xff]
        %v4238 = vld [vmem:[%s891 + $0xfd0] sm:$0xff]
        %v4239 = vld [vmem:[%s891 + $0xfd8] sm:$0xff]
        %v4240 = vld [vmem:[%s891 + $0xfe0] sm:$0xff]
        %v4241 = vld [vmem:[%s891 + $0xfe8] sm:$0xff]
        %v4242 = vld [vmem:[%s891 + $0xff0] sm:$0xff]
        %v4243 = vld [vmem:[%s891 + $0xff8] sm:$0xff]
        %v4244 = vld [vmem:[%s891 + $0x1000] sm:$0xff]
        %v4245 = vld [vmem:[%s891 + $0x1008] sm:$0xff]
        %v4246 = vld [vmem:[%s891 + $0x1010] sm:$0xff]
        %v4247 = vld [vmem:[%s891 + $0x1018] sm:$0xff]
        %v4248 = vld [vmem:[%s891 + $0x1020] sm:$0xff]
        %v4249 = vld [vmem:[%s891 + $0x1028] sm:$0xff]
        %v4250 = vld [vmem:[%s891 + $0x1030] sm:$0xff]
        %v4251 = vld [vmem:[%s891 + $0x1038] sm:$0xff]
        %v4252 = vld [vmem:[%s891 + $0x1040] sm:$0xff]
        %v4253 = vld [vmem:[%s891 + $0x1048] sm:$0xff]
        %v4254 = vld [vmem:[%s891 + $0x1050] sm:$0xff]
        %v4255 = vld [vmem:[%s891 + $0x1058] sm:$0xff]
        %v4256 = vld [vmem:[%s891 + $0x1060] sm:$0xff]
        %v4257 = vld [vmem:[%s891 + $0x1068] sm:$0xff]
        %v4258 = vld [vmem:[%s891 + $0x1070] sm:$0xff]
        %v4259 = vld [vmem:[%s891 + $0x1078] sm:$0xff]
        %v4260 = vld [vmem:[%s891 + $0x1080] sm:$0xff]
        %v4261 = vld [vmem:[%s891 + $0x1088] sm:$0xff]
        %v4262 = vld [vmem:[%s891 + $0x1090] sm:$0xff]
        %v4263 = vld [vmem:[%s891 + $0x1098] sm:$0xff]
        %v4264 = vld [vmem:[%s891 + $0x10a0] sm:$0xff]
        %v4265 = vld [vmem:[%s891 + $0x10a8] sm:$0xff]
        %v4266 = vld [vmem:[%s891 + $0x10b0] sm:$0xff]
        %v4267 = vld [vmem:[%s891 + $0x10b8] sm:$0xff]
        %v4268 = vld [vmem:[%s891 + $0x10c0] sm:$0xff]
        %v4269 = vld [vmem:[%s891 + $0x10c8] sm:$0xff]
        %v4270 = vld [vmem:[%s891 + $0x10d0] sm:$0xff]
        %v4271 = vld [vmem:[%s891 + $0x10d8] sm:$0xff]
        %v4272 = vld [vmem:[%s891 + $0x10e0] sm:$0xff]
        %v4273 = vld [vmem:[%s891 + $0x10e8] sm:$0xff]
        %v4274 = vld [vmem:[%s891 + $0x10f0] sm:$0xff]
        %v4275 = vld [vmem:[%s891 + $0x10f8] sm:$0xff]
        %v4276 = vld [vmem:[%s891 + $0x1100] sm:$0xff]
        %v4277 = vld [vmem:[%s891 + $0x1108] sm:$0xff]
        %v4278 = vld [vmem:[%s891 + $0x1110] sm:$0xff]
        %v4279 = vld [vmem:[%s891 + $0x1118] sm:$0xff]
        %v4280 = vld [vmem:[%s891 + $0x1120] sm:$0xff]
        %v4281 = vld [vmem:[%s891 + $0x1128] sm:$0xff]
        %v4282 = vld [vmem:[%s891 + $0x1130] sm:$0xff]
        %v4283 = vld [vmem:[%s891 + $0x1138] sm:$0xff]
        %v4284 = vld [vmem:[%s891 + $0x1140] sm:$0xff]
        %v4285 = vld [vmem:[%s891 + $0x1148] sm:$0xff]
        %v4286 = vld [vmem:[%s891 + $0x1150] sm:$0xff]
        %v4287 = vld [vmem:[%s891 + $0x1158] sm:$0xff]
        %v4288 = vld [vmem:[%s891 + $0x1160] sm:$0xff]
        %v4289 = vld [vmem:[%s891 + $0x1168] sm:$0xff]
        %v4290 = vld [vmem:[%s891 + $0x1170] sm:$0xff]
        %v4291 = vld [vmem:[%s891 + $0x1178] sm:$0xff]
        %v4292 = vld [vmem:[%s891 + $0x1180] sm:$0xff]
        %v4293 = vld [vmem:[%s891 + $0x1188] sm:$0xff]
        %v4294 = vld [vmem:[%s891 + $0x1190] sm:$0xff]
        %v4295 = vld [vmem:[%s891 + $0x1198] sm:$0xff]
        %v4296 = vld [vmem:[%s891 + $0x11a0] sm:$0xff]
        %v4297 = vld [vmem:[%s891 + $0x11a8] sm:$0xff]
        %v4298 = vld [vmem:[%s891 + $0x11b0] sm:$0xff]
        %v4299 = vld [vmem:[%s891 + $0x11b8] sm:$0xff]
        %v4300 = vld [vmem:[%s891 + $0x11c0] sm:$0xff]
        %v4301 = vld [vmem:[%s891 + $0x11c8] sm:$0xff]
        %v4302 = vld [vmem:[%s891 + $0x11d0] sm:$0xff]
        %v4303 = vld [vmem:[%s891 + $0x11d8] sm:$0xff]
        %v4304 = vld [vmem:[%s891 + $0x11e0] sm:$0xff]
        %v4305 = vld [vmem:[%s891 + $0x11e8] sm:$0xff]
        %v4306 = vld [vmem:[%s891 + $0x11f0] sm:$0xff]
        %v4307 = vld [vmem:[%s891 + $0x11f8] sm:$0xff]
        %v4308 = vld [vmem:[%s891 + $0x1200] sm:$0xff]
        %v4309 = vld [vmem:[%s891 + $0x1208] sm:$0xff]
        %v4310 = vld [vmem:[%s891 + $0x1210] sm:$0xff]
        %v4311 = vld [vmem:[%s891 + $0x1218] sm:$0xff]
        %v4312 = vld [vmem:[%s891 + $0x1220] sm:$0xff]
        %v4313 = vld [vmem:[%s891 + $0x1228] sm:$0xff]
        %v4314 = vld [vmem:[%s891 + $0x1230] sm:$0xff]
        %v4315 = vld [vmem:[%s891 + $0x1238] sm:$0xff]
        %v4316 = vld [vmem:[%s891 + $0x1240] sm:$0xff]
        %v4317 = vld [vmem:[%s891 + $0x1248] sm:$0xff]
        %v4318 = vld [vmem:[%s891 + $0x1250] sm:$0xff]
        %v4319 = vld [vmem:[%s891 + $0x1258] sm:$0xff]
        %v4320 = vld [vmem:[%s891 + $0x1260] sm:$0xff]
        %v4321 = vld [vmem:[%s891 + $0x1268] sm:$0xff]
        %v4322 = vld [vmem:[%s891 + $0x1270] sm:$0xff]
        %v4323 = vld [vmem:[%s891 + $0x1278] sm:$0xff]
        %v4324 = vld [vmem:[%s891 + $0x1280] sm:$0xff]
        %v4325 = vld [vmem:[%s891 + $0x1288] sm:$0xff]
        %v4326 = vld [vmem:[%s891 + $0x1290] sm:$0xff]
        %v4327 = vld [vmem:[%s891 + $0x1298] sm:$0xff]
        %v4328 = vld [vmem:[%s891 + $0x12a0] sm:$0xff]
        %v4329 = vld [vmem:[%s891 + $0x12a8] sm:$0xff]
        %v4330 = vld [vmem:[%s891 + $0x12b0] sm:$0xff]
        %v4331 = vld [vmem:[%s891 + $0x12b8] sm:$0xff]
        %v4332 = vld [vmem:[%s891 + $0x12c0] sm:$0xff]
        %v4333 = vld [vmem:[%s891 + $0x12c8] sm:$0xff]
        %v4334 = vld [vmem:[%s891 + $0x12d0] sm:$0xff]
        %v4335 = vld [vmem:[%s891 + $0x12d8] sm:$0xff]
        %v4336 = vld [vmem:[%s891 + $0x12e0] sm:$0xff]
        %v4337 = vld [vmem:[%s891 + $0x12e8] sm:$0xff]
        %v4338 = vld [vmem:[%s891 + $0x12f0] sm:$0xff]
        %v4339 = vld [vmem:[%s891 + $0x12f8] sm:$0xff]
        %v4340 = vld [vmem:[%s891 + $0x1300] sm:$0xff]
        %v4341 = vld [vmem:[%s891 + $0x1308] sm:$0xff]
        %v4342 = vld [vmem:[%s891 + $0x1310] sm:$0xff]
        %v4343 = vld [vmem:[%s891 + $0x1318] sm:$0xff]
        %v4344 = vld [vmem:[%s891 + $0x1320] sm:$0xff]
        %v4345 = vld [vmem:[%s891 + $0x1328] sm:$0xff]
        %v4346 = vld [vmem:[%s891 + $0x1330] sm:$0xff]
        %v4347 = vld [vmem:[%s891 + $0x1338] sm:$0xff]
        %v4348 = vld [vmem:[%s891 + $0x1340] sm:$0xff]
        %v4349 = vld [vmem:[%s891 + $0x1348] sm:$0xff]
        %v4350 = vld [vmem:[%s891 + $0x1350] sm:$0xff]
        %v4351 = vld [vmem:[%s891 + $0x1358] sm:$0xff]
        %v4352 = vld [vmem:[%s891 + $0x1360] sm:$0xff]
        %v4353 = vld [vmem:[%s891 + $0x1368] sm:$0xff]
        %v4354 = vld [vmem:[%s891 + $0x1370] sm:$0xff]
        %v4355 = vld [vmem:[%s891 + $0x1378] sm:$0xff]
        %v4356 = vld [vmem:[%s891 + $0x1380] sm:$0xff]
        %v4357 = vld [vmem:[%s891 + $0x1388] sm:$0xff]
        %v4358 = vld [vmem:[%s891 + $0x1390] sm:$0xff]
        %v4359 = vld [vmem:[%s891 + $0x1398] sm:$0xff]
        %v4360 = vld [vmem:[%s891 + $0x13a0] sm:$0xff]
        %v4361 = vld [vmem:[%s891 + $0x13a8] sm:$0xff]
        %v4362 = vld [vmem:[%s891 + $0x13b0] sm:$0xff]
        %v4363 = vld [vmem:[%s891 + $0x13b8] sm:$0xff]
        %v4364 = vld [vmem:[%s891 + $0x13c0] sm:$0xff]
        %v4365 = vld [vmem:[%s891 + $0x13c8] sm:$0xff]
        %v4366 = vld [vmem:[%s891 + $0x13d0] sm:$0xff]
        %v4367 = vld [vmem:[%s891 + $0x13d8] sm:$0xff]
        %v4368 = vld [vmem:[%s891 + $0x13e0] sm:$0xff]
        %v4369 = vld [vmem:[%s891 + $0x13e8] sm:$0xff]
        %v4370 = vld [vmem:[%s891 + $0x13f0] sm:$0xff]
        %v4371 = vld [vmem:[%s891 + $0x13f8] sm:$0xff]
        %v4372 = vld [vmem:[%s891 + $0x1400] sm:$0xff]
        %v4373 = vld [vmem:[%s891 + $0x1408] sm:$0xff]
        %v4374 = vld [vmem:[%s891 + $0x1410] sm:$0xff]
        %v4375 = vld [vmem:[%s891 + $0x1418] sm:$0xff]
        %v4376 = vld [vmem:[%s891 + $0x1420] sm:$0xff]
        %v4377 = vld [vmem:[%s891 + $0x1428] sm:$0xff]
        %v4378 = vld [vmem:[%s891 + $0x1430] sm:$0xff]
        %v4379 = vld [vmem:[%s891 + $0x1438] sm:$0xff]
        %v4380 = vld [vmem:[%s891 + $0x1440] sm:$0xff]
        %v4381 = vld [vmem:[%s891 + $0x1448] sm:$0xff]
        %v4382 = vld [vmem:[%s891 + $0x1450] sm:$0xff]
        %v4383 = vld [vmem:[%s891 + $0x1458] sm:$0xff]
        %v4384 = vld [vmem:[%s891 + $0x1460] sm:$0xff]
        %v4385 = vld [vmem:[%s891 + $0x1468] sm:$0xff]
        %v4386 = vld [vmem:[%s891 + $0x1470] sm:$0xff]
        %v4387 = vld [vmem:[%s891 + $0x1478] sm:$0xff]
        %v4388 = vld [vmem:[%s891 + $0x1480] sm:$0xff]
        %v4389 = vld [vmem:[%s891 + $0x1488] sm:$0xff]
        %v4390 = vld [vmem:[%s891 + $0x1490] sm:$0xff]
        %v4391 = vld [vmem:[%s891 + $0x1498] sm:$0xff]
        %v4392 = vld [vmem:[%s891 + $0x14a0] sm:$0xff]
        %v4393 = vld [vmem:[%s891 + $0x14a8] sm:$0xff]
        %v4394 = vld [vmem:[%s891 + $0x14b0] sm:$0xff]
        %v4395 = vld [vmem:[%s891 + $0x14b8] sm:$0xff]
        %v4396 = vld [vmem:[%s891 + $0x14c0] sm:$0xff]
        %v4397 = vld [vmem:[%s891 + $0x14c8] sm:$0xff]
        %v4398 = vld [vmem:[%s891 + $0x14d0] sm:$0xff]
        %v4399 = vld [vmem:[%s891 + $0x14d8] sm:$0xff]
        %v4400 = vld [vmem:[%s891 + $0x14e0] sm:$0xff]
        %v4401 = vld [vmem:[%s891 + $0x14e8] sm:$0xff]
        %v4402 = vld [vmem:[%s891 + $0x14f0] sm:$0xff]
        %v4403 = vld [vmem:[%s891 + $0x14f8] sm:$0xff]
        %v4404 = vld [vmem:[%s891 + $0x1500] sm:$0xff]
        %v4405 = vld [vmem:[%s891 + $0x1508] sm:$0xff]
        %v4406 = vld [vmem:[%s891 + $0x1510] sm:$0xff]
        %v4407 = vld [vmem:[%s891 + $0x1518] sm:$0xff]
        %v4408 = vld [vmem:[%s891 + $0x1520] sm:$0xff]
        %v4409 = vld [vmem:[%s891 + $0x1528] sm:$0xff]
        %v4410 = vld [vmem:[%s891 + $0x1530] sm:$0xff]
        %v4411 = vld [vmem:[%s891 + $0x1538] sm:$0xff]
        %v4412 = vld [vmem:[%s891 + $0x1540] sm:$0xff]
        %v4413 = vld [vmem:[%s891 + $0x1548] sm:$0xff]
        %v4414 = vld [vmem:[%s891 + $0x1550] sm:$0xff]
        %v4415 = vld [vmem:[%s891 + $0x1558] sm:$0xff]
        %v4416 = vld [vmem:[%s891 + $0x1560] sm:$0xff]
        %v4417 = vld [vmem:[%s891 + $0x1568] sm:$0xff]
        %v4418 = vld [vmem:[%s891 + $0x1570] sm:$0xff]
        %v4419 = vld [vmem:[%s891 + $0x1578] sm:$0xff]
        %v4420 = vld [vmem:[%s891 + $0x1580] sm:$0xff]
        %v4421 = vld [vmem:[%s891 + $0x1588] sm:$0xff]
        %v4422 = vld [vmem:[%s891 + $0x1590] sm:$0xff]
        %v4423 = vld [vmem:[%s891 + $0x1598] sm:$0xff]
        %v4424 = vld [vmem:[%s891 + $0x15a0] sm:$0xff]
        %v4425 = vld [vmem:[%s891 + $0x15a8] sm:$0xff]
        %v4426 = vld [vmem:[%s891 + $0x15b0] sm:$0xff]
        %v4427 = vld [vmem:[%s891 + $0x15b8] sm:$0xff]
        %v4428 = vld [vmem:[%s891 + $0x15c0] sm:$0xff]
        %v4429 = vld [vmem:[%s891 + $0x15c8] sm:$0xff]
        %v4430 = vld [vmem:[%s891 + $0x15d0] sm:$0xff]
        %v4431 = vld [vmem:[%s891 + $0x15d8] sm:$0xff]
        %v4432 = vld [vmem:[%s891 + $0x15e0] sm:$0xff]
        %v4433 = vld [vmem:[%s891 + $0x15e8] sm:$0xff]
        %v4434 = vld [vmem:[%s891 + $0x15f0] sm:$0xff]
        %v4435 = vld [vmem:[%s891 + $0x15f8] sm:$0xff]
        %v4436 = vld [vmem:[%s891 + $0x1600] sm:$0xff]
        %v4437 = vld [vmem:[%s891 + $0x1608] sm:$0xff]
        %v4438 = vld [vmem:[%s891 + $0x1610] sm:$0xff]
        %v4439 = vld [vmem:[%s891 + $0x1618] sm:$0xff]
        %v4440 = vld [vmem:[%s891 + $0x1620] sm:$0xff]
        %v4441 = vld [vmem:[%s891 + $0x1628] sm:$0xff]
        %v4442 = vld [vmem:[%s891 + $0x1630] sm:$0xff]
        %v4443 = vld [vmem:[%s891 + $0x1638] sm:$0xff]
        %v4444 = vld [vmem:[%s891 + $0x1640] sm:$0xff]
        %v4445 = vld [vmem:[%s891 + $0x1648] sm:$0xff]
        %v4446 = vld [vmem:[%s891 + $0x1650] sm:$0xff]
        %v4447 = vld [vmem:[%s891 + $0x1658] sm:$0xff]
        %v4448 = vld [vmem:[%s891 + $0x1660] sm:$0xff]
        %v4449 = vld [vmem:[%s891 + $0x1668] sm:$0xff]
        %v4450 = vld [vmem:[%s891 + $0x1670] sm:$0xff]
        %v4451 = vld [vmem:[%s891 + $0x1678] sm:$0xff]
        %v4452 = vld [vmem:[%s891 + $0x1680] sm:$0xff]
        %v4453 = vld [vmem:[%s891 + $0x1688] sm:$0xff]
        %v4454 = vld [vmem:[%s891 + $0x1690] sm:$0xff]
        %v4455 = vld [vmem:[%s891 + $0x1698] sm:$0xff]
        %v4456 = vld [vmem:[%s891 + $0x16a0] sm:$0xff]
        %v4457 = vld [vmem:[%s891 + $0x16a8] sm:$0xff]
        %v4458 = vld [vmem:[%s891 + $0x16b0] sm:$0xff]
        %v4459 = vld [vmem:[%s891 + $0x16b8] sm:$0xff]
        %v4460 = vld [vmem:[%s891 + $0x16c0] sm:$0xff]
        %v4461 = vld [vmem:[%s891 + $0x16c8] sm:$0xff]
        %v4462 = vld [vmem:[%s891 + $0x16d0] sm:$0xff]
        %v4463 = vld [vmem:[%s891 + $0x16d8] sm:$0xff]
        %v4464 = vld [vmem:[%s891 + $0x16e0] sm:$0xff]
        %v4465 = vld [vmem:[%s891 + $0x16e8] sm:$0xff]
        %v4466 = vld [vmem:[%s891 + $0x16f0] sm:$0xff]
        %v4467 = vld [vmem:[%s891 + $0x16f8] sm:$0xff]
        %v4468 = vld [vmem:[%s891 + $0x1700] sm:$0xff]
        %v4469 = vld [vmem:[%s891 + $0x1708] sm:$0xff]
        %v4470 = vld [vmem:[%s891 + $0x1710] sm:$0xff]
        %v4471 = vld [vmem:[%s891 + $0x1718] sm:$0xff]
        %v4472 = vld [vmem:[%s891 + $0x1720] sm:$0xff]
        %v4473 = vld [vmem:[%s891 + $0x1728] sm:$0xff]
        %v4474 = vld [vmem:[%s891 + $0x1730] sm:$0xff]
        %v4475 = vld [vmem:[%s891 + $0x1738] sm:$0xff]
        %v4476 = vld [vmem:[%s891 + $0x1740] sm:$0xff]
        %v4477 = vld [vmem:[%s891 + $0x1748] sm:$0xff]
        %v4478 = vld [vmem:[%s891 + $0x1750] sm:$0xff]
        %v4479 = vld [vmem:[%s891 + $0x1758] sm:$0xff]
        %v4480 = vld [vmem:[%s891 + $0x1760] sm:$0xff]
        %v4481 = vld [vmem:[%s891 + $0x1768] sm:$0xff]
        %v4482 = vld [vmem:[%s891 + $0x1770] sm:$0xff]
        %v4483 = vld [vmem:[%s891 + $0x1778] sm:$0xff]
        %v4484 = vld [vmem:[%s891 + $0x1780] sm:$0xff]
        %v4485 = vld [vmem:[%s891 + $0x1788] sm:$0xff]
        %v4486 = vld [vmem:[%s891 + $0x1790] sm:$0xff]
        %v4487 = vld [vmem:[%s891 + $0x1798] sm:$0xff]
        %v4488 = vld [vmem:[%s891 + $0x17a0] sm:$0xff]
        %v4489 = vld [vmem:[%s891 + $0x17a8] sm:$0xff]
        %v4490 = vld [vmem:[%s891 + $0x17b0] sm:$0xff]
        %v4491 = vld [vmem:[%s891 + $0x17b8] sm:$0xff]
        %v4492 = vld [vmem:[%s891 + $0x17c0] sm:$0xff]
        %v4493 = vld [vmem:[%s891 + $0x17c8] sm:$0xff]
        %v4494 = vld [vmem:[%s891 + $0x17d0] sm:$0xff]
        %v4495 = vld [vmem:[%s891 + $0x17d8] sm:$0xff]
        %v4496 = vld [vmem:[%s891 + $0x17e0] sm:$0xff]
        %v4497 = vld [vmem:[%s891 + $0x17e8] sm:$0xff]
        %v4498 = vld [vmem:[%s891 + $0x17f0] sm:$0xff]
        %v4499 = vld [vmem:[%s891 + $0x17f8] sm:$0xff]
        %v4500 = vld [vmem:[%s891 + $0x1800] sm:$0xff]
        %v4501 = vld [vmem:[%s891 + $0x1808] sm:$0xff]
        %v4502 = vld [vmem:[%s891 + $0x1810] sm:$0xff]
        %v4503 = vld [vmem:[%s891 + $0x1818] sm:$0xff]
        %v4504 = vld [vmem:[%s891 + $0x1820] sm:$0xff]
        %v4505 = vld [vmem:[%s891 + $0x1828] sm:$0xff]
        %v4506 = vld [vmem:[%s891 + $0x1830] sm:$0xff]
        %v4507 = vld [vmem:[%s891 + $0x1838] sm:$0xff]
        %v4508 = vld [vmem:[%s891 + $0x1840] sm:$0xff]
        %v4509 = vld [vmem:[%s891 + $0x1848] sm:$0xff]
        %v4510 = vld [vmem:[%s891 + $0x1850] sm:$0xff]
        %v4511 = vld [vmem:[%s891 + $0x1858] sm:$0xff]
        %v4512 = vld [vmem:[%s891 + $0x1860] sm:$0xff]
        %v4513 = vld [vmem:[%s891 + $0x1868] sm:$0xff]
        %v4514 = vld [vmem:[%s891 + $0x1870] sm:$0xff]
        %v4515 = vld [vmem:[%s891 + $0x1878] sm:$0xff]
        %v4516 = vld [vmem:[%s891 + $0x1880] sm:$0xff]
        %v4517 = vld [vmem:[%s891 + $0x1888] sm:$0xff]
        %v4518 = vld [vmem:[%s891 + $0x1890] sm:$0xff]
        %v4519 = vld [vmem:[%s891 + $0x1898] sm:$0xff]
        %v4520 = vld [vmem:[%s891 + $0x18a0] sm:$0xff]
        %v4521 = vld [vmem:[%s891 + $0x18a8] sm:$0xff]
        %v4522 = vld [vmem:[%s891 + $0x18b0] sm:$0xff]
        %v4523 = vld [vmem:[%s891 + $0x18b8] sm:$0xff]
        %v4524 = vld [vmem:[%s891 + $0x18c0] sm:$0xff]
        %v4525 = vld [vmem:[%s891 + $0x18c8] sm:$0xff]
        %v4526 = vld [vmem:[%s891 + $0x18d0] sm:$0xff]
        %v4527 = vld [vmem:[%s891 + $0x18d8] sm:$0xff]
        %v4528 = vld [vmem:[%s891 + $0x18e0] sm:$0xff]
        %v4529 = vld [vmem:[%s891 + $0x18e8] sm:$0xff]
        %v4530 = vld [vmem:[%s891 + $0x18f0] sm:$0xff]
        %v4531 = vld [vmem:[%s891 + $0x18f8] sm:$0xff]
        %v4532 = vld [vmem:[%s891 + $0x1900] sm:$0xff]
        %v4533 = vld [vmem:[%s891 + $0x1908] sm:$0xff]
        %v4534 = vld [vmem:[%s891 + $0x1910] sm:$0xff]
        %v4535 = vld [vmem:[%s891 + $0x1918] sm:$0xff]
        %v4536 = vld [vmem:[%s891 + $0x1920] sm:$0xff]
        %v4537 = vld [vmem:[%s891 + $0x1928] sm:$0xff]
        %v4538 = vld [vmem:[%s891 + $0x1930] sm:$0xff]
        %v4539 = vld [vmem:[%s891 + $0x1938] sm:$0xff]
        %v4540 = vld [vmem:[%s891 + $0x1940] sm:$0xff]
        %v4541 = vld [vmem:[%s891 + $0x1948] sm:$0xff]
        %v4542 = vld [vmem:[%s891 + $0x1950] sm:$0xff]
        %v4543 = vld [vmem:[%s891 + $0x1958] sm:$0xff]
        %v4544 = vld [vmem:[%s891 + $0x1960] sm:$0xff]
        %v4545 = vld [vmem:[%s891 + $0x1968] sm:$0xff]
        %v4546 = vld [vmem:[%s891 + $0x1970] sm:$0xff]
        %v4547 = vld [vmem:[%s891 + $0x1978] sm:$0xff]
        %v4548 = vld [vmem:[%s891 + $0x1980] sm:$0xff]
        %v4549 = vld [vmem:[%s891 + $0x1988] sm:$0xff]
        %v4550 = vld [vmem:[%s891 + $0x1990] sm:$0xff]
        %v4551 = vld [vmem:[%s891 + $0x1998] sm:$0xff]
        %v4552 = vld [vmem:[%s891 + $0x19a0] sm:$0xff]
        %v4553 = vld [vmem:[%s891 + $0x19a8] sm:$0xff]
        %v4554 = vld [vmem:[%s891 + $0x19b0] sm:$0xff]
        %v4555 = vld [vmem:[%s891 + $0x19b8] sm:$0xff]
        %v4556 = vld [vmem:[%s891 + $0x19c0] sm:$0xff]
        %v4557 = vld [vmem:[%s891 + $0x19c8] sm:$0xff]
        %v4558 = vld [vmem:[%s891 + $0x19d0] sm:$0xff]
        %v4559 = vld [vmem:[%s891 + $0x19d8] sm:$0xff]
        %v4560 = vld [vmem:[%s891 + $0x19e0] sm:$0xff]
        %v4561 = vld [vmem:[%s891 + $0x19e8] sm:$0xff]
        %v4562 = vld [vmem:[%s891 + $0x19f0] sm:$0xff]
        %v4563 = vld [vmem:[%s891 + $0x19f8] sm:$0xff]
        %v4564 = vld [vmem:[%s891 + $0x1a00] sm:$0xff]
        %v4565 = vld [vmem:[%s891 + $0x1a08] sm:$0xff]
        %v4566 = vld [vmem:[%s891 + $0x1a10] sm:$0xff]
        %v4567 = vld [vmem:[%s891 + $0x1a18] sm:$0xff]
        %v4568 = vld [vmem:[%s891 + $0x1a20] sm:$0xff]
        %v4569 = vld [vmem:[%s891 + $0x1a28] sm:$0xff]
        %v4570 = vld [vmem:[%s891 + $0x1a30] sm:$0xff]
        %v4571 = vld [vmem:[%s891 + $0x1a38] sm:$0xff]
        %v4572 = vld [vmem:[%s891 + $0x1a40] sm:$0xff]
        %v4573 = vld [vmem:[%s891 + $0x1a48] sm:$0xff]
        %v4574 = vld [vmem:[%s891 + $0x1a50] sm:$0xff]
        %v4575 = vld [vmem:[%s891 + $0x1a58] sm:$0xff]
        %v4576 = vld [vmem:[%s891 + $0x1a60] sm:$0xff]
        %v4577 = vld [vmem:[%s891 + $0x1a68] sm:$0xff]
        %v4578 = vld [vmem:[%s891 + $0x1a70] sm:$0xff]
        %v4579 = vld [vmem:[%s891 + $0x1a78] sm:$0xff]
        %v4580 = vld [vmem:[%s891 + $0x1a80] sm:$0xff]
        %v4581 = vld [vmem:[%s891 + $0x1a88] sm:$0xff]
        %v4582 = vld [vmem:[%s891 + $0x1a90] sm:$0xff]
        %v4583 = vld [vmem:[%s891 + $0x1a98] sm:$0xff]
        %v4584 = vld [vmem:[%s891 + $0x1aa0] sm:$0xff]
        %v4585 = vld [vmem:[%s891 + $0x1aa8] sm:$0xff]
        %v4586 = vld [vmem:[%s891 + $0x1ab0] sm:$0xff]
        %v4587 = vld [vmem:[%s891 + $0x1ab8] sm:$0xff]
        %v4588 = vld [vmem:[%s891 + $0x1ac0] sm:$0xff]
        %v4589 = vld [vmem:[%s891 + $0x1ac8] sm:$0xff]
        %v4590 = vld [vmem:[%s891 + $0x1ad0] sm:$0xff]
        %v4591 = vld [vmem:[%s891 + $0x1ad8] sm:$0xff]
        %v4592 = vld [vmem:[%s891 + $0x1ae0] sm:$0xff]
        %v4593 = vld [vmem:[%s891 + $0x1ae8] sm:$0xff]
        %v4594 = vld [vmem:[%s891 + $0x1af0] sm:$0xff]
        %v4595 = vld [vmem:[%s891 + $0x1af8] sm:$0xff]
        %v4596 = vld [vmem:[%s891 + $0x1b00] sm:$0xff]
        %v4597 = vld [vmem:[%s891 + $0x1b08] sm:$0xff]
        %v4598 = vld [vmem:[%s891 + $0x1b10] sm:$0xff]
        %v4599 = vld [vmem:[%s891 + $0x1b18] sm:$0xff]
        %v4600 = vld [vmem:[%s891 + $0x1b20] sm:$0xff]
        %v4601 = vld [vmem:[%s891 + $0x1b28] sm:$0xff]
        %v4602 = vld [vmem:[%s891 + $0x1b30] sm:$0xff]
        %v4603 = vld [vmem:[%s891 + $0x1b38] sm:$0xff]
        %v4604 = vld [vmem:[%s891 + $0x1b40] sm:$0xff]
        %v4605 = vld [vmem:[%s891 + $0x1b48] sm:$0xff]
        %v4606 = vld [vmem:[%s891 + $0x1b50] sm:$0xff]
        %v4607 = vld [vmem:[%s891 + $0x1b58] sm:$0xff]
        %v4608 = vld [vmem:[%s891 + $0x1b60] sm:$0xff]
        %v4609 = vld [vmem:[%s891 + $0x1b68] sm:$0xff]
        %v4610 = vld [vmem:[%s891 + $0x1b70] sm:$0xff]
        %v4611 = vld [vmem:[%s891 + $0x1b78] sm:$0xff]
        %v4612 = vld [vmem:[%s891 + $0x1b80] sm:$0xff]
        %v4613 = vld [vmem:[%s891 + $0x1b88] sm:$0xff]
        %v4614 = vld [vmem:[%s891 + $0x1b90] sm:$0xff]
        %v4615 = vld [vmem:[%s891 + $0x1b98] sm:$0xff]
        %v4616 = vld [vmem:[%s891 + $0x1ba0] sm:$0xff]
        %v4617 = vld [vmem:[%s891 + $0x1ba8] sm:$0xff]
        %v4618 = vld [vmem:[%s891 + $0x1bb0] sm:$0xff]
        %v4619 = vld [vmem:[%s891 + $0x1bb8] sm:$0xff]
        %v4620 = vld [vmem:[%s891 + $0x1bc0] sm:$0xff]
        %v4621 = vld [vmem:[%s891 + $0x1bc8] sm:$0xff]
        %v4622 = vld [vmem:[%s891 + $0x1bd0] sm:$0xff]
        %v4623 = vld [vmem:[%s891 + $0x1bd8] sm:$0xff]
        %v4624 = vld [vmem:[%s891 + $0x1be0] sm:$0xff]
        %v4625 = vld [vmem:[%s891 + $0x1be8] sm:$0xff]
        %v4626 = vld [vmem:[%s891 + $0x1bf0] sm:$0xff]
        %v4627 = vld [vmem:[%s891 + $0x1bf8] sm:$0xff]
        %v4628 = vld [vmem:[%s891 + $0x1c00] sm:$0xff]
        %v4629 = vld [vmem:[%s891 + $0x1c08] sm:$0xff]
        %v4630 = vld [vmem:[%s891 + $0x1c10] sm:$0xff]
        %v4631 = vld [vmem:[%s891 + $0x1c18] sm:$0xff]
        %v4632 = vld [vmem:[%s891 + $0x1c20] sm:$0xff]
        %v4633 = vld [vmem:[%s891 + $0x1c28] sm:$0xff]
        %v4634 = vld [vmem:[%s891 + $0x1c30] sm:$0xff]
        %v4635 = vld [vmem:[%s891 + $0x1c38] sm:$0xff]
        %v4636 = vld [vmem:[%s891 + $0x1c40] sm:$0xff]
        %v4637 = vld [vmem:[%s891 + $0x1c48] sm:$0xff]
        %v4638 = vld [vmem:[%s891 + $0x1c50] sm:$0xff]
        %v4639 = vld [vmem:[%s891 + $0x1c58] sm:$0xff]
        %v4640 = vld [vmem:[%s891 + $0x1c60] sm:$0xff]
        %v4641 = vld [vmem:[%s891 + $0x1c68] sm:$0xff]
        %v4642 = vld [vmem:[%s891 + $0x1c70] sm:$0xff]
        %v4643 = vld [vmem:[%s891 + $0x1c78] sm:$0xff]
        %v4644 = vld [vmem:[%s891 + $0x1c80] sm:$0xff]
        %v4645 = vld [vmem:[%s891 + $0x1c88] sm:$0xff]
        %v4646 = vld [vmem:[%s891 + $0x1c90] sm:$0xff]
        %v4647 = vld [vmem:[%s891 + $0x1c98] sm:$0xff]
        %v4648 = vld [vmem:[%s891 + $0x1ca0] sm:$0xff]
        %v4649 = vld [vmem:[%s891 + $0x1ca8] sm:$0xff]
        %v4650 = vld [vmem:[%s891 + $0x1cb0] sm:$0xff]
        %v4651 = vld [vmem:[%s891 + $0x1cb8] sm:$0xff]
        %v4652 = vld [vmem:[%s891 + $0x1cc0] sm:$0xff]
        %v4653 = vld [vmem:[%s891 + $0x1cc8] sm:$0xff]
        %v4654 = vld [vmem:[%s891 + $0x1cd0] sm:$0xff]
        %v4655 = vld [vmem:[%s891 + $0x1cd8] sm:$0xff]
        %v4656 = vld [vmem:[%s891 + $0x1ce0] sm:$0xff]
        %v4657 = vld [vmem:[%s891 + $0x1ce8] sm:$0xff]
        %v4658 = vld [vmem:[%s891 + $0x1cf0] sm:$0xff]
        %v4659 = vld [vmem:[%s891 + $0x1cf8] sm:$0xff]
        %v4660 = vld [vmem:[%s891 + $0x1d00] sm:$0xff]
        %v4661 = vld [vmem:[%s891 + $0x1d08] sm:$0xff]
        %v4662 = vld [vmem:[%s891 + $0x1d10] sm:$0xff]
        %v4663 = vld [vmem:[%s891 + $0x1d18] sm:$0xff]
        %v4664 = vld [vmem:[%s891 + $0x1d20] sm:$0xff]
        %v4665 = vld [vmem:[%s891 + $0x1d28] sm:$0xff]
        %v4666 = vld [vmem:[%s891 + $0x1d30] sm:$0xff]
        %v4667 = vld [vmem:[%s891 + $0x1d38] sm:$0xff]
        %v4668 = vld [vmem:[%s891 + $0x1d40] sm:$0xff]
        %v4669 = vld [vmem:[%s891 + $0x1d48] sm:$0xff]
        %v4670 = vld [vmem:[%s891 + $0x1d50] sm:$0xff]
        %v4671 = vld [vmem:[%s891 + $0x1d58] sm:$0xff]
        %v4672 = vld [vmem:[%s891 + $0x1d60] sm:$0xff]
        %v4673 = vld [vmem:[%s891 + $0x1d68] sm:$0xff]
        %v4674 = vld [vmem:[%s891 + $0x1d70] sm:$0xff]
        %v4675 = vld [vmem:[%s891 + $0x1d78] sm:$0xff]
        %v4676 = vld [vmem:[%s891 + $0x1d80] sm:$0xff]
        %v4677 = vld [vmem:[%s891 + $0x1d88] sm:$0xff]
        %v4678 = vld [vmem:[%s891 + $0x1d90] sm:$0xff]
        %v4679 = vld [vmem:[%s891 + $0x1d98] sm:$0xff]
        %v4680 = vld [vmem:[%s891 + $0x1da0] sm:$0xff]
        %v4681 = vld [vmem:[%s891 + $0x1da8] sm:$0xff]
        %v4682 = vld [vmem:[%s891 + $0x1db0] sm:$0xff]
        %v4683 = vld [vmem:[%s891 + $0x1db8] sm:$0xff]
        %v4684 = vld [vmem:[%s891 + $0x1dc0] sm:$0xff]
        %v4685 = vld [vmem:[%s891 + $0x1dc8] sm:$0xff]
        %v4686 = vld [vmem:[%s891 + $0x1dd0] sm:$0xff]
        %v4687 = vld [vmem:[%s891 + $0x1dd8] sm:$0xff]
        %v4688 = vld [vmem:[%s891 + $0x1de0] sm:$0xff]
        %v4689 = vld [vmem:[%s891 + $0x1de8] sm:$0xff]
        %v4690 = vld [vmem:[%s891 + $0x1df0] sm:$0xff]
        %v4691 = vld [vmem:[%s891 + $0x1df8] sm:$0xff]
        %v4692 = vld [vmem:[%s891 + $0x1e00] sm:$0xff]
        %v4693 = vld [vmem:[%s891 + $0x1e08] sm:$0xff]
        %v4694 = vld [vmem:[%s891 + $0x1e10] sm:$0xff]
        %v4695 = vld [vmem:[%s891 + $0x1e18] sm:$0xff]
        %v4696 = vld [vmem:[%s891 + $0x1e20] sm:$0xff]
        %v4697 = vld [vmem:[%s891 + $0x1e28] sm:$0xff]
        %v4698 = vld [vmem:[%s891 + $0x1e30] sm:$0xff]
        %v4699 = vld [vmem:[%s891 + $0x1e38] sm:$0xff]
        %v4700 = vld [vmem:[%s891 + $0x1e40] sm:$0xff]
        %v4701 = vld [vmem:[%s891 + $0x1e48] sm:$0xff]
        %v4702 = vld [vmem:[%s891 + $0x1e50] sm:$0xff]
        %v4703 = vld [vmem:[%s891 + $0x1e58] sm:$0xff]
        %v4704 = vld [vmem:[%s891 + $0x1e60] sm:$0xff]
        %v4705 = vld [vmem:[%s891 + $0x1e68] sm:$0xff]
        %v4706 = vld [vmem:[%s891 + $0x1e70] sm:$0xff]
        %v4707 = vld [vmem:[%s891 + $0x1e78] sm:$0xff]
        %v4708 = vld [vmem:[%s891 + $0x1e80] sm:$0xff]
        %v4709 = vld [vmem:[%s891 + $0x1e88] sm:$0xff]
        %v4710 = vld [vmem:[%s891 + $0x1e90] sm:$0xff]
        %v4711 = vld [vmem:[%s891 + $0x1e98] sm:$0xff]
        %v4712 = vld [vmem:[%s891 + $0x1ea0] sm:$0xff]
        %v4713 = vld [vmem:[%s891 + $0x1ea8] sm:$0xff]
        %v4714 = vld [vmem:[%s891 + $0x1eb0] sm:$0xff]
        %v4715 = vld [vmem:[%s891 + $0x1eb8] sm:$0xff]
        %v4716 = vld [vmem:[%s891 + $0x1ec0] sm:$0xff]
        %v4717 = vld [vmem:[%s891 + $0x1ec8] sm:$0xff]
        %v4718 = vld [vmem:[%s891 + $0x1ed0] sm:$0xff]
        %v4719 = vld [vmem:[%s891 + $0x1ed8] sm:$0xff]
        %v4720 = vld [vmem:[%s891 + $0x1ee0] sm:$0xff]
        %v4721 = vld [vmem:[%s891 + $0x1ee8] sm:$0xff]
        %v4722 = vld [vmem:[%s891 + $0x1ef0] sm:$0xff]
        %v4723 = vld [vmem:[%s891 + $0x1ef8] sm:$0xff]
        %v4724 = vld [vmem:[%s891 + $0x1f00] sm:$0xff]
        %v4725 = vld [vmem:[%s891 + $0x1f08] sm:$0xff]
        %v4726 = vld [vmem:[%s891 + $0x1f10] sm:$0xff]
        %v4727 = vld [vmem:[%s891 + $0x1f18] sm:$0xff]
        %v4728 = vld [vmem:[%s891 + $0x1f20] sm:$0xff]
        %v4729 = vld [vmem:[%s891 + $0x1f28] sm:$0xff]
        %v4730 = vld [vmem:[%s891 + $0x1f30] sm:$0xff]
        %v4731 = vld [vmem:[%s891 + $0x1f38] sm:$0xff]
        %v4732 = vld [vmem:[%s891 + $0x1f40] sm:$0xff]
        %v4733 = vld [vmem:[%s891 + $0x1f48] sm:$0xff]
        %v4734 = vld [vmem:[%s891 + $0x1f50] sm:$0xff]
        %v4735 = vld [vmem:[%s891 + $0x1f58] sm:$0xff]
        %v4736 = vld [vmem:[%s891 + $0x1f60] sm:$0xff]
        %v4737 = vld [vmem:[%s891 + $0x1f68] sm:$0xff]
        %v4738 = vld [vmem:[%s891 + $0x1f70] sm:$0xff]
        %v4739 = vld [vmem:[%s891 + $0x1f78] sm:$0xff]
        %v4740 = vld [vmem:[%s891 + $0x1f80] sm:$0xff]
        %v4741 = vld [vmem:[%s891 + $0x1f88] sm:$0xff]
        %v4742 = vld [vmem:[%s891 + $0x1f90] sm:$0xff]
        %v4743 = vld [vmem:[%s891 + $0x1f98] sm:$0xff]
        %v4744 = vld [vmem:[%s891 + $0x1fa0] sm:$0xff]
        %v4745 = vld [vmem:[%s891 + $0x1fa8] sm:$0xff]
        %v4746 = vld [vmem:[%s891 + $0x1fb0] sm:$0xff]
        %v4747 = vld [vmem:[%s891 + $0x1fb8] sm:$0xff]
        %v4748 = vld [vmem:[%s891 + $0x1fc0] sm:$0xff]
        %v4749 = vld [vmem:[%s891 + $0x1fc8] sm:$0xff]
        %v4750 = vld [vmem:[%s891 + $0x1fd0] sm:$0xff]
        %v4751 = vld [vmem:[%s891 + $0x1fd8] sm:$0xff]
        %v4752 = vld [vmem:[%s891 + $0x1fe0] sm:$0xff]
        %v4753 = vld [vmem:[%s891 + $0x1fe8] sm:$0xff]
        %v4754 = vld [vmem:[%s891 + $0x1ff0] sm:$0xff]
        %v4755 = vld [vmem:[%s891 + $0x1ff8] sm:$0xff]
        %v4756 = vunpack.c.l.s8.bf16 %v3732
        %v4757 = vunpack.c.l.s8.bf16 %v3733
        %v4758 = vunpack.c.l.s8.bf16 %v3734
        %v4759 = vunpack.c.l.s8.bf16 %v3735
        %v4760 = vunpack.c.l.s8.bf16 %v3736
        %v4761 = vunpack.c.l.s8.bf16 %v3737
        %v4762 = vunpack.c.l.s8.bf16 %v3738
        %v4763 = vunpack.c.l.s8.bf16 %v3739
        %v4764 = vunpack.c.l.s8.bf16 %v3740
        %v4765 = vunpack.c.l.s8.bf16 %v3741
        %v4766 = vunpack.c.l.s8.bf16 %v3742
        %v4767 = vunpack.c.l.s8.bf16 %v3743
        %v4768 = vunpack.c.l.s8.bf16 %v3744
        %v4769 = vunpack.c.l.s8.bf16 %v3745
        %v4770 = vunpack.c.l.s8.bf16 %v3746
        %v4771 = vunpack.c.l.s8.bf16 %v3747
        %v4772 = vunpack.c.l.s8.bf16 %v3748
        %v4773 = vunpack.c.l.s8.bf16 %v3749
        %v4774 = vunpack.c.l.s8.bf16 %v3750
        %v4775 = vunpack.c.l.s8.bf16 %v3751
        %v4776 = vunpack.c.l.s8.bf16 %v3752
        %v4777 = vunpack.c.l.s8.bf16 %v3753
        %v4778 = vunpack.c.l.s8.bf16 %v3754
        %v4779 = vunpack.c.l.s8.bf16 %v3755
        %v4780 = vunpack.c.l.s8.bf16 %v3756
        %v4781 = vunpack.c.l.s8.bf16 %v3757
        %v4782 = vunpack.c.l.s8.bf16 %v3758
        %v4783 = vunpack.c.l.s8.bf16 %v3759
        %v4784 = vunpack.c.l.s8.bf16 %v3760
        %v4785 = vunpack.c.l.s8.bf16 %v3761
        %v4786 = vunpack.c.l.s8.bf16 %v3762
        %v4787 = vunpack.c.l.s8.bf16 %v3763
        %v4788 = vunpack.c.h.s8.bf16 %v3732
        %v4789 = vunpack.c.h.s8.bf16 %v3733
        %v4790 = vunpack.c.h.s8.bf16 %v3734
        %v4791 = vunpack.c.h.s8.bf16 %v3735
        %v4792 = vunpack.c.h.s8.bf16 %v3736
        %v4793 = vunpack.c.h.s8.bf16 %v3737
        %v4794 = vunpack.c.h.s8.bf16 %v3738
        %v4795 = vunpack.c.h.s8.bf16 %v3739
        %v4796 = vunpack.c.h.s8.bf16 %v3740
        %v4797 = vunpack.c.h.s8.bf16 %v3741
        %v4798 = vunpack.c.h.s8.bf16 %v3742
        %v4799 = vunpack.c.h.s8.bf16 %v3743
        %v4800 = vunpack.c.h.s8.bf16 %v3744
        %v4801 = vunpack.c.h.s8.bf16 %v3745
        %v4802 = vunpack.c.h.s8.bf16 %v3746
        %v4803 = vunpack.c.h.s8.bf16 %v3747
        %v4804 = vunpack.c.h.s8.bf16 %v3748
        %v4805 = vunpack.c.h.s8.bf16 %v3749
        %v4806 = vunpack.c.h.s8.bf16 %v3750
        %v4807 = vunpack.c.h.s8.bf16 %v3751
        %v4808 = vunpack.c.h.s8.bf16 %v3752
        %v4809 = vunpack.c.h.s8.bf16 %v3753
        %v4810 = vunpack.c.h.s8.bf16 %v3754
        %v4811 = vunpack.c.h.s8.bf16 %v3755
        %v4812 = vunpack.c.h.s8.bf16 %v3756
        %v4813 = vunpack.c.h.s8.bf16 %v3757
        %v4814 = vunpack.c.h.s8.bf16 %v3758
        %v4815 = vunpack.c.h.s8.bf16 %v3759
        %v4816 = vunpack.c.h.s8.bf16 %v3760
        %v4817 = vunpack.c.h.s8.bf16 %v3761
        %v4818 = vunpack.c.h.s8.bf16 %v3762
        %v4819 = vunpack.c.h.s8.bf16 %v3763
        %v4820 = vunpack.c.l.s8.bf16 %v3764
        %v4821 = vunpack.c.l.s8.bf16 %v3765
        %v4822 = vunpack.c.l.s8.bf16 %v3766
        %v4823 = vunpack.c.l.s8.bf16 %v3767
        %v4824 = vunpack.c.l.s8.bf16 %v3768
        %v4825 = vunpack.c.l.s8.bf16 %v3769
        %v4826 = vunpack.c.l.s8.bf16 %v3770
        %v4827 = vunpack.c.l.s8.bf16 %v3771
        %v4828 = vunpack.c.l.s8.bf16 %v3772
        %v4829 = vunpack.c.l.s8.bf16 %v3773
        %v4830 = vunpack.c.l.s8.bf16 %v3774
        %v4831 = vunpack.c.l.s8.bf16 %v3775
        %v4832 = vunpack.c.l.s8.bf16 %v3776
        %v4833 = vunpack.c.l.s8.bf16 %v3777
        %v4834 = vunpack.c.l.s8.bf16 %v3778
        %v4835 = vunpack.c.l.s8.bf16 %v3779
        %v4836 = vunpack.c.l.s8.bf16 %v3780
        %v4837 = vunpack.c.l.s8.bf16 %v3781
        %v4838 = vunpack.c.l.s8.bf16 %v3782
        %v4839 = vunpack.c.l.s8.bf16 %v3783
        %v4840 = vunpack.c.l.s8.bf16 %v3784
        %v4841 = vunpack.c.l.s8.bf16 %v3785
        %v4842 = vunpack.c.l.s8.bf16 %v3786
        %v4843 = vunpack.c.l.s8.bf16 %v3787
        %v4844 = vunpack.c.l.s8.bf16 %v3788
        %v4845 = vunpack.c.l.s8.bf16 %v3789
        %v4846 = vunpack.c.l.s8.bf16 %v3790
        %v4847 = vunpack.c.l.s8.bf16 %v3791
        %v4848 = vunpack.c.l.s8.bf16 %v3792
        %v4849 = vunpack.c.l.s8.bf16 %v3793
        %v4850 = vunpack.c.l.s8.bf16 %v3794
        %v4851 = vunpack.c.l.s8.bf16 %v3795
        %v4852 = vunpack.c.h.s8.bf16 %v3764
        %v4853 = vunpack.c.h.s8.bf16 %v3765
        %v4854 = vunpack.c.h.s8.bf16 %v3766
        %v4855 = vunpack.c.h.s8.bf16 %v3767
        %v4856 = vunpack.c.h.s8.bf16 %v3768
        %v4857 = vunpack.c.h.s8.bf16 %v3769
        %v4858 = vunpack.c.h.s8.bf16 %v3770
        %v4859 = vunpack.c.h.s8.bf16 %v3771
        %v4860 = vunpack.c.h.s8.bf16 %v3772
        %v4861 = vunpack.c.h.s8.bf16 %v3773
        %v4862 = vunpack.c.h.s8.bf16 %v3774
        %v4863 = vunpack.c.h.s8.bf16 %v3775
        %v4864 = vunpack.c.h.s8.bf16 %v3776
        %v4865 = vunpack.c.h.s8.bf16 %v3777
        %v4866 = vunpack.c.h.s8.bf16 %v3778
        %v4867 = vunpack.c.h.s8.bf16 %v3779
        %v4868 = vunpack.c.h.s8.bf16 %v3780
        %v4869 = vunpack.c.h.s8.bf16 %v3781
        %v4870 = vunpack.c.h.s8.bf16 %v3782
        %v4871 = vunpack.c.h.s8.bf16 %v3783
        %v4872 = vunpack.c.h.s8.bf16 %v3784
        %v4873 = vunpack.c.h.s8.bf16 %v3785
        %v4874 = vunpack.c.h.s8.bf16 %v3786
        %v4875 = vunpack.c.h.s8.bf16 %v3787
        %v4876 = vunpack.c.h.s8.bf16 %v3788
        %v4877 = vunpack.c.h.s8.bf16 %v3789
        %v4878 = vunpack.c.h.s8.bf16 %v3790
        %v4879 = vunpack.c.h.s8.bf16 %v3791
        %v4880 = vunpack.c.h.s8.bf16 %v3792
        %v4881 = vunpack.c.h.s8.bf16 %v3793
        %v4882 = vunpack.c.h.s8.bf16 %v3794
        %v4883 = vunpack.c.h.s8.bf16 %v3795
        %v4884 = vunpack.c.l.s8.bf16 %v3796
        %v4885 = vunpack.c.l.s8.bf16 %v3797
        %v4886 = vunpack.c.l.s8.bf16 %v3798
        %v4887 = vunpack.c.l.s8.bf16 %v3799
        %v4888 = vunpack.c.l.s8.bf16 %v3800
        %v4889 = vunpack.c.l.s8.bf16 %v3801
        %v4890 = vunpack.c.l.s8.bf16 %v3802
        %v4891 = vunpack.c.l.s8.bf16 %v3803
        %v4892 = vunpack.c.l.s8.bf16 %v3804
        %v4893 = vunpack.c.l.s8.bf16 %v3805
        %v4894 = vunpack.c.l.s8.bf16 %v3806
        %v4895 = vunpack.c.l.s8.bf16 %v3807
        %v4896 = vunpack.c.l.s8.bf16 %v3808
        %v4897 = vunpack.c.l.s8.bf16 %v3809
        %v4898 = vunpack.c.l.s8.bf16 %v3810
        %v4899 = vunpack.c.l.s8.bf16 %v3811
        %v4900 = vunpack.c.l.s8.bf16 %v3812
        %v4901 = vunpack.c.l.s8.bf16 %v3813
        %v4902 = vunpack.c.l.s8.bf16 %v3814
        %v4903 = vunpack.c.l.s8.bf16 %v3815
        %v4904 = vunpack.c.l.s8.bf16 %v3816
        %v4905 = vunpack.c.l.s8.bf16 %v3817
        %v4906 = vunpack.c.l.s8.bf16 %v3818
        %v4907 = vunpack.c.l.s8.bf16 %v3819
        %v4908 = vunpack.c.l.s8.bf16 %v3820
        %v4909 = vunpack.c.l.s8.bf16 %v3821
        %v4910 = vunpack.c.l.s8.bf16 %v3822
        %v4911 = vunpack.c.l.s8.bf16 %v3823
        %v4912 = vunpack.c.l.s8.bf16 %v3824
        %v4913 = vunpack.c.l.s8.bf16 %v3825
        %v4914 = vunpack.c.l.s8.bf16 %v3826
        %v4915 = vunpack.c.l.s8.bf16 %v3827
        %v4916 = vunpack.c.h.s8.bf16 %v3796
        %v4917 = vunpack.c.h.s8.bf16 %v3797
        %v4918 = vunpack.c.h.s8.bf16 %v3798
        %v4919 = vunpack.c.h.s8.bf16 %v3799
        %v4920 = vunpack.c.h.s8.bf16 %v3800
        %v4921 = vunpack.c.h.s8.bf16 %v3801
        %v4922 = vunpack.c.h.s8.bf16 %v3802
        %v4923 = vunpack.c.h.s8.bf16 %v3803
        %v4924 = vunpack.c.h.s8.bf16 %v3804
        %v4925 = vunpack.c.h.s8.bf16 %v3805
        %v4926 = vunpack.c.h.s8.bf16 %v3806
        %v4927 = vunpack.c.h.s8.bf16 %v3807
        %v4928 = vunpack.c.h.s8.bf16 %v3808
        %v4929 = vunpack.c.h.s8.bf16 %v3809
        %v4930 = vunpack.c.h.s8.bf16 %v3810
        %v4931 = vunpack.c.h.s8.bf16 %v3811
        %v4932 = vunpack.c.h.s8.bf16 %v3812
        %v4933 = vunpack.c.h.s8.bf16 %v3813
        %v4934 = vunpack.c.h.s8.bf16 %v3814
        %v4935 = vunpack.c.h.s8.bf16 %v3815
        %v4936 = vunpack.c.h.s8.bf16 %v3816
        %v4937 = vunpack.c.h.s8.bf16 %v3817
        %v4938 = vunpack.c.h.s8.bf16 %v3818
        %v4939 = vunpack.c.h.s8.bf16 %v3819
        %v4940 = vunpack.c.h.s8.bf16 %v3820
        %v4941 = vunpack.c.h.s8.bf16 %v3821
        %v4942 = vunpack.c.h.s8.bf16 %v3822
        %v4943 = vunpack.c.h.s8.bf16 %v3823
        %v4944 = vunpack.c.h.s8.bf16 %v3824
        %v4945 = vunpack.c.h.s8.bf16 %v3825
        %v4946 = vunpack.c.h.s8.bf16 %v3826
        %v4947 = vunpack.c.h.s8.bf16 %v3827
        %v4948 = vunpack.c.l.s8.bf16 %v3828
        %v4949 = vunpack.c.l.s8.bf16 %v3829
        %v4950 = vunpack.c.l.s8.bf16 %v3830
        %v4951 = vunpack.c.l.s8.bf16 %v3831
        %v4952 = vunpack.c.l.s8.bf16 %v3832
        %v4953 = vunpack.c.l.s8.bf16 %v3833
        %v4954 = vunpack.c.l.s8.bf16 %v3834
        %v4955 = vunpack.c.l.s8.bf16 %v3835
        %v4956 = vunpack.c.l.s8.bf16 %v3836
        %v4957 = vunpack.c.l.s8.bf16 %v3837
        %v4958 = vunpack.c.l.s8.bf16 %v3838
        %v4959 = vunpack.c.l.s8.bf16 %v3839
        %v4960 = vunpack.c.l.s8.bf16 %v3840
        %v4961 = vunpack.c.l.s8.bf16 %v3841
        %v4962 = vunpack.c.l.s8.bf16 %v3842
        %v4963 = vunpack.c.l.s8.bf16 %v3843
        %v4964 = vunpack.c.l.s8.bf16 %v3844
        %v4965 = vunpack.c.l.s8.bf16 %v3845
        %v4966 = vunpack.c.l.s8.bf16 %v3846
        %v4967 = vunpack.c.l.s8.bf16 %v3847
        %v4968 = vunpack.c.l.s8.bf16 %v3848
        %v4969 = vunpack.c.l.s8.bf16 %v3849
        %v4970 = vunpack.c.l.s8.bf16 %v3850
        %v4971 = vunpack.c.l.s8.bf16 %v3851
        %v4972 = vunpack.c.l.s8.bf16 %v3852
        %v4973 = vunpack.c.l.s8.bf16 %v3853
        %v4974 = vunpack.c.l.s8.bf16 %v3854
        %v4975 = vunpack.c.l.s8.bf16 %v3855
        %v4976 = vunpack.c.l.s8.bf16 %v3856
        %v4977 = vunpack.c.l.s8.bf16 %v3857
        %v4978 = vunpack.c.l.s8.bf16 %v3858
        %v4979 = vunpack.c.l.s8.bf16 %v3859
        %v4980 = vunpack.c.h.s8.bf16 %v3828
        %v4981 = vunpack.c.h.s8.bf16 %v3829
        %v4982 = vunpack.c.h.s8.bf16 %v3830
        %v4983 = vunpack.c.h.s8.bf16 %v3831
        %v4984 = vunpack.c.h.s8.bf16 %v3832
        %v4985 = vunpack.c.h.s8.bf16 %v3833
        %v4986 = vunpack.c.h.s8.bf16 %v3834
        %v4987 = vunpack.c.h.s8.bf16 %v3835
        %v4988 = vunpack.c.h.s8.bf16 %v3836
        %v4989 = vunpack.c.h.s8.bf16 %v3837
        %v4990 = vunpack.c.h.s8.bf16 %v3838
        %v4991 = vunpack.c.h.s8.bf16 %v3839
        %v4992 = vunpack.c.h.s8.bf16 %v3840
        %v4993 = vunpack.c.h.s8.bf16 %v3841
        %v4994 = vunpack.c.h.s8.bf16 %v3842
        %v4995 = vunpack.c.h.s8.bf16 %v3843
        %v4996 = vunpack.c.h.s8.bf16 %v3844
        %v4997 = vunpack.c.h.s8.bf16 %v3845
        %v4998 = vunpack.c.h.s8.bf16 %v3846
        %v4999 = vunpack.c.h.s8.bf16 %v3847
        %v5000 = vunpack.c.h.s8.bf16 %v3848
        %v5001 = vunpack.c.h.s8.bf16 %v3849
        %v5002 = vunpack.c.h.s8.bf16 %v3850
        %v5003 = vunpack.c.h.s8.bf16 %v3851
        %v5004 = vunpack.c.h.s8.bf16 %v3852
        %v5005 = vunpack.c.h.s8.bf16 %v3853
        %v5006 = vunpack.c.h.s8.bf16 %v3854
        %v5007 = vunpack.c.h.s8.bf16 %v3855
        %v5008 = vunpack.c.h.s8.bf16 %v3856
        %v5009 = vunpack.c.h.s8.bf16 %v3857
        %v5010 = vunpack.c.h.s8.bf16 %v3858
        %v5011 = vunpack.c.h.s8.bf16 %v3859
        %v5012 = vunpack.c.l.s8.bf16 %v3860
        %v5013 = vunpack.c.l.s8.bf16 %v3861
        %v5014 = vunpack.c.l.s8.bf16 %v3862
        %v5015 = vunpack.c.l.s8.bf16 %v3863
        %v5016 = vunpack.c.l.s8.bf16 %v3864
        %v5017 = vunpack.c.l.s8.bf16 %v3865
        %v5018 = vunpack.c.l.s8.bf16 %v3866
        %v5019 = vunpack.c.l.s8.bf16 %v3867
        %v5020 = vunpack.c.l.s8.bf16 %v3868
        %v5021 = vunpack.c.l.s8.bf16 %v3869
        %v5022 = vunpack.c.l.s8.bf16 %v3870
        %v5023 = vunpack.c.l.s8.bf16 %v3871
        %v5024 = vunpack.c.l.s8.bf16 %v3872
        %v5025 = vunpack.c.l.s8.bf16 %v3873
        %v5026 = vunpack.c.l.s8.bf16 %v3874
        %v5027 = vunpack.c.l.s8.bf16 %v3875
        %v5028 = vunpack.c.l.s8.bf16 %v3876
        %v5029 = vunpack.c.l.s8.bf16 %v3877
        %v5030 = vunpack.c.l.s8.bf16 %v3878
        %v5031 = vunpack.c.l.s8.bf16 %v3879
        %v5032 = vunpack.c.l.s8.bf16 %v3880
        %v5033 = vunpack.c.l.s8.bf16 %v3881
        %v5034 = vunpack.c.l.s8.bf16 %v3882
        %v5035 = vunpack.c.l.s8.bf16 %v3883
        %v5036 = vunpack.c.l.s8.bf16 %v3884
        %v5037 = vunpack.c.l.s8.bf16 %v3885
        %v5038 = vunpack.c.l.s8.bf16 %v3886
        %v5039 = vunpack.c.l.s8.bf16 %v3887
        %v5040 = vunpack.c.l.s8.bf16 %v3888
        %v5041 = vunpack.c.l.s8.bf16 %v3889
        %v5042 = vunpack.c.l.s8.bf16 %v3890
        %v5043 = vunpack.c.l.s8.bf16 %v3891
        %v5044 = vunpack.c.h.s8.bf16 %v3860
        %v5045 = vunpack.c.h.s8.bf16 %v3861
        %v5046 = vunpack.c.h.s8.bf16 %v3862
        %v5047 = vunpack.c.h.s8.bf16 %v3863
        %v5048 = vunpack.c.h.s8.bf16 %v3864
        %v5049 = vunpack.c.h.s8.bf16 %v3865
        %v5050 = vunpack.c.h.s8.bf16 %v3866
        %v5051 = vunpack.c.h.s8.bf16 %v3867
        %v5052 = vunpack.c.h.s8.bf16 %v3868
        %v5053 = vunpack.c.h.s8.bf16 %v3869
        %v5054 = vunpack.c.h.s8.bf16 %v3870
        %v5055 = vunpack.c.h.s8.bf16 %v3871
        %v5056 = vunpack.c.h.s8.bf16 %v3872
        %v5057 = vunpack.c.h.s8.bf16 %v3873
        %v5058 = vunpack.c.h.s8.bf16 %v3874
        %v5059 = vunpack.c.h.s8.bf16 %v3875
        %v5060 = vunpack.c.h.s8.bf16 %v3876
        %v5061 = vunpack.c.h.s8.bf16 %v3877
        %v5062 = vunpack.c.h.s8.bf16 %v3878
        %v5063 = vunpack.c.h.s8.bf16 %v3879
        %v5064 = vunpack.c.h.s8.bf16 %v3880
        %v5065 = vunpack.c.h.s8.bf16 %v3881
        %v5066 = vunpack.c.h.s8.bf16 %v3882
        %v5067 = vunpack.c.h.s8.bf16 %v3883
        %v5068 = vunpack.c.h.s8.bf16 %v3884
        %v5069 = vunpack.c.h.s8.bf16 %v3885
        %v5070 = vunpack.c.h.s8.bf16 %v3886
        %v5071 = vunpack.c.h.s8.bf16 %v3887
        %v5072 = vunpack.c.h.s8.bf16 %v3888
        %v5073 = vunpack.c.h.s8.bf16 %v3889
        %v5074 = vunpack.c.h.s8.bf16 %v3890
        %v5075 = vunpack.c.h.s8.bf16 %v3891
        %v5076 = vunpack.c.l.s8.bf16 %v3892
        %v5077 = vunpack.c.l.s8.bf16 %v3893
        %v5078 = vunpack.c.l.s8.bf16 %v3894
        %v5079 = vunpack.c.l.s8.bf16 %v3895
        %v5080 = vunpack.c.l.s8.bf16 %v3896
        %v5081 = vunpack.c.l.s8.bf16 %v3897
        %v5082 = vunpack.c.l.s8.bf16 %v3898
        %v5083 = vunpack.c.l.s8.bf16 %v3899
        %v5084 = vunpack.c.l.s8.bf16 %v3900
        %v5085 = vunpack.c.l.s8.bf16 %v3901
        %v5086 = vunpack.c.l.s8.bf16 %v3902
        %v5087 = vunpack.c.l.s8.bf16 %v3903
        %v5088 = vunpack.c.l.s8.bf16 %v3904
        %v5089 = vunpack.c.l.s8.bf16 %v3905
        %v5090 = vunpack.c.l.s8.bf16 %v3906
        %v5091 = vunpack.c.l.s8.bf16 %v3907
        %v5092 = vunpack.c.l.s8.bf16 %v3908
        %v5093 = vunpack.c.l.s8.bf16 %v3909
        %v5094 = vunpack.c.l.s8.bf16 %v3910
        %v5095 = vunpack.c.l.s8.bf16 %v3911
        %v5096 = vunpack.c.l.s8.bf16 %v3912
        %v5097 = vunpack.c.l.s8.bf16 %v3913
        %v5098 = vunpack.c.l.s8.bf16 %v3914
        %v5099 = vunpack.c.l.s8.bf16 %v3915
        %v5100 = vunpack.c.l.s8.bf16 %v3916
        %v5101 = vunpack.c.l.s8.bf16 %v3917
        %v5102 = vunpack.c.l.s8.bf16 %v3918
        %v5103 = vunpack.c.l.s8.bf16 %v3919
        %v5104 = vunpack.c.l.s8.bf16 %v3920
        %v5105 = vunpack.c.l.s8.bf16 %v3921
        %v5106 = vunpack.c.l.s8.bf16 %v3922
        %v5107 = vunpack.c.l.s8.bf16 %v3923
        %v5108 = vunpack.c.h.s8.bf16 %v3892
        %v5109 = vunpack.c.h.s8.bf16 %v3893
        %v5110 = vunpack.c.h.s8.bf16 %v3894
        %v5111 = vunpack.c.h.s8.bf16 %v3895
        %v5112 = vunpack.c.h.s8.bf16 %v3896
        %v5113 = vunpack.c.h.s8.bf16 %v3897
        %v5114 = vunpack.c.h.s8.bf16 %v3898
        %v5115 = vunpack.c.h.s8.bf16 %v3899
        %v5116 = vunpack.c.h.s8.bf16 %v3900
        %v5117 = vunpack.c.h.s8.bf16 %v3901
        %v5118 = vunpack.c.h.s8.bf16 %v3902
        %v5119 = vunpack.c.h.s8.bf16 %v3903
        %v5120 = vunpack.c.h.s8.bf16 %v3904
        %v5121 = vunpack.c.h.s8.bf16 %v3905
        %v5122 = vunpack.c.h.s8.bf16 %v3906
        %v5123 = vunpack.c.h.s8.bf16 %v3907
        %v5124 = vunpack.c.h.s8.bf16 %v3908
        %v5125 = vunpack.c.h.s8.bf16 %v3909
        %v5126 = vunpack.c.h.s8.bf16 %v3910
        %v5127 = vunpack.c.h.s8.bf16 %v3911
        %v5128 = vunpack.c.h.s8.bf16 %v3912
        %v5129 = vunpack.c.h.s8.bf16 %v3913
        %v5130 = vunpack.c.h.s8.bf16 %v3914
        %v5131 = vunpack.c.h.s8.bf16 %v3915
        %v5132 = vunpack.c.h.s8.bf16 %v3916
        %v5133 = vunpack.c.h.s8.bf16 %v3917
        %v5134 = vunpack.c.h.s8.bf16 %v3918
        %v5135 = vunpack.c.h.s8.bf16 %v3919
        %v5136 = vunpack.c.h.s8.bf16 %v3920
        %v5137 = vunpack.c.h.s8.bf16 %v3921
        %v5138 = vunpack.c.h.s8.bf16 %v3922
        %v5139 = vunpack.c.h.s8.bf16 %v3923
        %v5140 = vunpack.c.l.s8.bf16 %v3924
        %v5141 = vunpack.c.l.s8.bf16 %v3925
        %v5142 = vunpack.c.l.s8.bf16 %v3926
        %v5143 = vunpack.c.l.s8.bf16 %v3927
        %v5144 = vunpack.c.l.s8.bf16 %v3928
        %v5145 = vunpack.c.l.s8.bf16 %v3929
        %v5146 = vunpack.c.l.s8.bf16 %v3930
        %v5147 = vunpack.c.l.s8.bf16 %v3931
        %v5148 = vunpack.c.l.s8.bf16 %v3932
        %v5149 = vunpack.c.l.s8.bf16 %v3933
        %v5150 = vunpack.c.l.s8.bf16 %v3934
        %v5151 = vunpack.c.l.s8.bf16 %v3935
        %v5152 = vunpack.c.l.s8.bf16 %v3936
        %v5153 = vunpack.c.l.s8.bf16 %v3937
        %v5154 = vunpack.c.l.s8.bf16 %v3938
        %v5155 = vunpack.c.l.s8.bf16 %v3939
        %v5156 = vunpack.c.l.s8.bf16 %v3940
        %v5157 = vunpack.c.l.s8.bf16 %v3941
        %v5158 = vunpack.c.l.s8.bf16 %v3942
        %v5159 = vunpack.c.l.s8.bf16 %v3943
        %v5160 = vunpack.c.l.s8.bf16 %v3944
        %v5161 = vunpack.c.l.s8.bf16 %v3945
        %v5162 = vunpack.c.l.s8.bf16 %v3946
        %v5163 = vunpack.c.l.s8.bf16 %v3947
        %v5164 = vunpack.c.l.s8.bf16 %v3948
        %v5165 = vunpack.c.l.s8.bf16 %v3949
        %v5166 = vunpack.c.l.s8.bf16 %v3950
        %v5167 = vunpack.c.l.s8.bf16 %v3951
        %v5168 = vunpack.c.l.s8.bf16 %v3952
        %v5169 = vunpack.c.l.s8.bf16 %v3953
        %v5170 = vunpack.c.l.s8.bf16 %v3954
        %v5171 = vunpack.c.l.s8.bf16 %v3955
        %v5172 = vunpack.c.h.s8.bf16 %v3924
        %v5173 = vunpack.c.h.s8.bf16 %v3925
        %v5174 = vunpack.c.h.s8.bf16 %v3926
        %v5175 = vunpack.c.h.s8.bf16 %v3927
        %v5176 = vunpack.c.h.s8.bf16 %v3928
        %v5177 = vunpack.c.h.s8.bf16 %v3929
        %v5178 = vunpack.c.h.s8.bf16 %v3930
        %v5179 = vunpack.c.h.s8.bf16 %v3931
        %v5180 = vunpack.c.h.s8.bf16 %v3932
        %v5181 = vunpack.c.h.s8.bf16 %v3933
        %v5182 = vunpack.c.h.s8.bf16 %v3934
        %v5183 = vunpack.c.h.s8.bf16 %v3935
        %v5184 = vunpack.c.h.s8.bf16 %v3936
        %v5185 = vunpack.c.h.s8.bf16 %v3937
        %v5186 = vunpack.c.h.s8.bf16 %v3938
        %v5187 = vunpack.c.h.s8.bf16 %v3939
        %v5188 = vunpack.c.h.s8.bf16 %v3940
        %v5189 = vunpack.c.h.s8.bf16 %v3941
        %v5190 = vunpack.c.h.s8.bf16 %v3942
        %v5191 = vunpack.c.h.s8.bf16 %v3943
        %v5192 = vunpack.c.h.s8.bf16 %v3944
        %v5193 = vunpack.c.h.s8.bf16 %v3945
        %v5194 = vunpack.c.h.s8.bf16 %v3946
        %v5195 = vunpack.c.h.s8.bf16 %v3947
        %v5196 = vunpack.c.h.s8.bf16 %v3948
        %v5197 = vunpack.c.h.s8.bf16 %v3949
        %v5198 = vunpack.c.h.s8.bf16 %v3950
        %v5199 = vunpack.c.h.s8.bf16 %v3951
        %v5200 = vunpack.c.h.s8.bf16 %v3952
        %v5201 = vunpack.c.h.s8.bf16 %v3953
        %v5202 = vunpack.c.h.s8.bf16 %v3954
        %v5203 = vunpack.c.h.s8.bf16 %v3955
        %v5204 = vunpack.c.l.s8.bf16 %v3956
        %v5205 = vunpack.c.l.s8.bf16 %v3957
        %v5206 = vunpack.c.l.s8.bf16 %v3958
        %v5207 = vunpack.c.l.s8.bf16 %v3959
        %v5208 = vunpack.c.l.s8.bf16 %v3960
        %v5209 = vunpack.c.l.s8.bf16 %v3961
        %v5210 = vunpack.c.l.s8.bf16 %v3962
        %v5211 = vunpack.c.l.s8.bf16 %v3963
        %v5212 = vunpack.c.l.s8.bf16 %v3964
        %v5213 = vunpack.c.l.s8.bf16 %v3965
        %v5214 = vunpack.c.l.s8.bf16 %v3966
        %v5215 = vunpack.c.l.s8.bf16 %v3967
        %v5216 = vunpack.c.l.s8.bf16 %v3968
        %v5217 = vunpack.c.l.s8.bf16 %v3969
        %v5218 = vunpack.c.l.s8.bf16 %v3970
        %v5219 = vunpack.c.l.s8.bf16 %v3971
        %v5220 = vunpack.c.l.s8.bf16 %v3972
        %v5221 = vunpack.c.l.s8.bf16 %v3973
        %v5222 = vunpack.c.l.s8.bf16 %v3974
        %v5223 = vunpack.c.l.s8.bf16 %v3975
        %v5224 = vunpack.c.l.s8.bf16 %v3976
        %v5225 = vunpack.c.l.s8.bf16 %v3977
        %v5226 = vunpack.c.l.s8.bf16 %v3978
        %v5227 = vunpack.c.l.s8.bf16 %v3979
        %v5228 = vunpack.c.l.s8.bf16 %v3980
        %v5229 = vunpack.c.l.s8.bf16 %v3981
        %v5230 = vunpack.c.l.s8.bf16 %v3982
        %v5231 = vunpack.c.l.s8.bf16 %v3983
        %v5232 = vunpack.c.l.s8.bf16 %v3984
        %v5233 = vunpack.c.l.s8.bf16 %v3985
        %v5234 = vunpack.c.l.s8.bf16 %v3986
        %v5235 = vunpack.c.l.s8.bf16 %v3987
        %v5236 = vunpack.c.h.s8.bf16 %v3956
        %v5237 = vunpack.c.h.s8.bf16 %v3957
        %v5238 = vunpack.c.h.s8.bf16 %v3958
        %v5239 = vunpack.c.h.s8.bf16 %v3959
        %v5240 = vunpack.c.h.s8.bf16 %v3960
        %v5241 = vunpack.c.h.s8.bf16 %v3961
        %v5242 = vunpack.c.h.s8.bf16 %v3962
        %v5243 = vunpack.c.h.s8.bf16 %v3963
        %v5244 = vunpack.c.h.s8.bf16 %v3964
        %v5245 = vunpack.c.h.s8.bf16 %v3965
        %v5246 = vunpack.c.h.s8.bf16 %v3966
        %v5247 = vunpack.c.h.s8.bf16 %v3967
        %v5248 = vunpack.c.h.s8.bf16 %v3968
        %v5249 = vunpack.c.h.s8.bf16 %v3969
        %v5250 = vunpack.c.h.s8.bf16 %v3970
        %v5251 = vunpack.c.h.s8.bf16 %v3971
        %v5252 = vunpack.c.h.s8.bf16 %v3972
        %v5253 = vunpack.c.h.s8.bf16 %v3973
        %v5254 = vunpack.c.h.s8.bf16 %v3974
        %v5255 = vunpack.c.h.s8.bf16 %v3975
        %v5256 = vunpack.c.h.s8.bf16 %v3976
        %v5257 = vunpack.c.h.s8.bf16 %v3977
        %v5258 = vunpack.c.h.s8.bf16 %v3978
        %v5259 = vunpack.c.h.s8.bf16 %v3979
        %v5260 = vunpack.c.h.s8.bf16 %v3980
        %v5261 = vunpack.c.h.s8.bf16 %v3981
        %v5262 = vunpack.c.h.s8.bf16 %v3982
        %v5263 = vunpack.c.h.s8.bf16 %v3983
        %v5264 = vunpack.c.h.s8.bf16 %v3984
        %v5265 = vunpack.c.h.s8.bf16 %v3985
        %v5266 = vunpack.c.h.s8.bf16 %v3986
        %v5267 = vunpack.c.h.s8.bf16 %v3987
        %v5268 = vunpack.c.l.s8.bf16 %v3988
        %v5269 = vunpack.c.l.s8.bf16 %v3989
        %v5270 = vunpack.c.l.s8.bf16 %v3990
        %v5271 = vunpack.c.l.s8.bf16 %v3991
        %v5272 = vunpack.c.l.s8.bf16 %v3992
        %v5273 = vunpack.c.l.s8.bf16 %v3993
        %v5274 = vunpack.c.l.s8.bf16 %v3994
        %v5275 = vunpack.c.l.s8.bf16 %v3995
        %v5276 = vunpack.c.l.s8.bf16 %v3996
        %v5277 = vunpack.c.l.s8.bf16 %v3997
        %v5278 = vunpack.c.l.s8.bf16 %v3998
        %v5279 = vunpack.c.l.s8.bf16 %v3999
        %v5280 = vunpack.c.l.s8.bf16 %v4000
        %v5281 = vunpack.c.l.s8.bf16 %v4001
        %v5282 = vunpack.c.l.s8.bf16 %v4002
        %v5283 = vunpack.c.l.s8.bf16 %v4003
        %v5284 = vunpack.c.l.s8.bf16 %v4004
        %v5285 = vunpack.c.l.s8.bf16 %v4005
        %v5286 = vunpack.c.l.s8.bf16 %v4006
        %v5287 = vunpack.c.l.s8.bf16 %v4007
        %v5288 = vunpack.c.l.s8.bf16 %v4008
        %v5289 = vunpack.c.l.s8.bf16 %v4009
        %v5290 = vunpack.c.l.s8.bf16 %v4010
        %v5291 = vunpack.c.l.s8.bf16 %v4011
        %v5292 = vunpack.c.l.s8.bf16 %v4012
        %v5293 = vunpack.c.l.s8.bf16 %v4013
        %v5294 = vunpack.c.l.s8.bf16 %v4014
        %v5295 = vunpack.c.l.s8.bf16 %v4015
        %v5296 = vunpack.c.l.s8.bf16 %v4016
        %v5297 = vunpack.c.l.s8.bf16 %v4017
        %v5298 = vunpack.c.l.s8.bf16 %v4018
        %v5299 = vunpack.c.l.s8.bf16 %v4019
        %v5300 = vunpack.c.h.s8.bf16 %v3988
        %v5301 = vunpack.c.h.s8.bf16 %v3989
        %v5302 = vunpack.c.h.s8.bf16 %v3990
        %v5303 = vunpack.c.h.s8.bf16 %v3991
        %v5304 = vunpack.c.h.s8.bf16 %v3992
        %v5305 = vunpack.c.h.s8.bf16 %v3993
        %v5306 = vunpack.c.h.s8.bf16 %v3994
        %v5307 = vunpack.c.h.s8.bf16 %v3995
        %v5308 = vunpack.c.h.s8.bf16 %v3996
        %v5309 = vunpack.c.h.s8.bf16 %v3997
        %v5310 = vunpack.c.h.s8.bf16 %v3998
        %v5311 = vunpack.c.h.s8.bf16 %v3999
        %v5312 = vunpack.c.h.s8.bf16 %v4000
        %v5313 = vunpack.c.h.s8.bf16 %v4001
        %v5314 = vunpack.c.h.s8.bf16 %v4002
        %v5315 = vunpack.c.h.s8.bf16 %v4003
        %v5316 = vunpack.c.h.s8.bf16 %v4004
        %v5317 = vunpack.c.h.s8.bf16 %v4005
        %v5318 = vunpack.c.h.s8.bf16 %v4006
        %v5319 = vunpack.c.h.s8.bf16 %v4007
        %v5320 = vunpack.c.h.s8.bf16 %v4008
        %v5321 = vunpack.c.h.s8.bf16 %v4009
        %v5322 = vunpack.c.h.s8.bf16 %v4010
        %v5323 = vunpack.c.h.s8.bf16 %v4011
        %v5324 = vunpack.c.h.s8.bf16 %v4012
        %v5325 = vunpack.c.h.s8.bf16 %v4013
        %v5326 = vunpack.c.h.s8.bf16 %v4014
        %v5327 = vunpack.c.h.s8.bf16 %v4015
        %v5328 = vunpack.c.h.s8.bf16 %v4016
        %v5329 = vunpack.c.h.s8.bf16 %v4017
        %v5330 = vunpack.c.h.s8.bf16 %v4018
        %v5331 = vunpack.c.h.s8.bf16 %v4019
        %v5332 = vunpack.c.l.s8.bf16 %v4020
        %v5333 = vunpack.c.l.s8.bf16 %v4021
        %v5334 = vunpack.c.l.s8.bf16 %v4022
        %v5335 = vunpack.c.l.s8.bf16 %v4023
        %v5336 = vunpack.c.l.s8.bf16 %v4024
        %v5337 = vunpack.c.l.s8.bf16 %v4025
        %v5338 = vunpack.c.l.s8.bf16 %v4026
        %v5339 = vunpack.c.l.s8.bf16 %v4027
        %v5340 = vunpack.c.l.s8.bf16 %v4028
        %v5341 = vunpack.c.l.s8.bf16 %v4029
        %v5342 = vunpack.c.l.s8.bf16 %v4030
        %v5343 = vunpack.c.l.s8.bf16 %v4031
        %v5344 = vunpack.c.l.s8.bf16 %v4032
        %v5345 = vunpack.c.l.s8.bf16 %v4033
        %v5346 = vunpack.c.l.s8.bf16 %v4034
        %v5347 = vunpack.c.l.s8.bf16 %v4035
        %v5348 = vunpack.c.l.s8.bf16 %v4036
        %v5349 = vunpack.c.l.s8.bf16 %v4037
        %v5350 = vunpack.c.l.s8.bf16 %v4038
        %v5351 = vunpack.c.l.s8.bf16 %v4039
        %v5352 = vunpack.c.l.s8.bf16 %v4040
        %v5353 = vunpack.c.l.s8.bf16 %v4041
        %v5354 = vunpack.c.l.s8.bf16 %v4042
        %v5355 = vunpack.c.l.s8.bf16 %v4043
        %v5356 = vunpack.c.l.s8.bf16 %v4044
        %v5357 = vunpack.c.l.s8.bf16 %v4045
        %v5358 = vunpack.c.l.s8.bf16 %v4046
        %v5359 = vunpack.c.l.s8.bf16 %v4047
        %v5360 = vunpack.c.l.s8.bf16 %v4048
        %v5361 = vunpack.c.l.s8.bf16 %v4049
        %v5362 = vunpack.c.l.s8.bf16 %v4050
        %v5363 = vunpack.c.l.s8.bf16 %v4051
        %v5364 = vunpack.c.h.s8.bf16 %v4020
        %v5365 = vunpack.c.h.s8.bf16 %v4021
        %v5366 = vunpack.c.h.s8.bf16 %v4022
        %v5367 = vunpack.c.h.s8.bf16 %v4023
        %v5368 = vunpack.c.h.s8.bf16 %v4024
        %v5369 = vunpack.c.h.s8.bf16 %v4025
        %v5370 = vunpack.c.h.s8.bf16 %v4026
        %v5371 = vunpack.c.h.s8.bf16 %v4027
        %v5372 = vunpack.c.h.s8.bf16 %v4028
        %v5373 = vunpack.c.h.s8.bf16 %v4029
        %v5374 = vunpack.c.h.s8.bf16 %v4030
        %v5375 = vunpack.c.h.s8.bf16 %v4031
        %v5376 = vunpack.c.h.s8.bf16 %v4032
        %v5377 = vunpack.c.h.s8.bf16 %v4033
        %v5378 = vunpack.c.h.s8.bf16 %v4034
        %v5379 = vunpack.c.h.s8.bf16 %v4035
        %v5380 = vunpack.c.h.s8.bf16 %v4036
        %v5381 = vunpack.c.h.s8.bf16 %v4037
        %v5382 = vunpack.c.h.s8.bf16 %v4038
        %v5383 = vunpack.c.h.s8.bf16 %v4039
        %v5384 = vunpack.c.h.s8.bf16 %v4040
        %v5385 = vunpack.c.h.s8.bf16 %v4041
        %v5386 = vunpack.c.h.s8.bf16 %v4042
        %v5387 = vunpack.c.h.s8.bf16 %v4043
        %v5388 = vunpack.c.h.s8.bf16 %v4044
        %v5389 = vunpack.c.h.s8.bf16 %v4045
        %v5390 = vunpack.c.h.s8.bf16 %v4046
        %v5391 = vunpack.c.h.s8.bf16 %v4047
        %v5392 = vunpack.c.h.s8.bf16 %v4048
        %v5393 = vunpack.c.h.s8.bf16 %v4049
        %v5394 = vunpack.c.h.s8.bf16 %v4050
        %v5395 = vunpack.c.h.s8.bf16 %v4051
        %v5396 = vunpack.c.l.s8.bf16 %v4052
        %v5397 = vunpack.c.l.s8.bf16 %v4053
        %v5398 = vunpack.c.l.s8.bf16 %v4054
        %v5399 = vunpack.c.l.s8.bf16 %v4055
        %v5400 = vunpack.c.l.s8.bf16 %v4056
        %v5401 = vunpack.c.l.s8.bf16 %v4057
        %v5402 = vunpack.c.l.s8.bf16 %v4058
        %v5403 = vunpack.c.l.s8.bf16 %v4059
        %v5404 = vunpack.c.l.s8.bf16 %v4060
        %v5405 = vunpack.c.l.s8.bf16 %v4061
        %v5406 = vunpack.c.l.s8.bf16 %v4062
        %v5407 = vunpack.c.l.s8.bf16 %v4063
        %v5408 = vunpack.c.l.s8.bf16 %v4064
        %v5409 = vunpack.c.l.s8.bf16 %v4065
        %v5410 = vunpack.c.l.s8.bf16 %v4066
        %v5411 = vunpack.c.l.s8.bf16 %v4067
        %v5412 = vunpack.c.l.s8.bf16 %v4068
        %v5413 = vunpack.c.l.s8.bf16 %v4069
        %v5414 = vunpack.c.l.s8.bf16 %v4070
        %v5415 = vunpack.c.l.s8.bf16 %v4071
        %v5416 = vunpack.c.l.s8.bf16 %v4072
        %v5417 = vunpack.c.l.s8.bf16 %v4073
        %v5418 = vunpack.c.l.s8.bf16 %v4074
        %v5419 = vunpack.c.l.s8.bf16 %v4075
        %v5420 = vunpack.c.l.s8.bf16 %v4076
        %v5421 = vunpack.c.l.s8.bf16 %v4077
        %v5422 = vunpack.c.l.s8.bf16 %v4078
        %v5423 = vunpack.c.l.s8.bf16 %v4079
        %v5424 = vunpack.c.l.s8.bf16 %v4080
        %v5425 = vunpack.c.l.s8.bf16 %v4081
        %v5426 = vunpack.c.l.s8.bf16 %v4082
        %v5427 = vunpack.c.l.s8.bf16 %v4083
        %v5428 = vunpack.c.h.s8.bf16 %v4052
        %v5429 = vunpack.c.h.s8.bf16 %v4053
        %v5430 = vunpack.c.h.s8.bf16 %v4054
        %v5431 = vunpack.c.h.s8.bf16 %v4055
        %v5432 = vunpack.c.h.s8.bf16 %v4056
        %v5433 = vunpack.c.h.s8.bf16 %v4057
        %v5434 = vunpack.c.h.s8.bf16 %v4058
        %v5435 = vunpack.c.h.s8.bf16 %v4059
        %v5436 = vunpack.c.h.s8.bf16 %v4060
        %v5437 = vunpack.c.h.s8.bf16 %v4061
        %v5438 = vunpack.c.h.s8.bf16 %v4062
        %v5439 = vunpack.c.h.s8.bf16 %v4063
        %v5440 = vunpack.c.h.s8.bf16 %v4064
        %v5441 = vunpack.c.h.s8.bf16 %v4065
        %v5442 = vunpack.c.h.s8.bf16 %v4066
        %v5443 = vunpack.c.h.s8.bf16 %v4067
        %v5444 = vunpack.c.h.s8.bf16 %v4068
        %v5445 = vunpack.c.h.s8.bf16 %v4069
        %v5446 = vunpack.c.h.s8.bf16 %v4070
        %v5447 = vunpack.c.h.s8.bf16 %v4071
        %v5448 = vunpack.c.h.s8.bf16 %v4072
        %v5449 = vunpack.c.h.s8.bf16 %v4073
        %v5450 = vunpack.c.h.s8.bf16 %v4074
        %v5451 = vunpack.c.h.s8.bf16 %v4075
        %v5452 = vunpack.c.h.s8.bf16 %v4076
        %v5453 = vunpack.c.h.s8.bf16 %v4077
        %v5454 = vunpack.c.h.s8.bf16 %v4078
        %v5455 = vunpack.c.h.s8.bf16 %v4079
        %v5456 = vunpack.c.h.s8.bf16 %v4080
        %v5457 = vunpack.c.h.s8.bf16 %v4081
        %v5458 = vunpack.c.h.s8.bf16 %v4082
        %v5459 = vunpack.c.h.s8.bf16 %v4083
        %v5460 = vunpack.c.l.s8.bf16 %v4084
        %v5461 = vunpack.c.l.s8.bf16 %v4085
        %v5462 = vunpack.c.l.s8.bf16 %v4086
        %v5463 = vunpack.c.l.s8.bf16 %v4087
        %v5464 = vunpack.c.l.s8.bf16 %v4088
        %v5465 = vunpack.c.l.s8.bf16 %v4089
        %v5466 = vunpack.c.l.s8.bf16 %v4090
        %v5467 = vunpack.c.l.s8.bf16 %v4091
        %v5468 = vunpack.c.l.s8.bf16 %v4092
        %v5469 = vunpack.c.l.s8.bf16 %v4093
        %v5470 = vunpack.c.l.s8.bf16 %v4094
        %v5471 = vunpack.c.l.s8.bf16 %v4095
        %v5472 = vunpack.c.l.s8.bf16 %v4096
        %v5473 = vunpack.c.l.s8.bf16 %v4097
        %v5474 = vunpack.c.l.s8.bf16 %v4098
        %v5475 = vunpack.c.l.s8.bf16 %v4099
        %v5476 = vunpack.c.l.s8.bf16 %v4100
        %v5477 = vunpack.c.l.s8.bf16 %v4101
        %v5478 = vunpack.c.l.s8.bf16 %v4102
        %v5479 = vunpack.c.l.s8.bf16 %v4103
        %v5480 = vunpack.c.l.s8.bf16 %v4104
        %v5481 = vunpack.c.l.s8.bf16 %v4105
        %v5482 = vunpack.c.l.s8.bf16 %v4106
        %v5483 = vunpack.c.l.s8.bf16 %v4107
        %v5484 = vunpack.c.l.s8.bf16 %v4108
        %v5485 = vunpack.c.l.s8.bf16 %v4109
        %v5486 = vunpack.c.l.s8.bf16 %v4110
        %v5487 = vunpack.c.l.s8.bf16 %v4111
        %v5488 = vunpack.c.l.s8.bf16 %v4112
        %v5489 = vunpack.c.l.s8.bf16 %v4113
        %v5490 = vunpack.c.l.s8.bf16 %v4114
        %v5491 = vunpack.c.l.s8.bf16 %v4115
        %v5492 = vunpack.c.h.s8.bf16 %v4084
        %v5493 = vunpack.c.h.s8.bf16 %v4085
        %v5494 = vunpack.c.h.s8.bf16 %v4086
        %v5495 = vunpack.c.h.s8.bf16 %v4087
        %v5496 = vunpack.c.h.s8.bf16 %v4088
        %v5497 = vunpack.c.h.s8.bf16 %v4089
        %v5498 = vunpack.c.h.s8.bf16 %v4090
        %v5499 = vunpack.c.h.s8.bf16 %v4091
        %v5500 = vunpack.c.h.s8.bf16 %v4092
        %v5501 = vunpack.c.h.s8.bf16 %v4093
        %v5502 = vunpack.c.h.s8.bf16 %v4094
        %v5503 = vunpack.c.h.s8.bf16 %v4095
        %v5504 = vunpack.c.h.s8.bf16 %v4096
        %v5505 = vunpack.c.h.s8.bf16 %v4097
        %v5506 = vunpack.c.h.s8.bf16 %v4098
        %v5507 = vunpack.c.h.s8.bf16 %v4099
        %v5508 = vunpack.c.h.s8.bf16 %v4100
        %v5509 = vunpack.c.h.s8.bf16 %v4101
        %v5510 = vunpack.c.h.s8.bf16 %v4102
        %v5511 = vunpack.c.h.s8.bf16 %v4103
        %v5512 = vunpack.c.h.s8.bf16 %v4104
        %v5513 = vunpack.c.h.s8.bf16 %v4105
        %v5514 = vunpack.c.h.s8.bf16 %v4106
        %v5515 = vunpack.c.h.s8.bf16 %v4107
        %v5516 = vunpack.c.h.s8.bf16 %v4108
        %v5517 = vunpack.c.h.s8.bf16 %v4109
        %v5518 = vunpack.c.h.s8.bf16 %v4110
        %v5519 = vunpack.c.h.s8.bf16 %v4111
        %v5520 = vunpack.c.h.s8.bf16 %v4112
        %v5521 = vunpack.c.h.s8.bf16 %v4113
        %v5522 = vunpack.c.h.s8.bf16 %v4114
        %v5523 = vunpack.c.h.s8.bf16 %v4115
        %v5524 = vunpack.c.l.s8.bf16 %v4116
        %v5525 = vunpack.c.l.s8.bf16 %v4117
        %v5526 = vunpack.c.l.s8.bf16 %v4118
        %v5527 = vunpack.c.l.s8.bf16 %v4119
        %v5528 = vunpack.c.l.s8.bf16 %v4120
        %v5529 = vunpack.c.l.s8.bf16 %v4121
        %v5530 = vunpack.c.l.s8.bf16 %v4122
        %v5531 = vunpack.c.l.s8.bf16 %v4123
        %v5532 = vunpack.c.l.s8.bf16 %v4124
        %v5533 = vunpack.c.l.s8.bf16 %v4125
        %v5534 = vunpack.c.l.s8.bf16 %v4126
        %v5535 = vunpack.c.l.s8.bf16 %v4127
        %v5536 = vunpack.c.l.s8.bf16 %v4128
        %v5537 = vunpack.c.l.s8.bf16 %v4129
        %v5538 = vunpack.c.l.s8.bf16 %v4130
        %v5539 = vunpack.c.l.s8.bf16 %v4131
        %v5540 = vunpack.c.l.s8.bf16 %v4132
        %v5541 = vunpack.c.l.s8.bf16 %v4133
        %v5542 = vunpack.c.l.s8.bf16 %v4134
        %v5543 = vunpack.c.l.s8.bf16 %v4135
        %v5544 = vunpack.c.l.s8.bf16 %v4136
        %v5545 = vunpack.c.l.s8.bf16 %v4137
        %v5546 = vunpack.c.l.s8.bf16 %v4138
        %v5547 = vunpack.c.l.s8.bf16 %v4139
        %v5548 = vunpack.c.l.s8.bf16 %v4140
        %v5549 = vunpack.c.l.s8.bf16 %v4141
        %v5550 = vunpack.c.l.s8.bf16 %v4142
        %v5551 = vunpack.c.l.s8.bf16 %v4143
        %v5552 = vunpack.c.l.s8.bf16 %v4144
        %v5553 = vunpack.c.l.s8.bf16 %v4145
        %v5554 = vunpack.c.l.s8.bf16 %v4146
        %v5555 = vunpack.c.l.s8.bf16 %v4147
        %v5556 = vunpack.c.h.s8.bf16 %v4116
        %v5557 = vunpack.c.h.s8.bf16 %v4117
        %v5558 = vunpack.c.h.s8.bf16 %v4118
        %v5559 = vunpack.c.h.s8.bf16 %v4119
        %v5560 = vunpack.c.h.s8.bf16 %v4120
        %v5561 = vunpack.c.h.s8.bf16 %v4121
        %v5562 = vunpack.c.h.s8.bf16 %v4122
        %v5563 = vunpack.c.h.s8.bf16 %v4123
        %v5564 = vunpack.c.h.s8.bf16 %v4124
        %v5565 = vunpack.c.h.s8.bf16 %v4125
        %v5566 = vunpack.c.h.s8.bf16 %v4126
        %v5567 = vunpack.c.h.s8.bf16 %v4127
        %v5568 = vunpack.c.h.s8.bf16 %v4128
        %v5569 = vunpack.c.h.s8.bf16 %v4129
        %v5570 = vunpack.c.h.s8.bf16 %v4130
        %v5571 = vunpack.c.h.s8.bf16 %v4131
        %v5572 = vunpack.c.h.s8.bf16 %v4132
        %v5573 = vunpack.c.h.s8.bf16 %v4133
        %v5574 = vunpack.c.h.s8.bf16 %v4134
        %v5575 = vunpack.c.h.s8.bf16 %v4135
        %v5576 = vunpack.c.h.s8.bf16 %v4136
        %v5577 = vunpack.c.h.s8.bf16 %v4137
        %v5578 = vunpack.c.h.s8.bf16 %v4138
        %v5579 = vunpack.c.h.s8.bf16 %v4139
        %v5580 = vunpack.c.h.s8.bf16 %v4140
        %v5581 = vunpack.c.h.s8.bf16 %v4141
        %v5582 = vunpack.c.h.s8.bf16 %v4142
        %v5583 = vunpack.c.h.s8.bf16 %v4143
        %v5584 = vunpack.c.h.s8.bf16 %v4144
        %v5585 = vunpack.c.h.s8.bf16 %v4145
        %v5586 = vunpack.c.h.s8.bf16 %v4146
        %v5587 = vunpack.c.h.s8.bf16 %v4147
        %v5588 = vunpack.c.l.s8.bf16 %v4148
        %v5589 = vunpack.c.l.s8.bf16 %v4149
        %v5590 = vunpack.c.l.s8.bf16 %v4150
        %v5591 = vunpack.c.l.s8.bf16 %v4151
        %v5592 = vunpack.c.l.s8.bf16 %v4152
        %v5593 = vunpack.c.l.s8.bf16 %v4153
        %v5594 = vunpack.c.l.s8.bf16 %v4154
        %v5595 = vunpack.c.l.s8.bf16 %v4155
        %v5596 = vunpack.c.l.s8.bf16 %v4156
        %v5597 = vunpack.c.l.s8.bf16 %v4157
        %v5598 = vunpack.c.l.s8.bf16 %v4158
        %v5599 = vunpack.c.l.s8.bf16 %v4159
        %v5600 = vunpack.c.l.s8.bf16 %v4160
        %v5601 = vunpack.c.l.s8.bf16 %v4161
        %v5602 = vunpack.c.l.s8.bf16 %v4162
        %v5603 = vunpack.c.l.s8.bf16 %v4163
        %v5604 = vunpack.c.l.s8.bf16 %v4164
        %v5605 = vunpack.c.l.s8.bf16 %v4165
        %v5606 = vunpack.c.l.s8.bf16 %v4166
        %v5607 = vunpack.c.l.s8.bf16 %v4167
        %v5608 = vunpack.c.l.s8.bf16 %v4168
        %v5609 = vunpack.c.l.s8.bf16 %v4169
        %v5610 = vunpack.c.l.s8.bf16 %v4170
        %v5611 = vunpack.c.l.s8.bf16 %v4171
        %v5612 = vunpack.c.l.s8.bf16 %v4172
        %v5613 = vunpack.c.l.s8.bf16 %v4173
        %v5614 = vunpack.c.l.s8.bf16 %v4174
        %v5615 = vunpack.c.l.s8.bf16 %v4175
        %v5616 = vunpack.c.l.s8.bf16 %v4176
        %v5617 = vunpack.c.l.s8.bf16 %v4177
        %v5618 = vunpack.c.l.s8.bf16 %v4178
        %v5619 = vunpack.c.l.s8.bf16 %v4179
        %v5620 = vunpack.c.h.s8.bf16 %v4148
        %v5621 = vunpack.c.h.s8.bf16 %v4149
        %v5622 = vunpack.c.h.s8.bf16 %v4150
        %v5623 = vunpack.c.h.s8.bf16 %v4151
        %v5624 = vunpack.c.h.s8.bf16 %v4152
        %v5625 = vunpack.c.h.s8.bf16 %v4153
        %v5626 = vunpack.c.h.s8.bf16 %v4154
        %v5627 = vunpack.c.h.s8.bf16 %v4155
        %v5628 = vunpack.c.h.s8.bf16 %v4156
        %v5629 = vunpack.c.h.s8.bf16 %v4157
        %v5630 = vunpack.c.h.s8.bf16 %v4158
        %v5631 = vunpack.c.h.s8.bf16 %v4159
        %v5632 = vunpack.c.h.s8.bf16 %v4160
        %v5633 = vunpack.c.h.s8.bf16 %v4161
        %v5634 = vunpack.c.h.s8.bf16 %v4162
        %v5635 = vunpack.c.h.s8.bf16 %v4163
        %v5636 = vunpack.c.h.s8.bf16 %v4164
        %v5637 = vunpack.c.h.s8.bf16 %v4165
        %v5638 = vunpack.c.h.s8.bf16 %v4166
        %v5639 = vunpack.c.h.s8.bf16 %v4167
        %v5640 = vunpack.c.h.s8.bf16 %v4168
        %v5641 = vunpack.c.h.s8.bf16 %v4169
        %v5642 = vunpack.c.h.s8.bf16 %v4170
        %v5643 = vunpack.c.h.s8.bf16 %v4171
        %v5644 = vunpack.c.h.s8.bf16 %v4172
        %v5645 = vunpack.c.h.s8.bf16 %v4173
        %v5646 = vunpack.c.h.s8.bf16 %v4174
        %v5647 = vunpack.c.h.s8.bf16 %v4175
        %v5648 = vunpack.c.h.s8.bf16 %v4176
        %v5649 = vunpack.c.h.s8.bf16 %v4177
        %v5650 = vunpack.c.h.s8.bf16 %v4178
        %v5651 = vunpack.c.h.s8.bf16 %v4179
        %v5652 = vunpack.c.l.s8.bf16 %v4180
        %v5653 = vunpack.c.l.s8.bf16 %v4181
        %v5654 = vunpack.c.l.s8.bf16 %v4182
        %v5655 = vunpack.c.l.s8.bf16 %v4183
        %v5656 = vunpack.c.l.s8.bf16 %v4184
        %v5657 = vunpack.c.l.s8.bf16 %v4185
        %v5658 = vunpack.c.l.s8.bf16 %v4186
        %v5659 = vunpack.c.l.s8.bf16 %v4187
        %v5660 = vunpack.c.l.s8.bf16 %v4188
        %v5661 = vunpack.c.l.s8.bf16 %v4189
        %v5662 = vunpack.c.l.s8.bf16 %v4190
        %v5663 = vunpack.c.l.s8.bf16 %v4191
        %v5664 = vunpack.c.l.s8.bf16 %v4192
        %v5665 = vunpack.c.l.s8.bf16 %v4193
        %v5666 = vunpack.c.l.s8.bf16 %v4194
        %v5667 = vunpack.c.l.s8.bf16 %v4195
        %v5668 = vunpack.c.l.s8.bf16 %v4196
        %v5669 = vunpack.c.l.s8.bf16 %v4197
        %v5670 = vunpack.c.l.s8.bf16 %v4198
        %v5671 = vunpack.c.l.s8.bf16 %v4199
        %v5672 = vunpack.c.l.s8.bf16 %v4200
        %v5673 = vunpack.c.l.s8.bf16 %v4201
        %v5674 = vunpack.c.l.s8.bf16 %v4202
        %v5675 = vunpack.c.l.s8.bf16 %v4203
        %v5676 = vunpack.c.l.s8.bf16 %v4204
        %v5677 = vunpack.c.l.s8.bf16 %v4205
        %v5678 = vunpack.c.l.s8.bf16 %v4206
        %v5679 = vunpack.c.l.s8.bf16 %v4207
        %v5680 = vunpack.c.l.s8.bf16 %v4208
        %v5681 = vunpack.c.l.s8.bf16 %v4209
        %v5682 = vunpack.c.l.s8.bf16 %v4210
        %v5683 = vunpack.c.l.s8.bf16 %v4211
        %v5684 = vunpack.c.h.s8.bf16 %v4180
        %v5685 = vunpack.c.h.s8.bf16 %v4181
        %v5686 = vunpack.c.h.s8.bf16 %v4182
        %v5687 = vunpack.c.h.s8.bf16 %v4183
        %v5688 = vunpack.c.h.s8.bf16 %v4184
        %v5689 = vunpack.c.h.s8.bf16 %v4185
        %v5690 = vunpack.c.h.s8.bf16 %v4186
        %v5691 = vunpack.c.h.s8.bf16 %v4187
        %v5692 = vunpack.c.h.s8.bf16 %v4188
        %v5693 = vunpack.c.h.s8.bf16 %v4189
        %v5694 = vunpack.c.h.s8.bf16 %v4190
        %v5695 = vunpack.c.h.s8.bf16 %v4191
        %v5696 = vunpack.c.h.s8.bf16 %v4192
        %v5697 = vunpack.c.h.s8.bf16 %v4193
        %v5698 = vunpack.c.h.s8.bf16 %v4194
        %v5699 = vunpack.c.h.s8.bf16 %v4195
        %v5700 = vunpack.c.h.s8.bf16 %v4196
        %v5701 = vunpack.c.h.s8.bf16 %v4197
        %v5702 = vunpack.c.h.s8.bf16 %v4198
        %v5703 = vunpack.c.h.s8.bf16 %v4199
        %v5704 = vunpack.c.h.s8.bf16 %v4200
        %v5705 = vunpack.c.h.s8.bf16 %v4201
        %v5706 = vunpack.c.h.s8.bf16 %v4202
        %v5707 = vunpack.c.h.s8.bf16 %v4203
        %v5708 = vunpack.c.h.s8.bf16 %v4204
        %v5709 = vunpack.c.h.s8.bf16 %v4205
        %v5710 = vunpack.c.h.s8.bf16 %v4206
        %v5711 = vunpack.c.h.s8.bf16 %v4207
        %v5712 = vunpack.c.h.s8.bf16 %v4208
        %v5713 = vunpack.c.h.s8.bf16 %v4209
        %v5714 = vunpack.c.h.s8.bf16 %v4210
        %v5715 = vunpack.c.h.s8.bf16 %v4211
        %v5716 = vunpack.c.l.s8.bf16 %v4212
        %v5717 = vunpack.c.l.s8.bf16 %v4213
        %v5718 = vunpack.c.l.s8.bf16 %v4214
        %v5719 = vunpack.c.l.s8.bf16 %v4215
        %v5720 = vunpack.c.l.s8.bf16 %v4216
        %v5721 = vunpack.c.l.s8.bf16 %v4217
        %v5722 = vunpack.c.l.s8.bf16 %v4218
        %v5723 = vunpack.c.l.s8.bf16 %v4219
        %v5724 = vunpack.c.l.s8.bf16 %v4220
        %v5725 = vunpack.c.l.s8.bf16 %v4221
        %v5726 = vunpack.c.l.s8.bf16 %v4222
        %v5727 = vunpack.c.l.s8.bf16 %v4223
        %v5728 = vunpack.c.l.s8.bf16 %v4224
        %v5729 = vunpack.c.l.s8.bf16 %v4225
        %v5730 = vunpack.c.l.s8.bf16 %v4226
        %v5731 = vunpack.c.l.s8.bf16 %v4227
        %v5732 = vunpack.c.l.s8.bf16 %v4228
        %v5733 = vunpack.c.l.s8.bf16 %v4229
        %v5734 = vunpack.c.l.s8.bf16 %v4230
        %v5735 = vunpack.c.l.s8.bf16 %v4231
        %v5736 = vunpack.c.l.s8.bf16 %v4232
        %v5737 = vunpack.c.l.s8.bf16 %v4233
        %v5738 = vunpack.c.l.s8.bf16 %v4234
        %v5739 = vunpack.c.l.s8.bf16 %v4235
        %v5740 = vunpack.c.l.s8.bf16 %v4236
        %v5741 = vunpack.c.l.s8.bf16 %v4237
        %v5742 = vunpack.c.l.s8.bf16 %v4238
        %v5743 = vunpack.c.l.s8.bf16 %v4239
        %v5744 = vunpack.c.l.s8.bf16 %v4240
        %v5745 = vunpack.c.l.s8.bf16 %v4241
        %v5746 = vunpack.c.l.s8.bf16 %v4242
        %v5747 = vunpack.c.l.s8.bf16 %v4243
        %v5748 = vunpack.c.h.s8.bf16 %v4212
        %v5749 = vunpack.c.h.s8.bf16 %v4213
        %v5750 = vunpack.c.h.s8.bf16 %v4214
        %v5751 = vunpack.c.h.s8.bf16 %v4215
        %v5752 = vunpack.c.h.s8.bf16 %v4216
        %v5753 = vunpack.c.h.s8.bf16 %v4217
        %v5754 = vunpack.c.h.s8.bf16 %v4218
        %v5755 = vunpack.c.h.s8.bf16 %v4219
        %v5756 = vunpack.c.h.s8.bf16 %v4220
        %v5757 = vunpack.c.h.s8.bf16 %v4221
        %v5758 = vunpack.c.h.s8.bf16 %v4222
        %v5759 = vunpack.c.h.s8.bf16 %v4223
        %v5760 = vunpack.c.h.s8.bf16 %v4224
        %v5761 = vunpack.c.h.s8.bf16 %v4225
        %v5762 = vunpack.c.h.s8.bf16 %v4226
        %v5763 = vunpack.c.h.s8.bf16 %v4227
        %v5764 = vunpack.c.h.s8.bf16 %v4228
        %v5765 = vunpack.c.h.s8.bf16 %v4229
        %v5766 = vunpack.c.h.s8.bf16 %v4230
        %v5767 = vunpack.c.h.s8.bf16 %v4231
        %v5768 = vunpack.c.h.s8.bf16 %v4232
        %v5769 = vunpack.c.h.s8.bf16 %v4233
        %v5770 = vunpack.c.h.s8.bf16 %v4234
        %v5771 = vunpack.c.h.s8.bf16 %v4235
        %v5772 = vunpack.c.h.s8.bf16 %v4236
        %v5773 = vunpack.c.h.s8.bf16 %v4237
        %v5774 = vunpack.c.h.s8.bf16 %v4238
        %v5775 = vunpack.c.h.s8.bf16 %v4239
        %v5776 = vunpack.c.h.s8.bf16 %v4240
        %v5777 = vunpack.c.h.s8.bf16 %v4241
        %v5778 = vunpack.c.h.s8.bf16 %v4242
        %v5779 = vunpack.c.h.s8.bf16 %v4243
        %v5780 = vunpack.c.l.s8.bf16 %v4244
        %v5781 = vunpack.c.l.s8.bf16 %v4245
        %v5782 = vunpack.c.l.s8.bf16 %v4246
        %v5783 = vunpack.c.l.s8.bf16 %v4247
        %v5784 = vunpack.c.l.s8.bf16 %v4248
        %v5785 = vunpack.c.l.s8.bf16 %v4249
        %v5786 = vunpack.c.l.s8.bf16 %v4250
        %v5787 = vunpack.c.l.s8.bf16 %v4251
        %v5788 = vunpack.c.l.s8.bf16 %v4252
        %v5789 = vunpack.c.l.s8.bf16 %v4253
        %v5790 = vunpack.c.l.s8.bf16 %v4254
        %v5791 = vunpack.c.l.s8.bf16 %v4255
        %v5792 = vunpack.c.l.s8.bf16 %v4256
        %v5793 = vunpack.c.l.s8.bf16 %v4257
        %v5794 = vunpack.c.l.s8.bf16 %v4258
        %v5795 = vunpack.c.l.s8.bf16 %v4259
        %v5796 = vunpack.c.l.s8.bf16 %v4260
        %v5797 = vunpack.c.l.s8.bf16 %v4261
        %v5798 = vunpack.c.l.s8.bf16 %v4262
        %v5799 = vunpack.c.l.s8.bf16 %v4263
        %v5800 = vunpack.c.l.s8.bf16 %v4264
        %v5801 = vunpack.c.l.s8.bf16 %v4265
        %v5802 = vunpack.c.l.s8.bf16 %v4266
        %v5803 = vunpack.c.l.s8.bf16 %v4267
        %v5804 = vunpack.c.l.s8.bf16 %v4268
        %v5805 = vunpack.c.l.s8.bf16 %v4269
        %v5806 = vunpack.c.l.s8.bf16 %v4270
        %v5807 = vunpack.c.l.s8.bf16 %v4271
        %v5808 = vunpack.c.l.s8.bf16 %v4272
        %v5809 = vunpack.c.l.s8.bf16 %v4273
        %v5810 = vunpack.c.l.s8.bf16 %v4274
        %v5811 = vunpack.c.l.s8.bf16 %v4275
        %v5812 = vunpack.c.h.s8.bf16 %v4244
        %v5813 = vunpack.c.h.s8.bf16 %v4245
        %v5814 = vunpack.c.h.s8.bf16 %v4246
        %v5815 = vunpack.c.h.s8.bf16 %v4247
        %v5816 = vunpack.c.h.s8.bf16 %v4248
        %v5817 = vunpack.c.h.s8.bf16 %v4249
        %v5818 = vunpack.c.h.s8.bf16 %v4250
        %v5819 = vunpack.c.h.s8.bf16 %v4251
        %v5820 = vunpack.c.h.s8.bf16 %v4252
        %v5821 = vunpack.c.h.s8.bf16 %v4253
        %v5822 = vunpack.c.h.s8.bf16 %v4254
        %v5823 = vunpack.c.h.s8.bf16 %v4255
        %v5824 = vunpack.c.h.s8.bf16 %v4256
        %v5825 = vunpack.c.h.s8.bf16 %v4257
        %v5826 = vunpack.c.h.s8.bf16 %v4258
        %v5827 = vunpack.c.h.s8.bf16 %v4259
        %v5828 = vunpack.c.h.s8.bf16 %v4260
        %v5829 = vunpack.c.h.s8.bf16 %v4261
        %v5830 = vunpack.c.h.s8.bf16 %v4262
        %v5831 = vunpack.c.h.s8.bf16 %v4263
        %v5832 = vunpack.c.h.s8.bf16 %v4264
        %v5833 = vunpack.c.h.s8.bf16 %v4265
        %v5834 = vunpack.c.h.s8.bf16 %v4266
        %v5835 = vunpack.c.h.s8.bf16 %v4267
        %v5836 = vunpack.c.h.s8.bf16 %v4268
        %v5837 = vunpack.c.h.s8.bf16 %v4269
        %v5838 = vunpack.c.h.s8.bf16 %v4270
        %v5839 = vunpack.c.h.s8.bf16 %v4271
        %v5840 = vunpack.c.h.s8.bf16 %v4272
        %v5841 = vunpack.c.h.s8.bf16 %v4273
        %v5842 = vunpack.c.h.s8.bf16 %v4274
        %v5843 = vunpack.c.h.s8.bf16 %v4275
        %v5844 = vunpack.c.l.s8.bf16 %v4276
        %v5845 = vunpack.c.l.s8.bf16 %v4277
        %v5846 = vunpack.c.l.s8.bf16 %v4278
        %v5847 = vunpack.c.l.s8.bf16 %v4279
        %v5848 = vunpack.c.l.s8.bf16 %v4280
        %v5849 = vunpack.c.l.s8.bf16 %v4281
        %v5850 = vunpack.c.l.s8.bf16 %v4282
        %v5851 = vunpack.c.l.s8.bf16 %v4283
        %v5852 = vunpack.c.l.s8.bf16 %v4284
        %v5853 = vunpack.c.l.s8.bf16 %v4285
        %v5854 = vunpack.c.l.s8.bf16 %v4286
        %v5855 = vunpack.c.l.s8.bf16 %v4287
        %v5856 = vunpack.c.l.s8.bf16 %v4288
        %v5857 = vunpack.c.l.s8.bf16 %v4289
        %v5858 = vunpack.c.l.s8.bf16 %v4290
        %v5859 = vunpack.c.l.s8.bf16 %v4291
        %v5860 = vunpack.c.l.s8.bf16 %v4292
        %v5861 = vunpack.c.l.s8.bf16 %v4293
        %v5862 = vunpack.c.l.s8.bf16 %v4294
        %v5863 = vunpack.c.l.s8.bf16 %v4295
        %v5864 = vunpack.c.l.s8.bf16 %v4296
        %v5865 = vunpack.c.l.s8.bf16 %v4297
        %v5866 = vunpack.c.l.s8.bf16 %v4298
        %v5867 = vunpack.c.l.s8.bf16 %v4299
        %v5868 = vunpack.c.l.s8.bf16 %v4300
        %v5869 = vunpack.c.l.s8.bf16 %v4301
        %v5870 = vunpack.c.l.s8.bf16 %v4302
        %v5871 = vunpack.c.l.s8.bf16 %v4303
        %v5872 = vunpack.c.l.s8.bf16 %v4304
        %v5873 = vunpack.c.l.s8.bf16 %v4305
        %v5874 = vunpack.c.l.s8.bf16 %v4306
        %v5875 = vunpack.c.l.s8.bf16 %v4307
        %v5876 = vunpack.c.h.s8.bf16 %v4276
        %v5877 = vunpack.c.h.s8.bf16 %v4277
        %v5878 = vunpack.c.h.s8.bf16 %v4278
        %v5879 = vunpack.c.h.s8.bf16 %v4279
        %v5880 = vunpack.c.h.s8.bf16 %v4280
        %v5881 = vunpack.c.h.s8.bf16 %v4281
        %v5882 = vunpack.c.h.s8.bf16 %v4282
        %v5883 = vunpack.c.h.s8.bf16 %v4283
        %v5884 = vunpack.c.h.s8.bf16 %v4284
        %v5885 = vunpack.c.h.s8.bf16 %v4285
        %v5886 = vunpack.c.h.s8.bf16 %v4286
        %v5887 = vunpack.c.h.s8.bf16 %v4287
        %v5888 = vunpack.c.h.s8.bf16 %v4288
        %v5889 = vunpack.c.h.s8.bf16 %v4289
        %v5890 = vunpack.c.h.s8.bf16 %v4290
        %v5891 = vunpack.c.h.s8.bf16 %v4291
        %v5892 = vunpack.c.h.s8.bf16 %v4292
        %v5893 = vunpack.c.h.s8.bf16 %v4293
        %v5894 = vunpack.c.h.s8.bf16 %v4294
        %v5895 = vunpack.c.h.s8.bf16 %v4295
        %v5896 = vunpack.c.h.s8.bf16 %v4296
        %v5897 = vunpack.c.h.s8.bf16 %v4297
        %v5898 = vunpack.c.h.s8.bf16 %v4298
        %v5899 = vunpack.c.h.s8.bf16 %v4299
        %v5900 = vunpack.c.h.s8.bf16 %v4300
        %v5901 = vunpack.c.h.s8.bf16 %v4301
        %v5902 = vunpack.c.h.s8.bf16 %v4302
        %v5903 = vunpack.c.h.s8.bf16 %v4303
        %v5904 = vunpack.c.h.s8.bf16 %v4304
        %v5905 = vunpack.c.h.s8.bf16 %v4305
        %v5906 = vunpack.c.h.s8.bf16 %v4306
        %v5907 = vunpack.c.h.s8.bf16 %v4307
        %v5908 = vunpack.c.l.s8.bf16 %v4308
        %v5909 = vunpack.c.l.s8.bf16 %v4309
        %v5910 = vunpack.c.l.s8.bf16 %v4310
        %v5911 = vunpack.c.l.s8.bf16 %v4311
        %v5912 = vunpack.c.l.s8.bf16 %v4312
        %v5913 = vunpack.c.l.s8.bf16 %v4313
        %v5914 = vunpack.c.l.s8.bf16 %v4314
        %v5915 = vunpack.c.l.s8.bf16 %v4315
        %v5916 = vunpack.c.l.s8.bf16 %v4316
        %v5917 = vunpack.c.l.s8.bf16 %v4317
        %v5918 = vunpack.c.l.s8.bf16 %v4318
        %v5919 = vunpack.c.l.s8.bf16 %v4319
        %v5920 = vunpack.c.l.s8.bf16 %v4320
        %v5921 = vunpack.c.l.s8.bf16 %v4321
        %v5922 = vunpack.c.l.s8.bf16 %v4322
        %v5923 = vunpack.c.l.s8.bf16 %v4323
        %v5924 = vunpack.c.l.s8.bf16 %v4324
        %v5925 = vunpack.c.l.s8.bf16 %v4325
        %v5926 = vunpack.c.l.s8.bf16 %v4326
        %v5927 = vunpack.c.l.s8.bf16 %v4327
        %v5928 = vunpack.c.l.s8.bf16 %v4328
        %v5929 = vunpack.c.l.s8.bf16 %v4329
        %v5930 = vunpack.c.l.s8.bf16 %v4330
        %v5931 = vunpack.c.l.s8.bf16 %v4331
        %v5932 = vunpack.c.l.s8.bf16 %v4332
        %v5933 = vunpack.c.l.s8.bf16 %v4333
        %v5934 = vunpack.c.l.s8.bf16 %v4334
        %v5935 = vunpack.c.l.s8.bf16 %v4335
        %v5936 = vunpack.c.l.s8.bf16 %v4336
        %v5937 = vunpack.c.l.s8.bf16 %v4337
        %v5938 = vunpack.c.l.s8.bf16 %v4338
        %v5939 = vunpack.c.l.s8.bf16 %v4339
        %v5940 = vunpack.c.h.s8.bf16 %v4308
        %v5941 = vunpack.c.h.s8.bf16 %v4309
        %v5942 = vunpack.c.h.s8.bf16 %v4310
        %v5943 = vunpack.c.h.s8.bf16 %v4311
        %v5944 = vunpack.c.h.s8.bf16 %v4312
        %v5945 = vunpack.c.h.s8.bf16 %v4313
        %v5946 = vunpack.c.h.s8.bf16 %v4314
        %v5947 = vunpack.c.h.s8.bf16 %v4315
        %v5948 = vunpack.c.h.s8.bf16 %v4316
        %v5949 = vunpack.c.h.s8.bf16 %v4317
        %v5950 = vunpack.c.h.s8.bf16 %v4318
        %v5951 = vunpack.c.h.s8.bf16 %v4319
        %v5952 = vunpack.c.h.s8.bf16 %v4320
        %v5953 = vunpack.c.h.s8.bf16 %v4321
        %v5954 = vunpack.c.h.s8.bf16 %v4322
        %v5955 = vunpack.c.h.s8.bf16 %v4323
        %v5956 = vunpack.c.h.s8.bf16 %v4324
        %v5957 = vunpack.c.h.s8.bf16 %v4325
        %v5958 = vunpack.c.h.s8.bf16 %v4326
        %v5959 = vunpack.c.h.s8.bf16 %v4327
        %v5960 = vunpack.c.h.s8.bf16 %v4328
        %v5961 = vunpack.c.h.s8.bf16 %v4329
        %v5962 = vunpack.c.h.s8.bf16 %v4330
        %v5963 = vunpack.c.h.s8.bf16 %v4331
        %v5964 = vunpack.c.h.s8.bf16 %v4332
        %v5965 = vunpack.c.h.s8.bf16 %v4333
        %v5966 = vunpack.c.h.s8.bf16 %v4334
        %v5967 = vunpack.c.h.s8.bf16 %v4335
        %v5968 = vunpack.c.h.s8.bf16 %v4336
        %v5969 = vunpack.c.h.s8.bf16 %v4337
        %v5970 = vunpack.c.h.s8.bf16 %v4338
        %v5971 = vunpack.c.h.s8.bf16 %v4339
        %v5972 = vunpack.c.l.s8.bf16 %v4340
        %v5973 = vunpack.c.l.s8.bf16 %v4341
        %v5974 = vunpack.c.l.s8.bf16 %v4342
        %v5975 = vunpack.c.l.s8.bf16 %v4343
        %v5976 = vunpack.c.l.s8.bf16 %v4344
        %v5977 = vunpack.c.l.s8.bf16 %v4345
        %v5978 = vunpack.c.l.s8.bf16 %v4346
        %v5979 = vunpack.c.l.s8.bf16 %v4347
        %v5980 = vunpack.c.l.s8.bf16 %v4348
        %v5981 = vunpack.c.l.s8.bf16 %v4349
        %v5982 = vunpack.c.l.s8.bf16 %v4350
        %v5983 = vunpack.c.l.s8.bf16 %v4351
        %v5984 = vunpack.c.l.s8.bf16 %v4352
        %v5985 = vunpack.c.l.s8.bf16 %v4353
        %v5986 = vunpack.c.l.s8.bf16 %v4354
        %v5987 = vunpack.c.l.s8.bf16 %v4355
        %v5988 = vunpack.c.l.s8.bf16 %v4356
        %v5989 = vunpack.c.l.s8.bf16 %v4357
        %v5990 = vunpack.c.l.s8.bf16 %v4358
        %v5991 = vunpack.c.l.s8.bf16 %v4359
        %v5992 = vunpack.c.l.s8.bf16 %v4360
        %v5993 = vunpack.c.l.s8.bf16 %v4361
        %v5994 = vunpack.c.l.s8.bf16 %v4362
        %v5995 = vunpack.c.l.s8.bf16 %v4363
        %v5996 = vunpack.c.l.s8.bf16 %v4364
        %v5997 = vunpack.c.l.s8.bf16 %v4365
        %v5998 = vunpack.c.l.s8.bf16 %v4366
        %v5999 = vunpack.c.l.s8.bf16 %v4367
        %v6000 = vunpack.c.l.s8.bf16 %v4368
        %v6001 = vunpack.c.l.s8.bf16 %v4369
        %v6002 = vunpack.c.l.s8.bf16 %v4370
        %v6003 = vunpack.c.l.s8.bf16 %v4371
        %v6004 = vunpack.c.h.s8.bf16 %v4340
        %v6005 = vunpack.c.h.s8.bf16 %v4341
        %v6006 = vunpack.c.h.s8.bf16 %v4342
        %v6007 = vunpack.c.h.s8.bf16 %v4343
        %v6008 = vunpack.c.h.s8.bf16 %v4344
        %v6009 = vunpack.c.h.s8.bf16 %v4345
        %v6010 = vunpack.c.h.s8.bf16 %v4346
        %v6011 = vunpack.c.h.s8.bf16 %v4347
        %v6012 = vunpack.c.h.s8.bf16 %v4348
        %v6013 = vunpack.c.h.s8.bf16 %v4349
        %v6014 = vunpack.c.h.s8.bf16 %v4350
        %v6015 = vunpack.c.h.s8.bf16 %v4351
        %v6016 = vunpack.c.h.s8.bf16 %v4352
        %v6017 = vunpack.c.h.s8.bf16 %v4353
        %v6018 = vunpack.c.h.s8.bf16 %v4354
        %v6019 = vunpack.c.h.s8.bf16 %v4355
        %v6020 = vunpack.c.h.s8.bf16 %v4356
        %v6021 = vunpack.c.h.s8.bf16 %v4357
        %v6022 = vunpack.c.h.s8.bf16 %v4358
        %v6023 = vunpack.c.h.s8.bf16 %v4359
        %v6024 = vunpack.c.h.s8.bf16 %v4360
        %v6025 = vunpack.c.h.s8.bf16 %v4361
        %v6026 = vunpack.c.h.s8.bf16 %v4362
        %v6027 = vunpack.c.h.s8.bf16 %v4363
        %v6028 = vunpack.c.h.s8.bf16 %v4364
        %v6029 = vunpack.c.h.s8.bf16 %v4365
        %v6030 = vunpack.c.h.s8.bf16 %v4366
        %v6031 = vunpack.c.h.s8.bf16 %v4367
        %v6032 = vunpack.c.h.s8.bf16 %v4368
        %v6033 = vunpack.c.h.s8.bf16 %v4369
        %v6034 = vunpack.c.h.s8.bf16 %v4370
        %v6035 = vunpack.c.h.s8.bf16 %v4371
        %v6036 = vunpack.c.l.s8.bf16 %v4372
        %v6037 = vunpack.c.l.s8.bf16 %v4373
        %v6038 = vunpack.c.l.s8.bf16 %v4374
        %v6039 = vunpack.c.l.s8.bf16 %v4375
        %v6040 = vunpack.c.l.s8.bf16 %v4376
        %v6041 = vunpack.c.l.s8.bf16 %v4377
        %v6042 = vunpack.c.l.s8.bf16 %v4378
        %v6043 = vunpack.c.l.s8.bf16 %v4379
        %v6044 = vunpack.c.l.s8.bf16 %v4380
        %v6045 = vunpack.c.l.s8.bf16 %v4381
        %v6046 = vunpack.c.l.s8.bf16 %v4382
        %v6047 = vunpack.c.l.s8.bf16 %v4383
        %v6048 = vunpack.c.l.s8.bf16 %v4384
        %v6049 = vunpack.c.l.s8.bf16 %v4385
        %v6050 = vunpack.c.l.s8.bf16 %v4386
        %v6051 = vunpack.c.l.s8.bf16 %v4387
        %v6052 = vunpack.c.l.s8.bf16 %v4388
        %v6053 = vunpack.c.l.s8.bf16 %v4389
        %v6054 = vunpack.c.l.s8.bf16 %v4390
        %v6055 = vunpack.c.l.s8.bf16 %v4391
        %v6056 = vunpack.c.l.s8.bf16 %v4392
        %v6057 = vunpack.c.l.s8.bf16 %v4393
        %v6058 = vunpack.c.l.s8.bf16 %v4394
        %v6059 = vunpack.c.l.s8.bf16 %v4395
        %v6060 = vunpack.c.l.s8.bf16 %v4396
        %v6061 = vunpack.c.l.s8.bf16 %v4397
        %v6062 = vunpack.c.l.s8.bf16 %v4398
        %v6063 = vunpack.c.l.s8.bf16 %v4399
        %v6064 = vunpack.c.l.s8.bf16 %v4400
        %v6065 = vunpack.c.l.s8.bf16 %v4401
        %v6066 = vunpack.c.l.s8.bf16 %v4402
        %v6067 = vunpack.c.l.s8.bf16 %v4403
        %v6068 = vunpack.c.h.s8.bf16 %v4372
        %v6069 = vunpack.c.h.s8.bf16 %v4373
        %v6070 = vunpack.c.h.s8.bf16 %v4374
        %v6071 = vunpack.c.h.s8.bf16 %v4375
        %v6072 = vunpack.c.h.s8.bf16 %v4376
        %v6073 = vunpack.c.h.s8.bf16 %v4377
        %v6074 = vunpack.c.h.s8.bf16 %v4378
        %v6075 = vunpack.c.h.s8.bf16 %v4379
        %v6076 = vunpack.c.h.s8.bf16 %v4380
        %v6077 = vunpack.c.h.s8.bf16 %v4381
        %v6078 = vunpack.c.h.s8.bf16 %v4382
        %v6079 = vunpack.c.h.s8.bf16 %v4383
        %v6080 = vunpack.c.h.s8.bf16 %v4384
        %v6081 = vunpack.c.h.s8.bf16 %v4385
        %v6082 = vunpack.c.h.s8.bf16 %v4386
        %v6083 = vunpack.c.h.s8.bf16 %v4387
        %v6084 = vunpack.c.h.s8.bf16 %v4388
        %v6085 = vunpack.c.h.s8.bf16 %v4389
        %v6086 = vunpack.c.h.s8.bf16 %v4390
        %v6087 = vunpack.c.h.s8.bf16 %v4391
        %v6088 = vunpack.c.h.s8.bf16 %v4392
        %v6089 = vunpack.c.h.s8.bf16 %v4393
        %v6090 = vunpack.c.h.s8.bf16 %v4394
        %v6091 = vunpack.c.h.s8.bf16 %v4395
        %v6092 = vunpack.c.h.s8.bf16 %v4396
        %v6093 = vunpack.c.h.s8.bf16 %v4397
        %v6094 = vunpack.c.h.s8.bf16 %v4398
        %v6095 = vunpack.c.h.s8.bf16 %v4399
        %v6096 = vunpack.c.h.s8.bf16 %v4400
        %v6097 = vunpack.c.h.s8.bf16 %v4401
        %v6098 = vunpack.c.h.s8.bf16 %v4402
        %v6099 = vunpack.c.h.s8.bf16 %v4403
        %v6100 = vunpack.c.l.s8.bf16 %v4404
        %v6101 = vunpack.c.l.s8.bf16 %v4405
        %v6102 = vunpack.c.l.s8.bf16 %v4406
        %v6103 = vunpack.c.l.s8.bf16 %v4407
        %v6104 = vunpack.c.l.s8.bf16 %v4408
        %v6105 = vunpack.c.l.s8.bf16 %v4409
        %v6106 = vunpack.c.l.s8.bf16 %v4410
        %v6107 = vunpack.c.l.s8.bf16 %v4411
        %v6108 = vunpack.c.l.s8.bf16 %v4412
        %v6109 = vunpack.c.l.s8.bf16 %v4413
        %v6110 = vunpack.c.l.s8.bf16 %v4414
        %v6111 = vunpack.c.l.s8.bf16 %v4415
        %v6112 = vunpack.c.l.s8.bf16 %v4416
        %v6113 = vunpack.c.l.s8.bf16 %v4417
        %v6114 = vunpack.c.l.s8.bf16 %v4418
        %v6115 = vunpack.c.l.s8.bf16 %v4419
        %v6116 = vunpack.c.l.s8.bf16 %v4420
        %v6117 = vunpack.c.l.s8.bf16 %v4421
        %v6118 = vunpack.c.l.s8.bf16 %v4422
        %v6119 = vunpack.c.l.s8.bf16 %v4423
        %v6120 = vunpack.c.l.s8.bf16 %v4424
        %v6121 = vunpack.c.l.s8.bf16 %v4425
        %v6122 = vunpack.c.l.s8.bf16 %v4426
        %v6123 = vunpack.c.l.s8.bf16 %v4427
        %v6124 = vunpack.c.l.s8.bf16 %v4428
        %v6125 = vunpack.c.l.s8.bf16 %v4429
        %v6126 = vunpack.c.l.s8.bf16 %v4430
        %v6127 = vunpack.c.l.s8.bf16 %v4431
        %v6128 = vunpack.c.l.s8.bf16 %v4432
        %v6129 = vunpack.c.l.s8.bf16 %v4433
        %v6130 = vunpack.c.l.s8.bf16 %v4434
        %v6131 = vunpack.c.l.s8.bf16 %v4435
        %v6132 = vunpack.c.h.s8.bf16 %v4404
        %v6133 = vunpack.c.h.s8.bf16 %v4405
        %v6134 = vunpack.c.h.s8.bf16 %v4406
        %v6135 = vunpack.c.h.s8.bf16 %v4407
        %v6136 = vunpack.c.h.s8.bf16 %v4408
        %v6137 = vunpack.c.h.s8.bf16 %v4409
        %v6138 = vunpack.c.h.s8.bf16 %v4410
        %v6139 = vunpack.c.h.s8.bf16 %v4411
        %v6140 = vunpack.c.h.s8.bf16 %v4412
        %v6141 = vunpack.c.h.s8.bf16 %v4413
        %v6142 = vunpack.c.h.s8.bf16 %v4414
        %v6143 = vunpack.c.h.s8.bf16 %v4415
        %v6144 = vunpack.c.h.s8.bf16 %v4416
        %v6145 = vunpack.c.h.s8.bf16 %v4417
        %v6146 = vunpack.c.h.s8.bf16 %v4418
        %v6147 = vunpack.c.h.s8.bf16 %v4419
        %v6148 = vunpack.c.h.s8.bf16 %v4420
        %v6149 = vunpack.c.h.s8.bf16 %v4421
        %v6150 = vunpack.c.h.s8.bf16 %v4422
        %v6151 = vunpack.c.h.s8.bf16 %v4423
        %v6152 = vunpack.c.h.s8.bf16 %v4424
        %v6153 = vunpack.c.h.s8.bf16 %v4425
        %v6154 = vunpack.c.h.s8.bf16 %v4426
        %v6155 = vunpack.c.h.s8.bf16 %v4427
        %v6156 = vunpack.c.h.s8.bf16 %v4428
        %v6157 = vunpack.c.h.s8.bf16 %v4429
        %v6158 = vunpack.c.h.s8.bf16 %v4430
        %v6159 = vunpack.c.h.s8.bf16 %v4431
        %v6160 = vunpack.c.h.s8.bf16 %v4432
        %v6161 = vunpack.c.h.s8.bf16 %v4433
        %v6162 = vunpack.c.h.s8.bf16 %v4434
        %v6163 = vunpack.c.h.s8.bf16 %v4435
        %v6164 = vunpack.c.l.s8.bf16 %v4436
        %v6165 = vunpack.c.l.s8.bf16 %v4437
        %v6166 = vunpack.c.l.s8.bf16 %v4438
        %v6167 = vunpack.c.l.s8.bf16 %v4439
        %v6168 = vunpack.c.l.s8.bf16 %v4440
        %v6169 = vunpack.c.l.s8.bf16 %v4441
        %v6170 = vunpack.c.l.s8.bf16 %v4442
        %v6171 = vunpack.c.l.s8.bf16 %v4443
        %v6172 = vunpack.c.l.s8.bf16 %v4444
        %v6173 = vunpack.c.l.s8.bf16 %v4445
        %v6174 = vunpack.c.l.s8.bf16 %v4446
        %v6175 = vunpack.c.l.s8.bf16 %v4447
        %v6176 = vunpack.c.l.s8.bf16 %v4448
        %v6177 = vunpack.c.l.s8.bf16 %v4449
        %v6178 = vunpack.c.l.s8.bf16 %v4450
        %v6179 = vunpack.c.l.s8.bf16 %v4451
        %v6180 = vunpack.c.l.s8.bf16 %v4452
        %v6181 = vunpack.c.l.s8.bf16 %v4453
        %v6182 = vunpack.c.l.s8.bf16 %v4454
        %v6183 = vunpack.c.l.s8.bf16 %v4455
        %v6184 = vunpack.c.l.s8.bf16 %v4456
        %v6185 = vunpack.c.l.s8.bf16 %v4457
        %v6186 = vunpack.c.l.s8.bf16 %v4458
        %v6187 = vunpack.c.l.s8.bf16 %v4459
        %v6188 = vunpack.c.l.s8.bf16 %v4460
        %v6189 = vunpack.c.l.s8.bf16 %v4461
        %v6190 = vunpack.c.l.s8.bf16 %v4462
        %v6191 = vunpack.c.l.s8.bf16 %v4463
        %v6192 = vunpack.c.l.s8.bf16 %v4464
        %v6193 = vunpack.c.l.s8.bf16 %v4465
        %v6194 = vunpack.c.l.s8.bf16 %v4466
        %v6195 = vunpack.c.l.s8.bf16 %v4467
        %v6196 = vunpack.c.h.s8.bf16 %v4436
        %v6197 = vunpack.c.h.s8.bf16 %v4437
        %v6198 = vunpack.c.h.s8.bf16 %v4438
        %v6199 = vunpack.c.h.s8.bf16 %v4439
        %v6200 = vunpack.c.h.s8.bf16 %v4440
        %v6201 = vunpack.c.h.s8.bf16 %v4441
        %v6202 = vunpack.c.h.s8.bf16 %v4442
        %v6203 = vunpack.c.h.s8.bf16 %v4443
        %v6204 = vunpack.c.h.s8.bf16 %v4444
        %v6205 = vunpack.c.h.s8.bf16 %v4445
        %v6206 = vunpack.c.h.s8.bf16 %v4446
        %v6207 = vunpack.c.h.s8.bf16 %v4447
        %v6208 = vunpack.c.h.s8.bf16 %v4448
        %v6209 = vunpack.c.h.s8.bf16 %v4449
        %v6210 = vunpack.c.h.s8.bf16 %v4450
        %v6211 = vunpack.c.h.s8.bf16 %v4451
        %v6212 = vunpack.c.h.s8.bf16 %v4452
        %v6213 = vunpack.c.h.s8.bf16 %v4453
        %v6214 = vunpack.c.h.s8.bf16 %v4454
        %v6215 = vunpack.c.h.s8.bf16 %v4455
        %v6216 = vunpack.c.h.s8.bf16 %v4456
        %v6217 = vunpack.c.h.s8.bf16 %v4457
        %v6218 = vunpack.c.h.s8.bf16 %v4458
        %v6219 = vunpack.c.h.s8.bf16 %v4459
        %v6220 = vunpack.c.h.s8.bf16 %v4460
        %v6221 = vunpack.c.h.s8.bf16 %v4461
        %v6222 = vunpack.c.h.s8.bf16 %v4462
        %v6223 = vunpack.c.h.s8.bf16 %v4463
        %v6224 = vunpack.c.h.s8.bf16 %v4464
        %v6225 = vunpack.c.h.s8.bf16 %v4465
        %v6226 = vunpack.c.h.s8.bf16 %v4466
        %v6227 = vunpack.c.h.s8.bf16 %v4467
        %v6228 = vunpack.c.l.s8.bf16 %v4468
        %v6229 = vunpack.c.l.s8.bf16 %v4469
        %v6230 = vunpack.c.l.s8.bf16 %v4470
        %v6231 = vunpack.c.l.s8.bf16 %v4471
        %v6232 = vunpack.c.l.s8.bf16 %v4472
        %v6233 = vunpack.c.l.s8.bf16 %v4473
        %v6234 = vunpack.c.l.s8.bf16 %v4474
        %v6235 = vunpack.c.l.s8.bf16 %v4475
        %v6236 = vunpack.c.l.s8.bf16 %v4476
        %v6237 = vunpack.c.l.s8.bf16 %v4477
        %v6238 = vunpack.c.l.s8.bf16 %v4478
        %v6239 = vunpack.c.l.s8.bf16 %v4479
        %v6240 = vunpack.c.l.s8.bf16 %v4480
        %v6241 = vunpack.c.l.s8.bf16 %v4481
        %v6242 = vunpack.c.l.s8.bf16 %v4482
        %v6243 = vunpack.c.l.s8.bf16 %v4483
        %v6244 = vunpack.c.l.s8.bf16 %v4484
        %v6245 = vunpack.c.l.s8.bf16 %v4485
        %v6246 = vunpack.c.l.s8.bf16 %v4486
        %v6247 = vunpack.c.l.s8.bf16 %v4487
        %v6248 = vunpack.c.l.s8.bf16 %v4488
        %v6249 = vunpack.c.l.s8.bf16 %v4489
        %v6250 = vunpack.c.l.s8.bf16 %v4490
        %v6251 = vunpack.c.l.s8.bf16 %v4491
        %v6252 = vunpack.c.l.s8.bf16 %v4492
        %v6253 = vunpack.c.l.s8.bf16 %v4493
        %v6254 = vunpack.c.l.s8.bf16 %v4494
        %v6255 = vunpack.c.l.s8.bf16 %v4495
        %v6256 = vunpack.c.l.s8.bf16 %v4496
        %v6257 = vunpack.c.l.s8.bf16 %v4497
        %v6258 = vunpack.c.l.s8.bf16 %v4498
        %v6259 = vunpack.c.l.s8.bf16 %v4499
        %v6260 = vunpack.c.h.s8.bf16 %v4468
        %v6261 = vunpack.c.h.s8.bf16 %v4469
        %v6262 = vunpack.c.h.s8.bf16 %v4470
        %v6263 = vunpack.c.h.s8.bf16 %v4471
        %v6264 = vunpack.c.h.s8.bf16 %v4472
        %v6265 = vunpack.c.h.s8.bf16 %v4473
        %v6266 = vunpack.c.h.s8.bf16 %v4474
        %v6267 = vunpack.c.h.s8.bf16 %v4475
        %v6268 = vunpack.c.h.s8.bf16 %v4476
        %v6269 = vunpack.c.h.s8.bf16 %v4477
        %v6270 = vunpack.c.h.s8.bf16 %v4478
        %v6271 = vunpack.c.h.s8.bf16 %v4479
        %v6272 = vunpack.c.h.s8.bf16 %v4480
        %v6273 = vunpack.c.h.s8.bf16 %v4481
        %v6274 = vunpack.c.h.s8.bf16 %v4482
        %v6275 = vunpack.c.h.s8.bf16 %v4483
        %v6276 = vunpack.c.h.s8.bf16 %v4484
        %v6277 = vunpack.c.h.s8.bf16 %v4485
        %v6278 = vunpack.c.h.s8.bf16 %v4486
        %v6279 = vunpack.c.h.s8.bf16 %v4487
        %v6280 = vunpack.c.h.s8.bf16 %v4488
        %v6281 = vunpack.c.h.s8.bf16 %v4489
        %v6282 = vunpack.c.h.s8.bf16 %v4490
        %v6283 = vunpack.c.h.s8.bf16 %v4491
        %v6284 = vunpack.c.h.s8.bf16 %v4492
        %v6285 = vunpack.c.h.s8.bf16 %v4493
        %v6286 = vunpack.c.h.s8.bf16 %v4494
        %v6287 = vunpack.c.h.s8.bf16 %v4495
        %v6288 = vunpack.c.h.s8.bf16 %v4496
        %v6289 = vunpack.c.h.s8.bf16 %v4497
        %v6290 = vunpack.c.h.s8.bf16 %v4498
        %v6291 = vunpack.c.h.s8.bf16 %v4499
        %v6292 = vunpack.c.l.s8.bf16 %v4500
        %v6293 = vunpack.c.l.s8.bf16 %v4501
        %v6294 = vunpack.c.l.s8.bf16 %v4502
        %v6295 = vunpack.c.l.s8.bf16 %v4503
        %v6296 = vunpack.c.l.s8.bf16 %v4504
        %v6297 = vunpack.c.l.s8.bf16 %v4505
        %v6298 = vunpack.c.l.s8.bf16 %v4506
        %v6299 = vunpack.c.l.s8.bf16 %v4507
        %v6300 = vunpack.c.l.s8.bf16 %v4508
        %v6301 = vunpack.c.l.s8.bf16 %v4509
        %v6302 = vunpack.c.l.s8.bf16 %v4510
        %v6303 = vunpack.c.l.s8.bf16 %v4511
        %v6304 = vunpack.c.l.s8.bf16 %v4512
        %v6305 = vunpack.c.l.s8.bf16 %v4513
        %v6306 = vunpack.c.l.s8.bf16 %v4514
        %v6307 = vunpack.c.l.s8.bf16 %v4515
        %v6308 = vunpack.c.l.s8.bf16 %v4516
        %v6309 = vunpack.c.l.s8.bf16 %v4517
        %v6310 = vunpack.c.l.s8.bf16 %v4518
        %v6311 = vunpack.c.l.s8.bf16 %v4519
        %v6312 = vunpack.c.l.s8.bf16 %v4520
        %v6313 = vunpack.c.l.s8.bf16 %v4521
        %v6314 = vunpack.c.l.s8.bf16 %v4522
        %v6315 = vunpack.c.l.s8.bf16 %v4523
        %v6316 = vunpack.c.l.s8.bf16 %v4524
        %v6317 = vunpack.c.l.s8.bf16 %v4525
        %v6318 = vunpack.c.l.s8.bf16 %v4526
        %v6319 = vunpack.c.l.s8.bf16 %v4527
        %v6320 = vunpack.c.l.s8.bf16 %v4528
        %v6321 = vunpack.c.l.s8.bf16 %v4529
        %v6322 = vunpack.c.l.s8.bf16 %v4530
        %v6323 = vunpack.c.l.s8.bf16 %v4531
        %v6324 = vunpack.c.h.s8.bf16 %v4500
        %v6325 = vunpack.c.h.s8.bf16 %v4501
        %v6326 = vunpack.c.h.s8.bf16 %v4502
        %v6327 = vunpack.c.h.s8.bf16 %v4503
        %v6328 = vunpack.c.h.s8.bf16 %v4504
        %v6329 = vunpack.c.h.s8.bf16 %v4505
        %v6330 = vunpack.c.h.s8.bf16 %v4506
        %v6331 = vunpack.c.h.s8.bf16 %v4507
        %v6332 = vunpack.c.h.s8.bf16 %v4508
        %v6333 = vunpack.c.h.s8.bf16 %v4509
        %v6334 = vunpack.c.h.s8.bf16 %v4510
        %v6335 = vunpack.c.h.s8.bf16 %v4511
        %v6336 = vunpack.c.h.s8.bf16 %v4512
        %v6337 = vunpack.c.h.s8.bf16 %v4513
        %v6338 = vunpack.c.h.s8.bf16 %v4514
        %v6339 = vunpack.c.h.s8.bf16 %v4515
        %v6340 = vunpack.c.h.s8.bf16 %v4516
        %v6341 = vunpack.c.h.s8.bf16 %v4517
        %v6342 = vunpack.c.h.s8.bf16 %v4518
        %v6343 = vunpack.c.h.s8.bf16 %v4519
        %v6344 = vunpack.c.h.s8.bf16 %v4520
        %v6345 = vunpack.c.h.s8.bf16 %v4521
        %v6346 = vunpack.c.h.s8.bf16 %v4522
        %v6347 = vunpack.c.h.s8.bf16 %v4523
        %v6348 = vunpack.c.h.s8.bf16 %v4524
        %v6349 = vunpack.c.h.s8.bf16 %v4525
        %v6350 = vunpack.c.h.s8.bf16 %v4526
        %v6351 = vunpack.c.h.s8.bf16 %v4527
        %v6352 = vunpack.c.h.s8.bf16 %v4528
        %v6353 = vunpack.c.h.s8.bf16 %v4529
        %v6354 = vunpack.c.h.s8.bf16 %v4530
        %v6355 = vunpack.c.h.s8.bf16 %v4531
        %v6356 = vunpack.c.l.s8.bf16 %v4532
        %v6357 = vunpack.c.l.s8.bf16 %v4533
        %v6358 = vunpack.c.l.s8.bf16 %v4534
        %v6359 = vunpack.c.l.s8.bf16 %v4535
        %v6360 = vunpack.c.l.s8.bf16 %v4536
        %v6361 = vunpack.c.l.s8.bf16 %v4537
        %v6362 = vunpack.c.l.s8.bf16 %v4538
        %v6363 = vunpack.c.l.s8.bf16 %v4539
        %v6364 = vunpack.c.l.s8.bf16 %v4540
        %v6365 = vunpack.c.l.s8.bf16 %v4541
        %v6366 = vunpack.c.l.s8.bf16 %v4542
        %v6367 = vunpack.c.l.s8.bf16 %v4543
        %v6368 = vunpack.c.l.s8.bf16 %v4544
        %v6369 = vunpack.c.l.s8.bf16 %v4545
        %v6370 = vunpack.c.l.s8.bf16 %v4546
        %v6371 = vunpack.c.l.s8.bf16 %v4547
        %v6372 = vunpack.c.l.s8.bf16 %v4548
        %v6373 = vunpack.c.l.s8.bf16 %v4549
        %v6374 = vunpack.c.l.s8.bf16 %v4550
        %v6375 = vunpack.c.l.s8.bf16 %v4551
        %v6376 = vunpack.c.l.s8.bf16 %v4552
        %v6377 = vunpack.c.l.s8.bf16 %v4553
        %v6378 = vunpack.c.l.s8.bf16 %v4554
        %v6379 = vunpack.c.l.s8.bf16 %v4555
        %v6380 = vunpack.c.l.s8.bf16 %v4556
        %v6381 = vunpack.c.l.s8.bf16 %v4557
        %v6382 = vunpack.c.l.s8.bf16 %v4558
        %v6383 = vunpack.c.l.s8.bf16 %v4559
        %v6384 = vunpack.c.l.s8.bf16 %v4560
        %v6385 = vunpack.c.l.s8.bf16 %v4561
        %v6386 = vunpack.c.l.s8.bf16 %v4562
        %v6387 = vunpack.c.l.s8.bf16 %v4563
        %v6388 = vunpack.c.h.s8.bf16 %v4532
        %v6389 = vunpack.c.h.s8.bf16 %v4533
        %v6390 = vunpack.c.h.s8.bf16 %v4534
        %v6391 = vunpack.c.h.s8.bf16 %v4535
        %v6392 = vunpack.c.h.s8.bf16 %v4536
        %v6393 = vunpack.c.h.s8.bf16 %v4537
        %v6394 = vunpack.c.h.s8.bf16 %v4538
        %v6395 = vunpack.c.h.s8.bf16 %v4539
        %v6396 = vunpack.c.h.s8.bf16 %v4540
        %v6397 = vunpack.c.h.s8.bf16 %v4541
        %v6398 = vunpack.c.h.s8.bf16 %v4542
        %v6399 = vunpack.c.h.s8.bf16 %v4543
        %v6400 = vunpack.c.h.s8.bf16 %v4544
        %v6401 = vunpack.c.h.s8.bf16 %v4545
        %v6402 = vunpack.c.h.s8.bf16 %v4546
        %v6403 = vunpack.c.h.s8.bf16 %v4547
        %v6404 = vunpack.c.h.s8.bf16 %v4548
        %v6405 = vunpack.c.h.s8.bf16 %v4549
        %v6406 = vunpack.c.h.s8.bf16 %v4550
        %v6407 = vunpack.c.h.s8.bf16 %v4551
        %v6408 = vunpack.c.h.s8.bf16 %v4552
        %v6409 = vunpack.c.h.s8.bf16 %v4553
        %v6410 = vunpack.c.h.s8.bf16 %v4554
        %v6411 = vunpack.c.h.s8.bf16 %v4555
        %v6412 = vunpack.c.h.s8.bf16 %v4556
        %v6413 = vunpack.c.h.s8.bf16 %v4557
        %v6414 = vunpack.c.h.s8.bf16 %v4558
        %v6415 = vunpack.c.h.s8.bf16 %v4559
        %v6416 = vunpack.c.h.s8.bf16 %v4560
        %v6417 = vunpack.c.h.s8.bf16 %v4561
        %v6418 = vunpack.c.h.s8.bf16 %v4562
        %v6419 = vunpack.c.h.s8.bf16 %v4563
        %v6420 = vunpack.c.l.s8.bf16 %v4564
        %v6421 = vunpack.c.l.s8.bf16 %v4565
        %v6422 = vunpack.c.l.s8.bf16 %v4566
        %v6423 = vunpack.c.l.s8.bf16 %v4567
        %v6424 = vunpack.c.l.s8.bf16 %v4568
        %v6425 = vunpack.c.l.s8.bf16 %v4569
        %v6426 = vunpack.c.l.s8.bf16 %v4570
        %v6427 = vunpack.c.l.s8.bf16 %v4571
        %v6428 = vunpack.c.l.s8.bf16 %v4572
        %v6429 = vunpack.c.l.s8.bf16 %v4573
        %v6430 = vunpack.c.l.s8.bf16 %v4574
        %v6431 = vunpack.c.l.s8.bf16 %v4575
        %v6432 = vunpack.c.l.s8.bf16 %v4576
        %v6433 = vunpack.c.l.s8.bf16 %v4577
        %v6434 = vunpack.c.l.s8.bf16 %v4578
        %v6435 = vunpack.c.l.s8.bf16 %v4579
        %v6436 = vunpack.c.l.s8.bf16 %v4580
        %v6437 = vunpack.c.l.s8.bf16 %v4581
        %v6438 = vunpack.c.l.s8.bf16 %v4582
        %v6439 = vunpack.c.l.s8.bf16 %v4583
        %v6440 = vunpack.c.l.s8.bf16 %v4584
        %v6441 = vunpack.c.l.s8.bf16 %v4585
        %v6442 = vunpack.c.l.s8.bf16 %v4586
        %v6443 = vunpack.c.l.s8.bf16 %v4587
        %v6444 = vunpack.c.l.s8.bf16 %v4588
        %v6445 = vunpack.c.l.s8.bf16 %v4589
        %v6446 = vunpack.c.l.s8.bf16 %v4590
        %v6447 = vunpack.c.l.s8.bf16 %v4591
        %v6448 = vunpack.c.l.s8.bf16 %v4592
        %v6449 = vunpack.c.l.s8.bf16 %v4593
        %v6450 = vunpack.c.l.s8.bf16 %v4594
        %v6451 = vunpack.c.l.s8.bf16 %v4595
        %v6452 = vunpack.c.h.s8.bf16 %v4564
        %v6453 = vunpack.c.h.s8.bf16 %v4565
        %v6454 = vunpack.c.h.s8.bf16 %v4566
        %v6455 = vunpack.c.h.s8.bf16 %v4567
        %v6456 = vunpack.c.h.s8.bf16 %v4568
        %v6457 = vunpack.c.h.s8.bf16 %v4569
        %v6458 = vunpack.c.h.s8.bf16 %v4570
        %v6459 = vunpack.c.h.s8.bf16 %v4571
        %v6460 = vunpack.c.h.s8.bf16 %v4572
        %v6461 = vunpack.c.h.s8.bf16 %v4573
        %v6462 = vunpack.c.h.s8.bf16 %v4574
        %v6463 = vunpack.c.h.s8.bf16 %v4575
        %v6464 = vunpack.c.h.s8.bf16 %v4576
        %v6465 = vunpack.c.h.s8.bf16 %v4577
        %v6466 = vunpack.c.h.s8.bf16 %v4578
        %v6467 = vunpack.c.h.s8.bf16 %v4579
        %v6468 = vunpack.c.h.s8.bf16 %v4580
        %v6469 = vunpack.c.h.s8.bf16 %v4581
        %v6470 = vunpack.c.h.s8.bf16 %v4582
        %v6471 = vunpack.c.h.s8.bf16 %v4583
        %v6472 = vunpack.c.h.s8.bf16 %v4584
        %v6473 = vunpack.c.h.s8.bf16 %v4585
        %v6474 = vunpack.c.h.s8.bf16 %v4586
        %v6475 = vunpack.c.h.s8.bf16 %v4587
        %v6476 = vunpack.c.h.s8.bf16 %v4588
        %v6477 = vunpack.c.h.s8.bf16 %v4589
        %v6478 = vunpack.c.h.s8.bf16 %v4590
        %v6479 = vunpack.c.h.s8.bf16 %v4591
        %v6480 = vunpack.c.h.s8.bf16 %v4592
        %v6481 = vunpack.c.h.s8.bf16 %v4593
        %v6482 = vunpack.c.h.s8.bf16 %v4594
        %v6483 = vunpack.c.h.s8.bf16 %v4595
        %v6484 = vunpack.c.l.s8.bf16 %v4596
        %v6485 = vunpack.c.l.s8.bf16 %v4597
        %v6486 = vunpack.c.l.s8.bf16 %v4598
        %v6487 = vunpack.c.l.s8.bf16 %v4599
        %v6488 = vunpack.c.l.s8.bf16 %v4600
        %v6489 = vunpack.c.l.s8.bf16 %v4601
        %v6490 = vunpack.c.l.s8.bf16 %v4602
        %v6491 = vunpack.c.l.s8.bf16 %v4603
        %v6492 = vunpack.c.l.s8.bf16 %v4604
        %v6493 = vunpack.c.l.s8.bf16 %v4605
        %v6494 = vunpack.c.l.s8.bf16 %v4606
        %v6495 = vunpack.c.l.s8.bf16 %v4607
        %v6496 = vunpack.c.l.s8.bf16 %v4608
        %v6497 = vunpack.c.l.s8.bf16 %v4609
        %v6498 = vunpack.c.l.s8.bf16 %v4610
        %v6499 = vunpack.c.l.s8.bf16 %v4611
        %v6500 = vunpack.c.l.s8.bf16 %v4612
        %v6501 = vunpack.c.l.s8.bf16 %v4613
        %v6502 = vunpack.c.l.s8.bf16 %v4614
        %v6503 = vunpack.c.l.s8.bf16 %v4615
        %v6504 = vunpack.c.l.s8.bf16 %v4616
        %v6505 = vunpack.c.l.s8.bf16 %v4617
        %v6506 = vunpack.c.l.s8.bf16 %v4618
        %v6507 = vunpack.c.l.s8.bf16 %v4619
        %v6508 = vunpack.c.l.s8.bf16 %v4620
        %v6509 = vunpack.c.l.s8.bf16 %v4621
        %v6510 = vunpack.c.l.s8.bf16 %v4622
        %v6511 = vunpack.c.l.s8.bf16 %v4623
        %v6512 = vunpack.c.l.s8.bf16 %v4624
        %v6513 = vunpack.c.l.s8.bf16 %v4625
        %v6514 = vunpack.c.l.s8.bf16 %v4626
        %v6515 = vunpack.c.l.s8.bf16 %v4627
        %v6516 = vunpack.c.h.s8.bf16 %v4596
        %v6517 = vunpack.c.h.s8.bf16 %v4597
        %v6518 = vunpack.c.h.s8.bf16 %v4598
        %v6519 = vunpack.c.h.s8.bf16 %v4599
        %v6520 = vunpack.c.h.s8.bf16 %v4600
        %v6521 = vunpack.c.h.s8.bf16 %v4601
        %v6522 = vunpack.c.h.s8.bf16 %v4602
        %v6523 = vunpack.c.h.s8.bf16 %v4603
        %v6524 = vunpack.c.h.s8.bf16 %v4604
        %v6525 = vunpack.c.h.s8.bf16 %v4605
        %v6526 = vunpack.c.h.s8.bf16 %v4606
        %v6527 = vunpack.c.h.s8.bf16 %v4607
        %v6528 = vunpack.c.h.s8.bf16 %v4608
        %v6529 = vunpack.c.h.s8.bf16 %v4609
        %v6530 = vunpack.c.h.s8.bf16 %v4610
        %v6531 = vunpack.c.h.s8.bf16 %v4611
        %v6532 = vunpack.c.h.s8.bf16 %v4612
        %v6533 = vunpack.c.h.s8.bf16 %v4613
        %v6534 = vunpack.c.h.s8.bf16 %v4614
        %v6535 = vunpack.c.h.s8.bf16 %v4615
        %v6536 = vunpack.c.h.s8.bf16 %v4616
        %v6537 = vunpack.c.h.s8.bf16 %v4617
        %v6538 = vunpack.c.h.s8.bf16 %v4618
        %v6539 = vunpack.c.h.s8.bf16 %v4619
        %v6540 = vunpack.c.h.s8.bf16 %v4620
        %v6541 = vunpack.c.h.s8.bf16 %v4621
        %v6542 = vunpack.c.h.s8.bf16 %v4622
        %v6543 = vunpack.c.h.s8.bf16 %v4623
        %v6544 = vunpack.c.h.s8.bf16 %v4624
        %v6545 = vunpack.c.h.s8.bf16 %v4625
        %v6546 = vunpack.c.h.s8.bf16 %v4626
        %v6547 = vunpack.c.h.s8.bf16 %v4627
        %v6548 = vunpack.c.l.s8.bf16 %v4628
        %v6549 = vunpack.c.l.s8.bf16 %v4629
        %v6550 = vunpack.c.l.s8.bf16 %v4630
        %v6551 = vunpack.c.l.s8.bf16 %v4631
        %v6552 = vunpack.c.l.s8.bf16 %v4632
        %v6553 = vunpack.c.l.s8.bf16 %v4633
        %v6554 = vunpack.c.l.s8.bf16 %v4634
        %v6555 = vunpack.c.l.s8.bf16 %v4635
        %v6556 = vunpack.c.l.s8.bf16 %v4636
        %v6557 = vunpack.c.l.s8.bf16 %v4637
        %v6558 = vunpack.c.l.s8.bf16 %v4638
        %v6559 = vunpack.c.l.s8.bf16 %v4639
        %v6560 = vunpack.c.l.s8.bf16 %v4640
        %v6561 = vunpack.c.l.s8.bf16 %v4641
        %v6562 = vunpack.c.l.s8.bf16 %v4642
        %v6563 = vunpack.c.l.s8.bf16 %v4643
        %v6564 = vunpack.c.l.s8.bf16 %v4644
        %v6565 = vunpack.c.l.s8.bf16 %v4645
        %v6566 = vunpack.c.l.s8.bf16 %v4646
        %v6567 = vunpack.c.l.s8.bf16 %v4647
        %v6568 = vunpack.c.l.s8.bf16 %v4648
        %v6569 = vunpack.c.l.s8.bf16 %v4649
        %v6570 = vunpack.c.l.s8.bf16 %v4650
        %v6571 = vunpack.c.l.s8.bf16 %v4651
        %v6572 = vunpack.c.l.s8.bf16 %v4652
        %v6573 = vunpack.c.l.s8.bf16 %v4653
        %v6574 = vunpack.c.l.s8.bf16 %v4654
        %v6575 = vunpack.c.l.s8.bf16 %v4655
        %v6576 = vunpack.c.l.s8.bf16 %v4656
        %v6577 = vunpack.c.l.s8.bf16 %v4657
        %v6578 = vunpack.c.l.s8.bf16 %v4658
        %v6579 = vunpack.c.l.s8.bf16 %v4659
        %v6580 = vunpack.c.h.s8.bf16 %v4628
        %v6581 = vunpack.c.h.s8.bf16 %v4629
        %v6582 = vunpack.c.h.s8.bf16 %v4630
        %v6583 = vunpack.c.h.s8.bf16 %v4631
        %v6584 = vunpack.c.h.s8.bf16 %v4632
        %v6585 = vunpack.c.h.s8.bf16 %v4633
        %v6586 = vunpack.c.h.s8.bf16 %v4634
        %v6587 = vunpack.c.h.s8.bf16 %v4635
        %v6588 = vunpack.c.h.s8.bf16 %v4636
        %v6589 = vunpack.c.h.s8.bf16 %v4637
        %v6590 = vunpack.c.h.s8.bf16 %v4638
        %v6591 = vunpack.c.h.s8.bf16 %v4639
        %v6592 = vunpack.c.h.s8.bf16 %v4640
        %v6593 = vunpack.c.h.s8.bf16 %v4641
        %v6594 = vunpack.c.h.s8.bf16 %v4642
        %v6595 = vunpack.c.h.s8.bf16 %v4643
        %v6596 = vunpack.c.h.s8.bf16 %v4644
        %v6597 = vunpack.c.h.s8.bf16 %v4645
        %v6598 = vunpack.c.h.s8.bf16 %v4646
        %v6599 = vunpack.c.h.s8.bf16 %v4647
        %v6600 = vunpack.c.h.s8.bf16 %v4648
        %v6601 = vunpack.c.h.s8.bf16 %v4649
        %v6602 = vunpack.c.h.s8.bf16 %v4650
        %v6603 = vunpack.c.h.s8.bf16 %v4651
        %v6604 = vunpack.c.h.s8.bf16 %v4652
        %v6605 = vunpack.c.h.s8.bf16 %v4653
        %v6606 = vunpack.c.h.s8.bf16 %v4654
        %v6607 = vunpack.c.h.s8.bf16 %v4655
        %v6608 = vunpack.c.h.s8.bf16 %v4656
        %v6609 = vunpack.c.h.s8.bf16 %v4657
        %v6610 = vunpack.c.h.s8.bf16 %v4658
        %v6611 = vunpack.c.h.s8.bf16 %v4659
        %v6612 = vunpack.c.l.s8.bf16 %v4660
        %v6613 = vunpack.c.l.s8.bf16 %v4661
        %v6614 = vunpack.c.l.s8.bf16 %v4662
        %v6615 = vunpack.c.l.s8.bf16 %v4663
        %v6616 = vunpack.c.l.s8.bf16 %v4664
        %v6617 = vunpack.c.l.s8.bf16 %v4665
        %v6618 = vunpack.c.l.s8.bf16 %v4666
        %v6619 = vunpack.c.l.s8.bf16 %v4667
        %v6620 = vunpack.c.l.s8.bf16 %v4668
        %v6621 = vunpack.c.l.s8.bf16 %v4669
        %v6622 = vunpack.c.l.s8.bf16 %v4670
        %v6623 = vunpack.c.l.s8.bf16 %v4671
        %v6624 = vunpack.c.l.s8.bf16 %v4672
        %v6625 = vunpack.c.l.s8.bf16 %v4673
        %v6626 = vunpack.c.l.s8.bf16 %v4674
        %v6627 = vunpack.c.l.s8.bf16 %v4675
        %v6628 = vunpack.c.l.s8.bf16 %v4676
        %v6629 = vunpack.c.l.s8.bf16 %v4677
        %v6630 = vunpack.c.l.s8.bf16 %v4678
        %v6631 = vunpack.c.l.s8.bf16 %v4679
        %v6632 = vunpack.c.l.s8.bf16 %v4680
        %v6633 = vunpack.c.l.s8.bf16 %v4681
        %v6634 = vunpack.c.l.s8.bf16 %v4682
        %v6635 = vunpack.c.l.s8.bf16 %v4683
        %v6636 = vunpack.c.l.s8.bf16 %v4684
        %v6637 = vunpack.c.l.s8.bf16 %v4685
        %v6638 = vunpack.c.l.s8.bf16 %v4686
        %v6639 = vunpack.c.l.s8.bf16 %v4687
        %v6640 = vunpack.c.l.s8.bf16 %v4688
        %v6641 = vunpack.c.l.s8.bf16 %v4689
        %v6642 = vunpack.c.l.s8.bf16 %v4690
        %v6643 = vunpack.c.l.s8.bf16 %v4691
        %v6644 = vunpack.c.h.s8.bf16 %v4660
        %v6645 = vunpack.c.h.s8.bf16 %v4661
        %v6646 = vunpack.c.h.s8.bf16 %v4662
        %v6647 = vunpack.c.h.s8.bf16 %v4663
        %v6648 = vunpack.c.h.s8.bf16 %v4664
        %v6649 = vunpack.c.h.s8.bf16 %v4665
        %v6650 = vunpack.c.h.s8.bf16 %v4666
        %v6651 = vunpack.c.h.s8.bf16 %v4667
        %v6652 = vunpack.c.h.s8.bf16 %v4668
        %v6653 = vunpack.c.h.s8.bf16 %v4669
        %v6654 = vunpack.c.h.s8.bf16 %v4670
        %v6655 = vunpack.c.h.s8.bf16 %v4671
        %v6656 = vunpack.c.h.s8.bf16 %v4672
        %v6657 = vunpack.c.h.s8.bf16 %v4673
        %v6658 = vunpack.c.h.s8.bf16 %v4674
        %v6659 = vunpack.c.h.s8.bf16 %v4675
        %v6660 = vunpack.c.h.s8.bf16 %v4676
        %v6661 = vunpack.c.h.s8.bf16 %v4677
        %v6662 = vunpack.c.h.s8.bf16 %v4678
        %v6663 = vunpack.c.h.s8.bf16 %v4679
        %v6664 = vunpack.c.h.s8.bf16 %v4680
        %v6665 = vunpack.c.h.s8.bf16 %v4681
        %v6666 = vunpack.c.h.s8.bf16 %v4682
        %v6667 = vunpack.c.h.s8.bf16 %v4683
        %v6668 = vunpack.c.h.s8.bf16 %v4684
        %v6669 = vunpack.c.h.s8.bf16 %v4685
        %v6670 = vunpack.c.h.s8.bf16 %v4686
        %v6671 = vunpack.c.h.s8.bf16 %v4687
        %v6672 = vunpack.c.h.s8.bf16 %v4688
        %v6673 = vunpack.c.h.s8.bf16 %v4689
        %v6674 = vunpack.c.h.s8.bf16 %v4690
        %v6675 = vunpack.c.h.s8.bf16 %v4691
        %v6676 = vunpack.c.l.s8.bf16 %v4692
        %v6677 = vunpack.c.l.s8.bf16 %v4693
        %v6678 = vunpack.c.l.s8.bf16 %v4694
        %v6679 = vunpack.c.l.s8.bf16 %v4695
        %v6680 = vunpack.c.l.s8.bf16 %v4696
        %v6681 = vunpack.c.l.s8.bf16 %v4697
        %v6682 = vunpack.c.l.s8.bf16 %v4698
        %v6683 = vunpack.c.l.s8.bf16 %v4699
        %v6684 = vunpack.c.l.s8.bf16 %v4700
        %v6685 = vunpack.c.l.s8.bf16 %v4701
        %v6686 = vunpack.c.l.s8.bf16 %v4702
        %v6687 = vunpack.c.l.s8.bf16 %v4703
        %v6688 = vunpack.c.l.s8.bf16 %v4704
        %v6689 = vunpack.c.l.s8.bf16 %v4705
        %v6690 = vunpack.c.l.s8.bf16 %v4706
        %v6691 = vunpack.c.l.s8.bf16 %v4707
        %v6692 = vunpack.c.l.s8.bf16 %v4708
        %v6693 = vunpack.c.l.s8.bf16 %v4709
        %v6694 = vunpack.c.l.s8.bf16 %v4710
        %v6695 = vunpack.c.l.s8.bf16 %v4711
        %v6696 = vunpack.c.l.s8.bf16 %v4712
        %v6697 = vunpack.c.l.s8.bf16 %v4713
        %v6698 = vunpack.c.l.s8.bf16 %v4714
        %v6699 = vunpack.c.l.s8.bf16 %v4715
        %v6700 = vunpack.c.l.s8.bf16 %v4716
        %v6701 = vunpack.c.l.s8.bf16 %v4717
        %v6702 = vunpack.c.l.s8.bf16 %v4718
        %v6703 = vunpack.c.l.s8.bf16 %v4719
        %v6704 = vunpack.c.l.s8.bf16 %v4720
        %v6705 = vunpack.c.l.s8.bf16 %v4721
        %v6706 = vunpack.c.l.s8.bf16 %v4722
        %v6707 = vunpack.c.l.s8.bf16 %v4723
        %v6708 = vunpack.c.h.s8.bf16 %v4692
        %v6709 = vunpack.c.h.s8.bf16 %v4693
        %v6710 = vunpack.c.h.s8.bf16 %v4694
        %v6711 = vunpack.c.h.s8.bf16 %v4695
        %v6712 = vunpack.c.h.s8.bf16 %v4696
        %v6713 = vunpack.c.h.s8.bf16 %v4697
        %v6714 = vunpack.c.h.s8.bf16 %v4698
        %v6715 = vunpack.c.h.s8.bf16 %v4699
        %v6716 = vunpack.c.h.s8.bf16 %v4700
        %v6717 = vunpack.c.h.s8.bf16 %v4701
        %v6718 = vunpack.c.h.s8.bf16 %v4702
        %v6719 = vunpack.c.h.s8.bf16 %v4703
        %v6720 = vunpack.c.h.s8.bf16 %v4704
        %v6721 = vunpack.c.h.s8.bf16 %v4705
        %v6722 = vunpack.c.h.s8.bf16 %v4706
        %v6723 = vunpack.c.h.s8.bf16 %v4707
        %v6724 = vunpack.c.h.s8.bf16 %v4708
        %v6725 = vunpack.c.h.s8.bf16 %v4709
        %v6726 = vunpack.c.h.s8.bf16 %v4710
        %v6727 = vunpack.c.h.s8.bf16 %v4711
        %v6728 = vunpack.c.h.s8.bf16 %v4712
        %v6729 = vunpack.c.h.s8.bf16 %v4713
        %v6730 = vunpack.c.h.s8.bf16 %v4714
        %v6731 = vunpack.c.h.s8.bf16 %v4715
        %v6732 = vunpack.c.h.s8.bf16 %v4716
        %v6733 = vunpack.c.h.s8.bf16 %v4717
        %v6734 = vunpack.c.h.s8.bf16 %v4718
        %v6735 = vunpack.c.h.s8.bf16 %v4719
        %v6736 = vunpack.c.h.s8.bf16 %v4720
        %v6737 = vunpack.c.h.s8.bf16 %v4721
        %v6738 = vunpack.c.h.s8.bf16 %v4722
        %v6739 = vunpack.c.h.s8.bf16 %v4723
        %v6740 = vunpack.c.l.s8.bf16 %v4724
        %v6741 = vunpack.c.l.s8.bf16 %v4725
        %v6742 = vunpack.c.l.s8.bf16 %v4726
        %v6743 = vunpack.c.l.s8.bf16 %v4727
        %v6744 = vunpack.c.l.s8.bf16 %v4728
        %v6745 = vunpack.c.l.s8.bf16 %v4729
        %v6746 = vunpack.c.l.s8.bf16 %v4730
        %v6747 = vunpack.c.l.s8.bf16 %v4731
        %v6748 = vunpack.c.l.s8.bf16 %v4732
        %v6749 = vunpack.c.l.s8.bf16 %v4733
        %v6750 = vunpack.c.l.s8.bf16 %v4734
        %v6751 = vunpack.c.l.s8.bf16 %v4735
        %v6752 = vunpack.c.l.s8.bf16 %v4736
        %v6753 = vunpack.c.l.s8.bf16 %v4737
        %v6754 = vunpack.c.l.s8.bf16 %v4738
        %v6755 = vunpack.c.l.s8.bf16 %v4739
        %v6756 = vunpack.c.l.s8.bf16 %v4740
        %v6757 = vunpack.c.l.s8.bf16 %v4741
        %v6758 = vunpack.c.l.s8.bf16 %v4742
        %v6759 = vunpack.c.l.s8.bf16 %v4743
        %v6760 = vunpack.c.l.s8.bf16 %v4744
        %v6761 = vunpack.c.l.s8.bf16 %v4745
        %v6762 = vunpack.c.l.s8.bf16 %v4746
        %v6763 = vunpack.c.l.s8.bf16 %v4747
        %v6764 = vunpack.c.l.s8.bf16 %v4748
        %v6765 = vunpack.c.l.s8.bf16 %v4749
        %v6766 = vunpack.c.l.s8.bf16 %v4750
        %v6767 = vunpack.c.l.s8.bf16 %v4751
        %v6768 = vunpack.c.l.s8.bf16 %v4752
        %v6769 = vunpack.c.l.s8.bf16 %v4753
        %v6770 = vunpack.c.l.s8.bf16 %v4754
        %v6771 = vunpack.c.l.s8.bf16 %v4755
        %v6772 = vunpack.c.h.s8.bf16 %v4724
        %v6773 = vunpack.c.h.s8.bf16 %v4725
        %v6774 = vunpack.c.h.s8.bf16 %v4726
        %v6775 = vunpack.c.h.s8.bf16 %v4727
        %v6776 = vunpack.c.h.s8.bf16 %v4728
        %v6777 = vunpack.c.h.s8.bf16 %v4729
        %v6778 = vunpack.c.h.s8.bf16 %v4730
        %v6779 = vunpack.c.h.s8.bf16 %v4731
        %v6780 = vunpack.c.h.s8.bf16 %v4732
        %v6781 = vunpack.c.h.s8.bf16 %v4733
        %v6782 = vunpack.c.h.s8.bf16 %v4734
        %v6783 = vunpack.c.h.s8.bf16 %v4735
        %v6784 = vunpack.c.h.s8.bf16 %v4736
        %v6785 = vunpack.c.h.s8.bf16 %v4737
        %v6786 = vunpack.c.h.s8.bf16 %v4738
        %v6787 = vunpack.c.h.s8.bf16 %v4739
        %v6788 = vunpack.c.h.s8.bf16 %v4740
        %v6789 = vunpack.c.h.s8.bf16 %v4741
        %v6790 = vunpack.c.h.s8.bf16 %v4742
        %v6791 = vunpack.c.h.s8.bf16 %v4743
        %v6792 = vunpack.c.h.s8.bf16 %v4744
        %v6793 = vunpack.c.h.s8.bf16 %v4745
        %v6794 = vunpack.c.h.s8.bf16 %v4746
        %v6795 = vunpack.c.h.s8.bf16 %v4747
        %v6796 = vunpack.c.h.s8.bf16 %v4748
        %v6797 = vunpack.c.h.s8.bf16 %v4749
        %v6798 = vunpack.c.h.s8.bf16 %v4750
        %v6799 = vunpack.c.h.s8.bf16 %v4751
        %v6800 = vunpack.c.h.s8.bf16 %v4752
        %v6801 = vunpack.c.h.s8.bf16 %v4753
        %v6802 = vunpack.c.h.s8.bf16 %v4754
        %v6803 = vunpack.c.h.s8.bf16 %v4755
        %v6804 = vpack.c.bf16 %v3724, %v3724
        %v6805 = vpack.c.bf16 %v3725, %v3725
        %v6806 = vpack.c.bf16 %v3726, %v3726
        %v6807 = vpack.c.bf16 %v3727, %v3727
        %v6808 = vpack.c.bf16 %v3728, %v3728
        %v6809 = vpack.c.bf16 %v3729, %v3729
        %v6810 = vpack.c.bf16 %v3730, %v3730
        %v6811 = vpack.c.bf16 %v3731, %v3731
        %6812 = vmatprep.subr.bf16.mxu0 %v4757
        %6813 = vmatpush1.bf16.msra.mxu0 %v4756
        %6814 = vmatprep.subr.bf16.mxu0 %v4789
        %6815 = vmatpush1.bf16.msra.mxu0 %v4788
        %6816 = vmatprep.subr.bf16.mxu0 %v4821
        %6817 = vmatpush1.bf16.msra.mxu0 %v4820
        %6818 = vmatprep.subr.bf16.mxu0 %v4853
        %6819 = vmatpush1.bf16.msra.mxu0 %v4852
        %6820 = vmatprep.subr.bf16.mxu0 %v4885
        %6821 = vmatpush1.bf16.msra.mxu0 %v4884
        %6822 = vmatprep.subr.bf16.mxu0 %v4917
        %6823 = vmatpush1.bf16.msra.mxu0 %v4916
        %6824 = vmatprep.subr.bf16.mxu0 %v4949
        %6825 = vmatpush1.bf16.msra.mxu0 %v4948
        %6826 = vmatprep.subr.bf16.mxu0 %v4981
        %6827 = vmatpush1.bf16.msra.mxu0 %v4980
        %6828 = vmatprep.subr.bf16.mxu0 %v5013
        %6829 = vmatpush1.bf16.msra.mxu0 %v5012
        %6830 = vmatprep.subr.bf16.mxu0 %v5045
        %6831 = vmatpush1.bf16.msra.mxu0 %v5044
        %6832 = vmatprep.subr.bf16.mxu0 %v5077
        %6833 = vmatpush1.bf16.msra.mxu0 %v5076
        %6834 = vmatprep.subr.bf16.mxu0 %v5109
        %6835 = vmatpush1.bf16.msra.mxu0 %v5108
        %6836 = vmatprep.subr.bf16.mxu0 %v5141
        %6837 = vmatpush1.bf16.msra.mxu0 %v5140
        %6838 = vmatprep.subr.bf16.mxu0 %v5173
        %6839 = vmatpush1.bf16.msra.mxu0 %v5172
        %6840 = vmatprep.subr.bf16.mxu0 %v5205
        %6841 = vmatpush1.bf16.msra.mxu0 %v5204
        %6842 = vmatprep.subr.bf16.mxu0 %v5237
        %6843 = vmatpush1.bf16.msra.mxu0 %v5236
        %6844 = vmatprep.mubr.bf16.mxu0 %v6805
        %6845 = vmatmul.mubr.bf16.gmra.mrb[0].mxu0 %v6804
        %v6846 = vpop.f32.mrb[0].mxu0
        %v6847 = vadd.f32 0.0, %v6846
        %v6848 = vpop.f32.mrb[0].mxu0
        %v6849 = vadd.f32 0.0, %v6848
        %v6850 = vpop.f32.mrb[0].mxu0
        %v6851 = vpop.f32.mrb[0].mxu0
        %6852 = vdwg.mxu0
        %6853 = vmatprep.subr.bf16.mxu0 %v5269
        %6854 = vmatpush1.bf16.msra.mxu0 %v5268
        %6855 = vmatprep.subr.bf16.mxu0 %v5301
        %6856 = vmatpush1.bf16.msra.mxu0 %v5300
        %6857 = vmatprep.subr.bf16.mxu0 %v5333
        %6858 = vmatpush1.bf16.msra.mxu0 %v5332
        %6859 = vmatprep.subr.bf16.mxu0 %v5365
        %6860 = vmatpush1.bf16.msra.mxu0 %v5364
        %6861 = vmatprep.subr.bf16.mxu0 %v5397
        %6862 = vmatpush1.bf16.msra.mxu0 %v5396
        %6863 = vmatprep.subr.bf16.mxu0 %v5429
        %6864 = vmatpush1.bf16.msra.mxu0 %v5428
        %6865 = vmatprep.subr.bf16.mxu0 %v5461
        %6866 = vmatpush1.bf16.msra.mxu0 %v5460
        %6867 = vmatprep.subr.bf16.mxu0 %v5493
        %6868 = vmatpush1.bf16.msra.mxu0 %v5492
        %6869 = vmatprep.subr.bf16.mxu0 %v5525
        %6870 = vmatpush1.bf16.msra.mxu0 %v5524
        %6871 = vmatprep.subr.bf16.mxu0 %v5557
        %6872 = vmatpush1.bf16.msra.mxu0 %v5556
        %6873 = vmatprep.subr.bf16.mxu0 %v5589
        %6874 = vmatpush1.bf16.msra.mxu0 %v5588
        %6875 = vmatprep.subr.bf16.mxu0 %v5621
        %6876 = vmatpush1.bf16.msra.mxu0 %v5620
        %6877 = vmatprep.subr.bf16.mxu0 %v5653
        %6878 = vmatpush1.bf16.msra.mxu0 %v5652
        %6879 = vmatprep.subr.bf16.mxu0 %v5685
        %6880 = vmatpush1.bf16.msra.mxu0 %v5684
        %6881 = vmatprep.subr.bf16.mxu0 %v5717
        %6882 = vmatpush1.bf16.msra.mxu0 %v5716
        %6883 = vmatprep.subr.bf16.mxu0 %v5749
        %6884 = vmatpush1.bf16.msra.mxu0 %v5748
        %6885 = vmatprep.mubr.bf16.mxu0 %v6807
        %6886 = vmatmul.mubr.bf16.gmra.mrb[0].mxu0 %v6806
        %v6887 = vpop.f32.mrb[0].mxu0
        %v6888 = vadd.f32 %v6847, %v6887
        %v6889 = vpop.f32.mrb[0].mxu0
        %v6890 = vadd.f32 %v6849, %v6889
        %v6891 = vpop.f32.mrb[0].mxu0
        %v6892 = vpop.f32.mrb[0].mxu0
        %6893 = vdwg.mxu0
        %6894 = vmatprep.subr.bf16.mxu0 %v5781
        %6895 = vmatpush1.bf16.msra.mxu0 %v5780
        %6896 = vmatprep.subr.bf16.mxu0 %v5813
        %6897 = vmatpush1.bf16.msra.mxu0 %v5812
        %6898 = vmatprep.subr.bf16.mxu0 %v5845
        %6899 = vmatpush1.bf16.msra.mxu0 %v5844
        %6900 = vmatprep.subr.bf16.mxu0 %v5877
        %6901 = vmatpush1.bf16.msra.mxu0 %v5876
        %6902 = vmatprep.subr.bf16.mxu0 %v5909
        %6903 = vmatpush1.bf16.msra.mxu0 %v5908
        %6904 = vmatprep.subr.bf16.mxu0 %v5941
        %6905 = vmatpush1.bf16.msra.mxu0 %v5940
        %6906 = vmatprep.subr.bf16.mxu0 %v5973
        %6907 = vmatpush1.bf16.msra.mxu0 %v5972
        %6908 = vmatprep.subr.bf16.mxu0 %v6005
        %6909 = vmatpush1.bf16.msra.mxu0 %v6004
        %6910 = vmatprep.subr.bf16.mxu0 %v6037
        %6911 = vmatpush1.bf16.msra.mxu0 %v6036
        %6912 = vmatprep.subr.bf16.mxu0 %v6069
        %6913 = vmatpush1.bf16.msra.mxu0 %v6068
        %6914 = vmatprep.subr.bf16.mxu0 %v6101
        %6915 = vmatpush1.bf16.msra.mxu0 %v6100
        %6916 = vmatprep.subr.bf16.mxu0 %v6133
        %6917 = vmatpush1.bf16.msra.mxu0 %v6132
        %6918 = vmatprep.subr.bf16.mxu0 %v6165
        %6919 = vmatpush1.bf16.msra.mxu0 %v6164
        %6920 = vmatprep.subr.bf16.mxu0 %v6197
        %6921 = vmatpush1.bf16.msra.mxu0 %v6196
        %6922 = vmatprep.subr.bf16.mxu0 %v6229
        %6923 = vmatpush1.bf16.msra.mxu0 %v6228
        %6924 = vmatprep.subr.bf16.mxu0 %v6261
        %6925 = vmatpush1.bf16.msra.mxu0 %v6260
        %6926 = vmatprep.mubr.bf16.mxu0 %v6809
        %6927 = vmatmul.mubr.bf16.gmra.mrb[0].mxu0 %v6808
        %v6928 = vpop.f32.mrb[0].mxu0
        %v6929 = vadd.f32 %v6888, %v6928
        %v6930 = vpop.f32.mrb[0].mxu0
        %v6931 = vadd.f32 %v6890, %v6930
        %v6932 = vpop.f32.mrb[0].mxu0
        %v6933 = vpop.f32.mrb[0].mxu0
        %6934 = vdwg.mxu0
        %6935 = vmatprep.subr.bf16.mxu0 %v6293
        %6936 = vmatpush1.bf16.msra.mxu0 %v6292
        %6937 = vmatprep.subr.bf16.mxu0 %v6325
        %6938 = vmatpush1.bf16.msra.mxu0 %v6324
        %6939 = vmatprep.subr.bf16.mxu0 %v6357
        %6940 = vmatpush1.bf16.msra.mxu0 %v6356
        %6941 = vmatprep.subr.bf16.mxu0 %v6389
        %6942 = vmatpush1.bf16.msra.mxu0 %v6388
        %6943 = vmatprep.subr.bf16.mxu0 %v6421
        %6944 = vmatpush1.bf16.msra.mxu0 %v6420
        %6945 = vmatprep.subr.bf16.mxu0 %v6453
        %6946 = vmatpush1.bf16.msra.mxu0 %v6452
        %6947 = vmatprep.subr.bf16.mxu0 %v6485
        %6948 = vmatpush1.bf16.msra.mxu0 %v6484
        %6949 = vmatprep.subr.bf16.mxu0 %v6517
        %6950 = vmatpush1.bf16.msra.mxu0 %v6516
        %6951 = vmatprep.subr.bf16.mxu0 %v6549
        %6952 = vmatpush1.bf16.msra.mxu0 %v6548
        %6953 = vmatprep.subr.bf16.mxu0 %v6581
        %6954 = vmatpush1.bf16.msra.mxu0 %v6580
        %6955 = vmatprep.subr.bf16.mxu0 %v6613
        %6956 = vmatpush1.bf16.msra.mxu0 %v6612
        %6957 = vmatprep.subr.bf16.mxu0 %v6645
        %6958 = vmatpush1.bf16.msra.mxu0 %v6644
        %6959 = vmatprep.subr.bf16.mxu0 %v6677
        %6960 = vmatpush1.bf16.msra.mxu0 %v6676
        %6961 = vmatprep.subr.bf16.mxu0 %v6709
        %6962 = vmatpush1.bf16.msra.mxu0 %v6708
        %6963 = vmatprep.subr.bf16.mxu0 %v6741
        %6964 = vmatpush1.bf16.msra.mxu0 %v6740
        %6965 = vmatprep.subr.bf16.mxu0 %v6773
        %6966 = vmatpush1.bf16.msra.mxu0 %v6772
        %6967 = vmatprep.mubr.bf16.mxu0 %v6811
        %6968 = vmatmul.mubr.bf16.gmra.mrb[0].mxu0 %v6810
        %v6969 = vpop.f32.mrb[0].mxu0
        %v6970 = vadd.f32 %v6929, %v6969
        %v6971 = vpop.f32.mrb[0].mxu0
        %v6972 = vadd.f32 %v6931, %v6971
        %v6973 = vpop.f32.mrb[0].mxu0
        %v6974 = vpop.f32.mrb[0].mxu0
        %6975 = vdwg.mxu0
        %6976 = vmatprep.subr.bf16.mxu0 %v4759
        %6977 = vmatpush1.bf16.msra.mxu0 %v4758
        %6978 = vmatprep.subr.bf16.mxu0 %v4791
        %6979 = vmatpush1.bf16.msra.mxu0 %v4790
        %6980 = vmatprep.subr.bf16.mxu0 %v4823
        %6981 = vmatpush1.bf16.msra.mxu0 %v4822
        %6982 = vmatprep.subr.bf16.mxu0 %v4855
        %6983 = vmatpush1.bf16.msra.mxu0 %v4854
        %6984 = vmatprep.subr.bf16.mxu0 %v4887
        %6985 = vmatpush1.bf16.msra.mxu0 %v4886
        %6986 = vmatprep.subr.bf16.mxu0 %v4919
        %6987 = vmatpush1.bf16.msra.mxu0 %v4918
        %6988 = vmatprep.subr.bf16.mxu0 %v4951
        %6989 = vmatpush1.bf16.msra.mxu0 %v4950
        %6990 = vmatprep.subr.bf16.mxu0 %v4983
        %6991 = vmatpush1.bf16.msra.mxu0 %v4982
        %6992 = vmatprep.subr.bf16.mxu0 %v5015
        %6993 = vmatpush1.bf16.msra.mxu0 %v5014
        %6994 = vmatprep.subr.bf16.mxu0 %v5047
        %6995 = vmatpush1.bf16.msra.mxu0 %v5046
        %6996 = vmatprep.subr.bf16.mxu0 %v5079
        %6997 = vmatpush1.bf16.msra.mxu0 %v5078
        %6998 = vmatprep.subr.bf16.mxu0 %v5111
        %6999 = vmatpush1.bf16.msra.mxu0 %v5110
        %7000 = vmatprep.subr.bf16.mxu0 %v5143
        %7001 = vmatpush1.bf16.msra.mxu0 %v5142
        %7002 = vmatprep.subr.bf16.mxu0 %v5175
        %7003 = vmatpush1.bf16.msra.mxu0 %v5174
        %7004 = vmatprep.subr.bf16.mxu0 %v5207
        %7005 = vmatpush1.bf16.msra.mxu0 %v5206
        %7006 = vmatprep.subr.bf16.mxu0 %v5239
        %7007 = vmatpush1.bf16.msra.mxu0 %v5238
        %7008 = vmatprep.mubr.bf16.mxu0 %v6805
        %7009 = vmatmul.mubr.bf16.gmra.mrb[0].mxu0 %v6804
        %v7010 = vpop.f32.mrb[0].mxu0
        %v7011 = vadd.f32 0.0, %v7010
        %v7012 = vpop.f32.mrb[0].mxu0
        %v7013 = vadd.f32 0.0, %v7012
        %v7014 = vpop.f32.mrb[0].mxu0
        %v7015 = vpop.f32.mrb[0].mxu0
        %7016 = vdwg.mxu0
        %7017 = vmatprep.subr.bf16.mxu0 %v5271
        %7018 = vmatpush1.bf16.msra.mxu0 %v5270
        %7019 = vmatprep.subr.bf16.mxu0 %v5303
        %7020 = vmatpush1.bf16.msra.mxu0 %v5302
        %7021 = vmatprep.subr.bf16.mxu0 %v5335
        %7022 = vmatpush1.bf16.msra.mxu0 %v5334
        %7023 = vmatprep.subr.bf16.mxu0 %v5367
        %7024 = vmatpush1.bf16.msra.mxu0 %v5366
        %7025 = vmatprep.subr.bf16.mxu0 %v5399
        %7026 = vmatpush1.bf16.msra.mxu0 %v5398
        %7027 = vmatprep.subr.bf16.mxu0 %v5431
        %7028 = vmatpush1.bf16.msra.mxu0 %v5430
        %7029 = vmatprep.subr.bf16.mxu0 %v5463
        %7030 = vmatpush1.bf16.msra.mxu0 %v5462
        %7031 = vmatprep.subr.bf16.mxu0 %v5495
        %7032 = vmatpush1.bf16.msra.mxu0 %v5494
        %7033 = vmatprep.subr.bf16.mxu0 %v5527
        %7034 = vmatpush1.bf16.msra.mxu0 %v5526
        %7035 = vmatprep.subr.bf16.mxu0 %v5559
        %7036 = vmatpush1.bf16.msra.mxu0 %v5558
        %7037 = vmatprep.subr.bf16.mxu0 %v5591
        %7038 = vmatpush1.bf16.msra.mxu0 %v5590
        %7039 = vmatprep.subr.bf16.mxu0 %v5623
        %7040 = vmatpush1.bf16.msra.mxu0 %v5622
        %7041 = vmatprep.subr.bf16.mxu0 %v5655
        %7042 = vmatpush1.bf16.msra.mxu0 %v5654
        %7043 = vmatprep.subr.bf16.mxu0 %v5687
        %7044 = vmatpush1.bf16.msra.mxu0 %v5686
        %7045 = vmatprep.subr.bf16.mxu0 %v5719
        %7046 = vmatpush1.bf16.msra.mxu0 %v5718
        %7047 = vmatprep.subr.bf16.mxu0 %v5751
        %7048 = vmatpush1.bf16.msra.mxu0 %v5750
        %7049 = vmatprep.mubr.bf16.mxu0 %v6807
        %7050 = vmatmul.mubr.bf16.gmra.mrb[0].mxu0 %v6806
        %v7051 = vpop.f32.mrb[0].mxu0
        %v7052 = vadd.f32 %v7011, %v7051
        %v7053 = vpop.f32.mrb[0].mxu0
        %v7054 = vadd.f32 %v7013, %v7053
        %v7055 = vpop.f32.mrb[0].mxu0
        %v7056 = vpop.f32.mrb[0].mxu0
        %7057 = vdwg.mxu0
        %7058 = vmatprep.subr.bf16.mxu0 %v5783
        %7059 = vmatpush1.bf16.msra.mxu0 %v5782
        %7060 = vmatprep.subr.bf16.mxu0 %v5815
        %7061 = vmatpush1.bf16.msra.mxu0 %v5814
        %7062 = vmatprep.subr.bf16.mxu0 %v5847
        %7063 = vmatpush1.bf16.msra.mxu0 %v5846
        %7064 = vmatprep.subr.bf16.mxu0 %v5879
        %7065 = vmatpush1.bf16.msra.mxu0 %v5878
        %7066 = vmatprep.subr.bf16.mxu0 %v5911
        %7067 = vmatpush1.bf16.msra.mxu0 %v5910
        %7068 = vmatprep.subr.bf16.mxu0 %v5943
        %7069 = vmatpush1.bf16.msra.mxu0 %v5942
        %7070 = vmatprep.subr.bf16.mxu0 %v5975
        %7071 = vmatpush1.bf16.msra.mxu0 %v5974
        %7072 = vmatprep.subr.bf16.mxu0 %v6007
        %7073 = vmatpush1.bf16.msra.mxu0 %v6006
        %7074 = vmatprep.subr.bf16.mxu0 %v6039
        %7075 = vmatpush1.bf16.msra.mxu0 %v6038
        %7076 = vmatprep.subr.bf16.mxu0 %v6071
        %7077 = vmatpush1.bf16.msra.mxu0 %v6070
        %7078 = vmatprep.subr.bf16.mxu0 %v6103
        %7079 = vmatpush1.bf16.msra.mxu0 %v6102
        %7080 = vmatprep.subr.bf16.mxu0 %v6135
        %7081 = vmatpush1.bf16.msra.mxu0 %v6134
        %7082 = vmatprep.subr.bf16.mxu0 %v6167
        %7083 = vmatpush1.bf16.msra.mxu0 %v6166
        %7084 = vmatprep.subr.bf16.mxu0 %v6199
        %7085 = vmatpush1.bf16.msra.mxu0 %v6198
        %7086 = vmatprep.subr.bf16.mxu0 %v6231
        %7087 = vmatpush1.bf16.msra.mxu0 %v6230
        %7088 = vmatprep.subr.bf16.mxu0 %v6263
        %7089 = vmatpush1.bf16.msra.mxu0 %v6262
        %7090 = vmatprep.mubr.bf16.mxu0 %v6809
        %7091 = vmatmul.mubr.bf16.gmra.mrb[0].mxu0 %v6808
        %v7092 = vpop.f32.mrb[0].mxu0
        %v7093 = vadd.f32 %v7052, %v7092
        %v7094 = vpop.f32.mrb[0].mxu0
        %v7095 = vadd.f32 %v7054, %v7094
        %v7096 = vpop.f32.mrb[0].mxu0
        %v7097 = vpop.f32.mrb[0].mxu0
        %7098 = vdwg.mxu0
        %7099 = vmatprep.subr.bf16.mxu0 %v6295
        %7100 = vmatpush1.bf16.msra.mxu0 %v6294
        %7101 = vmatprep.subr.bf16.mxu0 %v6327
        %7102 = vmatpush1.bf16.msra.mxu0 %v6326
        %7103 = vmatprep.subr.bf16.mxu0 %v6359
        %7104 = vmatpush1.bf16.msra.mxu0 %v6358
        %7105 = vmatprep.subr.bf16.mxu0 %v6391
        %7106 = vmatpush1.bf16.msra.mxu0 %v6390
        %7107 = vmatprep.subr.bf16.mxu0 %v6423
        %7108 = vmatpush1.bf16.msra.mxu0 %v6422
        %7109 = vmatprep.subr.bf16.mxu0 %v6455
        %7110 = vmatpush1.bf16.msra.mxu0 %v6454
        %7111 = vmatprep.subr.bf16.mxu0 %v6487
        %7112 = vmatpush1.bf16.msra.mxu0 %v6486
        %7113 = vmatprep.subr.bf16.mxu0 %v6519
        %7114 = vmatpush1.bf16.msra.mxu0 %v6518
        %7115 = vmatprep.subr.bf16.mxu0 %v6551
        %7116 = vmatpush1.bf16.msra.mxu0 %v6550
        %7117 = vmatprep.subr.bf16.mxu0 %v6583
        %7118 = vmatpush1.bf16.msra.mxu0 %v6582
        %7119 = vmatprep.subr.bf16.mxu0 %v6615
        %7120 = vmatpush1.bf16.msra.mxu0 %v6614
        %7121 = vmatprep.subr.bf16.mxu0 %v6647
        %7122 = vmatpush1.bf16.msra.mxu0 %v6646
        %7123 = vmatprep.subr.bf16.mxu0 %v6679
        %7124 = vmatpush1.bf16.msra.mxu0 %v6678
        %7125 = vmatprep.subr.bf16.mxu0 %v6711
        %7126 = vmatpush1.bf16.msra.mxu0 %v6710
        %7127 = vmatprep.subr.bf16.mxu0 %v6743
        %7128 = vmatpush1.bf16.msra.mxu0 %v6742
        %7129 = vmatprep.subr.bf16.mxu0 %v6775
        %7130 = vmatpush1.bf16.msra.mxu0 %v6774
        %7131 = vmatprep.mubr.bf16.mxu0 %v6811
        %7132 = vmatmul.mubr.bf16.gmra.mrb[0].mxu0 %v6810
        %v7133 = vpop.f32.mrb[0].mxu0
        %v7134 = vadd.f32 %v7093, %v7133
        %v7135 = vpop.f32.mrb[0].mxu0
        %v7136 = vadd.f32 %v7095, %v7135
        %v7137 = vpop.f32.mrb[0].mxu0
        %v7138 = vpop.f32.mrb[0].mxu0
        %7139 = vdwg.mxu0
        %7140 = vmatprep.subr.bf16.mxu0 %v4761
        %7141 = vmatpush1.bf16.msra.mxu0 %v4760
        %7142 = vmatprep.subr.bf16.mxu0 %v4793
        %7143 = vmatpush1.bf16.msra.mxu0 %v4792
        %7144 = vmatprep.subr.bf16.mxu0 %v4825
        %7145 = vmatpush1.bf16.msra.mxu0 %v4824
        %7146 = vmatprep.subr.bf16.mxu0 %v4857
        %7147 = vmatpush1.bf16.msra.mxu0 %v4856
        %7148 = vmatprep.subr.bf16.mxu0 %v4889
        %7149 = vmatpush1.bf16.msra.mxu0 %v4888
        %7150 = vmatprep.subr.bf16.mxu0 %v4921
        %7151 = vmatpush1.bf16.msra.mxu0 %v4920
        %7152 = vmatprep.subr.bf16.mxu0 %v4953
        %7153 = vmatpush1.bf16.msra.mxu0 %v4952
        %7154 = vmatprep.subr.bf16.mxu0 %v4985
        %7155 = vmatpush1.bf16.msra.mxu0 %v4984
        %7156 = vmatprep.subr.bf16.mxu0 %v5017
        %7157 = vmatpush1.bf16.msra.mxu0 %v5016
        %7158 = vmatprep.subr.bf16.mxu0 %v5049
        %7159 = vmatpush1.bf16.msra.mxu0 %v5048
        %7160 = vmatprep.subr.bf16.mxu0 %v5081
        %7161 = vmatpush1.bf16.msra.mxu0 %v5080
        %7162 = vmatprep.subr.bf16.mxu0 %v5113
        %7163 = vmatpush1.bf16.msra.mxu0 %v5112
        %7164 = vmatprep.subr.bf16.mxu0 %v5145
        %7165 = vmatpush1.bf16.msra.mxu0 %v5144
        %7166 = vmatprep.subr.bf16.mxu0 %v5177
        %7167 = vmatpush1.bf16.msra.mxu0 %v5176
        %7168 = vmatprep.subr.bf16.mxu0 %v5209
        %7169 = vmatpush1.bf16.msra.mxu0 %v5208
        %7170 = vmatprep.subr.bf16.mxu0 %v5241
        %7171 = vmatpush1.bf16.msra.mxu0 %v5240
        %7172 = vmatprep.mubr.bf16.mxu0 %v6805
        %7173 = vmatmul.mubr.bf16.gmra.mrb[0].mxu0 %v6804
        %v7174 = vpop.f32.mrb[0].mxu0
        %v7175 = vadd.f32 0.0, %v7174
        %v7176 = vpop.f32.mrb[0].mxu0
        %v7177 = vadd.f32 0.0, %v7176
        %v7178 = vpop.f32.mrb[0].mxu0
        %v7179 = vpop.f32.mrb[0].mxu0
        %7180 = vdwg.mxu0
        %7181 = vmatprep.subr.bf16.mxu0 %v5273
        %7182 = vmatpush1.bf16.msra.mxu0 %v5272
        %7183 = vmatprep.subr.bf16.mxu0 %v5305
        %7184 = vmatpush1.bf16.msra.mxu0 %v5304
        %7185 = vmatprep.subr.bf16.mxu0 %v5337
        %7186 = vmatpush1.bf16.msra.mxu0 %v5336
        %7187 = vmatprep.subr.bf16.mxu0 %v5369
        %7188 = vmatpush1.bf16.msra.mxu0 %v5368
        %7189 = vmatprep.subr.bf16.mxu0 %v5401
        %7190 = vmatpush1.bf16.msra.mxu0 %v5400
        %7191 = vmatprep.subr.bf16.mxu0 %v5433
        %7192 = vmatpush1.bf16.msra.mxu0 %v5432
        %7193 = vmatprep.subr.bf16.mxu0 %v5465
        %7194 = vmatpush1.bf16.msra.mxu0 %v5464
        %7195 = vmatprep.subr.bf16.mxu0 %v5497
        %7196 = vmatpush1.bf16.msra.mxu0 %v5496
        %7197 = vmatprep.subr.bf16.mxu0 %v5529
        %7198 = vmatpush1.bf16.msra.mxu0 %v5528
        %7199 = vmatprep.subr.bf16.mxu0 %v5561
        %7200 = vmatpush1.bf16.msra.mxu0 %v5560
        %7201 = vmatprep.subr.bf16.mxu0 %v5593
        %7202 = vmatpush1.bf16.msra.mxu0 %v5592
        %7203 = vmatprep.subr.bf16.mxu0 %v5625
        %7204 = vmatpush1.bf16.msra.mxu0 %v5624
        %7205 = vmatprep.subr.bf16.mxu0 %v5657
        %7206 = vmatpush1.bf16.msra.mxu0 %v5656
        %7207 = vmatprep.subr.bf16.mxu0 %v5689
        %7208 = vmatpush1.bf16.msra.mxu0 %v5688
        %7209 = vmatprep.subr.bf16.mxu0 %v5721
        %7210 = vmatpush1.bf16.msra.mxu0 %v5720
        %7211 = vmatprep.subr.bf16.mxu0 %v5753
        %7212 = vmatpush1.bf16.msra.mxu0 %v5752
        %7213 = vmatprep.mubr.bf16.mxu0 %v6807
        %7214 = vmatmul.mubr.bf16.gmra.mrb[0].mxu0 %v6806
        %v7215 = vpop.f32.mrb[0].mxu0
        %v7216 = vadd.f32 %v7175, %v7215
        %v7217 = vpop.f32.mrb[0].mxu0
        %v7218 = vadd.f32 %v7177, %v7217
        %v7219 = vpop.f32.mrb[0].mxu0
        %v7220 = vpop.f32.mrb[0].mxu0
        %7221 = vdwg.mxu0
        %7222 = vmatprep.subr.bf16.mxu0 %v5785
        %7223 = vmatpush1.bf16.msra.mxu0 %v5784
        %7224 = vmatprep.subr.bf16.mxu0 %v5817
        %7225 = vmatpush1.bf16.msra.mxu0 %v5816
        %7226 = vmatprep.subr.bf16.mxu0 %v5849
        %7227 = vmatpush1.bf16.msra.mxu0 %v5848
        %7228 = vmatprep.subr.bf16.mxu0 %v5881
        %7229 = vmatpush1.bf16.msra.mxu0 %v5880
        %7230 = vmatprep.subr.bf16.mxu0 %v5913
        %7231 = vmatpush1.bf16.msra.mxu0 %v5912
        %7232 = vmatprep.subr.bf16.mxu0 %v5945
        %7233 = vmatpush1.bf16.msra.mxu0 %v5944
        %7234 = vmatprep.subr.bf16.mxu0 %v5977
        %7235 = vmatpush1.bf16.msra.mxu0 %v5976
        %7236 = vmatprep.subr.bf16.mxu0 %v6009
        %7237 = vmatpush1.bf16.msra.mxu0 %v6008
        %7238 = vmatprep.subr.bf16.mxu0 %v6041
        %7239 = vmatpush1.bf16.msra.mxu0 %v6040
        %7240 = vmatprep.subr.bf16.mxu0 %v6073
        %7241 = vmatpush1.bf16.msra.mxu0 %v6072
        %7242 = vmatprep.subr.bf16.mxu0 %v6105
        %7243 = vmatpush1.bf16.msra.mxu0 %v6104
        %7244 = vmatprep.subr.bf16.mxu0 %v6137
        %7245 = vmatpush1.bf16.msra.mxu0 %v6136
        %7246 = vmatprep.subr.bf16.mxu0 %v6169
        %7247 = vmatpush1.bf16.msra.mxu0 %v6168
        %7248 = vmatprep.subr.bf16.mxu0 %v6201
        %7249 = vmatpush1.bf16.msra.mxu0 %v6200
        %7250 = vmatprep.subr.bf16.mxu0 %v6233
        %7251 = vmatpush1.bf16.msra.mxu0 %v6232
        %7252 = vmatprep.subr.bf16.mxu0 %v6265
        %7253 = vmatpush1.bf16.msra.mxu0 %v6264
        %7254 = vmatprep.mubr.bf16.mxu0 %v6809
        %7255 = vmatmul.mubr.bf16.gmra.mrb[0].mxu0 %v6808
        %v7256 = vpop.f32.mrb[0].mxu0
        %v7257 = vadd.f32 %v7216, %v7256
        %v7258 = vpop.f32.mrb[0].mxu0
        %v7259 = vadd.f32 %v7218, %v7258
        %v7260 = vpop.f32.mrb[0].mxu0
        %v7261 = vpop.f32.mrb[0].mxu0
        %7262 = vdwg.mxu0
        %7263 = vmatprep.subr.bf16.mxu0 %v6297
        %7264 = vmatpush1.bf16.msra.mxu0 %v6296
        %7265 = vmatprep.subr.bf16.mxu0 %v6329
        %7266 = vmatpush1.bf16.msra.mxu0 %v6328
        %7267 = vmatprep.subr.bf16.mxu0 %v6361
        %7268 = vmatpush1.bf16.msra.mxu0 %v6360
        %7269 = vmatprep.subr.bf16.mxu0 %v6393
        %7270 = vmatpush1.bf16.msra.mxu0 %v6392
        %7271 = vmatprep.subr.bf16.mxu0 %v6425
        %7272 = vmatpush1.bf16.msra.mxu0 %v6424
        %7273 = vmatprep.subr.bf16.mxu0 %v6457
        %7274 = vmatpush1.bf16.msra.mxu0 %v6456
        %7275 = vmatprep.subr.bf16.mxu0 %v6489
        %7276 = vmatpush1.bf16.msra.mxu0 %v6488
        %7277 = vmatprep.subr.bf16.mxu0 %v6521
        %7278 = vmatpush1.bf16.msra.mxu0 %v6520
        %7279 = vmatprep.subr.bf16.mxu0 %v6553
        %7280 = vmatpush1.bf16.msra.mxu0 %v6552
        %7281 = vmatprep.subr.bf16.mxu0 %v6585
        %7282 = vmatpush1.bf16.msra.mxu0 %v6584
        %7283 = vmatprep.subr.bf16.mxu0 %v6617
        %7284 = vmatpush1.bf16.msra.mxu0 %v6616
        %7285 = vmatprep.subr.bf16.mxu0 %v6649
        %7286 = vmatpush1.bf16.msra.mxu0 %v6648
        %7287 = vmatprep.subr.bf16.mxu0 %v6681
        %7288 = vmatpush1.bf16.msra.mxu0 %v6680
        %7289 = vmatprep.subr.bf16.mxu0 %v6713
        %7290 = vmatpush1.bf16.msra.mxu0 %v6712
        %7291 = vmatprep.subr.bf16.mxu0 %v6745
        %7292 = vmatpush1.bf16.msra.mxu0 %v6744
        %7293 = vmatprep.subr.bf16.mxu0 %v6777
        %7294 = vmatpush1.bf16.msra.mxu0 %v6776
        %7295 = vmatprep.mubr.bf16.mxu0 %v6811
        %7296 = vmatmul.mubr.bf16.gmra.mrb[0].mxu0 %v6810
        %v7297 = vpop.f32.mrb[0].mxu0
        %v7298 = vadd.f32 %v7257, %v7297
        %v7299 = vpop.f32.mrb[0].mxu0
        %v7300 = vadd.f32 %v7259, %v7299
        %v7301 = vpop.f32.mrb[0].mxu0
        %v7302 = vpop.f32.mrb[0].mxu0
        %7303 = vdwg.mxu0
        %7304 = vmatprep.subr.bf16.mxu0 %v4763
        %7305 = vmatpush1.bf16.msra.mxu0 %v4762
        %7306 = vmatprep.subr.bf16.mxu0 %v4795
        %7307 = vmatpush1.bf16.msra.mxu0 %v4794
        %7308 = vmatprep.subr.bf16.mxu0 %v4827
        %7309 = vmatpush1.bf16.msra.mxu0 %v4826
        %7310 = vmatprep.subr.bf16.mxu0 %v4859
        %7311 = vmatpush1.bf16.msra.mxu0 %v4858
        %7312 = vmatprep.subr.bf16.mxu0 %v4891
        %7313 = vmatpush1.bf16.msra.mxu0 %v4890
        %7314 = vmatprep.subr.bf16.mxu0 %v4923
        %7315 = vmatpush1.bf16.msra.mxu0 %v4922
        %7316 = vmatprep.subr.bf16.mxu0 %v4955
        %7317 = vmatpush1.bf16.msra.mxu0 %v4954
        %7318 = vmatprep.subr.bf16.mxu0 %v4987
        %7319 = vmatpush1.bf16.msra.mxu0 %v4986
        %7320 = vmatprep.subr.bf16.mxu0 %v5019
        %7321 = vmatpush1.bf16.msra.mxu0 %v5018
        %7322 = vmatprep.subr.bf16.mxu0 %v5051
        %7323 = vmatpush1.bf16.msra.mxu0 %v5050
        %7324 = vmatprep.subr.bf16.mxu0 %v5083
        %7325 = vmatpush1.bf16.msra.mxu0 %v5082
        %7326 = vmatprep.subr.bf16.mxu0 %v5115
        %7327 = vmatpush1.bf16.msra.mxu0 %v5114
        %7328 = vmatprep.subr.bf16.mxu0 %v5147
        %7329 = vmatpush1.bf16.msra.mxu0 %v5146
        %7330 = vmatprep.subr.bf16.mxu0 %v5179
        %7331 = vmatpush1.bf16.msra.mxu0 %v5178
        %7332 = vmatprep.subr.bf16.mxu0 %v5211
        %7333 = vmatpush1.bf16.msra.mxu0 %v5210
        %7334 = vmatprep.subr.bf16.mxu0 %v5243
        %7335 = vmatpush1.bf16.msra.mxu0 %v5242
        %7336 = vmatprep.mubr.bf16.mxu0 %v6805
        %7337 = vmatmul.mubr.bf16.gmra.mrb[0].mxu0 %v6804
        %v7338 = vpop.f32.mrb[0].mxu0
        %v7339 = vadd.f32 0.0, %v7338
        %v7340 = vpop.f32.mrb[0].mxu0
        %v7341 = vadd.f32 0.0, %v7340
        %v7342 = vpop.f32.mrb[0].mxu0
        %v7343 = vpop.f32.mrb[0].mxu0
        %7344 = vdwg.mxu0
        %7345 = vmatprep.subr.bf16.mxu0 %v5275
        %7346 = vmatpush1.bf16.msra.mxu0 %v5274
        %7347 = vmatprep.subr.bf16.mxu0 %v5307
        %7348 = vmatpush1.bf16.msra.mxu0 %v5306
        %7349 = vmatprep.subr.bf16.mxu0 %v5339
        %7350 = vmatpush1.bf16.msra.mxu0 %v5338
        %7351 = vmatprep.subr.bf16.mxu0 %v5371
        %7352 = vmatpush1.bf16.msra.mxu0 %v5370
        %7353 = vmatprep.subr.bf16.mxu0 %v5403
        %7354 = vmatpush1.bf16.msra.mxu0 %v5402
        %7355 = vmatprep.subr.bf16.mxu0 %v5435
        %7356 = vmatpush1.bf16.msra.mxu0 %v5434
        %7357 = vmatprep.subr.bf16.mxu0 %v5467
        %7358 = vmatpush1.bf16.msra.mxu0 %v5466
        %7359 = vmatprep.subr.bf16.mxu0 %v5499
        %7360 = vmatpush1.bf16.msra.mxu0 %v5498
        %7361 = vmatprep.subr.bf16.mxu0 %v5531
        %7362 = vmatpush1.bf16.msra.mxu0 %v5530
        %7363 = vmatprep.subr.bf16.mxu0 %v5563
        %7364 = vmatpush1.bf16.msra.mxu0 %v5562
        %7365 = vmatprep.subr.bf16.mxu0 %v5595
        %7366 = vmatpush1.bf16.msra.mxu0 %v5594
        %7367 = vmatprep.subr.bf16.mxu0 %v5627
        %7368 = vmatpush1.bf16.msra.mxu0 %v5626
        %7369 = vmatprep.subr.bf16.mxu0 %v5659
        %7370 = vmatpush1.bf16.msra.mxu0 %v5658
        %7371 = vmatprep.subr.bf16.mxu0 %v5691
        %7372 = vmatpush1.bf16.msra.mxu0 %v5690
        %7373 = vmatprep.subr.bf16.mxu0 %v5723
        %7374 = vmatpush1.bf16.msra.mxu0 %v5722
        %7375 = vmatprep.subr.bf16.mxu0 %v5755
        %7376 = vmatpush1.bf16.msra.mxu0 %v5754
        %7377 = vmatprep.mubr.bf16.mxu0 %v6807
        %7378 = vmatmul.mubr.bf16.gmra.mrb[0].mxu0 %v6806
        %v7379 = vpop.f32.mrb[0].mxu0
        %v7380 = vadd.f32 %v7339, %v7379
        %v7381 = vpop.f32.mrb[0].mxu0
        %v7382 = vadd.f32 %v7341, %v7381
        %v7383 = vpop.f32.mrb[0].mxu0
        %v7384 = vpop.f32.mrb[0].mxu0
        %7385 = vdwg.mxu0
        %7386 = vmatprep.subr.bf16.mxu0 %v5787
        %7387 = vmatpush1.bf16.msra.mxu0 %v5786
        %7388 = vmatprep.subr.bf16.mxu0 %v5819
        %7389 = vmatpush1.bf16.msra.mxu0 %v5818
        %7390 = vmatprep.subr.bf16.mxu0 %v5851
        %7391 = vmatpush1.bf16.msra.mxu0 %v5850
        %7392 = vmatprep.subr.bf16.mxu0 %v5883
        %7393 = vmatpush1.bf16.msra.mxu0 %v5882
        %7394 = vmatprep.subr.bf16.mxu0 %v5915
        %7395 = vmatpush1.bf16.msra.mxu0 %v5914
        %7396 = vmatprep.subr.bf16.mxu0 %v5947
        %7397 = vmatpush1.bf16.msra.mxu0 %v5946
        %7398 = vmatprep.subr.bf16.mxu0 %v5979
        %7399 = vmatpush1.bf16.msra.mxu0 %v5978
        %7400 = vmatprep.subr.bf16.mxu0 %v6011
        %7401 = vmatpush1.bf16.msra.mxu0 %v6010
        %7402 = vmatprep.subr.bf16.mxu0 %v6043
        %7403 = vmatpush1.bf16.msra.mxu0 %v6042
        %7404 = vmatprep.subr.bf16.mxu0 %v6075
        %7405 = vmatpush1.bf16.msra.mxu0 %v6074
        %7406 = vmatprep.subr.bf16.mxu0 %v6107
        %7407 = vmatpush1.bf16.msra.mxu0 %v6106
        %7408 = vmatprep.subr.bf16.mxu0 %v6139
        %7409 = vmatpush1.bf16.msra.mxu0 %v6138
        %7410 = vmatprep.subr.bf16.mxu0 %v6171
        %7411 = vmatpush1.bf16.msra.mxu0 %v6170
        %7412 = vmatprep.subr.bf16.mxu0 %v6203
        %7413 = vmatpush1.bf16.msra.mxu0 %v6202
        %7414 = vmatprep.subr.bf16.mxu0 %v6235
        %7415 = vmatpush1.bf16.msra.mxu0 %v6234
        %7416 = vmatprep.subr.bf16.mxu0 %v6267
        %7417 = vmatpush1.bf16.msra.mxu0 %v6266
        %7418 = vmatprep.mubr.bf16.mxu0 %v6809
        %7419 = vmatmul.mubr.bf16.gmra.mrb[0].mxu0 %v6808
        %v7420 = vpop.f32.mrb[0].mxu0
        %v7421 = vadd.f32 %v7380, %v7420
        %v7422 = vpop.f32.mrb[0].mxu0
        %v7423 = vadd.f32 %v7382, %v7422
        %v7424 = vpop.f32.mrb[0].mxu0
        %v7425 = vpop.f32.mrb[0].mxu0
        %7426 = vdwg.mxu0
        %7427 = vmatprep.subr.bf16.mxu0 %v6299
        %7428 = vmatpush1.bf16.msra.mxu0 %v6298
        %7429 = vmatprep.subr.bf16.mxu0 %v6331
        %7430 = vmatpush1.bf16.msra.mxu0 %v6330
        %7431 = vmatprep.subr.bf16.mxu0 %v6363
        %7432 = vmatpush1.bf16.msra.mxu0 %v6362
        %7433 = vmatprep.subr.bf16.mxu0 %v6395
        %7434 = vmatpush1.bf16.msra.mxu0 %v6394
        %7435 = vmatprep.subr.bf16.mxu0 %v6427
        %7436 = vmatpush1.bf16.msra.mxu0 %v6426
        %7437 = vmatprep.subr.bf16.mxu0 %v6459
        %7438 = vmatpush1.bf16.msra.mxu0 %v6458
        %7439 = vmatprep.subr.bf16.mxu0 %v6491
        %7440 = vmatpush1.bf16.msra.mxu0 %v6490
        %7441 = vmatprep.subr.bf16.mxu0 %v6523
        %7442 = vmatpush1.bf16.msra.mxu0 %v6522
        %7443 = vmatprep.subr.bf16.mxu0 %v6555
        %7444 = vmatpush1.bf16.msra.mxu0 %v6554
        %7445 = vmatprep.subr.bf16.mxu0 %v6587
        %7446 = vmatpush1.bf16.msra.mxu0 %v6586
        %7447 = vmatprep.subr.bf16.mxu0 %v6619
        %7448 = vmatpush1.bf16.msra.mxu0 %v6618
        %7449 = vmatprep.subr.bf16.mxu0 %v6651
        %7450 = vmatpush1.bf16.msra.mxu0 %v6650
        %7451 = vmatprep.subr.bf16.mxu0 %v6683
        %7452 = vmatpush1.bf16.msra.mxu0 %v6682
        %7453 = vmatprep.subr.bf16.mxu0 %v6715
        %7454 = vmatpush1.bf16.msra.mxu0 %v6714
        %7455 = vmatprep.subr.bf16.mxu0 %v6747
        %7456 = vmatpush1.bf16.msra.mxu0 %v6746
        %7457 = vmatprep.subr.bf16.mxu0 %v6779
        %7458 = vmatpush1.bf16.msra.mxu0 %v6778
        %7459 = vmatprep.mubr.bf16.mxu0 %v6811
        %7460 = vmatmul.mubr.bf16.gmra.mrb[0].mxu0 %v6810
        %v7461 = vpop.f32.mrb[0].mxu0
        %v7462 = vadd.f32 %v7421, %v7461
        %v7463 = vpop.f32.mrb[0].mxu0
        %v7464 = vadd.f32 %v7423, %v7463
        %v7465 = vpop.f32.mrb[0].mxu0
        %v7466 = vpop.f32.mrb[0].mxu0
        %7467 = vdwg.mxu0
        %7468 = vmatprep.subr.bf16.mxu0 %v4765
        %7469 = vmatpush1.bf16.msra.mxu0 %v4764
        %7470 = vmatprep.subr.bf16.mxu0 %v4797
        %7471 = vmatpush1.bf16.msra.mxu0 %v4796
        %7472 = vmatprep.subr.bf16.mxu0 %v4829
        %7473 = vmatpush1.bf16.msra.mxu0 %v4828
        %7474 = vmatprep.subr.bf16.mxu0 %v4861
        %7475 = vmatpush1.bf16.msra.mxu0 %v4860
        %7476 = vmatprep.subr.bf16.mxu0 %v4893
        %7477 = vmatpush1.bf16.msra.mxu0 %v4892
        %7478 = vmatprep.subr.bf16.mxu0 %v4925
        %7479 = vmatpush1.bf16.msra.mxu0 %v4924
        %7480 = vmatprep.subr.bf16.mxu0 %v4957
        %7481 = vmatpush1.bf16.msra.mxu0 %v4956
        %7482 = vmatprep.subr.bf16.mxu0 %v4989
        %7483 = vmatpush1.bf16.msra.mxu0 %v4988
        %7484 = vmatprep.subr.bf16.mxu0 %v5021
        %7485 = vmatpush1.bf16.msra.mxu0 %v5020
        %7486 = vmatprep.subr.bf16.mxu0 %v5053
        %7487 = vmatpush1.bf16.msra.mxu0 %v5052
        %7488 = vmatprep.subr.bf16.mxu0 %v5085
        %7489 = vmatpush1.bf16.msra.mxu0 %v5084
        %7490 = vmatprep.subr.bf16.mxu0 %v5117
        %7491 = vmatpush1.bf16.msra.mxu0 %v5116
        %7492 = vmatprep.subr.bf16.mxu0 %v5149
        %7493 = vmatpush1.bf16.msra.mxu0 %v5148
        %7494 = vmatprep.subr.bf16.mxu0 %v5181
        %7495 = vmatpush1.bf16.msra.mxu0 %v5180
        %7496 = vmatprep.subr.bf16.mxu0 %v5213
        %7497 = vmatpush1.bf16.msra.mxu0 %v5212
        %7498 = vmatprep.subr.bf16.mxu0 %v5245
        %7499 = vmatpush1.bf16.msra.mxu0 %v5244
        %7500 = vmatprep.mubr.bf16.mxu0 %v6805
        %7501 = vmatmul.mubr.bf16.gmra.mrb[0].mxu0 %v6804
        %v7502 = vpop.f32.mrb[0].mxu0
        %v7503 = vadd.f32 0.0, %v7502
        %v7504 = vpop.f32.mrb[0].mxu0
        %v7505 = vadd.f32 0.0, %v7504
        %v7506 = vpop.f32.mrb[0].mxu0
        %v7507 = vpop.f32.mrb[0].mxu0
        %7508 = vdwg.mxu0
        %7509 = vmatprep.subr.bf16.mxu0 %v5277
        %7510 = vmatpush1.bf16.msra.mxu0 %v5276
        %7511 = vmatprep.subr.bf16.mxu0 %v5309
        %7512 = vmatpush1.bf16.msra.mxu0 %v5308
        %7513 = vmatprep.subr.bf16.mxu0 %v5341
        %7514 = vmatpush1.bf16.msra.mxu0 %v5340
        %7515 = vmatprep.subr.bf16.mxu0 %v5373
        %7516 = vmatpush1.bf16.msra.mxu0 %v5372
        %7517 = vmatprep.subr.bf16.mxu0 %v5405
        %7518 = vmatpush1.bf16.msra.mxu0 %v5404
        %7519 = vmatprep.subr.bf16.mxu0 %v5437
        %7520 = vmatpush1.bf16.msra.mxu0 %v5436
        %7521 = vmatprep.subr.bf16.mxu0 %v5469
        %7522 = vmatpush1.bf16.msra.mxu0 %v5468
        %7523 = vmatprep.subr.bf16.mxu0 %v5501
        %7524 = vmatpush1.bf16.msra.mxu0 %v5500
        %7525 = vmatprep.subr.bf16.mxu0 %v5533
        %7526 = vmatpush1.bf16.msra.mxu0 %v5532
        %7527 = vmatprep.subr.bf16.mxu0 %v5565
        %7528 = vmatpush1.bf16.msra.mxu0 %v5564
        %7529 = vmatprep.subr.bf16.mxu0 %v5597
        %7530 = vmatpush1.bf16.msra.mxu0 %v5596
        %7531 = vmatprep.subr.bf16.mxu0 %v5629
        %7532 = vmatpush1.bf16.msra.mxu0 %v5628
        %7533 = vmatprep.subr.bf16.mxu0 %v5661
        %7534 = vmatpush1.bf16.msra.mxu0 %v5660
        %7535 = vmatprep.subr.bf16.mxu0 %v5693
        %7536 = vmatpush1.bf16.msra.mxu0 %v5692
        %7537 = vmatprep.subr.bf16.mxu0 %v5725
        %7538 = vmatpush1.bf16.msra.mxu0 %v5724
        %7539 = vmatprep.subr.bf16.mxu0 %v5757
        %7540 = vmatpush1.bf16.msra.mxu0 %v5756
        %7541 = vmatprep.mubr.bf16.mxu0 %v6807
        %7542 = vmatmul.mubr.bf16.gmra.mrb[0].mxu0 %v6806
        %v7543 = vpop.f32.mrb[0].mxu0
        %v7544 = vadd.f32 %v7503, %v7543
        %v7545 = vpop.f32.mrb[0].mxu0
        %v7546 = vadd.f32 %v7505, %v7545
        %v7547 = vpop.f32.mrb[0].mxu0
        %v7548 = vpop.f32.mrb[0].mxu0
        %7549 = vdwg.mxu0
        %7550 = vmatprep.subr.bf16.mxu0 %v5789
        %7551 = vmatpush1.bf16.msra.mxu0 %v5788
        %7552 = vmatprep.subr.bf16.mxu0 %v5821
        %7553 = vmatpush1.bf16.msra.mxu0 %v5820
        %7554 = vmatprep.subr.bf16.mxu0 %v5853
        %7555 = vmatpush1.bf16.msra.mxu0 %v5852
        %7556 = vmatprep.subr.bf16.mxu0 %v5885
        %7557 = vmatpush1.bf16.msra.mxu0 %v5884
        %7558 = vmatprep.subr.bf16.mxu0 %v5917
        %7559 = vmatpush1.bf16.msra.mxu0 %v5916
        %7560 = vmatprep.subr.bf16.mxu0 %v5949
        %7561 = vmatpush1.bf16.msra.mxu0 %v5948
        %7562 = vmatprep.subr.bf16.mxu0 %v5981
        %7563 = vmatpush1.bf16.msra.mxu0 %v5980
        %7564 = vmatprep.subr.bf16.mxu0 %v6013
        %7565 = vmatpush1.bf16.msra.mxu0 %v6012
        %7566 = vmatprep.subr.bf16.mxu0 %v6045
        %7567 = vmatpush1.bf16.msra.mxu0 %v6044
        %7568 = vmatprep.subr.bf16.mxu0 %v6077
        %7569 = vmatpush1.bf16.msra.mxu0 %v6076
        %7570 = vmatprep.subr.bf16.mxu0 %v6109
        %7571 = vmatpush1.bf16.msra.mxu0 %v6108
        %7572 = vmatprep.subr.bf16.mxu0 %v6141
        %7573 = vmatpush1.bf16.msra.mxu0 %v6140
        %7574 = vmatprep.subr.bf16.mxu0 %v6173
        %7575 = vmatpush1.bf16.msra.mxu0 %v6172
        %7576 = vmatprep.subr.bf16.mxu0 %v6205
        %7577 = vmatpush1.bf16.msra.mxu0 %v6204
        %7578 = vmatprep.subr.bf16.mxu0 %v6237
        %7579 = vmatpush1.bf16.msra.mxu0 %v6236
        %7580 = vmatprep.subr.bf16.mxu0 %v6269
        %7581 = vmatpush1.bf16.msra.mxu0 %v6268
        %7582 = vmatprep.mubr.bf16.mxu0 %v6809
        %7583 = vmatmul.mubr.bf16.gmra.mrb[0].mxu0 %v6808
        %v7584 = vpop.f32.mrb[0].mxu0
        %v7585 = vadd.f32 %v7544, %v7584
        %v7586 = vpop.f32.mrb[0].mxu0
        %v7587 = vadd.f32 %v7546, %v7586
        %v7588 = vpop.f32.mrb[0].mxu0
        %v7589 = vpop.f32.mrb[0].mxu0
        %7590 = vdwg.mxu0
        %7591 = vmatprep.subr.bf16.mxu0 %v6301
        %7592 = vmatpush1.bf16.msra.mxu0 %v6300
        %7593 = vmatprep.subr.bf16.mxu0 %v6333
        %7594 = vmatpush1.bf16.msra.mxu0 %v6332
        %7595 = vmatprep.subr.bf16.mxu0 %v6365
        %7596 = vmatpush1.bf16.msra.mxu0 %v6364
        %7597 = vmatprep.subr.bf16.mxu0 %v6397
        %7598 = vmatpush1.bf16.msra.mxu0 %v6396
        %7599 = vmatprep.subr.bf16.mxu0 %v6429
        %7600 = vmatpush1.bf16.msra.mxu0 %v6428
        %7601 = vmatprep.subr.bf16.mxu0 %v6461
        %7602 = vmatpush1.bf16.msra.mxu0 %v6460
        %7603 = vmatprep.subr.bf16.mxu0 %v6493
        %7604 = vmatpush1.bf16.msra.mxu0 %v6492
        %7605 = vmatprep.subr.bf16.mxu0 %v6525
        %7606 = vmatpush1.bf16.msra.mxu0 %v6524
        %7607 = vmatprep.subr.bf16.mxu0 %v6557
        %7608 = vmatpush1.bf16.msra.mxu0 %v6556
        %7609 = vmatprep.subr.bf16.mxu0 %v6589
        %7610 = vmatpush1.bf16.msra.mxu0 %v6588
        %7611 = vmatprep.subr.bf16.mxu0 %v6621
        %7612 = vmatpush1.bf16.msra.mxu0 %v6620
        %7613 = vmatprep.subr.bf16.mxu0 %v6653
        %7614 = vmatpush1.bf16.msra.mxu0 %v6652
        %7615 = vmatprep.subr.bf16.mxu0 %v6685
        %7616 = vmatpush1.bf16.msra.mxu0 %v6684
        %7617 = vmatprep.subr.bf16.mxu0 %v6717
        %7618 = vmatpush1.bf16.msra.mxu0 %v6716
        %7619 = vmatprep.subr.bf16.mxu0 %v6749
        %7620 = vmatpush1.bf16.msra.mxu0 %v6748
        %7621 = vmatprep.subr.bf16.mxu0 %v6781
        %7622 = vmatpush1.bf16.msra.mxu0 %v6780
        %7623 = vmatprep.mubr.bf16.mxu0 %v6811
        %7624 = vmatmul.mubr.bf16.gmra.mrb[0].mxu0 %v6810
        %v7625 = vpop.f32.mrb[0].mxu0
        %v7626 = vadd.f32 %v7585, %v7625
        %v7627 = vpop.f32.mrb[0].mxu0
        %v7628 = vadd.f32 %v7587, %v7627
        %v7629 = vpop.f32.mrb[0].mxu0
        %v7630 = vpop.f32.mrb[0].mxu0
        %7631 = vdwg.mxu0
        %7632 = vmatprep.subr.bf16.mxu0 %v4767
        %7633 = vmatpush1.bf16.msra.mxu0 %v4766
        %7634 = vmatprep.subr.bf16.mxu0 %v4799
        %7635 = vmatpush1.bf16.msra.mxu0 %v4798
        %7636 = vmatprep.subr.bf16.mxu0 %v4831
        %7637 = vmatpush1.bf16.msra.mxu0 %v4830
        %7638 = vmatprep.subr.bf16.mxu0 %v4863
        %7639 = vmatpush1.bf16.msra.mxu0 %v4862
        %7640 = vmatprep.subr.bf16.mxu0 %v4895
        %7641 = vmatpush1.bf16.msra.mxu0 %v4894
        %7642 = vmatprep.subr.bf16.mxu0 %v4927
        %7643 = vmatpush1.bf16.msra.mxu0 %v4926
        %7644 = vmatprep.subr.bf16.mxu0 %v4959
        %7645 = vmatpush1.bf16.msra.mxu0 %v4958
        %7646 = vmatprep.subr.bf16.mxu0 %v4991
        %7647 = vmatpush1.bf16.msra.mxu0 %v4990
        %7648 = vmatprep.subr.bf16.mxu0 %v5023
        %7649 = vmatpush1.bf16.msra.mxu0 %v5022
        %7650 = vmatprep.subr.bf16.mxu0 %v5055
        %7651 = vmatpush1.bf16.msra.mxu0 %v5054
        %7652 = vmatprep.subr.bf16.mxu0 %v5087
        %7653 = vmatpush1.bf16.msra.mxu0 %v5086
        %7654 = vmatprep.subr.bf16.mxu0 %v5119
        %7655 = vmatpush1.bf16.msra.mxu0 %v5118
        %7656 = vmatprep.subr.bf16.mxu0 %v5151
        %7657 = vmatpush1.bf16.msra.mxu0 %v5150
        %7658 = vmatprep.subr.bf16.mxu0 %v5183
        %7659 = vmatpush1.bf16.msra.mxu0 %v5182
        %7660 = vmatprep.subr.bf16.mxu0 %v5215
        %7661 = vmatpush1.bf16.msra.mxu0 %v5214
        %7662 = vmatprep.subr.bf16.mxu0 %v5247
        %7663 = vmatpush1.bf16.msra.mxu0 %v5246
        %7664 = vmatprep.mubr.bf16.mxu0 %v6805
        %7665 = vmatmul.mubr.bf16.gmra.mrb[0].mxu0 %v6804
        %v7666 = vpop.f32.mrb[0].mxu0
        %v7667 = vadd.f32 0.0, %v7666
        %v7668 = vpop.f32.mrb[0].mxu0
        %v7669 = vadd.f32 0.0, %v7668
        %v7670 = vpop.f32.mrb[0].mxu0
        %v7671 = vpop.f32.mrb[0].mxu0
        %7672 = vdwg.mxu0
        %7673 = vmatprep.subr.bf16.mxu0 %v5279
        %7674 = vmatpush1.bf16.msra.mxu0 %v5278
        %7675 = vmatprep.subr.bf16.mxu0 %v5311
        %7676 = vmatpush1.bf16.msra.mxu0 %v5310
        %7677 = vmatprep.subr.bf16.mxu0 %v5343
        %7678 = vmatpush1.bf16.msra.mxu0 %v5342
        %7679 = vmatprep.subr.bf16.mxu0 %v5375
        %7680 = vmatpush1.bf16.msra.mxu0 %v5374
        %7681 = vmatprep.subr.bf16.mxu0 %v5407
        %7682 = vmatpush1.bf16.msra.mxu0 %v5406
        %7683 = vmatprep.subr.bf16.mxu0 %v5439
        %7684 = vmatpush1.bf16.msra.mxu0 %v5438
        %7685 = vmatprep.subr.bf16.mxu0 %v5471
        %7686 = vmatpush1.bf16.msra.mxu0 %v5470
        %7687 = vmatprep.subr.bf16.mxu0 %v5503
        %7688 = vmatpush1.bf16.msra.mxu0 %v5502
        %7689 = vmatprep.subr.bf16.mxu0 %v5535
        %7690 = vmatpush1.bf16.msra.mxu0 %v5534
        %7691 = vmatprep.subr.bf16.mxu0 %v5567
        %7692 = vmatpush1.bf16.msra.mxu0 %v5566
        %7693 = vmatprep.subr.bf16.mxu0 %v5599
        %7694 = vmatpush1.bf16.msra.mxu0 %v5598
        %7695 = vmatprep.subr.bf16.mxu0 %v5631
        %7696 = vmatpush1.bf16.msra.mxu0 %v5630
        %7697 = vmatprep.subr.bf16.mxu0 %v5663
        %7698 = vmatpush1.bf16.msra.mxu0 %v5662
        %7699 = vmatprep.subr.bf16.mxu0 %v5695
        %7700 = vmatpush1.bf16.msra.mxu0 %v5694
        %7701 = vmatprep.subr.bf16.mxu0 %v5727
        %7702 = vmatpush1.bf16.msra.mxu0 %v5726
        %7703 = vmatprep.subr.bf16.mxu0 %v5759
        %7704 = vmatpush1.bf16.msra.mxu0 %v5758
        %7705 = vmatprep.mubr.bf16.mxu0 %v6807
        %7706 = vmatmul.mubr.bf16.gmra.mrb[0].mxu0 %v6806
        %v7707 = vpop.f32.mrb[0].mxu0
        %v7708 = vadd.f32 %v7667, %v7707
        %v7709 = vpop.f32.mrb[0].mxu0
        %v7710 = vadd.f32 %v7669, %v7709
        %v7711 = vpop.f32.mrb[0].mxu0
        %v7712 = vpop.f32.mrb[0].mxu0
        %7713 = vdwg.mxu0
        %7714 = vmatprep.subr.bf16.mxu0 %v5791
        %7715 = vmatpush1.bf16.msra.mxu0 %v5790
        %7716 = vmatprep.subr.bf16.mxu0 %v5823
        %7717 = vmatpush1.bf16.msra.mxu0 %v5822
        %7718 = vmatprep.subr.bf16.mxu0 %v5855
        %7719 = vmatpush1.bf16.msra.mxu0 %v5854
        %7720 = vmatprep.subr.bf16.mxu0 %v5887
        %7721 = vmatpush1.bf16.msra.mxu0 %v5886
        %7722 = vmatprep.subr.bf16.mxu0 %v5919
        %7723 = vmatpush1.bf16.msra.mxu0 %v5918
        %7724 = vmatprep.subr.bf16.mxu0 %v5951
        %7725 = vmatpush1.bf16.msra.mxu0 %v5950
        %7726 = vmatprep.subr.bf16.mxu0 %v5983
        %7727 = vmatpush1.bf16.msra.mxu0 %v5982
        %7728 = vmatprep.subr.bf16.mxu0 %v6015
        %7729 = vmatpush1.bf16.msra.mxu0 %v6014
        %7730 = vmatprep.subr.bf16.mxu0 %v6047
        %7731 = vmatpush1.bf16.msra.mxu0 %v6046
        %7732 = vmatprep.subr.bf16.mxu0 %v6079
        %7733 = vmatpush1.bf16.msra.mxu0 %v6078
        %7734 = vmatprep.subr.bf16.mxu0 %v6111
        %7735 = vmatpush1.bf16.msra.mxu0 %v6110
        %7736 = vmatprep.subr.bf16.mxu0 %v6143
        %7737 = vmatpush1.bf16.msra.mxu0 %v6142
        %7738 = vmatprep.subr.bf16.mxu0 %v6175
        %7739 = vmatpush1.bf16.msra.mxu0 %v6174
        %7740 = vmatprep.subr.bf16.mxu0 %v6207
        %7741 = vmatpush1.bf16.msra.mxu0 %v6206
        %7742 = vmatprep.subr.bf16.mxu0 %v6239
        %7743 = vmatpush1.bf16.msra.mxu0 %v6238
        %7744 = vmatprep.subr.bf16.mxu0 %v6271
        %7745 = vmatpush1.bf16.msra.mxu0 %v6270
        %7746 = vmatprep.mubr.bf16.mxu0 %v6809
        %7747 = vmatmul.mubr.bf16.gmra.mrb[0].mxu0 %v6808
        %v7748 = vpop.f32.mrb[0].mxu0
        %v7749 = vadd.f32 %v7708, %v7748
        %v7750 = vpop.f32.mrb[0].mxu0
        %v7751 = vadd.f32 %v7710, %v7750
        %v7752 = vpop.f32.mrb[0].mxu0
        %v7753 = vpop.f32.mrb[0].mxu0
        %7754 = vdwg.mxu0
        %7755 = vmatprep.subr.bf16.mxu0 %v6303
        %7756 = vmatpush1.bf16.msra.mxu0 %v6302
        %7757 = vmatprep.subr.bf16.mxu0 %v6335
        %7758 = vmatpush1.bf16.msra.mxu0 %v6334
        %7759 = vmatprep.subr.bf16.mxu0 %v6367
        %7760 = vmatpush1.bf16.msra.mxu0 %v6366
        %7761 = vmatprep.subr.bf16.mxu0 %v6399
        %7762 = vmatpush1.bf16.msra.mxu0 %v6398
        %7763 = vmatprep.subr.bf16.mxu0 %v6431
        %7764 = vmatpush1.bf16.msra.mxu0 %v6430
        %7765 = vmatprep.subr.bf16.mxu0 %v6463
        %7766 = vmatpush1.bf16.msra.mxu0 %v6462
        %7767 = vmatprep.subr.bf16.mxu0 %v6495
        %7768 = vmatpush1.bf16.msra.mxu0 %v6494
        %7769 = vmatprep.subr.bf16.mxu0 %v6527
        %7770 = vmatpush1.bf16.msra.mxu0 %v6526
        %7771 = vmatprep.subr.bf16.mxu0 %v6559
        %7772 = vmatpush1.bf16.msra.mxu0 %v6558
        %7773 = vmatprep.subr.bf16.mxu0 %v6591
        %7774 = vmatpush1.bf16.msra.mxu0 %v6590
        %7775 = vmatprep.subr.bf16.mxu0 %v6623
        %7776 = vmatpush1.bf16.msra.mxu0 %v6622
        %7777 = vmatprep.subr.bf16.mxu0 %v6655
        %7778 = vmatpush1.bf16.msra.mxu0 %v6654
        %7779 = vmatprep.subr.bf16.mxu0 %v6687
        %7780 = vmatpush1.bf16.msra.mxu0 %v6686
        %7781 = vmatprep.subr.bf16.mxu0 %v6719
        %7782 = vmatpush1.bf16.msra.mxu0 %v6718
        %7783 = vmatprep.subr.bf16.mxu0 %v6751
        %7784 = vmatpush1.bf16.msra.mxu0 %v6750
        %7785 = vmatprep.subr.bf16.mxu0 %v6783
        %7786 = vmatpush1.bf16.msra.mxu0 %v6782
        %7787 = vmatprep.mubr.bf16.mxu0 %v6811
        %7788 = vmatmul.mubr.bf16.gmra.mrb[0].mxu0 %v6810
        %v7789 = vpop.f32.mrb[0].mxu0
        %v7790 = vadd.f32 %v7749, %v7789
        %v7791 = vpop.f32.mrb[0].mxu0
        %v7792 = vadd.f32 %v7751, %v7791
        %v7793 = vpop.f32.mrb[0].mxu0
        %v7794 = vpop.f32.mrb[0].mxu0
        %7795 = vdwg.mxu0
        %7796 = vmatprep.subr.bf16.mxu0 %v4769
        %7797 = vmatpush1.bf16.msra.mxu0 %v4768
        %7798 = vmatprep.subr.bf16.mxu0 %v4801
        %7799 = vmatpush1.bf16.msra.mxu0 %v4800
        %7800 = vmatprep.subr.bf16.mxu0 %v4833
        %7801 = vmatpush1.bf16.msra.mxu0 %v4832
        %7802 = vmatprep.subr.bf16.mxu0 %v4865
        %7803 = vmatpush1.bf16.msra.mxu0 %v4864
        %7804 = vmatprep.subr.bf16.mxu0 %v4897
        %7805 = vmatpush1.bf16.msra.mxu0 %v4896
        %7806 = vmatprep.subr.bf16.mxu0 %v4929
        %7807 = vmatpush1.bf16.msra.mxu0 %v4928
        %7808 = vmatprep.subr.bf16.mxu0 %v4961
        %7809 = vmatpush1.bf16.msra.mxu0 %v4960
        %7810 = vmatprep.subr.bf16.mxu0 %v4993
        %7811 = vmatpush1.bf16.msra.mxu0 %v4992
        %7812 = vmatprep.subr.bf16.mxu0 %v5025
        %7813 = vmatpush1.bf16.msra.mxu0 %v5024
        %7814 = vmatprep.subr.bf16.mxu0 %v5057
        %7815 = vmatpush1.bf16.msra.mxu0 %v5056
        %7816 = vmatprep.subr.bf16.mxu0 %v5089
        %7817 = vmatpush1.bf16.msra.mxu0 %v5088
        %7818 = vmatprep.subr.bf16.mxu0 %v5121
        %7819 = vmatpush1.bf16.msra.mxu0 %v5120
        %7820 = vmatprep.subr.bf16.mxu0 %v5153
        %7821 = vmatpush1.bf16.msra.mxu0 %v5152
        %7822 = vmatprep.subr.bf16.mxu0 %v5185
        %7823 = vmatpush1.bf16.msra.mxu0 %v5184
        %7824 = vmatprep.subr.bf16.mxu0 %v5217
        %7825 = vmatpush1.bf16.msra.mxu0 %v5216
        %7826 = vmatprep.subr.bf16.mxu0 %v5249
        %7827 = vmatpush1.bf16.msra.mxu0 %v5248
        %7828 = vmatprep.mubr.bf16.mxu0 %v6805
        %7829 = vmatmul.mubr.bf16.gmra.mrb[0].mxu0 %v6804
        %v7830 = vpop.f32.mrb[0].mxu0
        %v7831 = vadd.f32 0.0, %v7830
        %v7832 = vpop.f32.mrb[0].mxu0
        %v7833 = vadd.f32 0.0, %v7832
        %v7834 = vpop.f32.mrb[0].mxu0
        %v7835 = vpop.f32.mrb[0].mxu0
        %7836 = vdwg.mxu0
        %7837 = vmatprep.subr.bf16.mxu0 %v5281
        %7838 = vmatpush1.bf16.msra.mxu0 %v5280
        %7839 = vmatprep.subr.bf16.mxu0 %v5313
        %7840 = vmatpush1.bf16.msra.mxu0 %v5312
        %7841 = vmatprep.subr.bf16.mxu0 %v5345
        %7842 = vmatpush1.bf16.msra.mxu0 %v5344
        %7843 = vmatprep.subr.bf16.mxu0 %v5377
        %7844 = vmatpush1.bf16.msra.mxu0 %v5376
        %7845 = vmatprep.subr.bf16.mxu0 %v5409
        %7846 = vmatpush1.bf16.msra.mxu0 %v5408
        %7847 = vmatprep.subr.bf16.mxu0 %v5441
        %7848 = vmatpush1.bf16.msra.mxu0 %v5440
        %7849 = vmatprep.subr.bf16.mxu0 %v5473
        %7850 = vmatpush1.bf16.msra.mxu0 %v5472
        %7851 = vmatprep.subr.bf16.mxu0 %v5505
        %7852 = vmatpush1.bf16.msra.mxu0 %v5504
        %7853 = vmatprep.subr.bf16.mxu0 %v5537
        %7854 = vmatpush1.bf16.msra.mxu0 %v5536
        %7855 = vmatprep.subr.bf16.mxu0 %v5569
        %7856 = vmatpush1.bf16.msra.mxu0 %v5568
        %7857 = vmatprep.subr.bf16.mxu0 %v5601
        %7858 = vmatpush1.bf16.msra.mxu0 %v5600
        %7859 = vmatprep.subr.bf16.mxu0 %v5633
        %7860 = vmatpush1.bf16.msra.mxu0 %v5632
        %7861 = vmatprep.subr.bf16.mxu0 %v5665
        %7862 = vmatpush1.bf16.msra.mxu0 %v5664
        %7863 = vmatprep.subr.bf16.mxu0 %v5697
        %7864 = vmatpush1.bf16.msra.mxu0 %v5696
        %7865 = vmatprep.subr.bf16.mxu0 %v5729
        %7866 = vmatpush1.bf16.msra.mxu0 %v5728
        %7867 = vmatprep.subr.bf16.mxu0 %v5761
        %7868 = vmatpush1.bf16.msra.mxu0 %v5760
        %7869 = vmatprep.mubr.bf16.mxu0 %v6807
        %7870 = vmatmul.mubr.bf16.gmra.mrb[0].mxu0 %v6806
        %v7871 = vpop.f32.mrb[0].mxu0
        %v7872 = vadd.f32 %v7831, %v7871
        %v7873 = vpop.f32.mrb[0].mxu0
        %v7874 = vadd.f32 %v7833, %v7873
        %v7875 = vpop.f32.mrb[0].mxu0
        %v7876 = vpop.f32.mrb[0].mxu0
        %7877 = vdwg.mxu0
        %7878 = vmatprep.subr.bf16.mxu0 %v5793
        %7879 = vmatpush1.bf16.msra.mxu0 %v5792
        %7880 = vmatprep.subr.bf16.mxu0 %v5825
        %7881 = vmatpush1.bf16.msra.mxu0 %v5824
        %7882 = vmatprep.subr.bf16.mxu0 %v5857
        %7883 = vmatpush1.bf16.msra.mxu0 %v5856
        %7884 = vmatprep.subr.bf16.mxu0 %v5889
        %7885 = vmatpush1.bf16.msra.mxu0 %v5888
        %7886 = vmatprep.subr.bf16.mxu0 %v5921
        %7887 = vmatpush1.bf16.msra.mxu0 %v5920
        %7888 = vmatprep.subr.bf16.mxu0 %v5953
        %7889 = vmatpush1.bf16.msra.mxu0 %v5952
        %7890 = vmatprep.subr.bf16.mxu0 %v5985
        %7891 = vmatpush1.bf16.msra.mxu0 %v5984
        %7892 = vmatprep.subr.bf16.mxu0 %v6017
        %7893 = vmatpush1.bf16.msra.mxu0 %v6016
        %7894 = vmatprep.subr.bf16.mxu0 %v6049
        %7895 = vmatpush1.bf16.msra.mxu0 %v6048
        %7896 = vmatprep.subr.bf16.mxu0 %v6081
        %7897 = vmatpush1.bf16.msra.mxu0 %v6080
        %7898 = vmatprep.subr.bf16.mxu0 %v6113
        %7899 = vmatpush1.bf16.msra.mxu0 %v6112
        %7900 = vmatprep.subr.bf16.mxu0 %v6145
        %7901 = vmatpush1.bf16.msra.mxu0 %v6144
        %7902 = vmatprep.subr.bf16.mxu0 %v6177
        %7903 = vmatpush1.bf16.msra.mxu0 %v6176
        %7904 = vmatprep.subr.bf16.mxu0 %v6209
        %7905 = vmatpush1.bf16.msra.mxu0 %v6208
        %7906 = vmatprep.subr.bf16.mxu0 %v6241
        %7907 = vmatpush1.bf16.msra.mxu0 %v6240
        %7908 = vmatprep.subr.bf16.mxu0 %v6273
        %7909 = vmatpush1.bf16.msra.mxu0 %v6272
        %7910 = vmatprep.mubr.bf16.mxu0 %v6809
        %7911 = vmatmul.mubr.bf16.gmra.mrb[0].mxu0 %v6808
        %v7912 = vpop.f32.mrb[0].mxu0
        %v7913 = vadd.f32 %v7872, %v7912
        %v7914 = vpop.f32.mrb[0].mxu0
        %v7915 = vadd.f32 %v7874, %v7914
        %v7916 = vpop.f32.mrb[0].mxu0
        %v7917 = vpop.f32.mrb[0].mxu0
        %7918 = vdwg.mxu0
        %7919 = vmatprep.subr.bf16.mxu0 %v6305
        %7920 = vmatpush1.bf16.msra.mxu0 %v6304
        %7921 = vmatprep.subr.bf16.mxu0 %v6337
        %7922 = vmatpush1.bf16.msra.mxu0 %v6336
        %7923 = vmatprep.subr.bf16.mxu0 %v6369
        %7924 = vmatpush1.bf16.msra.mxu0 %v6368
        %7925 = vmatprep.subr.bf16.mxu0 %v6401
        %7926 = vmatpush1.bf16.msra.mxu0 %v6400
        %7927 = vmatprep.subr.bf16.mxu0 %v6433
        %7928 = vmatpush1.bf16.msra.mxu0 %v6432
        %7929 = vmatprep.subr.bf16.mxu0 %v6465
        %7930 = vmatpush1.bf16.msra.mxu0 %v6464
        %7931 = vmatprep.subr.bf16.mxu0 %v6497
        %7932 = vmatpush1.bf16.msra.mxu0 %v6496
        %7933 = vmatprep.subr.bf16.mxu0 %v6529
        %7934 = vmatpush1.bf16.msra.mxu0 %v6528
        %7935 = vmatprep.subr.bf16.mxu0 %v6561
        %7936 = vmatpush1.bf16.msra.mxu0 %v6560
        %7937 = vmatprep.subr.bf16.mxu0 %v6593
        %7938 = vmatpush1.bf16.msra.mxu0 %v6592
        %7939 = vmatprep.subr.bf16.mxu0 %v6625
        %7940 = vmatpush1.bf16.msra.mxu0 %v6624
        %7941 = vmatprep.subr.bf16.mxu0 %v6657
        %7942 = vmatpush1.bf16.msra.mxu0 %v6656
        %7943 = vmatprep.subr.bf16.mxu0 %v6689
        %7944 = vmatpush1.bf16.msra.mxu0 %v6688
        %7945 = vmatprep.subr.bf16.mxu0 %v6721
        %7946 = vmatpush1.bf16.msra.mxu0 %v6720
        %7947 = vmatprep.subr.bf16.mxu0 %v6753
        %7948 = vmatpush1.bf16.msra.mxu0 %v6752
        %7949 = vmatprep.subr.bf16.mxu0 %v6785
        %7950 = vmatpush1.bf16.msra.mxu0 %v6784
        %7951 = vmatprep.mubr.bf16.mxu0 %v6811
        %7952 = vmatmul.mubr.bf16.gmra.mrb[0].mxu0 %v6810
        %v7953 = vpop.f32.mrb[0].mxu0
        %v7954 = vadd.f32 %v7913, %v7953
        %v7955 = vpop.f32.mrb[0].mxu0
        %v7956 = vadd.f32 %v7915, %v7955
        %v7957 = vpop.f32.mrb[0].mxu0
        %v7958 = vpop.f32.mrb[0].mxu0
        %7959 = vdwg.mxu0
        %7960 = vmatprep.subr.bf16.mxu0 %v4771
        %7961 = vmatpush1.bf16.msra.mxu0 %v4770
        %7962 = vmatprep.subr.bf16.mxu0 %v4803
        %7963 = vmatpush1.bf16.msra.mxu0 %v4802
        %7964 = vmatprep.subr.bf16.mxu0 %v4835
        %7965 = vmatpush1.bf16.msra.mxu0 %v4834
        %7966 = vmatprep.subr.bf16.mxu0 %v4867
        %7967 = vmatpush1.bf16.msra.mxu0 %v4866
        %7968 = vmatprep.subr.bf16.mxu0 %v4899
        %7969 = vmatpush1.bf16.msra.mxu0 %v4898
        %7970 = vmatprep.subr.bf16.mxu0 %v4931
        %7971 = vmatpush1.bf16.msra.mxu0 %v4930
        %7972 = vmatprep.subr.bf16.mxu0 %v4963
        %7973 = vmatpush1.bf16.msra.mxu0 %v4962
        %7974 = vmatprep.subr.bf16.mxu0 %v4995
        %7975 = vmatpush1.bf16.msra.mxu0 %v4994
        %7976 = vmatprep.subr.bf16.mxu0 %v5027
        %7977 = vmatpush1.bf16.msra.mxu0 %v5026
        %7978 = vmatprep.subr.bf16.mxu0 %v5059
        %7979 = vmatpush1.bf16.msra.mxu0 %v5058
        %7980 = vmatprep.subr.bf16.mxu0 %v5091
        %7981 = vmatpush1.bf16.msra.mxu0 %v5090
        %7982 = vmatprep.subr.bf16.mxu0 %v5123
        %7983 = vmatpush1.bf16.msra.mxu0 %v5122
        %7984 = vmatprep.subr.bf16.mxu0 %v5155
        %7985 = vmatpush1.bf16.msra.mxu0 %v5154
        %7986 = vmatprep.subr.bf16.mxu0 %v5187
        %7987 = vmatpush1.bf16.msra.mxu0 %v5186
        %7988 = vmatprep.subr.bf16.mxu0 %v5219
        %7989 = vmatpush1.bf16.msra.mxu0 %v5218
        %7990 = vmatprep.subr.bf16.mxu0 %v5251
        %7991 = vmatpush1.bf16.msra.mxu0 %v5250
        %7992 = vmatprep.mubr.bf16.mxu0 %v6805
        %7993 = vmatmul.mubr.bf16.gmra.mrb[0].mxu0 %v6804
        %v7994 = vpop.f32.mrb[0].mxu0
        %v7995 = vadd.f32 0.0, %v7994
        %v7996 = vpop.f32.mrb[0].mxu0
        %v7997 = vadd.f32 0.0, %v7996
        %v7998 = vpop.f32.mrb[0].mxu0
        %v7999 = vpop.f32.mrb[0].mxu0
        %8000 = vdwg.mxu0
        %8001 = vmatprep.subr.bf16.mxu0 %v5283
        %8002 = vmatpush1.bf16.msra.mxu0 %v5282
        %8003 = vmatprep.subr.bf16.mxu0 %v5315
        %8004 = vmatpush1.bf16.msra.mxu0 %v5314
        %8005 = vmatprep.subr.bf16.mxu0 %v5347
        %8006 = vmatpush1.bf16.msra.mxu0 %v5346
        %8007 = vmatprep.subr.bf16.mxu0 %v5379
        %8008 = vmatpush1.bf16.msra.mxu0 %v5378
        %8009 = vmatprep.subr.bf16.mxu0 %v5411
        %8010 = vmatpush1.bf16.msra.mxu0 %v5410
        %8011 = vmatprep.subr.bf16.mxu0 %v5443
        %8012 = vmatpush1.bf16.msra.mxu0 %v5442
        %8013 = vmatprep.subr.bf16.mxu0 %v5475
        %8014 = vmatpush1.bf16.msra.mxu0 %v5474
        %8015 = vmatprep.subr.bf16.mxu0 %v5507
        %8016 = vmatpush1.bf16.msra.mxu0 %v5506
        %8017 = vmatprep.subr.bf16.mxu0 %v5539
        %8018 = vmatpush1.bf16.msra.mxu0 %v5538
        %8019 = vmatprep.subr.bf16.mxu0 %v5571
        %8020 = vmatpush1.bf16.msra.mxu0 %v5570
        %8021 = vmatprep.subr.bf16.mxu0 %v5603
        %8022 = vmatpush1.bf16.msra.mxu0 %v5602
        %8023 = vmatprep.subr.bf16.mxu0 %v5635
        %8024 = vmatpush1.bf16.msra.mxu0 %v5634
        %8025 = vmatprep.subr.bf16.mxu0 %v5667
        %8026 = vmatpush1.bf16.msra.mxu0 %v5666
        %8027 = vmatprep.subr.bf16.mxu0 %v5699
        %8028 = vmatpush1.bf16.msra.mxu0 %v5698
        %8029 = vmatprep.subr.bf16.mxu0 %v5731
        %8030 = vmatpush1.bf16.msra.mxu0 %v5730
        %8031 = vmatprep.subr.bf16.mxu0 %v5763
        %8032 = vmatpush1.bf16.msra.mxu0 %v5762
        %8033 = vmatprep.mubr.bf16.mxu0 %v6807
        %8034 = vmatmul.mubr.bf16.gmra.mrb[0].mxu0 %v6806
        %v8035 = vpop.f32.mrb[0].mxu0
        %v8036 = vadd.f32 %v7995, %v8035
        %v8037 = vpop.f32.mrb[0].mxu0
        %v8038 = vadd.f32 %v7997, %v8037
        %v8039 = vpop.f32.mrb[0].mxu0
        %v8040 = vpop.f32.mrb[0].mxu0
        %8041 = vdwg.mxu0
        %8042 = vmatprep.subr.bf16.mxu0 %v5795
        %8043 = vmatpush1.bf16.msra.mxu0 %v5794
        %8044 = vmatprep.subr.bf16.mxu0 %v5827
        %8045 = vmatpush1.bf16.msra.mxu0 %v5826
        %8046 = vmatprep.subr.bf16.mxu0 %v5859
        %8047 = vmatpush1.bf16.msra.mxu0 %v5858
        %8048 = vmatprep.subr.bf16.mxu0 %v5891
        %8049 = vmatpush1.bf16.msra.mxu0 %v5890
        %8050 = vmatprep.subr.bf16.mxu0 %v5923
        %8051 = vmatpush1.bf16.msra.mxu0 %v5922
        %8052 = vmatprep.subr.bf16.mxu0 %v5955
        %8053 = vmatpush1.bf16.msra.mxu0 %v5954
        %8054 = vmatprep.subr.bf16.mxu0 %v5987
        %8055 = vmatpush1.bf16.msra.mxu0 %v5986
        %8056 = vmatprep.subr.bf16.mxu0 %v6019
        %8057 = vmatpush1.bf16.msra.mxu0 %v6018
        %8058 = vmatprep.subr.bf16.mxu0 %v6051
        %8059 = vmatpush1.bf16.msra.mxu0 %v6050
        %8060 = vmatprep.subr.bf16.mxu0 %v6083
        %8061 = vmatpush1.bf16.msra.mxu0 %v6082
        %8062 = vmatprep.subr.bf16.mxu0 %v6115
        %8063 = vmatpush1.bf16.msra.mxu0 %v6114
        %8064 = vmatprep.subr.bf16.mxu0 %v6147
        %8065 = vmatpush1.bf16.msra.mxu0 %v6146
        %8066 = vmatprep.subr.bf16.mxu0 %v6179
        %8067 = vmatpush1.bf16.msra.mxu0 %v6178
        %8068 = vmatprep.subr.bf16.mxu0 %v6211
        %8069 = vmatpush1.bf16.msra.mxu0 %v6210
        %8070 = vmatprep.subr.bf16.mxu0 %v6243
        %8071 = vmatpush1.bf16.msra.mxu0 %v6242
        %8072 = vmatprep.subr.bf16.mxu0 %v6275
        %8073 = vmatpush1.bf16.msra.mxu0 %v6274
        %8074 = vmatprep.mubr.bf16.mxu0 %v6809
        %8075 = vmatmul.mubr.bf16.gmra.mrb[0].mxu0 %v6808
        %v8076 = vpop.f32.mrb[0].mxu0
        %v8077 = vadd.f32 %v8036, %v8076
        %v8078 = vpop.f32.mrb[0].mxu0
        %v8079 = vadd.f32 %v8038, %v8078
        %v8080 = vpop.f32.mrb[0].mxu0
        %v8081 = vpop.f32.mrb[0].mxu0
        %8082 = vdwg.mxu0
        %8083 = vmatprep.subr.bf16.mxu0 %v6307
        %8084 = vmatpush1.bf16.msra.mxu0 %v6306
        %8085 = vmatprep.subr.bf16.mxu0 %v6339
        %8086 = vmatpush1.bf16.msra.mxu0 %v6338
        %8087 = vmatprep.subr.bf16.mxu0 %v6371
        %8088 = vmatpush1.bf16.msra.mxu0 %v6370
        %8089 = vmatprep.subr.bf16.mxu0 %v6403
        %8090 = vmatpush1.bf16.msra.mxu0 %v6402
        %8091 = vmatprep.subr.bf16.mxu0 %v6435
        %8092 = vmatpush1.bf16.msra.mxu0 %v6434
        %8093 = vmatprep.subr.bf16.mxu0 %v6467
        %8094 = vmatpush1.bf16.msra.mxu0 %v6466
        %8095 = vmatprep.subr.bf16.mxu0 %v6499
        %8096 = vmatpush1.bf16.msra.mxu0 %v6498
        %8097 = vmatprep.subr.bf16.mxu0 %v6531
        %8098 = vmatpush1.bf16.msra.mxu0 %v6530
        %8099 = vmatprep.subr.bf16.mxu0 %v6563
        %8100 = vmatpush1.bf16.msra.mxu0 %v6562
        %8101 = vmatprep.subr.bf16.mxu0 %v6595
        %8102 = vmatpush1.bf16.msra.mxu0 %v6594
        %8103 = vmatprep.subr.bf16.mxu0 %v6627
        %8104 = vmatpush1.bf16.msra.mxu0 %v6626
        %8105 = vmatprep.subr.bf16.mxu0 %v6659
        %8106 = vmatpush1.bf16.msra.mxu0 %v6658
        %8107 = vmatprep.subr.bf16.mxu0 %v6691
        %8108 = vmatpush1.bf16.msra.mxu0 %v6690
        %8109 = vmatprep.subr.bf16.mxu0 %v6723
        %8110 = vmatpush1.bf16.msra.mxu0 %v6722
        %8111 = vmatprep.subr.bf16.mxu0 %v6755
        %8112 = vmatpush1.bf16.msra.mxu0 %v6754
        %8113 = vmatprep.subr.bf16.mxu0 %v6787
        %8114 = vmatpush1.bf16.msra.mxu0 %v6786
        %8115 = vmatprep.mubr.bf16.mxu0 %v6811
        %8116 = vmatmul.mubr.bf16.gmra.mrb[0].mxu0 %v6810
        %v8117 = vpop.f32.mrb[0].mxu0
        %v8118 = vadd.f32 %v8077, %v8117
        %v8119 = vpop.f32.mrb[0].mxu0
        %v8120 = vadd.f32 %v8079, %v8119
        %v8121 = vpop.f32.mrb[0].mxu0
        %v8122 = vpop.f32.mrb[0].mxu0
        %8123 = vdwg.mxu0
        %8124 = vmatprep.subr.bf16.mxu0 %v4773
        %8125 = vmatpush1.bf16.msra.mxu0 %v4772
        %8126 = vmatprep.subr.bf16.mxu0 %v4805
        %8127 = vmatpush1.bf16.msra.mxu0 %v4804
        %8128 = vmatprep.subr.bf16.mxu0 %v4837
        %8129 = vmatpush1.bf16.msra.mxu0 %v4836
        %8130 = vmatprep.subr.bf16.mxu0 %v4869
        %8131 = vmatpush1.bf16.msra.mxu0 %v4868
        %8132 = vmatprep.subr.bf16.mxu0 %v4901
        %8133 = vmatpush1.bf16.msra.mxu0 %v4900
        %8134 = vmatprep.subr.bf16.mxu0 %v4933
        %8135 = vmatpush1.bf16.msra.mxu0 %v4932
        %8136 = vmatprep.subr.bf16.mxu0 %v4965
        %8137 = vmatpush1.bf16.msra.mxu0 %v4964
        %8138 = vmatprep.subr.bf16.mxu0 %v4997
        %8139 = vmatpush1.bf16.msra.mxu0 %v4996
        %8140 = vmatprep.subr.bf16.mxu0 %v5029
        %8141 = vmatpush1.bf16.msra.mxu0 %v5028
        %8142 = vmatprep.subr.bf16.mxu0 %v5061
        %8143 = vmatpush1.bf16.msra.mxu0 %v5060
        %8144 = vmatprep.subr.bf16.mxu0 %v5093
        %8145 = vmatpush1.bf16.msra.mxu0 %v5092
        %8146 = vmatprep.subr.bf16.mxu0 %v5125
        %8147 = vmatpush1.bf16.msra.mxu0 %v5124
        %8148 = vmatprep.subr.bf16.mxu0 %v5157
        %8149 = vmatpush1.bf16.msra.mxu0 %v5156
        %8150 = vmatprep.subr.bf16.mxu0 %v5189
        %8151 = vmatpush1.bf16.msra.mxu0 %v5188
        %8152 = vmatprep.subr.bf16.mxu0 %v5221
        %8153 = vmatpush1.bf16.msra.mxu0 %v5220
        %8154 = vmatprep.subr.bf16.mxu0 %v5253
        %8155 = vmatpush1.bf16.msra.mxu0 %v5252
        %8156 = vmatprep.mubr.bf16.mxu0 %v6805
        %8157 = vmatmul.mubr.bf16.gmra.mrb[0].mxu0 %v6804
        %v8158 = vpop.f32.mrb[0].mxu0
        %v8159 = vadd.f32 0.0, %v8158
        %v8160 = vpop.f32.mrb[0].mxu0
        %v8161 = vadd.f32 0.0, %v8160
        %v8162 = vpop.f32.mrb[0].mxu0
        %v8163 = vpop.f32.mrb[0].mxu0
        %8164 = vdwg.mxu0
        %8165 = vmatprep.subr.bf16.mxu0 %v5285
        %8166 = vmatpush1.bf16.msra.mxu0 %v5284
        %8167 = vmatprep.subr.bf16.mxu0 %v5317
        %8168 = vmatpush1.bf16.msra.mxu0 %v5316
        %8169 = vmatprep.subr.bf16.mxu0 %v5349
        %8170 = vmatpush1.bf16.msra.mxu0 %v5348
        %8171 = vmatprep.subr.bf16.mxu0 %v5381
        %8172 = vmatpush1.bf16.msra.mxu0 %v5380
        %8173 = vmatprep.subr.bf16.mxu0 %v5413
        %8174 = vmatpush1.bf16.msra.mxu0 %v5412
        %8175 = vmatprep.subr.bf16.mxu0 %v5445
        %8176 = vmatpush1.bf16.msra.mxu0 %v5444
        %8177 = vmatprep.subr.bf16.mxu0 %v5477
        %8178 = vmatpush1.bf16.msra.mxu0 %v5476
        %8179 = vmatprep.subr.bf16.mxu0 %v5509
        %8180 = vmatpush1.bf16.msra.mxu0 %v5508
        %8181 = vmatprep.subr.bf16.mxu0 %v5541
        %8182 = vmatpush1.bf16.msra.mxu0 %v5540
        %8183 = vmatprep.subr.bf16.mxu0 %v5573
        %8184 = vmatpush1.bf16.msra.mxu0 %v5572
        %8185 = vmatprep.subr.bf16.mxu0 %v5605
        %8186 = vmatpush1.bf16.msra.mxu0 %v5604
        %8187 = vmatprep.subr.bf16.mxu0 %v5637
        %8188 = vmatpush1.bf16.msra.mxu0 %v5636
        %8189 = vmatprep.subr.bf16.mxu0 %v5669
        %8190 = vmatpush1.bf16.msra.mxu0 %v5668
        %8191 = vmatprep.subr.bf16.mxu0 %v5701
        %8192 = vmatpush1.bf16.msra.mxu0 %v5700
        %8193 = vmatprep.subr.bf16.mxu0 %v5733
        %8194 = vmatpush1.bf16.msra.mxu0 %v5732
        %8195 = vmatprep.subr.bf16.mxu0 %v5765
        %8196 = vmatpush1.bf16.msra.mxu0 %v5764
        %8197 = vmatprep.mubr.bf16.mxu0 %v6807
        %8198 = vmatmul.mubr.bf16.gmra.mrb[0].mxu0 %v6806
        %v8199 = vpop.f32.mrb[0].mxu0
        %v8200 = vadd.f32 %v8159, %v8199
        %v8201 = vpop.f32.mrb[0].mxu0
        %v8202 = vadd.f32 %v8161, %v8201
        %v8203 = vpop.f32.mrb[0].mxu0
        %v8204 = vpop.f32.mrb[0].mxu0
        %8205 = vdwg.mxu0
        %8206 = vmatprep.subr.bf16.mxu0 %v5797
        %8207 = vmatpush1.bf16.msra.mxu0 %v5796
        %8208 = vmatprep.subr.bf16.mxu0 %v5829
        %8209 = vmatpush1.bf16.msra.mxu0 %v5828
        %8210 = vmatprep.subr.bf16.mxu0 %v5861
        %8211 = vmatpush1.bf16.msra.mxu0 %v5860
        %8212 = vmatprep.subr.bf16.mxu0 %v5893
        %8213 = vmatpush1.bf16.msra.mxu0 %v5892
        %8214 = vmatprep.subr.bf16.mxu0 %v5925
        %8215 = vmatpush1.bf16.msra.mxu0 %v5924
        %8216 = vmatprep.subr.bf16.mxu0 %v5957
        %8217 = vmatpush1.bf16.msra.mxu0 %v5956
        %8218 = vmatprep.subr.bf16.mxu0 %v5989
        %8219 = vmatpush1.bf16.msra.mxu0 %v5988
        %8220 = vmatprep.subr.bf16.mxu0 %v6021
        %8221 = vmatpush1.bf16.msra.mxu0 %v6020
        %8222 = vmatprep.subr.bf16.mxu0 %v6053
        %8223 = vmatpush1.bf16.msra.mxu0 %v6052
        %8224 = vmatprep.subr.bf16.mxu0 %v6085
        %8225 = vmatpush1.bf16.msra.mxu0 %v6084
        %8226 = vmatprep.subr.bf16.mxu0 %v6117
        %8227 = vmatpush1.bf16.msra.mxu0 %v6116
        %8228 = vmatprep.subr.bf16.mxu0 %v6149
        %8229 = vmatpush1.bf16.msra.mxu0 %v6148
        %8230 = vmatprep.subr.bf16.mxu0 %v6181
        %8231 = vmatpush1.bf16.msra.mxu0 %v6180
        %8232 = vmatprep.subr.bf16.mxu0 %v6213
        %8233 = vmatpush1.bf16.msra.mxu0 %v6212
        %8234 = vmatprep.subr.bf16.mxu0 %v6245
        %8235 = vmatpush1.bf16.msra.mxu0 %v6244
        %8236 = vmatprep.subr.bf16.mxu0 %v6277
        %8237 = vmatpush1.bf16.msra.mxu0 %v6276
        %8238 = vmatprep.mubr.bf16.mxu0 %v6809
        %8239 = vmatmul.mubr.bf16.gmra.mrb[0].mxu0 %v6808
        %v8240 = vpop.f32.mrb[0].mxu0
        %v8241 = vadd.f32 %v8200, %v8240
        %v8242 = vpop.f32.mrb[0].mxu0
        %v8243 = vadd.f32 %v8202, %v8242
        %v8244 = vpop.f32.mrb[0].mxu0
        %v8245 = vpop.f32.mrb[0].mxu0
        %8246 = vdwg.mxu0
        %8247 = vmatprep.subr.bf16.mxu0 %v6309
        %8248 = vmatpush1.bf16.msra.mxu0 %v6308
        %8249 = vmatprep.subr.bf16.mxu0 %v6341
        %8250 = vmatpush1.bf16.msra.mxu0 %v6340
        %8251 = vmatprep.subr.bf16.mxu0 %v6373
        %8252 = vmatpush1.bf16.msra.mxu0 %v6372
        %8253 = vmatprep.subr.bf16.mxu0 %v6405
        %8254 = vmatpush1.bf16.msra.mxu0 %v6404
        %8255 = vmatprep.subr.bf16.mxu0 %v6437
        %8256 = vmatpush1.bf16.msra.mxu0 %v6436
        %8257 = vmatprep.subr.bf16.mxu0 %v6469
        %8258 = vmatpush1.bf16.msra.mxu0 %v6468
        %8259 = vmatprep.subr.bf16.mxu0 %v6501
        %8260 = vmatpush1.bf16.msra.mxu0 %v6500
        %8261 = vmatprep.subr.bf16.mxu0 %v6533
        %8262 = vmatpush1.bf16.msra.mxu0 %v6532
        %8263 = vmatprep.subr.bf16.mxu0 %v6565
        %8264 = vmatpush1.bf16.msra.mxu0 %v6564
        %8265 = vmatprep.subr.bf16.mxu0 %v6597
        %8266 = vmatpush1.bf16.msra.mxu0 %v6596
        %8267 = vmatprep.subr.bf16.mxu0 %v6629
        %8268 = vmatpush1.bf16.msra.mxu0 %v6628
        %8269 = vmatprep.subr.bf16.mxu0 %v6661
        %8270 = vmatpush1.bf16.msra.mxu0 %v6660
        %8271 = vmatprep.subr.bf16.mxu0 %v6693
        %8272 = vmatpush1.bf16.msra.mxu0 %v6692
        %8273 = vmatprep.subr.bf16.mxu0 %v6725
        %8274 = vmatpush1.bf16.msra.mxu0 %v6724
        %8275 = vmatprep.subr.bf16.mxu0 %v6757
        %8276 = vmatpush1.bf16.msra.mxu0 %v6756
        %8277 = vmatprep.subr.bf16.mxu0 %v6789
        %8278 = vmatpush1.bf16.msra.mxu0 %v6788
        %8279 = vmatprep.mubr.bf16.mxu0 %v6811
        %8280 = vmatmul.mubr.bf16.gmra.mrb[0].mxu0 %v6810
        %v8281 = vpop.f32.mrb[0].mxu0
        %v8282 = vadd.f32 %v8241, %v8281
        %v8283 = vpop.f32.mrb[0].mxu0
        %v8284 = vadd.f32 %v8243, %v8283
        %v8285 = vpop.f32.mrb[0].mxu0
        %v8286 = vpop.f32.mrb[0].mxu0
        %8287 = vdwg.mxu0
        %8288 = vmatprep.subr.bf16.mxu0 %v4775
        %8289 = vmatpush1.bf16.msra.mxu0 %v4774
        %8290 = vmatprep.subr.bf16.mxu0 %v4807
        %8291 = vmatpush1.bf16.msra.mxu0 %v4806
        %8292 = vmatprep.subr.bf16.mxu0 %v4839
        %8293 = vmatpush1.bf16.msra.mxu0 %v4838
        %8294 = vmatprep.subr.bf16.mxu0 %v4871
        %8295 = vmatpush1.bf16.msra.mxu0 %v4870
        %8296 = vmatprep.subr.bf16.mxu0 %v4903
        %8297 = vmatpush1.bf16.msra.mxu0 %v4902
        %8298 = vmatprep.subr.bf16.mxu0 %v4935
        %8299 = vmatpush1.bf16.msra.mxu0 %v4934
        %8300 = vmatprep.subr.bf16.mxu0 %v4967
        %8301 = vmatpush1.bf16.msra.mxu0 %v4966
        %8302 = vmatprep.subr.bf16.mxu0 %v4999
        %8303 = vmatpush1.bf16.msra.mxu0 %v4998
        %8304 = vmatprep.subr.bf16.mxu0 %v5031
        %8305 = vmatpush1.bf16.msra.mxu0 %v5030
        %8306 = vmatprep.subr.bf16.mxu0 %v5063
        %8307 = vmatpush1.bf16.msra.mxu0 %v5062
        %8308 = vmatprep.subr.bf16.mxu0 %v5095
        %8309 = vmatpush1.bf16.msra.mxu0 %v5094
        %8310 = vmatprep.subr.bf16.mxu0 %v5127
        %8311 = vmatpush1.bf16.msra.mxu0 %v5126
        %8312 = vmatprep.subr.bf16.mxu0 %v5159
        %8313 = vmatpush1.bf16.msra.mxu0 %v5158
        %8314 = vmatprep.subr.bf16.mxu0 %v5191
        %8315 = vmatpush1.bf16.msra.mxu0 %v5190
        %8316 = vmatprep.subr.bf16.mxu0 %v5223
        %8317 = vmatpush1.bf16.msra.mxu0 %v5222
        %8318 = vmatprep.subr.bf16.mxu0 %v5255
        %8319 = vmatpush1.bf16.msra.mxu0 %v5254
        %8320 = vmatprep.mubr.bf16.mxu0 %v6805
        %8321 = vmatmul.mubr.bf16.gmra.mrb[0].mxu0 %v6804
        %v8322 = vpop.f32.mrb[0].mxu0
        %v8323 = vadd.f32 0.0, %v8322
        %v8324 = vpop.f32.mrb[0].mxu0
        %v8325 = vadd.f32 0.0, %v8324
        %v8326 = vpop.f32.mrb[0].mxu0
        %v8327 = vpop.f32.mrb[0].mxu0
        %8328 = vdwg.mxu0
        %8329 = vmatprep.subr.bf16.mxu0 %v5287
        %8330 = vmatpush1.bf16.msra.mxu0 %v5286
        %8331 = vmatprep.subr.bf16.mxu0 %v5319
        %8332 = vmatpush1.bf16.msra.mxu0 %v5318
        %8333 = vmatprep.subr.bf16.mxu0 %v5351
        %8334 = vmatpush1.bf16.msra.mxu0 %v5350
        %8335 = vmatprep.subr.bf16.mxu0 %v5383
        %8336 = vmatpush1.bf16.msra.mxu0 %v5382
        %8337 = vmatprep.subr.bf16.mxu0 %v5415
        %8338 = vmatpush1.bf16.msra.mxu0 %v5414
        %8339 = vmatprep.subr.bf16.mxu0 %v5447
        %8340 = vmatpush1.bf16.msra.mxu0 %v5446
        %8341 = vmatprep.subr.bf16.mxu0 %v5479
        %8342 = vmatpush1.bf16.msra.mxu0 %v5478
        %8343 = vmatprep.subr.bf16.mxu0 %v5511
        %8344 = vmatpush1.bf16.msra.mxu0 %v5510
        %8345 = vmatprep.subr.bf16.mxu0 %v5543
        %8346 = vmatpush1.bf16.msra.mxu0 %v5542
        %8347 = vmatprep.subr.bf16.mxu0 %v5575
        %8348 = vmatpush1.bf16.msra.mxu0 %v5574
        %8349 = vmatprep.subr.bf16.mxu0 %v5607
        %8350 = vmatpush1.bf16.msra.mxu0 %v5606
        %8351 = vmatprep.subr.bf16.mxu0 %v5639
        %8352 = vmatpush1.bf16.msra.mxu0 %v5638
        %8353 = vmatprep.subr.bf16.mxu0 %v5671
        %8354 = vmatpush1.bf16.msra.mxu0 %v5670
        %8355 = vmatprep.subr.bf16.mxu0 %v5703
        %8356 = vmatpush1.bf16.msra.mxu0 %v5702
        %8357 = vmatprep.subr.bf16.mxu0 %v5735
        %8358 = vmatpush1.bf16.msra.mxu0 %v5734
        %8359 = vmatprep.subr.bf16.mxu0 %v5767
        %8360 = vmatpush1.bf16.msra.mxu0 %v5766
        %8361 = vmatprep.mubr.bf16.mxu0 %v6807
        %8362 = vmatmul.mubr.bf16.gmra.mrb[0].mxu0 %v6806
        %v8363 = vpop.f32.mrb[0].mxu0
        %v8364 = vadd.f32 %v8323, %v8363
        %v8365 = vpop.f32.mrb[0].mxu0
        %v8366 = vadd.f32 %v8325, %v8365
        %v8367 = vpop.f32.mrb[0].mxu0
        %v8368 = vpop.f32.mrb[0].mxu0
        %8369 = vdwg.mxu0
        %8370 = vmatprep.subr.bf16.mxu0 %v5799
        %8371 = vmatpush1.bf16.msra.mxu0 %v5798
        %8372 = vmatprep.subr.bf16.mxu0 %v5831
        %8373 = vmatpush1.bf16.msra.mxu0 %v5830
        %8374 = vmatprep.subr.bf16.mxu0 %v5863
        %8375 = vmatpush1.bf16.msra.mxu0 %v5862
        %8376 = vmatprep.subr.bf16.mxu0 %v5895
        %8377 = vmatpush1.bf16.msra.mxu0 %v5894
        %8378 = vmatprep.subr.bf16.mxu0 %v5927
        %8379 = vmatpush1.bf16.msra.mxu0 %v5926
        %8380 = vmatprep.subr.bf16.mxu0 %v5959
        %8381 = vmatpush1.bf16.msra.mxu0 %v5958
        %8382 = vmatprep.subr.bf16.mxu0 %v5991
        %8383 = vmatpush1.bf16.msra.mxu0 %v5990
        %8384 = vmatprep.subr.bf16.mxu0 %v6023
        %8385 = vmatpush1.bf16.msra.mxu0 %v6022
        %8386 = vmatprep.subr.bf16.mxu0 %v6055
        %8387 = vmatpush1.bf16.msra.mxu0 %v6054
        %8388 = vmatprep.subr.bf16.mxu0 %v6087
        %8389 = vmatpush1.bf16.msra.mxu0 %v6086
        %8390 = vmatprep.subr.bf16.mxu0 %v6119
        %8391 = vmatpush1.bf16.msra.mxu0 %v6118
        %8392 = vmatprep.subr.bf16.mxu0 %v6151
        %8393 = vmatpush1.bf16.msra.mxu0 %v6150
        %8394 = vmatprep.subr.bf16.mxu0 %v6183
        %8395 = vmatpush1.bf16.msra.mxu0 %v6182
        %8396 = vmatprep.subr.bf16.mxu0 %v6215
        %8397 = vmatpush1.bf16.msra.mxu0 %v6214
        %8398 = vmatprep.subr.bf16.mxu0 %v6247
        %8399 = vmatpush1.bf16.msra.mxu0 %v6246
        %8400 = vmatprep.subr.bf16.mxu0 %v6279
        %8401 = vmatpush1.bf16.msra.mxu0 %v6278
        %8402 = vmatprep.mubr.bf16.mxu0 %v6809
        %8403 = vmatmul.mubr.bf16.gmra.mrb[0].mxu0 %v6808
        %v8404 = vpop.f32.mrb[0].mxu0
        %v8405 = vadd.f32 %v8364, %v8404
        %v8406 = vpop.f32.mrb[0].mxu0
        %v8407 = vadd.f32 %v8366, %v8406
        %v8408 = vpop.f32.mrb[0].mxu0
        %v8409 = vpop.f32.mrb[0].mxu0
        %8410 = vdwg.mxu0
        %8411 = vmatprep.subr.bf16.mxu0 %v6311
        %8412 = vmatpush1.bf16.msra.mxu0 %v6310
        %8413 = vmatprep.subr.bf16.mxu0 %v6343
        %8414 = vmatpush1.bf16.msra.mxu0 %v6342
        %8415 = vmatprep.subr.bf16.mxu0 %v6375
        %8416 = vmatpush1.bf16.msra.mxu0 %v6374
        %8417 = vmatprep.subr.bf16.mxu0 %v6407
        %8418 = vmatpush1.bf16.msra.mxu0 %v6406
        %8419 = vmatprep.subr.bf16.mxu0 %v6439
        %8420 = vmatpush1.bf16.msra.mxu0 %v6438
        %8421 = vmatprep.subr.bf16.mxu0 %v6471
        %8422 = vmatpush1.bf16.msra.mxu0 %v6470
        %8423 = vmatprep.subr.bf16.mxu0 %v6503
        %8424 = vmatpush1.bf16.msra.mxu0 %v6502
        %8425 = vmatprep.subr.bf16.mxu0 %v6535
        %8426 = vmatpush1.bf16.msra.mxu0 %v6534
        %8427 = vmatprep.subr.bf16.mxu0 %v6567
        %8428 = vmatpush1.bf16.msra.mxu0 %v6566
        %8429 = vmatprep.subr.bf16.mxu0 %v6599
        %8430 = vmatpush1.bf16.msra.mxu0 %v6598
        %8431 = vmatprep.subr.bf16.mxu0 %v6631
        %8432 = vmatpush1.bf16.msra.mxu0 %v6630
        %8433 = vmatprep.subr.bf16.mxu0 %v6663
        %8434 = vmatpush1.bf16.msra.mxu0 %v6662
        %8435 = vmatprep.subr.bf16.mxu0 %v6695
        %8436 = vmatpush1.bf16.msra.mxu0 %v6694
        %8437 = vmatprep.subr.bf16.mxu0 %v6727
        %8438 = vmatpush1.bf16.msra.mxu0 %v6726
        %8439 = vmatprep.subr.bf16.mxu0 %v6759
        %8440 = vmatpush1.bf16.msra.mxu0 %v6758
        %8441 = vmatprep.subr.bf16.mxu0 %v6791
        %8442 = vmatpush1.bf16.msra.mxu0 %v6790
        %8443 = vmatprep.mubr.bf16.mxu0 %v6811
        %8444 = vmatmul.mubr.bf16.gmra.mrb[0].mxu0 %v6810
        %v8445 = vpop.f32.mrb[0].mxu0
        %v8446 = vadd.f32 %v8405, %v8445
        %v8447 = vpop.f32.mrb[0].mxu0
        %v8448 = vadd.f32 %v8407, %v8447
        %v8449 = vpop.f32.mrb[0].mxu0
        %v8450 = vpop.f32.mrb[0].mxu0
        %8451 = vdwg.mxu0
        %8452 = vmatprep.subr.bf16.mxu0 %v4777
        %8453 = vmatpush1.bf16.msra.mxu0 %v4776
        %8454 = vmatprep.subr.bf16.mxu0 %v4809
        %8455 = vmatpush1.bf16.msra.mxu0 %v4808
        %8456 = vmatprep.subr.bf16.mxu0 %v4841
        %8457 = vmatpush1.bf16.msra.mxu0 %v4840
        %8458 = vmatprep.subr.bf16.mxu0 %v4873
        %8459 = vmatpush1.bf16.msra.mxu0 %v4872
        %8460 = vmatprep.subr.bf16.mxu0 %v4905
        %8461 = vmatpush1.bf16.msra.mxu0 %v4904
        %8462 = vmatprep.subr.bf16.mxu0 %v4937
        %8463 = vmatpush1.bf16.msra.mxu0 %v4936
        %8464 = vmatprep.subr.bf16.mxu0 %v4969
        %8465 = vmatpush1.bf16.msra.mxu0 %v4968
        %8466 = vmatprep.subr.bf16.mxu0 %v5001
        %8467 = vmatpush1.bf16.msra.mxu0 %v5000
        %8468 = vmatprep.subr.bf16.mxu0 %v5033
        %8469 = vmatpush1.bf16.msra.mxu0 %v5032
        %8470 = vmatprep.subr.bf16.mxu0 %v5065
        %8471 = vmatpush1.bf16.msra.mxu0 %v5064
        %8472 = vmatprep.subr.bf16.mxu0 %v5097
        %8473 = vmatpush1.bf16.msra.mxu0 %v5096
        %8474 = vmatprep.subr.bf16.mxu0 %v5129
        %8475 = vmatpush1.bf16.msra.mxu0 %v5128
        %8476 = vmatprep.subr.bf16.mxu0 %v5161
        %8477 = vmatpush1.bf16.msra.mxu0 %v5160
        %8478 = vmatprep.subr.bf16.mxu0 %v5193
        %8479 = vmatpush1.bf16.msra.mxu0 %v5192
        %8480 = vmatprep.subr.bf16.mxu0 %v5225
        %8481 = vmatpush1.bf16.msra.mxu0 %v5224
        %8482 = vmatprep.subr.bf16.mxu0 %v5257
        %8483 = vmatpush1.bf16.msra.mxu0 %v5256
        %8484 = vmatprep.mubr.bf16.mxu0 %v6805
        %8485 = vmatmul.mubr.bf16.gmra.mrb[0].mxu0 %v6804
        %v8486 = vpop.f32.mrb[0].mxu0
        %v8487 = vadd.f32 0.0, %v8486
        %v8488 = vpop.f32.mrb[0].mxu0
        %v8489 = vadd.f32 0.0, %v8488
        %v8490 = vpop.f32.mrb[0].mxu0
        %v8491 = vpop.f32.mrb[0].mxu0
        %8492 = vdwg.mxu0
        %8493 = vmatprep.subr.bf16.mxu0 %v5289
        %8494 = vmatpush1.bf16.msra.mxu0 %v5288
        %8495 = vmatprep.subr.bf16.mxu0 %v5321
        %8496 = vmatpush1.bf16.msra.mxu0 %v5320
        %8497 = vmatprep.subr.bf16.mxu0 %v5353
        %8498 = vmatpush1.bf16.msra.mxu0 %v5352
        %8499 = vmatprep.subr.bf16.mxu0 %v5385
        %8500 = vmatpush1.bf16.msra.mxu0 %v5384
        %8501 = vmatprep.subr.bf16.mxu0 %v5417
        %8502 = vmatpush1.bf16.msra.mxu0 %v5416
        %8503 = vmatprep.subr.bf16.mxu0 %v5449
        %8504 = vmatpush1.bf16.msra.mxu0 %v5448
        %8505 = vmatprep.subr.bf16.mxu0 %v5481
        %8506 = vmatpush1.bf16.msra.mxu0 %v5480
        %8507 = vmatprep.subr.bf16.mxu0 %v5513
        %8508 = vmatpush1.bf16.msra.mxu0 %v5512
        %8509 = vmatprep.subr.bf16.mxu0 %v5545
        %8510 = vmatpush1.bf16.msra.mxu0 %v5544
        %8511 = vmatprep.subr.bf16.mxu0 %v5577
        %8512 = vmatpush1.bf16.msra.mxu0 %v5576
        %8513 = vmatprep.subr.bf16.mxu0 %v5609
        %8514 = vmatpush1.bf16.msra.mxu0 %v5608
        %8515 = vmatprep.subr.bf16.mxu0 %v5641
        %8516 = vmatpush1.bf16.msra.mxu0 %v5640
        %8517 = vmatprep.subr.bf16.mxu0 %v5673
        %8518 = vmatpush1.bf16.msra.mxu0 %v5672
        %8519 = vmatprep.subr.bf16.mxu0 %v5705
        %8520 = vmatpush1.bf16.msra.mxu0 %v5704
        %8521 = vmatprep.subr.bf16.mxu0 %v5737
        %8522 = vmatpush1.bf16.msra.mxu0 %v5736
        %8523 = vmatprep.subr.bf16.mxu0 %v5769
        %8524 = vmatpush1.bf16.msra.mxu0 %v5768
        %8525 = vmatprep.mubr.bf16.mxu0 %v6807
        %8526 = vmatmul.mubr.bf16.gmra.mrb[0].mxu0 %v6806
        %v8527 = vpop.f32.mrb[0].mxu0
        %v8528 = vadd.f32 %v8487, %v8527
        %v8529 = vpop.f32.mrb[0].mxu0
        %v8530 = vadd.f32 %v8489, %v8529
        %v8531 = vpop.f32.mrb[0].mxu0
        %v8532 = vpop.f32.mrb[0].mxu0
        %8533 = vdwg.mxu0
        %8534 = vmatprep.subr.bf16.mxu0 %v5801
        %8535 = vmatpush1.bf16.msra.mxu0 %v5800
        %8536 = vmatprep.subr.bf16.mxu0 %v5833
        %8537 = vmatpush1.bf16.msra.mxu0 %v5832
        %8538 = vmatprep.subr.bf16.mxu0 %v5865
        %8539 = vmatpush1.bf16.msra.mxu0 %v5864
        %8540 = vmatprep.subr.bf16.mxu0 %v5897
        %8541 = vmatpush1.bf16.msra.mxu0 %v5896
        %8542 = vmatprep.subr.bf16.mxu0 %v5929
        %8543 = vmatpush1.bf16.msra.mxu0 %v5928
        %8544 = vmatprep.subr.bf16.mxu0 %v5961
        %8545 = vmatpush1.bf16.msra.mxu0 %v5960
        %8546 = vmatprep.subr.bf16.mxu0 %v5993
        %8547 = vmatpush1.bf16.msra.mxu0 %v5992
        %8548 = vmatprep.subr.bf16.mxu0 %v6025
        %8549 = vmatpush1.bf16.msra.mxu0 %v6024
        %8550 = vmatprep.subr.bf16.mxu0 %v6057
        %8551 = vmatpush1.bf16.msra.mxu0 %v6056
        %8552 = vmatprep.subr.bf16.mxu0 %v6089
        %8553 = vmatpush1.bf16.msra.mxu0 %v6088
        %8554 = vmatprep.subr.bf16.mxu0 %v6121
        %8555 = vmatpush1.bf16.msra.mxu0 %v6120
        %8556 = vmatprep.subr.bf16.mxu0 %v6153
        %8557 = vmatpush1.bf16.msra.mxu0 %v6152
        %8558 = vmatprep.subr.bf16.mxu0 %v6185
        %8559 = vmatpush1.bf16.msra.mxu0 %v6184
        %8560 = vmatprep.subr.bf16.mxu0 %v6217
        %8561 = vmatpush1.bf16.msra.mxu0 %v6216
        %8562 = vmatprep.subr.bf16.mxu0 %v6249
        %8563 = vmatpush1.bf16.msra.mxu0 %v6248
        %8564 = vmatprep.subr.bf16.mxu0 %v6281
        %8565 = vmatpush1.bf16.msra.mxu0 %v6280
        %8566 = vmatprep.mubr.bf16.mxu0 %v6809
        %8567 = vmatmul.mubr.bf16.gmra.mrb[0].mxu0 %v6808
        %v8568 = vpop.f32.mrb[0].mxu0
        %v8569 = vadd.f32 %v8528, %v8568
        %v8570 = vpop.f32.mrb[0].mxu0
        %v8571 = vadd.f32 %v8530, %v8570
        %v8572 = vpop.f32.mrb[0].mxu0
        %v8573 = vpop.f32.mrb[0].mxu0
        %8574 = vdwg.mxu0
        %8575 = vmatprep.subr.bf16.mxu0 %v6313
        %8576 = vmatpush1.bf16.msra.mxu0 %v6312
        %8577 = vmatprep.subr.bf16.mxu0 %v6345
        %8578 = vmatpush1.bf16.msra.mxu0 %v6344
        %8579 = vmatprep.subr.bf16.mxu0 %v6377
        %8580 = vmatpush1.bf16.msra.mxu0 %v6376
        %8581 = vmatprep.subr.bf16.mxu0 %v6409
        %8582 = vmatpush1.bf16.msra.mxu0 %v6408
        %8583 = vmatprep.subr.bf16.mxu0 %v6441
        %8584 = vmatpush1.bf16.msra.mxu0 %v6440
        %8585 = vmatprep.subr.bf16.mxu0 %v6473
        %8586 = vmatpush1.bf16.msra.mxu0 %v6472
        %8587 = vmatprep.subr.bf16.mxu0 %v6505
        %8588 = vmatpush1.bf16.msra.mxu0 %v6504
        %8589 = vmatprep.subr.bf16.mxu0 %v6537
        %8590 = vmatpush1.bf16.msra.mxu0 %v6536
        %8591 = vmatprep.subr.bf16.mxu0 %v6569
        %8592 = vmatpush1.bf16.msra.mxu0 %v6568
        %8593 = vmatprep.subr.bf16.mxu0 %v6601
        %8594 = vmatpush1.bf16.msra.mxu0 %v6600
        %8595 = vmatprep.subr.bf16.mxu0 %v6633
        %8596 = vmatpush1.bf16.msra.mxu0 %v6632
        %8597 = vmatprep.subr.bf16.mxu0 %v6665
        %8598 = vmatpush1.bf16.msra.mxu0 %v6664
        %8599 = vmatprep.subr.bf16.mxu0 %v6697
        %8600 = vmatpush1.bf16.msra.mxu0 %v6696
        %8601 = vmatprep.subr.bf16.mxu0 %v6729
        %8602 = vmatpush1.bf16.msra.mxu0 %v6728
        %8603 = vmatprep.subr.bf16.mxu0 %v6761
        %8604 = vmatpush1.bf16.msra.mxu0 %v6760
        %8605 = vmatprep.subr.bf16.mxu0 %v6793
        %8606 = vmatpush1.bf16.msra.mxu0 %v6792
        %8607 = vmatprep.mubr.bf16.mxu0 %v6811
        %8608 = vmatmul.mubr.bf16.gmra.mrb[0].mxu0 %v6810
        %v8609 = vpop.f32.mrb[0].mxu0
        %v8610 = vadd.f32 %v8569, %v8609
        %v8611 = vpop.f32.mrb[0].mxu0
        %v8612 = vadd.f32 %v8571, %v8611
        %v8613 = vpop.f32.mrb[0].mxu0
        %v8614 = vpop.f32.mrb[0].mxu0
        %8615 = vdwg.mxu0
        %8616 = vmatprep.subr.bf16.mxu0 %v4779
        %8617 = vmatpush1.bf16.msra.mxu0 %v4778
        %8618 = vmatprep.subr.bf16.mxu0 %v4811
        %8619 = vmatpush1.bf16.msra.mxu0 %v4810
        %8620 = vmatprep.subr.bf16.mxu0 %v4843
        %8621 = vmatpush1.bf16.msra.mxu0 %v4842
        %8622 = vmatprep.subr.bf16.mxu0 %v4875
        %8623 = vmatpush1.bf16.msra.mxu0 %v4874
        %8624 = vmatprep.subr.bf16.mxu0 %v4907
        %8625 = vmatpush1.bf16.msra.mxu0 %v4906
        %8626 = vmatprep.subr.bf16.mxu0 %v4939
        %8627 = vmatpush1.bf16.msra.mxu0 %v4938
        %8628 = vmatprep.subr.bf16.mxu0 %v4971
        %8629 = vmatpush1.bf16.msra.mxu0 %v4970
        %8630 = vmatprep.subr.bf16.mxu0 %v5003
        %8631 = vmatpush1.bf16.msra.mxu0 %v5002
        %8632 = vmatprep.subr.bf16.mxu0 %v5035
        %8633 = vmatpush1.bf16.msra.mxu0 %v5034
        %8634 = vmatprep.subr.bf16.mxu0 %v5067
        %8635 = vmatpush1.bf16.msra.mxu0 %v5066
        %8636 = vmatprep.subr.bf16.mxu0 %v5099
        %8637 = vmatpush1.bf16.msra.mxu0 %v5098
        %8638 = vmatprep.subr.bf16.mxu0 %v5131
        %8639 = vmatpush1.bf16.msra.mxu0 %v5130
        %8640 = vmatprep.subr.bf16.mxu0 %v5163
        %8641 = vmatpush1.bf16.msra.mxu0 %v5162
        %8642 = vmatprep.subr.bf16.mxu0 %v5195
        %8643 = vmatpush1.bf16.msra.mxu0 %v5194
        %8644 = vmatprep.subr.bf16.mxu0 %v5227
        %8645 = vmatpush1.bf16.msra.mxu0 %v5226
        %8646 = vmatprep.subr.bf16.mxu0 %v5259
        %8647 = vmatpush1.bf16.msra.mxu0 %v5258
        %8648 = vmatprep.mubr.bf16.mxu0 %v6805
        %8649 = vmatmul.mubr.bf16.gmra.mrb[0].mxu0 %v6804
        %v8650 = vpop.f32.mrb[0].mxu0
        %v8651 = vadd.f32 0.0, %v8650
        %v8652 = vpop.f32.mrb[0].mxu0
        %v8653 = vadd.f32 0.0, %v8652
        %v8654 = vpop.f32.mrb[0].mxu0
        %v8655 = vpop.f32.mrb[0].mxu0
        %8656 = vdwg.mxu0
        %8657 = vmatprep.subr.bf16.mxu0 %v5291
        %8658 = vmatpush1.bf16.msra.mxu0 %v5290
        %8659 = vmatprep.subr.bf16.mxu0 %v5323
        %8660 = vmatpush1.bf16.msra.mxu0 %v5322
        %8661 = vmatprep.subr.bf16.mxu0 %v5355
        %8662 = vmatpush1.bf16.msra.mxu0 %v5354
        %8663 = vmatprep.subr.bf16.mxu0 %v5387
        %8664 = vmatpush1.bf16.msra.mxu0 %v5386
        %8665 = vmatprep.subr.bf16.mxu0 %v5419
        %8666 = vmatpush1.bf16.msra.mxu0 %v5418
        %8667 = vmatprep.subr.bf16.mxu0 %v5451
        %8668 = vmatpush1.bf16.msra.mxu0 %v5450
        %8669 = vmatprep.subr.bf16.mxu0 %v5483
        %8670 = vmatpush1.bf16.msra.mxu0 %v5482
        %8671 = vmatprep.subr.bf16.mxu0 %v5515
        %8672 = vmatpush1.bf16.msra.mxu0 %v5514
        %8673 = vmatprep.subr.bf16.mxu0 %v5547
        %8674 = vmatpush1.bf16.msra.mxu0 %v5546
        %8675 = vmatprep.subr.bf16.mxu0 %v5579
        %8676 = vmatpush1.bf16.msra.mxu0 %v5578
        %8677 = vmatprep.subr.bf16.mxu0 %v5611
        %8678 = vmatpush1.bf16.msra.mxu0 %v5610
        %8679 = vmatprep.subr.bf16.mxu0 %v5643
        %8680 = vmatpush1.bf16.msra.mxu0 %v5642
        %8681 = vmatprep.subr.bf16.mxu0 %v5675
        %8682 = vmatpush1.bf16.msra.mxu0 %v5674
        %8683 = vmatprep.subr.bf16.mxu0 %v5707
        %8684 = vmatpush1.bf16.msra.mxu0 %v5706
        %8685 = vmatprep.subr.bf16.mxu0 %v5739
        %8686 = vmatpush1.bf16.msra.mxu0 %v5738
        %8687 = vmatprep.subr.bf16.mxu0 %v5771
        %8688 = vmatpush1.bf16.msra.mxu0 %v5770
        %8689 = vmatprep.mubr.bf16.mxu0 %v6807
        %8690 = vmatmul.mubr.bf16.gmra.mrb[0].mxu0 %v6806
        %v8691 = vpop.f32.mrb[0].mxu0
        %v8692 = vadd.f32 %v8651, %v8691
        %v8693 = vpop.f32.mrb[0].mxu0
        %v8694 = vadd.f32 %v8653, %v8693
        %v8695 = vpop.f32.mrb[0].mxu0
        %v8696 = vpop.f32.mrb[0].mxu0
        %8697 = vdwg.mxu0
        %8698 = vmatprep.subr.bf16.mxu0 %v5803
        %8699 = vmatpush1.bf16.msra.mxu0 %v5802
        %8700 = vmatprep.subr.bf16.mxu0 %v5835
        %8701 = vmatpush1.bf16.msra.mxu0 %v5834
        %8702 = vmatprep.subr.bf16.mxu0 %v5867
        %8703 = vmatpush1.bf16.msra.mxu0 %v5866
        %8704 = vmatprep.subr.bf16.mxu0 %v5899
        %8705 = vmatpush1.bf16.msra.mxu0 %v5898
        %8706 = vmatprep.subr.bf16.mxu0 %v5931
        %8707 = vmatpush1.bf16.msra.mxu0 %v5930
        %8708 = vmatprep.subr.bf16.mxu0 %v5963
        %8709 = vmatpush1.bf16.msra.mxu0 %v5962
        %8710 = vmatprep.subr.bf16.mxu0 %v5995
        %8711 = vmatpush1.bf16.msra.mxu0 %v5994
        %8712 = vmatprep.subr.bf16.mxu0 %v6027
        %8713 = vmatpush1.bf16.msra.mxu0 %v6026
        %8714 = vmatprep.subr.bf16.mxu0 %v6059
        %8715 = vmatpush1.bf16.msra.mxu0 %v6058
        %8716 = vmatprep.subr.bf16.mxu0 %v6091
        %8717 = vmatpush1.bf16.msra.mxu0 %v6090
        %8718 = vmatprep.subr.bf16.mxu0 %v6123
        %8719 = vmatpush1.bf16.msra.mxu0 %v6122
        %8720 = vmatprep.subr.bf16.mxu0 %v6155
        %8721 = vmatpush1.bf16.msra.mxu0 %v6154
        %8722 = vmatprep.subr.bf16.mxu0 %v6187
        %8723 = vmatpush1.bf16.msra.mxu0 %v6186
        %8724 = vmatprep.subr.bf16.mxu0 %v6219
        %8725 = vmatpush1.bf16.msra.mxu0 %v6218
        %8726 = vmatprep.subr.bf16.mxu0 %v6251
        %8727 = vmatpush1.bf16.msra.mxu0 %v6250
        %8728 = vmatprep.subr.bf16.mxu0 %v6283
        %8729 = vmatpush1.bf16.msra.mxu0 %v6282
        %8730 = vmatprep.mubr.bf16.mxu0 %v6809
        %8731 = vmatmul.mubr.bf16.gmra.mrb[0].mxu0 %v6808
        %v8732 = vpop.f32.mrb[0].mxu0
        %v8733 = vadd.f32 %v8692, %v8732
        %v8734 = vpop.f32.mrb[0].mxu0
        %v8735 = vadd.f32 %v8694, %v8734
        %v8736 = vpop.f32.mrb[0].mxu0
        %v8737 = vpop.f32.mrb[0].mxu0
        %8738 = vdwg.mxu0
        %8739 = vmatprep.subr.bf16.mxu0 %v6315
        %8740 = vmatpush1.bf16.msra.mxu0 %v6314
        %8741 = vmatprep.subr.bf16.mxu0 %v6347
        %8742 = vmatpush1.bf16.msra.mxu0 %v6346
        %8743 = vmatprep.subr.bf16.mxu0 %v6379
        %8744 = vmatpush1.bf16.msra.mxu0 %v6378
        %8745 = vmatprep.subr.bf16.mxu0 %v6411
        %8746 = vmatpush1.bf16.msra.mxu0 %v6410
        %8747 = vmatprep.subr.bf16.mxu0 %v6443
        %8748 = vmatpush1.bf16.msra.mxu0 %v6442
        %8749 = vmatprep.subr.bf16.mxu0 %v6475
        %8750 = vmatpush1.bf16.msra.mxu0 %v6474
        %8751 = vmatprep.subr.bf16.mxu0 %v6507
        %8752 = vmatpush1.bf16.msra.mxu0 %v6506
        %8753 = vmatprep.subr.bf16.mxu0 %v6539
        %8754 = vmatpush1.bf16.msra.mxu0 %v6538
        %8755 = vmatprep.subr.bf16.mxu0 %v6571
        %8756 = vmatpush1.bf16.msra.mxu0 %v6570
        %8757 = vmatprep.subr.bf16.mxu0 %v6603
        %8758 = vmatpush1.bf16.msra.mxu0 %v6602
        %8759 = vmatprep.subr.bf16.mxu0 %v6635
        %8760 = vmatpush1.bf16.msra.mxu0 %v6634
        %8761 = vmatprep.subr.bf16.mxu0 %v6667
        %8762 = vmatpush1.bf16.msra.mxu0 %v6666
        %8763 = vmatprep.subr.bf16.mxu0 %v6699
        %8764 = vmatpush1.bf16.msra.mxu0 %v6698
        %8765 = vmatprep.subr.bf16.mxu0 %v6731
        %8766 = vmatpush1.bf16.msra.mxu0 %v6730
        %8767 = vmatprep.subr.bf16.mxu0 %v6763
        %8768 = vmatpush1.bf16.msra.mxu0 %v6762
        %8769 = vmatprep.subr.bf16.mxu0 %v6795
        %8770 = vmatpush1.bf16.msra.mxu0 %v6794
        %8771 = vmatprep.mubr.bf16.mxu0 %v6811
        %8772 = vmatmul.mubr.bf16.gmra.mrb[0].mxu0 %v6810
        %v8773 = vpop.f32.mrb[0].mxu0
        %v8774 = vadd.f32 %v8733, %v8773
        %v8775 = vpop.f32.mrb[0].mxu0
        %v8776 = vadd.f32 %v8735, %v8775
        %v8777 = vpop.f32.mrb[0].mxu0
        %v8778 = vpop.f32.mrb[0].mxu0
        %8779 = vdwg.mxu0
        %8780 = vmatprep.subr.bf16.mxu0 %v4781
        %8781 = vmatpush1.bf16.msra.mxu0 %v4780
        %8782 = vmatprep.subr.bf16.mxu0 %v4813
        %8783 = vmatpush1.bf16.msra.mxu0 %v4812
        %8784 = vmatprep.subr.bf16.mxu0 %v4845
        %8785 = vmatpush1.bf16.msra.mxu0 %v4844
        %8786 = vmatprep.subr.bf16.mxu0 %v4877
        %8787 = vmatpush1.bf16.msra.mxu0 %v4876
        %8788 = vmatprep.subr.bf16.mxu0 %v4909
        %8789 = vmatpush1.bf16.msra.mxu0 %v4908
        %8790 = vmatprep.subr.bf16.mxu0 %v4941
        %8791 = vmatpush1.bf16.msra.mxu0 %v4940
        %8792 = vmatprep.subr.bf16.mxu0 %v4973
        %8793 = vmatpush1.bf16.msra.mxu0 %v4972
        %8794 = vmatprep.subr.bf16.mxu0 %v5005
        %8795 = vmatpush1.bf16.msra.mxu0 %v5004
        %8796 = vmatprep.subr.bf16.mxu0 %v5037
        %8797 = vmatpush1.bf16.msra.mxu0 %v5036
        %8798 = vmatprep.subr.bf16.mxu0 %v5069
        %8799 = vmatpush1.bf16.msra.mxu0 %v5068
        %8800 = vmatprep.subr.bf16.mxu0 %v5101
        %8801 = vmatpush1.bf16.msra.mxu0 %v5100
        %8802 = vmatprep.subr.bf16.mxu0 %v5133
        %8803 = vmatpush1.bf16.msra.mxu0 %v5132
        %8804 = vmatprep.subr.bf16.mxu0 %v5165
        %8805 = vmatpush1.bf16.msra.mxu0 %v5164
        %8806 = vmatprep.subr.bf16.mxu0 %v5197
        %8807 = vmatpush1.bf16.msra.mxu0 %v5196
        %8808 = vmatprep.subr.bf16.mxu0 %v5229
        %8809 = vmatpush1.bf16.msra.mxu0 %v5228
        %8810 = vmatprep.subr.bf16.mxu0 %v5261
        %8811 = vmatpush1.bf16.msra.mxu0 %v5260
        %8812 = vmatprep.mubr.bf16.mxu0 %v6805
        %8813 = vmatmul.mubr.bf16.gmra.mrb[0].mxu0 %v6804
        %v8814 = vpop.f32.mrb[0].mxu0
        %v8815 = vadd.f32 0.0, %v8814
        %v8816 = vpop.f32.mrb[0].mxu0
        %v8817 = vadd.f32 0.0, %v8816
        %v8818 = vpop.f32.mrb[0].mxu0
        %v8819 = vpop.f32.mrb[0].mxu0
        %8820 = vdwg.mxu0
        %8821 = vmatprep.subr.bf16.mxu0 %v5293
        %8822 = vmatpush1.bf16.msra.mxu0 %v5292
        %8823 = vmatprep.subr.bf16.mxu0 %v5325
        %8824 = vmatpush1.bf16.msra.mxu0 %v5324
        %8825 = vmatprep.subr.bf16.mxu0 %v5357
        %8826 = vmatpush1.bf16.msra.mxu0 %v5356
        %8827 = vmatprep.subr.bf16.mxu0 %v5389
        %8828 = vmatpush1.bf16.msra.mxu0 %v5388
        %8829 = vmatprep.subr.bf16.mxu0 %v5421
        %8830 = vmatpush1.bf16.msra.mxu0 %v5420
        %8831 = vmatprep.subr.bf16.mxu0 %v5453
        %8832 = vmatpush1.bf16.msra.mxu0 %v5452
        %8833 = vmatprep.subr.bf16.mxu0 %v5485
        %8834 = vmatpush1.bf16.msra.mxu0 %v5484
        %8835 = vmatprep.subr.bf16.mxu0 %v5517
        %8836 = vmatpush1.bf16.msra.mxu0 %v5516
        %8837 = vmatprep.subr.bf16.mxu0 %v5549
        %8838 = vmatpush1.bf16.msra.mxu0 %v5548
        %8839 = vmatprep.subr.bf16.mxu0 %v5581
        %8840 = vmatpush1.bf16.msra.mxu0 %v5580
        %8841 = vmatprep.subr.bf16.mxu0 %v5613
        %8842 = vmatpush1.bf16.msra.mxu0 %v5612
        %8843 = vmatprep.subr.bf16.mxu0 %v5645
        %8844 = vmatpush1.bf16.msra.mxu0 %v5644
        %8845 = vmatprep.subr.bf16.mxu0 %v5677
        %8846 = vmatpush1.bf16.msra.mxu0 %v5676
        %8847 = vmatprep.subr.bf16.mxu0 %v5709
        %8848 = vmatpush1.bf16.msra.mxu0 %v5708
        %8849 = vmatprep.subr.bf16.mxu0 %v5741
        %8850 = vmatpush1.bf16.msra.mxu0 %v5740
        %8851 = vmatprep.subr.bf16.mxu0 %v5773
        %8852 = vmatpush1.bf16.msra.mxu0 %v5772
        %8853 = vmatprep.mubr.bf16.mxu0 %v6807
        %8854 = vmatmul.mubr.bf16.gmra.mrb[0].mxu0 %v6806
        %v8855 = vpop.f32.mrb[0].mxu0
        %v8856 = vadd.f32 %v8815, %v8855
        %v8857 = vpop.f32.mrb[0].mxu0
        %v8858 = vadd.f32 %v8817, %v8857
        %v8859 = vpop.f32.mrb[0].mxu0
        %v8860 = vpop.f32.mrb[0].mxu0
        %8861 = vdwg.mxu0
        %8862 = vmatprep.subr.bf16.mxu0 %v5805
        %8863 = vmatpush1.bf16.msra.mxu0 %v5804
        %8864 = vmatprep.subr.bf16.mxu0 %v5837
        %8865 = vmatpush1.bf16.msra.mxu0 %v5836
        %8866 = vmatprep.subr.bf16.mxu0 %v5869
        %8867 = vmatpush1.bf16.msra.mxu0 %v5868
        %8868 = vmatprep.subr.bf16.mxu0 %v5901
        %8869 = vmatpush1.bf16.msra.mxu0 %v5900
        %8870 = vmatprep.subr.bf16.mxu0 %v5933
        %8871 = vmatpush1.bf16.msra.mxu0 %v5932
        %8872 = vmatprep.subr.bf16.mxu0 %v5965
        %8873 = vmatpush1.bf16.msra.mxu0 %v5964
        %8874 = vmatprep.subr.bf16.mxu0 %v5997
        %8875 = vmatpush1.bf16.msra.mxu0 %v5996
        %8876 = vmatprep.subr.bf16.mxu0 %v6029
        %8877 = vmatpush1.bf16.msra.mxu0 %v6028
        %8878 = vmatprep.subr.bf16.mxu0 %v6061
        %8879 = vmatpush1.bf16.msra.mxu0 %v6060
        %8880 = vmatprep.subr.bf16.mxu0 %v6093
        %8881 = vmatpush1.bf16.msra.mxu0 %v6092
        %8882 = vmatprep.subr.bf16.mxu0 %v6125
        %8883 = vmatpush1.bf16.msra.mxu0 %v6124
        %8884 = vmatprep.subr.bf16.mxu0 %v6157
        %8885 = vmatpush1.bf16.msra.mxu0 %v6156
        %8886 = vmatprep.subr.bf16.mxu0 %v6189
        %8887 = vmatpush1.bf16.msra.mxu0 %v6188
        %8888 = vmatprep.subr.bf16.mxu0 %v6221
        %8889 = vmatpush1.bf16.msra.mxu0 %v6220
        %8890 = vmatprep.subr.bf16.mxu0 %v6253
        %8891 = vmatpush1.bf16.msra.mxu0 %v6252
        %8892 = vmatprep.subr.bf16.mxu0 %v6285
        %8893 = vmatpush1.bf16.msra.mxu0 %v6284
        %8894 = vmatprep.mubr.bf16.mxu0 %v6809
        %8895 = vmatmul.mubr.bf16.gmra.mrb[0].mxu0 %v6808
        %v8896 = vpop.f32.mrb[0].mxu0
        %v8897 = vadd.f32 %v8856, %v8896
        %v8898 = vpop.f32.mrb[0].mxu0
        %v8899 = vadd.f32 %v8858, %v8898
        %v8900 = vpop.f32.mrb[0].mxu0
        %v8901 = vpop.f32.mrb[0].mxu0
        %8902 = vdwg.mxu0
        %8903 = vmatprep.subr.bf16.mxu0 %v6317
        %8904 = vmatpush1.bf16.msra.mxu0 %v6316
        %8905 = vmatprep.subr.bf16.mxu0 %v6349
        %8906 = vmatpush1.bf16.msra.mxu0 %v6348
        %8907 = vmatprep.subr.bf16.mxu0 %v6381
        %8908 = vmatpush1.bf16.msra.mxu0 %v6380
        %8909 = vmatprep.subr.bf16.mxu0 %v6413
        %8910 = vmatpush1.bf16.msra.mxu0 %v6412
        %8911 = vmatprep.subr.bf16.mxu0 %v6445
        %8912 = vmatpush1.bf16.msra.mxu0 %v6444
        %8913 = vmatprep.subr.bf16.mxu0 %v6477
        %8914 = vmatpush1.bf16.msra.mxu0 %v6476
        %8915 = vmatprep.subr.bf16.mxu0 %v6509
        %8916 = vmatpush1.bf16.msra.mxu0 %v6508
        %8917 = vmatprep.subr.bf16.mxu0 %v6541
        %8918 = vmatpush1.bf16.msra.mxu0 %v6540
        %8919 = vmatprep.subr.bf16.mxu0 %v6573
        %8920 = vmatpush1.bf16.msra.mxu0 %v6572
        %8921 = vmatprep.subr.bf16.mxu0 %v6605
        %8922 = vmatpush1.bf16.msra.mxu0 %v6604
        %8923 = vmatprep.subr.bf16.mxu0 %v6637
        %8924 = vmatpush1.bf16.msra.mxu0 %v6636
        %8925 = vmatprep.subr.bf16.mxu0 %v6669
        %8926 = vmatpush1.bf16.msra.mxu0 %v6668
        %8927 = vmatprep.subr.bf16.mxu0 %v6701
        %8928 = vmatpush1.bf16.msra.mxu0 %v6700
        %8929 = vmatprep.subr.bf16.mxu0 %v6733
        %8930 = vmatpush1.bf16.msra.mxu0 %v6732
        %8931 = vmatprep.subr.bf16.mxu0 %v6765
        %8932 = vmatpush1.bf16.msra.mxu0 %v6764
        %8933 = vmatprep.subr.bf16.mxu0 %v6797
        %8934 = vmatpush1.bf16.msra.mxu0 %v6796
        %8935 = vmatprep.mubr.bf16.mxu0 %v6811
        %8936 = vmatmul.mubr.bf16.gmra.mrb[0].mxu0 %v6810
        %v8937 = vpop.f32.mrb[0].mxu0
        %v8938 = vadd.f32 %v8897, %v8937
        %v8939 = vpop.f32.mrb[0].mxu0
        %v8940 = vadd.f32 %v8899, %v8939
        %v8941 = vpop.f32.mrb[0].mxu0
        %v8942 = vpop.f32.mrb[0].mxu0
        %8943 = vdwg.mxu0
        %8944 = vmatprep.subr.bf16.mxu0 %v4783
        %8945 = vmatpush1.bf16.msra.mxu0 %v4782
        %8946 = vmatprep.subr.bf16.mxu0 %v4815
        %8947 = vmatpush1.bf16.msra.mxu0 %v4814
        %8948 = vmatprep.subr.bf16.mxu0 %v4847
        %8949 = vmatpush1.bf16.msra.mxu0 %v4846
        %8950 = vmatprep.subr.bf16.mxu0 %v4879
        %8951 = vmatpush1.bf16.msra.mxu0 %v4878
        %8952 = vmatprep.subr.bf16.mxu0 %v4911
        %8953 = vmatpush1.bf16.msra.mxu0 %v4910
        %8954 = vmatprep.subr.bf16.mxu0 %v4943
        %8955 = vmatpush1.bf16.msra.mxu0 %v4942
        %8956 = vmatprep.subr.bf16.mxu0 %v4975
        %8957 = vmatpush1.bf16.msra.mxu0 %v4974
        %8958 = vmatprep.subr.bf16.mxu0 %v5007
        %8959 = vmatpush1.bf16.msra.mxu0 %v5006
        %8960 = vmatprep.subr.bf16.mxu0 %v5039
        %8961 = vmatpush1.bf16.msra.mxu0 %v5038
        %8962 = vmatprep.subr.bf16.mxu0 %v5071
        %8963 = vmatpush1.bf16.msra.mxu0 %v5070
        %8964 = vmatprep.subr.bf16.mxu0 %v5103
        %8965 = vmatpush1.bf16.msra.mxu0 %v5102
        %8966 = vmatprep.subr.bf16.mxu0 %v5135
        %8967 = vmatpush1.bf16.msra.mxu0 %v5134
        %8968 = vmatprep.subr.bf16.mxu0 %v5167
        %8969 = vmatpush1.bf16.msra.mxu0 %v5166
        %8970 = vmatprep.subr.bf16.mxu0 %v5199
        %8971 = vmatpush1.bf16.msra.mxu0 %v5198
        %8972 = vmatprep.subr.bf16.mxu0 %v5231
        %8973 = vmatpush1.bf16.msra.mxu0 %v5230
        %8974 = vmatprep.subr.bf16.mxu0 %v5263
        %8975 = vmatpush1.bf16.msra.mxu0 %v5262
        %8976 = vmatprep.mubr.bf16.mxu0 %v6805
        %8977 = vmatmul.mubr.bf16.gmra.mrb[0].mxu0 %v6804
        %v8978 = vpop.f32.mrb[0].mxu0
        %v8979 = vadd.f32 0.0, %v8978
        %v8980 = vpop.f32.mrb[0].mxu0
        %v8981 = vadd.f32 0.0, %v8980
        %v8982 = vpop.f32.mrb[0].mxu0
        %v8983 = vpop.f32.mrb[0].mxu0
        %8984 = vdwg.mxu0
        %8985 = vmatprep.subr.bf16.mxu0 %v5295
        %8986 = vmatpush1.bf16.msra.mxu0 %v5294
        %8987 = vmatprep.subr.bf16.mxu0 %v5327
        %8988 = vmatpush1.bf16.msra.mxu0 %v5326
        %8989 = vmatprep.subr.bf16.mxu0 %v5359
        %8990 = vmatpush1.bf16.msra.mxu0 %v5358
        %8991 = vmatprep.subr.bf16.mxu0 %v5391
        %8992 = vmatpush1.bf16.msra.mxu0 %v5390
        %8993 = vmatprep.subr.bf16.mxu0 %v5423
        %8994 = vmatpush1.bf16.msra.mxu0 %v5422
        %8995 = vmatprep.subr.bf16.mxu0 %v5455
        %8996 = vmatpush1.bf16.msra.mxu0 %v5454
        %8997 = vmatprep.subr.bf16.mxu0 %v5487
        %8998 = vmatpush1.bf16.msra.mxu0 %v5486
        %8999 = vmatprep.subr.bf16.mxu0 %v5519
        %9000 = vmatpush1.bf16.msra.mxu0 %v5518
        %9001 = vmatprep.subr.bf16.mxu0 %v5551
        %9002 = vmatpush1.bf16.msra.mxu0 %v5550
        %9003 = vmatprep.subr.bf16.mxu0 %v5583
        %9004 = vmatpush1.bf16.msra.mxu0 %v5582
        %9005 = vmatprep.subr.bf16.mxu0 %v5615
        %9006 = vmatpush1.bf16.msra.mxu0 %v5614
        %9007 = vmatprep.subr.bf16.mxu0 %v5647
        %9008 = vmatpush1.bf16.msra.mxu0 %v5646
        %9009 = vmatprep.subr.bf16.mxu0 %v5679
        %9010 = vmatpush1.bf16.msra.mxu0 %v5678
        %9011 = vmatprep.subr.bf16.mxu0 %v5711
        %9012 = vmatpush1.bf16.msra.mxu0 %v5710
        %9013 = vmatprep.subr.bf16.mxu0 %v5743
        %9014 = vmatpush1.bf16.msra.mxu0 %v5742
        %9015 = vmatprep.subr.bf16.mxu0 %v5775
        %9016 = vmatpush1.bf16.msra.mxu0 %v5774
        %9017 = vmatprep.mubr.bf16.mxu0 %v6807
        %9018 = vmatmul.mubr.bf16.gmra.mrb[0].mxu0 %v6806
        %v9019 = vpop.f32.mrb[0].mxu0
        %v9020 = vadd.f32 %v8979, %v9019
        %v9021 = vpop.f32.mrb[0].mxu0
        %v9022 = vadd.f32 %v8981, %v9021
        %v9023 = vpop.f32.mrb[0].mxu0
        %v9024 = vpop.f32.mrb[0].mxu0
        %9025 = vdwg.mxu0
        %9026 = vmatprep.subr.bf16.mxu0 %v5807
        %9027 = vmatpush1.bf16.msra.mxu0 %v5806
        %9028 = vmatprep.subr.bf16.mxu0 %v5839
        %9029 = vmatpush1.bf16.msra.mxu0 %v5838
        %9030 = vmatprep.subr.bf16.mxu0 %v5871
        %9031 = vmatpush1.bf16.msra.mxu0 %v5870
        %9032 = vmatprep.subr.bf16.mxu0 %v5903
        %9033 = vmatpush1.bf16.msra.mxu0 %v5902
        %9034 = vmatprep.subr.bf16.mxu0 %v5935
        %9035 = vmatpush1.bf16.msra.mxu0 %v5934
        %9036 = vmatprep.subr.bf16.mxu0 %v5967
        %9037 = vmatpush1.bf16.msra.mxu0 %v5966
        %9038 = vmatprep.subr.bf16.mxu0 %v5999
        %9039 = vmatpush1.bf16.msra.mxu0 %v5998
        %9040 = vmatprep.subr.bf16.mxu0 %v6031
        %9041 = vmatpush1.bf16.msra.mxu0 %v6030
        %9042 = vmatprep.subr.bf16.mxu0 %v6063
        %9043 = vmatpush1.bf16.msra.mxu0 %v6062
        %9044 = vmatprep.subr.bf16.mxu0 %v6095
        %9045 = vmatpush1.bf16.msra.mxu0 %v6094
        %9046 = vmatprep.subr.bf16.mxu0 %v6127
        %9047 = vmatpush1.bf16.msra.mxu0 %v6126
        %9048 = vmatprep.subr.bf16.mxu0 %v6159
        %9049 = vmatpush1.bf16.msra.mxu0 %v6158
        %9050 = vmatprep.subr.bf16.mxu0 %v6191
        %9051 = vmatpush1.bf16.msra.mxu0 %v6190
        %9052 = vmatprep.subr.bf16.mxu0 %v6223
        %9053 = vmatpush1.bf16.msra.mxu0 %v6222
        %9054 = vmatprep.subr.bf16.mxu0 %v6255
        %9055 = vmatpush1.bf16.msra.mxu0 %v6254
        %9056 = vmatprep.subr.bf16.mxu0 %v6287
        %9057 = vmatpush1.bf16.msra.mxu0 %v6286
        %9058 = vmatprep.mubr.bf16.mxu0 %v6809
        %9059 = vmatmul.mubr.bf16.gmra.mrb[0].mxu0 %v6808
        %v9060 = vpop.f32.mrb[0].mxu0
        %v9061 = vadd.f32 %v9020, %v9060
        %v9062 = vpop.f32.mrb[0].mxu0
        %v9063 = vadd.f32 %v9022, %v9062
        %v9064 = vpop.f32.mrb[0].mxu0
        %v9065 = vpop.f32.mrb[0].mxu0
        %9066 = vdwg.mxu0
        %9067 = vmatprep.subr.bf16.mxu0 %v6319
        %9068 = vmatpush1.bf16.msra.mxu0 %v6318
        %9069 = vmatprep.subr.bf16.mxu0 %v6351
        %9070 = vmatpush1.bf16.msra.mxu0 %v6350
        %9071 = vmatprep.subr.bf16.mxu0 %v6383
        %9072 = vmatpush1.bf16.msra.mxu0 %v6382
        %9073 = vmatprep.subr.bf16.mxu0 %v6415
        %9074 = vmatpush1.bf16.msra.mxu0 %v6414
        %9075 = vmatprep.subr.bf16.mxu0 %v6447
        %9076 = vmatpush1.bf16.msra.mxu0 %v6446
        %9077 = vmatprep.subr.bf16.mxu0 %v6479
        %9078 = vmatpush1.bf16.msra.mxu0 %v6478
        %9079 = vmatprep.subr.bf16.mxu0 %v6511
        %9080 = vmatpush1.bf16.msra.mxu0 %v6510
        %9081 = vmatprep.subr.bf16.mxu0 %v6543
        %9082 = vmatpush1.bf16.msra.mxu0 %v6542
        %9083 = vmatprep.subr.bf16.mxu0 %v6575
        %9084 = vmatpush1.bf16.msra.mxu0 %v6574
        %9085 = vmatprep.subr.bf16.mxu0 %v6607
        %9086 = vmatpush1.bf16.msra.mxu0 %v6606
        %9087 = vmatprep.subr.bf16.mxu0 %v6639
        %9088 = vmatpush1.bf16.msra.mxu0 %v6638
        %9089 = vmatprep.subr.bf16.mxu0 %v6671
        %9090 = vmatpush1.bf16.msra.mxu0 %v6670
        %9091 = vmatprep.subr.bf16.mxu0 %v6703
        %9092 = vmatpush1.bf16.msra.mxu0 %v6702
        %9093 = vmatprep.subr.bf16.mxu0 %v6735
        %9094 = vmatpush1.bf16.msra.mxu0 %v6734
        %9095 = vmatprep.subr.bf16.mxu0 %v6767
        %9096 = vmatpush1.bf16.msra.mxu0 %v6766
        %9097 = vmatprep.subr.bf16.mxu0 %v6799
        %9098 = vmatpush1.bf16.msra.mxu0 %v6798
        %9099 = vmatprep.mubr.bf16.mxu0 %v6811
        %9100 = vmatmul.mubr.bf16.gmra.mrb[0].mxu0 %v6810
        %v9101 = vpop.f32.mrb[0].mxu0
        %v9102 = vadd.f32 %v9061, %v9101
        %v9103 = vpop.f32.mrb[0].mxu0
        %v9104 = vadd.f32 %v9063, %v9103
        %v9105 = vpop.f32.mrb[0].mxu0
        %v9106 = vpop.f32.mrb[0].mxu0
        %9107 = vdwg.mxu0
        %9108 = vmatprep.subr.bf16.mxu0 %v4785
        %9109 = vmatpush1.bf16.msra.mxu0 %v4784
        %9110 = vmatprep.subr.bf16.mxu0 %v4817
        %9111 = vmatpush1.bf16.msra.mxu0 %v4816
        %9112 = vmatprep.subr.bf16.mxu0 %v4849
        %9113 = vmatpush1.bf16.msra.mxu0 %v4848
        %9114 = vmatprep.subr.bf16.mxu0 %v4881
        %9115 = vmatpush1.bf16.msra.mxu0 %v4880
        %9116 = vmatprep.subr.bf16.mxu0 %v4913
        %9117 = vmatpush1.bf16.msra.mxu0 %v4912
        %9118 = vmatprep.subr.bf16.mxu0 %v4945
        %9119 = vmatpush1.bf16.msra.mxu0 %v4944
        %9120 = vmatprep.subr.bf16.mxu0 %v4977
        %9121 = vmatpush1.bf16.msra.mxu0 %v4976
        %9122 = vmatprep.subr.bf16.mxu0 %v5009
        %9123 = vmatpush1.bf16.msra.mxu0 %v5008
        %9124 = vmatprep.subr.bf16.mxu0 %v5041
        %9125 = vmatpush1.bf16.msra.mxu0 %v5040
        %9126 = vmatprep.subr.bf16.mxu0 %v5073
        %9127 = vmatpush1.bf16.msra.mxu0 %v5072
        %9128 = vmatprep.subr.bf16.mxu0 %v5105
        %9129 = vmatpush1.bf16.msra.mxu0 %v5104
        %9130 = vmatprep.subr.bf16.mxu0 %v5137
        %9131 = vmatpush1.bf16.msra.mxu0 %v5136
        %9132 = vmatprep.subr.bf16.mxu0 %v5169
        %9133 = vmatpush1.bf16.msra.mxu0 %v5168
        %9134 = vmatprep.subr.bf16.mxu0 %v5201
        %9135 = vmatpush1.bf16.msra.mxu0 %v5200
        %9136 = vmatprep.subr.bf16.mxu0 %v5233
        %9137 = vmatpush1.bf16.msra.mxu0 %v5232
        %9138 = vmatprep.subr.bf16.mxu0 %v5265
        %9139 = vmatpush1.bf16.msra.mxu0 %v5264
        %9140 = vmatprep.mubr.bf16.mxu0 %v6805
        %9141 = vmatmul.mubr.bf16.gmra.mrb[0].mxu0 %v6804
        %v9142 = vpop.f32.mrb[0].mxu0
        %v9143 = vadd.f32 0.0, %v9142
        %v9144 = vpop.f32.mrb[0].mxu0
        %v9145 = vadd.f32 0.0, %v9144
        %v9146 = vpop.f32.mrb[0].mxu0
        %v9147 = vpop.f32.mrb[0].mxu0
        %9148 = vdwg.mxu0
        %9149 = vmatprep.subr.bf16.mxu0 %v5297
        %9150 = vmatpush1.bf16.msra.mxu0 %v5296
        %9151 = vmatprep.subr.bf16.mxu0 %v5329
        %9152 = vmatpush1.bf16.msra.mxu0 %v5328
        %9153 = vmatprep.subr.bf16.mxu0 %v5361
        %9154 = vmatpush1.bf16.msra.mxu0 %v5360
        %9155 = vmatprep.subr.bf16.mxu0 %v5393
        %9156 = vmatpush1.bf16.msra.mxu0 %v5392
        %9157 = vmatprep.subr.bf16.mxu0 %v5425
        %9158 = vmatpush1.bf16.msra.mxu0 %v5424
        %9159 = vmatprep.subr.bf16.mxu0 %v5457
        %9160 = vmatpush1.bf16.msra.mxu0 %v5456
        %9161 = vmatprep.subr.bf16.mxu0 %v5489
        %9162 = vmatpush1.bf16.msra.mxu0 %v5488
        %9163 = vmatprep.subr.bf16.mxu0 %v5521
        %9164 = vmatpush1.bf16.msra.mxu0 %v5520
        %9165 = vmatprep.subr.bf16.mxu0 %v5553
        %9166 = vmatpush1.bf16.msra.mxu0 %v5552
        %9167 = vmatprep.subr.bf16.mxu0 %v5585
        %9168 = vmatpush1.bf16.msra.mxu0 %v5584
        %9169 = vmatprep.subr.bf16.mxu0 %v5617
        %9170 = vmatpush1.bf16.msra.mxu0 %v5616
        %9171 = vmatprep.subr.bf16.mxu0 %v5649
        %9172 = vmatpush1.bf16.msra.mxu0 %v5648
        %9173 = vmatprep.subr.bf16.mxu0 %v5681
        %9174 = vmatpush1.bf16.msra.mxu0 %v5680
        %9175 = vmatprep.subr.bf16.mxu0 %v5713
        %9176 = vmatpush1.bf16.msra.mxu0 %v5712
        %9177 = vmatprep.subr.bf16.mxu0 %v5745
        %9178 = vmatpush1.bf16.msra.mxu0 %v5744
        %9179 = vmatprep.subr.bf16.mxu0 %v5777
        %9180 = vmatpush1.bf16.msra.mxu0 %v5776
        %9181 = vmatprep.mubr.bf16.mxu0 %v6807
        %9182 = vmatmul.mubr.bf16.gmra.mrb[0].mxu0 %v6806
        %v9183 = vpop.f32.mrb[0].mxu0
        %v9184 = vadd.f32 %v9143, %v9183
        %v9185 = vpop.f32.mrb[0].mxu0
        %v9186 = vadd.f32 %v9145, %v9185
        %v9187 = vpop.f32.mrb[0].mxu0
        %v9188 = vpop.f32.mrb[0].mxu0
        %9189 = vdwg.mxu0
        %9190 = vmatprep.subr.bf16.mxu0 %v5809
        %9191 = vmatpush1.bf16.msra.mxu0 %v5808
        %9192 = vmatprep.subr.bf16.mxu0 %v5841
        %9193 = vmatpush1.bf16.msra.mxu0 %v5840
        %9194 = vmatprep.subr.bf16.mxu0 %v5873
        %9195 = vmatpush1.bf16.msra.mxu0 %v5872
        %9196 = vmatprep.subr.bf16.mxu0 %v5905
        %9197 = vmatpush1.bf16.msra.mxu0 %v5904
        %9198 = vmatprep.subr.bf16.mxu0 %v5937
        %9199 = vmatpush1.bf16.msra.mxu0 %v5936
        %9200 = vmatprep.subr.bf16.mxu0 %v5969
        %9201 = vmatpush1.bf16.msra.mxu0 %v5968
        %9202 = vmatprep.subr.bf16.mxu0 %v6001
        %9203 = vmatpush1.bf16.msra.mxu0 %v6000
        %9204 = vmatprep.subr.bf16.mxu0 %v6033
        %9205 = vmatpush1.bf16.msra.mxu0 %v6032
        %9206 = vmatprep.subr.bf16.mxu0 %v6065
        %9207 = vmatpush1.bf16.msra.mxu0 %v6064
        %9208 = vmatprep.subr.bf16.mxu0 %v6097
        %9209 = vmatpush1.bf16.msra.mxu0 %v6096
        %9210 = vmatprep.subr.bf16.mxu0 %v6129
        %9211 = vmatpush1.bf16.msra.mxu0 %v6128
        %9212 = vmatprep.subr.bf16.mxu0 %v6161
        %9213 = vmatpush1.bf16.msra.mxu0 %v6160
        %9214 = vmatprep.subr.bf16.mxu0 %v6193
        %9215 = vmatpush1.bf16.msra.mxu0 %v6192
        %9216 = vmatprep.subr.bf16.mxu0 %v6225
        %9217 = vmatpush1.bf16.msra.mxu0 %v6224
        %9218 = vmatprep.subr.bf16.mxu0 %v6257
        %9219 = vmatpush1.bf16.msra.mxu0 %v6256
        %9220 = vmatprep.subr.bf16.mxu0 %v6289
        %9221 = vmatpush1.bf16.msra.mxu0 %v6288
        %9222 = vmatprep.mubr.bf16.mxu0 %v6809
        %9223 = vmatmul.mubr.bf16.gmra.mrb[0].mxu0 %v6808
        %v9224 = vpop.f32.mrb[0].mxu0
        %v9225 = vadd.f32 %v9184, %v9224
        %v9226 = vpop.f32.mrb[0].mxu0
        %v9227 = vadd.f32 %v9186, %v9226
        %v9228 = vpop.f32.mrb[0].mxu0
        %v9229 = vpop.f32.mrb[0].mxu0
        %9230 = vdwg.mxu0
        %9231 = vmatprep.subr.bf16.mxu0 %v6321
        %9232 = vmatpush1.bf16.msra.mxu0 %v6320
        %9233 = vmatprep.subr.bf16.mxu0 %v6353
        %9234 = vmatpush1.bf16.msra.mxu0 %v6352
        %9235 = vmatprep.subr.bf16.mxu0 %v6385
        %9236 = vmatpush1.bf16.msra.mxu0 %v6384
        %9237 = vmatprep.subr.bf16.mxu0 %v6417
        %9238 = vmatpush1.bf16.msra.mxu0 %v6416
        %9239 = vmatprep.subr.bf16.mxu0 %v6449
        %9240 = vmatpush1.bf16.msra.mxu0 %v6448
        %9241 = vmatprep.subr.bf16.mxu0 %v6481
        %9242 = vmatpush1.bf16.msra.mxu0 %v6480
        %9243 = vmatprep.subr.bf16.mxu0 %v6513
        %9244 = vmatpush1.bf16.msra.mxu0 %v6512
        %9245 = vmatprep.subr.bf16.mxu0 %v6545
        %9246 = vmatpush1.bf16.msra.mxu0 %v6544
        %9247 = vmatprep.subr.bf16.mxu0 %v6577
        %9248 = vmatpush1.bf16.msra.mxu0 %v6576
        %9249 = vmatprep.subr.bf16.mxu0 %v6609
        %9250 = vmatpush1.bf16.msra.mxu0 %v6608
        %9251 = vmatprep.subr.bf16.mxu0 %v6641
        %9252 = vmatpush1.bf16.msra.mxu0 %v6640
        %9253 = vmatprep.subr.bf16.mxu0 %v6673
        %9254 = vmatpush1.bf16.msra.mxu0 %v6672
        %9255 = vmatprep.subr.bf16.mxu0 %v6705
        %9256 = vmatpush1.bf16.msra.mxu0 %v6704
        %9257 = vmatprep.subr.bf16.mxu0 %v6737
        %9258 = vmatpush1.bf16.msra.mxu0 %v6736
        %9259 = vmatprep.subr.bf16.mxu0 %v6769
        %9260 = vmatpush1.bf16.msra.mxu0 %v6768
        %9261 = vmatprep.subr.bf16.mxu0 %v6801
        %9262 = vmatpush1.bf16.msra.mxu0 %v6800
        %9263 = vmatprep.mubr.bf16.mxu0 %v6811
        %9264 = vmatmul.mubr.bf16.gmra.mrb[0].mxu0 %v6810
        %v9265 = vpop.f32.mrb[0].mxu0
        %v9266 = vadd.f32 %v9225, %v9265
        %v9267 = vpop.f32.mrb[0].mxu0
        %v9268 = vadd.f32 %v9227, %v9267
        %v9269 = vpop.f32.mrb[0].mxu0
        %v9270 = vpop.f32.mrb[0].mxu0
        %9271 = vdwg.mxu0
        %9272 = vmatprep.subr.bf16.mxu0 %v4787
        %9273 = vmatpush1.bf16.msra.mxu0 %v4786
        %9274 = vmatprep.subr.bf16.mxu0 %v4819
        %9275 = vmatpush1.bf16.msra.mxu0 %v4818
        %9276 = vmatprep.subr.bf16.mxu0 %v4851
        %9277 = vmatpush1.bf16.msra.mxu0 %v4850
        %9278 = vmatprep.subr.bf16.mxu0 %v4883
        %9279 = vmatpush1.bf16.msra.mxu0 %v4882
        %9280 = vmatprep.subr.bf16.mxu0 %v4915
        %9281 = vmatpush1.bf16.msra.mxu0 %v4914
        %9282 = vmatprep.subr.bf16.mxu0 %v4947
        %9283 = vmatpush1.bf16.msra.mxu0 %v4946
        %9284 = vmatprep.subr.bf16.mxu0 %v4979
        %9285 = vmatpush1.bf16.msra.mxu0 %v4978
        %9286 = vmatprep.subr.bf16.mxu0 %v5011
        %9287 = vmatpush1.bf16.msra.mxu0 %v5010
        %9288 = vmatprep.subr.bf16.mxu0 %v5043
        %9289 = vmatpush1.bf16.msra.mxu0 %v5042
        %9290 = vmatprep.subr.bf16.mxu0 %v5075
        %9291 = vmatpush1.bf16.msra.mxu0 %v5074
        %9292 = vmatprep.subr.bf16.mxu0 %v5107
        %9293 = vmatpush1.bf16.msra.mxu0 %v5106
        %9294 = vmatprep.subr.bf16.mxu0 %v5139
        %9295 = vmatpush1.bf16.msra.mxu0 %v5138
        %9296 = vmatprep.subr.bf16.mxu0 %v5171
        %9297 = vmatpush1.bf16.msra.mxu0 %v5170
        %9298 = vmatprep.subr.bf16.mxu0 %v5203
        %9299 = vmatpush1.bf16.msra.mxu0 %v5202
        %9300 = vmatprep.subr.bf16.mxu0 %v5235
        %9301 = vmatpush1.bf16.msra.mxu0 %v5234
        %9302 = vmatprep.subr.bf16.mxu0 %v5267
        %9303 = vmatpush1.bf16.msra.mxu0 %v5266
        %9304 = vmatprep.mubr.bf16.mxu0 %v6805
        %9305 = vmatmul.mubr.bf16.gmra.mrb[0].mxu0 %v6804
        %v9306 = vpop.f32.mrb[0].mxu0
        %v9307 = vadd.f32 0.0, %v9306
        %v9308 = vpop.f32.mrb[0].mxu0
        %v9309 = vadd.f32 0.0, %v9308
        %v9310 = vpop.f32.mrb[0].mxu0
        %v9311 = vpop.f32.mrb[0].mxu0
        %9312 = vdwg.mxu0
        %9313 = vmatprep.subr.bf16.mxu0 %v5299
        %9314 = vmatpush1.bf16.msra.mxu0 %v5298
        %9315 = vmatprep.subr.bf16.mxu0 %v5331
        %9316 = vmatpush1.bf16.msra.mxu0 %v5330
        %9317 = vmatprep.subr.bf16.mxu0 %v5363
        %9318 = vmatpush1.bf16.msra.mxu0 %v5362
        %9319 = vmatprep.subr.bf16.mxu0 %v5395
        %9320 = vmatpush1.bf16.msra.mxu0 %v5394
        %9321 = vmatprep.subr.bf16.mxu0 %v5427
        %9322 = vmatpush1.bf16.msra.mxu0 %v5426
        %9323 = vmatprep.subr.bf16.mxu0 %v5459
        %9324 = vmatpush1.bf16.msra.mxu0 %v5458
        %9325 = vmatprep.subr.bf16.mxu0 %v5491
        %9326 = vmatpush1.bf16.msra.mxu0 %v5490
        %9327 = vmatprep.subr.bf16.mxu0 %v5523
        %9328 = vmatpush1.bf16.msra.mxu0 %v5522
        %9329 = vmatprep.subr.bf16.mxu0 %v5555
        %9330 = vmatpush1.bf16.msra.mxu0 %v5554
        %9331 = vmatprep.subr.bf16.mxu0 %v5587
        %9332 = vmatpush1.bf16.msra.mxu0 %v5586
        %9333 = vmatprep.subr.bf16.mxu0 %v5619
        %9334 = vmatpush1.bf16.msra.mxu0 %v5618
        %9335 = vmatprep.subr.bf16.mxu0 %v5651
        %9336 = vmatpush1.bf16.msra.mxu0 %v5650
        %9337 = vmatprep.subr.bf16.mxu0 %v5683
        %9338 = vmatpush1.bf16.msra.mxu0 %v5682
        %9339 = vmatprep.subr.bf16.mxu0 %v5715
        %9340 = vmatpush1.bf16.msra.mxu0 %v5714
        %9341 = vmatprep.subr.bf16.mxu0 %v5747
        %9342 = vmatpush1.bf16.msra.mxu0 %v5746
        %9343 = vmatprep.subr.bf16.mxu0 %v5779
        %9344 = vmatpush1.bf16.msra.mxu0 %v5778
        %9345 = vmatprep.mubr.bf16.mxu0 %v6807
        %9346 = vmatmul.mubr.bf16.gmra.mrb[0].mxu0 %v6806
        %v9347 = vpop.f32.mrb[0].mxu0
        %v9348 = vadd.f32 %v9307, %v9347
        %v9349 = vpop.f32.mrb[0].mxu0
        %v9350 = vadd.f32 %v9309, %v9349
        %v9351 = vpop.f32.mrb[0].mxu0
        %v9352 = vpop.f32.mrb[0].mxu0
        %9353 = vdwg.mxu0
        %9354 = vmatprep.subr.bf16.mxu0 %v5811
        %9355 = vmatpush1.bf16.msra.mxu0 %v5810
        %9356 = vmatprep.subr.bf16.mxu0 %v5843
        %9357 = vmatpush1.bf16.msra.mxu0 %v5842
        %9358 = vmatprep.subr.bf16.mxu0 %v5875
        %9359 = vmatpush1.bf16.msra.mxu0 %v5874
        %9360 = vmatprep.subr.bf16.mxu0 %v5907
        %9361 = vmatpush1.bf16.msra.mxu0 %v5906
        %9362 = vmatprep.subr.bf16.mxu0 %v5939
        %9363 = vmatpush1.bf16.msra.mxu0 %v5938
        %9364 = vmatprep.subr.bf16.mxu0 %v5971
        %9365 = vmatpush1.bf16.msra.mxu0 %v5970
        %9366 = vmatprep.subr.bf16.mxu0 %v6003
        %9367 = vmatpush1.bf16.msra.mxu0 %v6002
        %9368 = vmatprep.subr.bf16.mxu0 %v6035
        %9369 = vmatpush1.bf16.msra.mxu0 %v6034
        %9370 = vmatprep.subr.bf16.mxu0 %v6067
        %9371 = vmatpush1.bf16.msra.mxu0 %v6066
        %9372 = vmatprep.subr.bf16.mxu0 %v6099
        %9373 = vmatpush1.bf16.msra.mxu0 %v6098
        %9374 = vmatprep.subr.bf16.mxu0 %v6131
        %9375 = vmatpush1.bf16.msra.mxu0 %v6130
        %9376 = vmatprep.subr.bf16.mxu0 %v6163
        %9377 = vmatpush1.bf16.msra.mxu0 %v6162
        %9378 = vmatprep.subr.bf16.mxu0 %v6195
        %9379 = vmatpush1.bf16.msra.mxu0 %v6194
        %9380 = vmatprep.subr.bf16.mxu0 %v6227
        %9381 = vmatpush1.bf16.msra.mxu0 %v6226
        %9382 = vmatprep.subr.bf16.mxu0 %v6259
        %9383 = vmatpush1.bf16.msra.mxu0 %v6258
        %9384 = vmatprep.subr.bf16.mxu0 %v6291
        %9385 = vmatpush1.bf16.msra.mxu0 %v6290
        %9386 = vmatprep.mubr.bf16.mxu0 %v6809
        %9387 = vmatmul.mubr.bf16.gmra.mrb[0].mxu0 %v6808
        %v9388 = vpop.f32.mrb[0].mxu0
        %v9389 = vadd.f32 %v9348, %v9388
        %v9390 = vpop.f32.mrb[0].mxu0
        %v9391 = vadd.f32 %v9350, %v9390
        %v9392 = vpop.f32.mrb[0].mxu0
        %v9393 = vpop.f32.mrb[0].mxu0
        %9394 = vdwg.mxu0
        %9395 = vmatprep.subr.bf16.mxu0 %v6323
        %9396 = vmatpush1.bf16.msra.mxu0 %v6322
        %9397 = vmatprep.subr.bf16.mxu0 %v6355
        %9398 = vmatpush1.bf16.msra.mxu0 %v6354
        %9399 = vmatprep.subr.bf16.mxu0 %v6387
        %9400 = vmatpush1.bf16.msra.mxu0 %v6386
        %9401 = vmatprep.subr.bf16.mxu0 %v6419
        %9402 = vmatpush1.bf16.msra.mxu0 %v6418
        %9403 = vmatprep.subr.bf16.mxu0 %v6451
        %9404 = vmatpush1.bf16.msra.mxu0 %v6450
        %9405 = vmatprep.subr.bf16.mxu0 %v6483
        %9406 = vmatpush1.bf16.msra.mxu0 %v6482
        %9407 = vmatprep.subr.bf16.mxu0 %v6515
        %9408 = vmatpush1.bf16.msra.mxu0 %v6514
        %9409 = vmatprep.subr.bf16.mxu0 %v6547
        %9410 = vmatpush1.bf16.msra.mxu0 %v6546
        %9411 = vmatprep.subr.bf16.mxu0 %v6579
        %9412 = vmatpush1.bf16.msra.mxu0 %v6578
        %9413 = vmatprep.subr.bf16.mxu0 %v6611
        %9414 = vmatpush1.bf16.msra.mxu0 %v6610
        %9415 = vmatprep.subr.bf16.mxu0 %v6643
        %9416 = vmatpush1.bf16.msra.mxu0 %v6642
        %9417 = vmatprep.subr.bf16.mxu0 %v6675
        %9418 = vmatpush1.bf16.msra.mxu0 %v6674
        %9419 = vmatprep.subr.bf16.mxu0 %v6707
        %9420 = vmatpush1.bf16.msra.mxu0 %v6706
        %9421 = vmatprep.subr.bf16.mxu0 %v6739
        %9422 = vmatpush1.bf16.msra.mxu0 %v6738
        %9423 = vmatprep.subr.bf16.mxu0 %v6771
        %9424 = vmatpush1.bf16.msra.mxu0 %v6770
        %9425 = vmatprep.subr.bf16.mxu0 %v6803
        %9426 = vmatpush1.bf16.msra.mxu0 %v6802
        %9427 = vmatprep.mubr.bf16.mxu0 %v6811
        %9428 = vmatmul.mubr.bf16.gmra.mrb[0].mxu0 %v6810
        %v9429 = vpop.f32.mrb[0].mxu0
        %v9430 = vadd.f32 %v9389, %v9429
        %v9431 = vpop.f32.mrb[0].mxu0
        %v9432 = vadd.f32 %v9391, %v9431
        %v9433 = vpop.f32.mrb[0].mxu0
        %v9434 = vpop.f32.mrb[0].mxu0
        %9435 = vdwg.mxu0
        %v9436 = vld [vmem:[%s900] sm:$0xff]
        %v9437 = vld [vmem:[%s900 + $0x8] sm:$0xff]
        %v9438 = vld [vmem:[%s900 + $0x10] sm:$0xff]
        %v9439 = vld [vmem:[%s900 + $0x18] sm:$0xff]
        %v9444 = vlaneseq
        %v9445 = vshrl.u32 %v9444, 7
        %v9446 = vsub.s32 0, %v9445
        %v9447 = vrot.slane %v9436, %v9446
        %v9448 = vlaneseq
        %v9449 = vshrl.u32 %v9448, 7
        %v9450 = vsub.s32 1, %v9449
        %v9451 = vrot.slane %v9436, %v9450
        %v9452 = vlaneseq
        %v9453 = vshrl.u32 %v9452, 7
        %v9454 = vsub.s32 2, %v9453
        %v9455 = vrot.slane %v9436, %v9454
        %v9456 = vlaneseq
        %v9457 = vshrl.u32 %v9456, 7
        %v9458 = vsub.s32 3, %v9457
        %v9459 = vrot.slane %v9436, %v9458
        %v9460 = vlaneseq
        %v9461 = vshrl.u32 %v9460, 7
        %v9462 = vsub.s32 4, %v9461
        %v9463 = vrot.slane %v9436, %v9462
        %v9464 = vlaneseq
        %v9465 = vshrl.u32 %v9464, 7
        %v9466 = vsub.s32 5, %v9465
        %v9467 = vrot.slane %v9436, %v9466
        %v9468 = vlaneseq
        %v9469 = vshrl.u32 %v9468, 7
        %v9470 = vsub.s32 6, %v9469
        %v9471 = vrot.slane %v9436, %v9470
        %v9472 = vlaneseq
        %v9473 = vshrl.u32 %v9472, 7
        %v9474 = vsub.s32 7, %v9473
        %v9475 = vrot.slane %v9436, %v9474
        %v9476 = vlaneseq
        %v9477 = vshrl.u32 %v9476, 7
        %v9478 = vsub.s32 0, %v9477
        %v9479 = vrot.slane %v9437, %v9478
        %v9480 = vlaneseq
        %v9481 = vshrl.u32 %v9480, 7
        %v9482 = vsub.s32 1, %v9481
        %v9483 = vrot.slane %v9437, %v9482
        %v9484 = vlaneseq
        %v9485 = vshrl.u32 %v9484, 7
        %v9486 = vsub.s32 2, %v9485
        %v9487 = vrot.slane %v9437, %v9486
        %v9488 = vlaneseq
        %v9489 = vshrl.u32 %v9488, 7
        %v9490 = vsub.s32 3, %v9489
        %v9491 = vrot.slane %v9437, %v9490
        %v9492 = vlaneseq
        %v9493 = vshrl.u32 %v9492, 7
        %v9494 = vsub.s32 4, %v9493
        %v9495 = vrot.slane %v9437, %v9494
        %v9496 = vlaneseq
        %v9497 = vshrl.u32 %v9496, 7
        %v9498 = vsub.s32 5, %v9497
        %v9499 = vrot.slane %v9437, %v9498
        %v9500 = vlaneseq
        %v9501 = vshrl.u32 %v9500, 7
        %v9502 = vsub.s32 6, %v9501
        %v9503 = vrot.slane %v9437, %v9502
        %v9504 = vlaneseq
        %v9505 = vshrl.u32 %v9504, 7
        %v9506 = vsub.s32 7, %v9505
        %v9507 = vrot.slane %v9437, %v9506
        %v9508 = vlaneseq
        %v9509 = vshrl.u32 %v9508, 7
        %v9510 = vsub.s32 0, %v9509
        %v9511 = vrot.slane %v9438, %v9510
        %v9512 = vlaneseq
        %v9513 = vshrl.u32 %v9512, 7
        %v9514 = vsub.s32 1, %v9513
        %v9515 = vrot.slane %v9438, %v9514
        %v9516 = vlaneseq
        %v9517 = vshrl.u32 %v9516, 7
        %v9518 = vsub.s32 2, %v9517
        %v9519 = vrot.slane %v9438, %v9518
        %v9520 = vlaneseq
        %v9521 = vshrl.u32 %v9520, 7
        %v9522 = vsub.s32 3, %v9521
        %v9523 = vrot.slane %v9438, %v9522
        %v9524 = vlaneseq
        %v9525 = vshrl.u32 %v9524, 7
        %v9526 = vsub.s32 4, %v9525
        %v9527 = vrot.slane %v9438, %v9526
        %v9528 = vlaneseq
        %v9529 = vshrl.u32 %v9528, 7
        %v9530 = vsub.s32 5, %v9529
        %v9531 = vrot.slane %v9438, %v9530
        %v9532 = vlaneseq
        %v9533 = vshrl.u32 %v9532, 7
        %v9534 = vsub.s32 6, %v9533
        %v9535 = vrot.slane %v9438, %v9534
        %v9536 = vlaneseq
        %v9537 = vshrl.u32 %v9536, 7
        %v9538 = vsub.s32 7, %v9537
        %v9539 = vrot.slane %v9438, %v9538
        %v9540 = vlaneseq
        %v9541 = vshrl.u32 %v9540, 7
        %v9542 = vsub.s32 0, %v9541
        %v9543 = vrot.slane %v9439, %v9542
        %v9544 = vlaneseq
        %v9545 = vshrl.u32 %v9544, 7
        %v9546 = vsub.s32 1, %v9545
        %v9547 = vrot.slane %v9439, %v9546
        %v9548 = vlaneseq
        %v9549 = vshrl.u32 %v9548, 7
        %v9550 = vsub.s32 2, %v9549
        %v9551 = vrot.slane %v9439, %v9550
        %v9552 = vlaneseq
        %v9553 = vshrl.u32 %v9552, 7
        %v9554 = vsub.s32 3, %v9553
        %v9555 = vrot.slane %v9439, %v9554
        %v9556 = vlaneseq
        %v9557 = vshrl.u32 %v9556, 7
        %v9558 = vsub.s32 4, %v9557
        %v9559 = vrot.slane %v9439, %v9558
        %v9560 = vlaneseq
        %v9561 = vshrl.u32 %v9560, 7
        %v9562 = vsub.s32 5, %v9561
        %v9563 = vrot.slane %v9439, %v9562
        %v9564 = vlaneseq
        %v9565 = vshrl.u32 %v9564, 7
        %v9566 = vsub.s32 6, %v9565
        %v9567 = vrot.slane %v9439, %v9566
        %v9568 = vlaneseq
        %v9569 = vshrl.u32 %v9568, 7
        %v9570 = vsub.s32 7, %v9569
        %v9571 = vrot.slane %v9439, %v9570
        %v9604 = vmul.f32 %v6970, %v9447
        %v9605 = vmul.f32 %v6972, %v9451
        %v9606 = vmul.f32 %v7134, %v9455
        %v9607 = vmul.f32 %v7136, %v9459
        %v9608 = vmul.f32 %v7298, %v9463
        %v9609 = vmul.f32 %v7300, %v9467
        %v9610 = vmul.f32 %v7462, %v9471
        %v9611 = vmul.f32 %v7464, %v9475
        %v9612 = vmul.f32 %v7626, %v9479
        %v9613 = vmul.f32 %v7628, %v9483
        %v9614 = vmul.f32 %v7790, %v9487
        %v9615 = vmul.f32 %v7792, %v9491
        %v9616 = vmul.f32 %v7954, %v9495
        %v9617 = vmul.f32 %v7956, %v9499
        %v9618 = vmul.f32 %v8118, %v9503
        %v9619 = vmul.f32 %v8120, %v9507
        %v9620 = vmul.f32 %v8282, %v9511
        %v9621 = vmul.f32 %v8284, %v9515
        %v9622 = vmul.f32 %v8446, %v9519
        %v9623 = vmul.f32 %v8448, %v9523
        %v9624 = vmul.f32 %v8610, %v9527
        %v9625 = vmul.f32 %v8612, %v9531
        %v9626 = vmul.f32 %v8774, %v9535
        %v9627 = vmul.f32 %v8776, %v9539
        %v9628 = vmul.f32 %v8938, %v9543
        %v9629 = vmul.f32 %v8940, %v9547
        %v9630 = vmul.f32 %v9102, %v9551
        %v9631 = vmul.f32 %v9104, %v9555
        %v9632 = vmul.f32 %v9266, %v9559
        %v9633 = vmul.f32 %v9268, %v9563
        %v9634 = vmul.f32 %v9430, %v9567
        %v9635 = vmul.f32 %v9432, %v9571
        %v9636 = vld [vmem:[%s909] sm:$0xff]
        %v9637 = vld [vmem:[%s909 + $0x8] sm:$0xff]
        %v9638 = vld [vmem:[%s909 + $0x10] sm:$0xff]
        %v9639 = vld [vmem:[%s909 + $0x18] sm:$0xff]
        %v9644 = vlaneseq
        %v9645 = vshrl.u32 %v9644, 7
        %v9646 = vsub.s32 0, %v9645
        %v9647 = vrot.slane %v9636, %v9646
        %v9648 = vlaneseq
        %v9649 = vshrl.u32 %v9648, 7
        %v9650 = vsub.s32 1, %v9649
        %v9651 = vrot.slane %v9636, %v9650
        %v9652 = vlaneseq
        %v9653 = vshrl.u32 %v9652, 7
        %v9654 = vsub.s32 2, %v9653
        %v9655 = vrot.slane %v9636, %v9654
        %v9656 = vlaneseq
        %v9657 = vshrl.u32 %v9656, 7
        %v9658 = vsub.s32 3, %v9657
        %v9659 = vrot.slane %v9636, %v9658
        %v9660 = vlaneseq
        %v9661 = vshrl.u32 %v9660, 7
        %v9662 = vsub.s32 4, %v9661
        %v9663 = vrot.slane %v9636, %v9662
        %v9664 = vlaneseq
        %v9665 = vshrl.u32 %v9664, 7
        %v9666 = vsub.s32 5, %v9665
        %v9667 = vrot.slane %v9636, %v9666
        %v9668 = vlaneseq
        %v9669 = vshrl.u32 %v9668, 7
        %v9670 = vsub.s32 6, %v9669
        %v9671 = vrot.slane %v9636, %v9670
        %v9672 = vlaneseq
        %v9673 = vshrl.u32 %v9672, 7
        %v9674 = vsub.s32 7, %v9673
        %v9675 = vrot.slane %v9636, %v9674
        %v9676 = vlaneseq
        %v9677 = vshrl.u32 %v9676, 7
        %v9678 = vsub.s32 0, %v9677
        %v9679 = vrot.slane %v9637, %v9678
        %v9680 = vlaneseq
        %v9681 = vshrl.u32 %v9680, 7
        %v9682 = vsub.s32 1, %v9681
        %v9683 = vrot.slane %v9637, %v9682
        %v9684 = vlaneseq
        %v9685 = vshrl.u32 %v9684, 7
        %v9686 = vsub.s32 2, %v9685
        %v9687 = vrot.slane %v9637, %v9686
        %v9688 = vlaneseq
        %v9689 = vshrl.u32 %v9688, 7
        %v9690 = vsub.s32 3, %v9689
        %v9691 = vrot.slane %v9637, %v9690
        %v9692 = vlaneseq
        %v9693 = vshrl.u32 %v9692, 7
        %v9694 = vsub.s32 4, %v9693
        %v9695 = vrot.slane %v9637, %v9694
        %v9696 = vlaneseq
        %v9697 = vshrl.u32 %v9696, 7
        %v9698 = vsub.s32 5, %v9697
        %v9699 = vrot.slane %v9637, %v9698
        %v9700 = vlaneseq
        %v9701 = vshrl.u32 %v9700, 7
        %v9702 = vsub.s32 6, %v9701
        %v9703 = vrot.slane %v9637, %v9702
        %v9704 = vlaneseq
        %v9705 = vshrl.u32 %v9704, 7
        %v9706 = vsub.s32 7, %v9705
        %v9707 = vrot.slane %v9637, %v9706
        %v9708 = vlaneseq
        %v9709 = vshrl.u32 %v9708, 7
        %v9710 = vsub.s32 0, %v9709
        %v9711 = vrot.slane %v9638, %v9710
        %v9712 = vlaneseq
        %v9713 = vshrl.u32 %v9712, 7
        %v9714 = vsub.s32 1, %v9713
        %v9715 = vrot.slane %v9638, %v9714
        %v9716 = vlaneseq
        %v9717 = vshrl.u32 %v9716, 7
        %v9718 = vsub.s32 2, %v9717
        %v9719 = vrot.slane %v9638, %v9718
        %v9720 = vlaneseq
        %v9721 = vshrl.u32 %v9720, 7
        %v9722 = vsub.s32 3, %v9721
        %v9723 = vrot.slane %v9638, %v9722
        %v9724 = vlaneseq
        %v9725 = vshrl.u32 %v9724, 7
        %v9726 = vsub.s32 4, %v9725
        %v9727 = vrot.slane %v9638, %v9726
        %v9728 = vlaneseq
        %v9729 = vshrl.u32 %v9728, 7
        %v9730 = vsub.s32 5, %v9729
        %v9731 = vrot.slane %v9638, %v9730
        %v9732 = vlaneseq
        %v9733 = vshrl.u32 %v9732, 7
        %v9734 = vsub.s32 6, %v9733
        %v9735 = vrot.slane %v9638, %v9734
        %v9736 = vlaneseq
        %v9737 = vshrl.u32 %v9736, 7
        %v9738 = vsub.s32 7, %v9737
        %v9739 = vrot.slane %v9638, %v9738
        %v9740 = vlaneseq
        %v9741 = vshrl.u32 %v9740, 7
        %v9742 = vsub.s32 0, %v9741
        %v9743 = vrot.slane %v9639, %v9742
        %v9744 = vlaneseq
        %v9745 = vshrl.u32 %v9744, 7
        %v9746 = vsub.s32 1, %v9745
        %v9747 = vrot.slane %v9639, %v9746
        %v9748 = vlaneseq
        %v9749 = vshrl.u32 %v9748, 7
        %v9750 = vsub.s32 2, %v9749
        %v9751 = vrot.slane %v9639, %v9750
        %v9752 = vlaneseq
        %v9753 = vshrl.u32 %v9752, 7
        %v9754 = vsub.s32 3, %v9753
        %v9755 = vrot.slane %v9639, %v9754
        %v9756 = vlaneseq
        %v9757 = vshrl.u32 %v9756, 7
        %v9758 = vsub.s32 4, %v9757
        %v9759 = vrot.slane %v9639, %v9758
        %v9760 = vlaneseq
        %v9761 = vshrl.u32 %v9760, 7
        %v9762 = vsub.s32 5, %v9761
        %v9763 = vrot.slane %v9639, %v9762
        %v9764 = vlaneseq
        %v9765 = vshrl.u32 %v9764, 7
        %v9766 = vsub.s32 6, %v9765
        %v9767 = vrot.slane %v9639, %v9766
        %v9768 = vlaneseq
        %v9769 = vshrl.u32 %v9768, 7
        %v9770 = vsub.s32 7, %v9769
        %v9771 = vrot.slane %v9639, %v9770
        %v9804 = vadd.f32 %v9604, %v9647
        %v9805 = vadd.f32 %v9605, %v9651
        %v9806 = vadd.f32 %v9606, %v9655
        %v9807 = vadd.f32 %v9607, %v9659
        %v9808 = vadd.f32 %v9608, %v9663
        %v9809 = vadd.f32 %v9609, %v9667
        %v9810 = vadd.f32 %v9610, %v9671
        %v9811 = vadd.f32 %v9611, %v9675
        %v9812 = vadd.f32 %v9612, %v9679
        %v9813 = vadd.f32 %v9613, %v9683
        %v9814 = vadd.f32 %v9614, %v9687
        %v9815 = vadd.f32 %v9615, %v9691
        %v9816 = vadd.f32 %v9616, %v9695
        %v9817 = vadd.f32 %v9617, %v9699
        %v9818 = vadd.f32 %v9618, %v9703
        %v9819 = vadd.f32 %v9619, %v9707
        %v9820 = vadd.f32 %v9620, %v9711
        %v9821 = vadd.f32 %v9621, %v9715
        %v9822 = vadd.f32 %v9622, %v9719
        %v9823 = vadd.f32 %v9623, %v9723
        %v9824 = vadd.f32 %v9624, %v9727
        %v9825 = vadd.f32 %v9625, %v9731
        %v9826 = vadd.f32 %v9626, %v9735
        %v9827 = vadd.f32 %v9627, %v9739
        %v9828 = vadd.f32 %v9628, %v9743
        %v9829 = vadd.f32 %v9629, %v9747
        %v9830 = vadd.f32 %v9630, %v9751
        %v9831 = vadd.f32 %v9631, %v9755
        %v9832 = vadd.f32 %v9632, %v9759
        %v9833 = vadd.f32 %v9633, %v9763
        %v9834 = vadd.f32 %v9634, %v9767
        %v9835 = vadd.f32 %v9635, %v9771
        %v9836 = vxor.u32 %v9804, 2147483648
        %v9837 = vxor.u32 %v9805, 2147483648
        %v9838 = vxor.u32 %v9806, 2147483648
        %v9839 = vxor.u32 %v9807, 2147483648
        %v9840 = vxor.u32 %v9808, 2147483648
        %v9841 = vxor.u32 %v9809, 2147483648
        %v9842 = vxor.u32 %v9810, 2147483648
        %v9843 = vxor.u32 %v9811, 2147483648
        %v9844 = vxor.u32 %v9812, 2147483648
        %v9845 = vxor.u32 %v9813, 2147483648
        %v9846 = vxor.u32 %v9814, 2147483648
        %v9847 = vxor.u32 %v9815, 2147483648
        %v9848 = vxor.u32 %v9816, 2147483648
        %v9849 = vxor.u32 %v9817, 2147483648
        %v9850 = vxor.u32 %v9818, 2147483648
        %v9851 = vxor.u32 %v9819, 2147483648
        %v9852 = vxor.u32 %v9820, 2147483648
        %v9853 = vxor.u32 %v9821, 2147483648
        %v9854 = vxor.u32 %v9822, 2147483648
        %v9855 = vxor.u32 %v9823, 2147483648
        %v9856 = vxor.u32 %v9824, 2147483648
        %v9857 = vxor.u32 %v9825, 2147483648
        %v9858 = vxor.u32 %v9826, 2147483648
        %v9859 = vxor.u32 %v9827, 2147483648
        %v9860 = vxor.u32 %v9828, 2147483648
        %v9861 = vxor.u32 %v9829, 2147483648
        %v9862 = vxor.u32 %v9830, 2147483648
        %v9863 = vxor.u32 %v9831, 2147483648
        %v9864 = vxor.u32 %v9832, 2147483648
        %v9865 = vxor.u32 %v9833, 2147483648
        %v9866 = vxor.u32 %v9834, 2147483648
        %v9867 = vxor.u32 %v9835, 2147483648
        %v9868 = vmul.f32 %v9836, 1.442695
        %v9869 = vpow.pop %v9868
        %v9870 = vmul.f32 %v9837, 1.442695
        %v9871 = vpow.pop %v9870
        %v9872 = vmul.f32 %v9838, 1.442695
        %v9873 = vpow.pop %v9872
        %v9874 = vmul.f32 %v9839, 1.442695
        %v9875 = vpow.pop %v9874
        %v9876 = vmul.f32 %v9840, 1.442695
        %v9877 = vpow.pop %v9876
        %v9878 = vmul.f32 %v9841, 1.442695
        %v9879 = vpow.pop %v9878
        %v9880 = vmul.f32 %v9842, 1.442695
        %v9881 = vpow.pop %v9880
        %v9882 = vmul.f32 %v9843, 1.442695
        %v9883 = vpow.pop %v9882
        %v9884 = vmul.f32 %v9844, 1.442695
        %v9885 = vpow.pop %v9884
        %v9886 = vmul.f32 %v9845, 1.442695
        %v9887 = vpow.pop %v9886
        %v9888 = vmul.f32 %v9846, 1.442695
        %v9889 = vpow.pop %v9888
        %v9890 = vmul.f32 %v9847, 1.442695
        %v9891 = vpow.pop %v9890
        %v9892 = vmul.f32 %v9848, 1.442695
        %v9893 = vpow.pop %v9892
        %v9894 = vmul.f32 %v9849, 1.442695
        %v9895 = vpow.pop %v9894
        %v9896 = vmul.f32 %v9850, 1.442695
        %v9897 = vpow.pop %v9896
        %v9898 = vmul.f32 %v9851, 1.442695
        %v9899 = vpow.pop %v9898
        %v9900 = vmul.f32 %v9852, 1.442695
        %v9901 = vpow.pop %v9900
        %v9902 = vmul.f32 %v9853, 1.442695
        %v9903 = vpow.pop %v9902
        %v9904 = vmul.f32 %v9854, 1.442695
        %v9905 = vpow.pop %v9904
        %v9906 = vmul.f32 %v9855, 1.442695
        %v9907 = vpow.pop %v9906
        %v9908 = vmul.f32 %v9856, 1.442695
        %v9909 = vpow.pop %v9908
        %v9910 = vmul.f32 %v9857, 1.442695
        %v9911 = vpow.pop %v9910
        %v9912 = vmul.f32 %v9858, 1.442695
        %v9913 = vpow.pop %v9912
        %v9914 = vmul.f32 %v9859, 1.442695
        %v9915 = vpow.pop %v9914
        %v9916 = vmul.f32 %v9860, 1.442695
        %v9917 = vpow.pop %v9916
        %v9918 = vmul.f32 %v9861, 1.442695
        %v9919 = vpow.pop %v9918
        %v9920 = vmul.f32 %v9862, 1.442695
        %v9921 = vpow.pop %v9920
        %v9922 = vmul.f32 %v9863, 1.442695
        %v9923 = vpow.pop %v9922
        %v9924 = vmul.f32 %v9864, 1.442695
        %v9925 = vpow.pop %v9924
        %v9926 = vmul.f32 %v9865, 1.442695
        %v9927 = vpow.pop %v9926
        %v9928 = vmul.f32 %v9866, 1.442695
        %v9929 = vpow.pop %v9928
        %v9930 = vmul.f32 %v9867, 1.442695
        %v9931 = vpow.pop %v9930
        %v9932 = vadd.f32 %v9869, 1.0
        %v9933 = vadd.f32 %v9871, 1.0
        %v9934 = vadd.f32 %v9873, 1.0
        %v9935 = vadd.f32 %v9875, 1.0
        %v9936 = vadd.f32 %v9877, 1.0
        %v9937 = vadd.f32 %v9879, 1.0
        %v9938 = vadd.f32 %v9881, 1.0
        %v9939 = vadd.f32 %v9883, 1.0
        %v9940 = vadd.f32 %v9885, 1.0
        %v9941 = vadd.f32 %v9887, 1.0
        %v9942 = vadd.f32 %v9889, 1.0
        %v9943 = vadd.f32 %v9891, 1.0
        %v9944 = vadd.f32 %v9893, 1.0
        %v9945 = vadd.f32 %v9895, 1.0
        %v9946 = vadd.f32 %v9897, 1.0
        %v9947 = vadd.f32 %v9899, 1.0
        %v9948 = vadd.f32 %v9901, 1.0
        %v9949 = vadd.f32 %v9903, 1.0
        %v9950 = vadd.f32 %v9905, 1.0
        %v9951 = vadd.f32 %v9907, 1.0
        %v9952 = vadd.f32 %v9909, 1.0
        %v9953 = vadd.f32 %v9911, 1.0
        %v9954 = vadd.f32 %v9913, 1.0
        %v9955 = vadd.f32 %v9915, 1.0
        %v9956 = vadd.f32 %v9917, 1.0
        %v9957 = vadd.f32 %v9919, 1.0
        %v9958 = vadd.f32 %v9921, 1.0
        %v9959 = vadd.f32 %v9923, 1.0
        %v9960 = vadd.f32 %v9925, 1.0
        %v9961 = vadd.f32 %v9927, 1.0
        %v9962 = vadd.f32 %v9929, 1.0
        %v9963 = vadd.f32 %v9931, 1.0
        %v9964 = vrcp.pop %v9932
        %v9965 = vmul.f32 1.0, %v9964
        %v9966 = vrcp.pop %v9933
        %v9967 = vmul.f32 1.0, %v9966
        %v9968 = vrcp.pop %v9934
        %v9969 = vmul.f32 1.0, %v9968
        %v9970 = vrcp.pop %v9935
        %v9971 = vmul.f32 1.0, %v9970
        %v9972 = vrcp.pop %v9936
        %v9973 = vmul.f32 1.0, %v9972
        %v9974 = vrcp.pop %v9937
        %v9975 = vmul.f32 1.0, %v9974
        %v9976 = vrcp.pop %v9938
        %v9977 = vmul.f32 1.0, %v9976
        %v9978 = vrcp.pop %v9939
        %v9979 = vmul.f32 1.0, %v9978
        %v9980 = vrcp.pop %v9940
        %v9981 = vmul.f32 1.0, %v9980
        %v9982 = vrcp.pop %v9941
        %v9983 = vmul.f32 1.0, %v9982
        %v9984 = vrcp.pop %v9942
        %v9985 = vmul.f32 1.0, %v9984
        %v9986 = vrcp.pop %v9943
        %v9987 = vmul.f32 1.0, %v9986
        %v9988 = vrcp.pop %v9944
        %v9989 = vmul.f32 1.0, %v9988
        %v9990 = vrcp.pop %v9945
        %v9991 = vmul.f32 1.0, %v9990
        %v9992 = vrcp.pop %v9946
        %v9993 = vmul.f32 1.0, %v9992
        %v9994 = vrcp.pop %v9947
        %v9995 = vmul.f32 1.0, %v9994
        %v9996 = vrcp.pop %v9948
        %v9997 = vmul.f32 1.0, %v9996
        %v9998 = vrcp.pop %v9949
        %v9999 = vmul.f32 1.0, %v9998
        %v10000 = vrcp.pop %v9950
        %v10001 = vmul.f32 1.0, %v10000
        %v10002 = vrcp.pop %v9951
        %v10003 = vmul.f32 1.0, %v10002
        %v10004 = vrcp.pop %v9952
        %v10005 = vmul.f32 1.0, %v10004
        %v10006 = vrcp.pop %v9953
        %v10007 = vmul.f32 1.0, %v10006
        %v10008 = vrcp.pop %v9954
        %v10009 = vmul.f32 1.0, %v10008
        %v10010 = vrcp.pop %v9955
        %v10011 = vmul.f32 1.0, %v10010
        %v10012 = vrcp.pop %v9956
        %v10013 = vmul.f32 1.0, %v10012
        %v10014 = vrcp.pop %v9957
        %v10015 = vmul.f32 1.0, %v10014
        %v10016 = vrcp.pop %v9958
        %v10017 = vmul.f32 1.0, %v10016
        %v10018 = vrcp.pop %v9959
        %v10019 = vmul.f32 1.0, %v10018
        %v10020 = vrcp.pop %v9960
        %v10021 = vmul.f32 1.0, %v10020
        %v10022 = vrcp.pop %v9961
        %v10023 = vmul.f32 1.0, %v10022
        %v10024 = vrcp.pop %v9962
        %v10025 = vmul.f32 1.0, %v10024
        %v10026 = vrcp.pop %v9963
        %v10027 = vmul.f32 1.0, %v10026
        %v10060 = vcombine.low %v9965, %v9967
        %v10061 = vcombine.low %v9969, %v9971
        %v10063 = vunpack.c.l.s4 1983009808
        %v10064 = vunpack.c.0.s8 %v10063
        %v10065 = vlaneseq
        %v10066 = vshrl.u32 %v10065, 7
        %v10067 = vsub.s32 %v10064, %v10066
        %v10068 = vrot.slane %v10060, %v10067
        %v10070 = vunpack.c.l.s4 1983009808
        %v10071 = vunpack.c.0.s8 %v10070
        %v10072 = vlaneseq
        %v10073 = vshrl.u32 %v10072, 7
        %v10074 = vsub.s32 %v10071, %v10073
        %v10075 = vrot.slane %v10061, %v10074
        %v10076 = vcombine.low %v10068, %v10075
        %v10077 = vcombine.low %v9973, %v9975
        %v10078 = vcombine.low %v9977, %v9979
        %v10080 = vunpack.c.l.s4 1983009808
        %v10081 = vunpack.c.0.s8 %v10080
        %v10082 = vlaneseq
        %v10083 = vshrl.u32 %v10082, 7
        %v10084 = vsub.s32 %v10081, %v10083
        %v10085 = vrot.slane %v10077, %v10084
        %v10087 = vunpack.c.l.s4 1983009808
        %v10088 = vunpack.c.0.s8 %v10087
        %v10089 = vlaneseq
        %v10090 = vshrl.u32 %v10089, 7
        %v10091 = vsub.s32 %v10088, %v10090
        %v10092 = vrot.slane %v10078, %v10091
        %v10093 = vcombine.low %v10085, %v10092
        %v10094 = vcombine.low %v9981, %v9983
        %v10095 = vcombine.low %v9985, %v9987
        %v10097 = vunpack.c.l.s4 1983009808
        %v10098 = vunpack.c.0.s8 %v10097
        %v10099 = vlaneseq
        %v10100 = vshrl.u32 %v10099, 7
        %v10101 = vsub.s32 %v10098, %v10100
        %v10102 = vrot.slane %v10094, %v10101
        %v10104 = vunpack.c.l.s4 1983009808
        %v10105 = vunpack.c.0.s8 %v10104
        %v10106 = vlaneseq
        %v10107 = vshrl.u32 %v10106, 7
        %v10108 = vsub.s32 %v10105, %v10107
        %v10109 = vrot.slane %v10095, %v10108
        %v10110 = vcombine.low %v10102, %v10109
        %v10111 = vcombine.low %v9989, %v9991
        %v10112 = vcombine.low %v9993, %v9995
        %v10114 = vunpack.c.l.s4 1983009808
        %v10115 = vunpack.c.0.s8 %v10114
        %v10116 = vlaneseq
        %v10117 = vshrl.u32 %v10116, 7
        %v10118 = vsub.s32 %v10115, %v10117
        %v10119 = vrot.slane %v10111, %v10118
        %v10121 = vunpack.c.l.s4 1983009808
        %v10122 = vunpack.c.0.s8 %v10121
        %v10123 = vlaneseq
        %v10124 = vshrl.u32 %v10123, 7
        %v10125 = vsub.s32 %v10122, %v10124
        %v10126 = vrot.slane %v10112, %v10125
        %v10127 = vcombine.low %v10119, %v10126
        %v10128 = vcombine.low %v9997, %v9999
        %v10129 = vcombine.low %v10001, %v10003
        %v10131 = vunpack.c.l.s4 1983009808
        %v10132 = vunpack.c.0.s8 %v10131
        %v10133 = vlaneseq
        %v10134 = vshrl.u32 %v10133, 7
        %v10135 = vsub.s32 %v10132, %v10134
        %v10136 = vrot.slane %v10128, %v10135
        %v10138 = vunpack.c.l.s4 1983009808
        %v10139 = vunpack.c.0.s8 %v10138
        %v10140 = vlaneseq
        %v10141 = vshrl.u32 %v10140, 7
        %v10142 = vsub.s32 %v10139, %v10141
        %v10143 = vrot.slane %v10129, %v10142
        %v10144 = vcombine.low %v10136, %v10143
        %v10145 = vcombine.low %v10005, %v10007
        %v10146 = vcombine.low %v10009, %v10011
        %v10148 = vunpack.c.l.s4 1983009808
        %v10149 = vunpack.c.0.s8 %v10148
        %v10150 = vlaneseq
        %v10151 = vshrl.u32 %v10150, 7
        %v10152 = vsub.s32 %v10149, %v10151
        %v10153 = vrot.slane %v10145, %v10152
        %v10155 = vunpack.c.l.s4 1983009808
        %v10156 = vunpack.c.0.s8 %v10155
        %v10157 = vlaneseq
        %v10158 = vshrl.u32 %v10157, 7
        %v10159 = vsub.s32 %v10156, %v10158
        %v10160 = vrot.slane %v10146, %v10159
        %v10161 = vcombine.low %v10153, %v10160
        %v10162 = vcombine.low %v10013, %v10015
        %v10163 = vcombine.low %v10017, %v10019
        %v10165 = vunpack.c.l.s4 1983009808
        %v10166 = vunpack.c.0.s8 %v10165
        %v10167 = vlaneseq
        %v10168 = vshrl.u32 %v10167, 7
        %v10169 = vsub.s32 %v10166, %v10168
        %v10170 = vrot.slane %v10162, %v10169
        %v10172 = vunpack.c.l.s4 1983009808
        %v10173 = vunpack.c.0.s8 %v10172
        %v10174 = vlaneseq
        %v10175 = vshrl.u32 %v10174, 7
        %v10176 = vsub.s32 %v10173, %v10175
        %v10177 = vrot.slane %v10163, %v10176
        %v10178 = vcombine.low %v10170, %v10177
        %v10179 = vcombine.low %v10021, %v10023
        %v10180 = vcombine.low %v10025, %v10027
        %v10182 = vunpack.c.l.s4 1983009808
        %v10183 = vunpack.c.0.s8 %v10182
        %v10184 = vlaneseq
        %v10185 = vshrl.u32 %v10184, 7
        %v10186 = vsub.s32 %v10183, %v10185
        %v10187 = vrot.slane %v10179, %v10186
        %v10189 = vunpack.c.l.s4 1983009808
        %v10190 = vunpack.c.0.s8 %v10189
        %v10191 = vlaneseq
        %v10192 = vshrl.u32 %v10191, 7
        %v10193 = vsub.s32 %v10190, %v10192
        %v10194 = vrot.slane %v10180, %v10193
        %v10195 = vcombine.low %v10187, %v10194
        %10204 = vst [vmem:[%s979] sm:$0xff] %v10076
        %10205 = vst [vmem:[%s979 + $0x8] sm:$0xff] %v10093
        %10206 = vst [vmem:[%s979 + $0x10] sm:$0xff] %v10110
        %10207 = vst [vmem:[%s979 + $0x18] sm:$0xff] %v10127
        %10208 = vst [vmem:[%s979 + $0x20] sm:$0xff] %v10144
        %10209 = vst [vmem:[%s979 + $0x28] sm:$0xff] %v10161
        %10210 = vst [vmem:[%s979 + $0x30] sm:$0xff] %v10178
        %10211 = vst [vmem:[%s979 + $0x38] sm:$0xff] %v10195
        %s10212 = sand.u32 %s530, 1
        %s10213 = scalar_lea.sflag [#allocation4], %s10212
        %s10214 = sand.u32 %s530, 1
        %s10215 = smul.addr %s10214, 64
        %s10216 = scalar_lea.vmem [#allocation31], %s10215
        // Predicated region
        $region185: #{tpu_custom_call.1} parent=107 // pred_check
          %p10217 = pneg %p540
        $region186: #{tpu_custom_call.1} parent=107 // pred_check_branch
          %10219 = sbr.rel (%p10217) target = $region188
        $region187: #{tpu_custom_call.1} parent=107 // pred_region
          %s10220 = smul.u32 32, %s45
          %s10222 = ssub.s32 1024, 1024
          %10223 = vsyncadd %s10213, %s10222
          %s10224 = smul.addr %s10220, 32
          %s10225 = scalar_lea.hbm %s22, %s10224
          %s10227 = sshll.u32 %s10216, 4
          %s10228 = int_to_ptr.vmem [resolvable:$true] %s10227
          %10230 = dma.vmem_to_hbm [thread:$0]  %s10228, 1024, %s10225, %s10213
        $region188: #{tpu_custom_call.1} parent=107 // pred_fallthru
          _
      $region108: #{tpu_custom_call.1} parent=5 // pred_fallthru
        _
      %p10231 = scmp.le.s32.totalorder 2, %s40
      // Predicated region
      $region189: #{tpu_custom_call.1} parent=5 // pred_check
        %p10232 = pneg %p10231
      $region190: #{tpu_custom_call.1} parent=5 // pred_check_branch
        %10234 = sbr.rel (%p10232) target = $region192
      $region191: #{tpu_custom_call.1} parent=5 // pred_region
        %s10235 = ssub.s32 %s40, 2
        // Predicated region
        $region193: #{tpu_custom_call.1} parent=191 // pred_check
          %p10236 = pneg %p546
        $region194: #{tpu_custom_call.1} parent=191 // pred_check_branch
          %10238 = sbr.rel (%p10236) target = $region196
        $region195: #{tpu_custom_call.1} parent=191 // pred_region
          %s10239 = sand.u32 %s531, 1
          %s10240 = scalar_lea.sflag [#allocation4], %s10239
          %s10241 = sand.u32 %s531, 1
          %s10242 = smul.addr %s10241, 64
          %s10243 = scalar_lea.vmem [#allocation31], %s10242
          %10244 = dma.done %s10240, 1024
        $region196: #{tpu_custom_call.1} parent=191 // pred_fallthru
          _
      $region192: #{tpu_custom_call.1} parent=5 // pred_fallthru
        _
    $region6: #{tpu_custom_call.1} parent=1 // loop_footer
      %s44 = sadd.s32 1, %s40
    $region7: #{tpu_custom_call.1} parent=1 // loop_footer_branch
      %39 = sbr.rel target = $region3
    $region8: #{tpu_custom_call.1} parent=1 // loop_exit
      _
    %10245 = vsyncpa [#allocation3], 1
    %s10246 = scalar_lea.sflag [#allocation3], 1
    %10247 = vsyncpa %s10246, 1
    %10248 = vsyncpa [#allocation6], 1
    %10249 = vsyncpa [#allocation9], 1
    %10250 = vsyncpa [#allocation12], 1
    %10251 = vsyncpa [#allocation15], 1
    %10252 = vsyncpa [#allocation18], 1
    %10253 = vsyncpa [#allocation21], 1
    %10254 = vsyncpa [#allocation24], 1
    %10255 = vsyncpa [#allocation27], 1
    %10256 = vsyncpa [#allocation4], 1
    %s10257 = scalar_lea.sflag [#allocation4], 1
    %10258 = vsyncpa %s10257, 1

</llo_original>
